<compile_context>
chip_gen: v7x
topology: tpu7x:2x2x1
jax: 0.10.0
libtpu: 0.0.40
codegen_flags: <defaults>
</compile_context>

<pallas_src>
import functools

import jax
import jax.numpy as jnp
from jax.experimental import pallas as pl
from jax.experimental.pallas import tpu as pltpu

NUM_CLASSES = 10
IN_FEATURES = 32 * 32 * 3  # 3072

# (in_features, out_features) of every Linear in the Sequential, in order.
LAYER_DIMS = [
    (IN_FEATURES, 512),
    (512, 256),
    (256, 128),
    (128, 64),
    (64, 32),
    (32, 32),
    (32, 16),
    (16, 14),
    (14, 12),
    (12, NUM_CLASSES),
]
NUM_LAYERS = len(LAYER_DIMS)


def _round_up(x, m):
    return ((x + m - 1) // m) * m


# Lane-dense (padded-to-128) layer dims actually used by the kernel.
PADDED_DIMS = [(_round_up(fi, 128), _round_up(fo, 128)) for fi, fo in LAYER_DIMS]


def mlp_softmax_kernel(x_ref, *refs):
    """refs = (w0, b0, w1, b1, ..., w9, b9, out_ref).

    x_ref : (TB, 3072) bf16 batch tile
    w_i   : (in_pad, out_pad) bf16, zero-padded to 128-lane multiples
    b_i   : (1, out_pad) f32, zero-padded
    out   : (TB, NUM_CLASSES) f32 softmax probabilities
    """
    out_ref = refs[-1]
    param_refs = refs[:-1]

    h = x_ref[...]  # bf16
    for i in range(NUM_LAYERS):
        w = param_refs[2 * i][...]        # (in_pad, out_pad) bf16
        b = param_refs[2 * i + 1][...]    # (1, out_pad)      f32
        # bf16 MXU matmul with f32 accumulation; bias/activation math in f32.
        acc = jnp.dot(h, w, preferred_element_type=jnp.float32) + b
        if i < NUM_LAYERS - 1:
            # Padded lanes stay exactly 0 through ReLU (zero weights/biases).
            h = jnp.maximum(acc, 0.0).astype(jnp.bfloat16)
        else:
            h = acc  # final logits, f32, (TB, 128)

    # Numerically stable Softmax(dim=1) over the first NUM_CLASSES lanes only;
    # padded lanes carry zero logits -> mask them to -inf (exp(-inf) == 0).
    lane = jax.lax.broadcasted_iota(jnp.int32, h.shape, dimension=1)
    logits = jnp.where(lane < NUM_CLASSES, h, -jnp.inf)
    m = jnp.max(logits, axis=1, keepdims=True)
    e = jnp.exp(logits - m)
    inv = pl.reciprocal(jnp.sum(e, axis=1, keepdims=True), approx=True)
    out_ref[...] = (e * inv)[:, :NUM_CLASSES]


def init_params(key):
    """PyTorch-style init U(-1/sqrt(fan_in), 1/sqrt(fan_in)), padded to 128 lanes.

    Weights -> bf16 (MXU operand/storage format), biases stay f32.
    """
    params = []
    for (fan_in, fan_out), (in_pad, out_pad) in zip(LAYER_DIMS, PADDED_DIMS):
        key, kw, kb = jax.random.split(key, 3)
        bound = 1.0 / jnp.sqrt(jnp.float32(fan_in))
        w = jax.random.uniform(kw, (fan_in, fan_out), jnp.float32, -bound, bound)
        b = jax.random.uniform(kb, (1, fan_out), jnp.float32, -bound, bound)
        w_pad = jnp.zeros((in_pad, out_pad), jnp.float32).at[:fan_in, :fan_out].set(w)
        b_pad = jnp.zeros((1, out_pad), jnp.float32).at[:, :fan_out].set(b)
        params.append(w_pad.astype(jnp.bfloat16))
        params.append(b_pad)
    return params


@functools.partial(jax.jit, static_argnames=("tb",))
def net_forward(x, params, *, tb=128):
    """x: (B, 3072) float32. Returns (B, 10) float32 softmax probabilities."""
    batch = x.shape[0]
    tb = min(tb, _round_up(batch, 8))        # small batches: one small tile
    b_pad = _round_up(batch, tb)
    grid = (b_pad // tb,)

    x_bf16 = x.astype(jnp.bfloat16)
    if b_pad != batch:
        x_bf16 = jnp.pad(x_bf16, ((0, b_pad - batch), (0, 0)))

    # Batch tile streams per grid step; params use constant index_maps so they
    # are fetched once and stay VMEM-resident across all grid steps.
    x_spec = pl.BlockSpec((tb, IN_FEATURES), lambda i: (i, 0))
    param_specs = []
    for (in_pad, out_pad) in PADDED_DIMS:
        param_specs.append(pl.BlockSpec((in_pad, out_pad), lambda i: (0, 0)))
        param_specs.append(pl.BlockSpec((1, out_pad), lambda i: (0, 0)))
    out_spec = pl.BlockSpec((tb, NUM_CLASSES), lambda i: (i, 0))

    out = pl.pallas_call(
        mlp_softmax_kernel,
        out_shape=jax.ShapeDtypeStruct((b_pad, NUM_CLASSES), jnp.float32),
        grid=grid,
        in_specs=[x_spec] + param_specs,
        out_specs=out_spec,
        compiler_params=pltpu.CompilerParams(
            dimension_semantics=("parallel",),   # batch tiles across cores (v7x)
            vmem_limit_bytes=32 << 20,
        ),
    )(x_bf16, *params)
    return out[:batch]


if __name__ == "__main__":
    key = jax.random.PRNGKey(0)
    key, kx = jax.random.split(key)

    batch = 8
    x = jax.random.normal(kx, (batch, IN_FEATURES), jnp.float32)
    params = init_params(key)

    out = net_forward(x, params)
    out = jax.block_until_ready(out)

    # sanity: valid softmax rows (bf16 matmuls + approx reciprocal -> loose tol)
    assert out.shape == (batch, NUM_CLASSES)
    assert bool(jnp.all(out >= 0.0))
    assert jnp.allclose(jnp.sum(out, axis=1), 1.0, atol=1e-2)

    print("KERNEL_OK")
</pallas_src>

<mosaic_0001>
module attributes {stable_mosaic.version = 11 : i64} {
  func.func @mlp_softmax_kernel(%arg0: i32, %arg1: memref<8x3072xbf16, #tpu.memory_space<vmem>>, %arg2: memref<3072x512xbf16, #tpu.memory_space<vmem>>, %arg3: memref<1x512xf32, #tpu.memory_space<vmem>>, %arg4: memref<512x256xbf16, #tpu.memory_space<vmem>>, %arg5: memref<1x256xf32, #tpu.memory_space<vmem>>, %arg6: memref<256x128xbf16, #tpu.memory_space<vmem>>, %arg7: memref<1x128xf32, #tpu.memory_space<vmem>>, %arg8: memref<128x128xbf16, #tpu.memory_space<vmem>>, %arg9: memref<1x128xf32, #tpu.memory_space<vmem>>, %arg10: memref<128x128xbf16, #tpu.memory_space<vmem>>, %arg11: memref<1x128xf32, #tpu.memory_space<vmem>>, %arg12: memref<128x128xbf16, #tpu.memory_space<vmem>>, %arg13: memref<1x128xf32, #tpu.memory_space<vmem>>, %arg14: memref<128x128xbf16, #tpu.memory_space<vmem>>, %arg15: memref<1x128xf32, #tpu.memory_space<vmem>>, %arg16: memref<128x128xbf16, #tpu.memory_space<vmem>>, %arg17: memref<1x128xf32, #tpu.memory_space<vmem>>, %arg18: memref<128x128xbf16, #tpu.memory_space<vmem>>, %arg19: memref<1x128xf32, #tpu.memory_space<vmem>>, %arg20: memref<128x128xbf16, #tpu.memory_space<vmem>>, %arg21: memref<1x128xf32, #tpu.memory_space<vmem>>, %arg22: memref<8x10xf32, #tpu.memory_space<vmem>>) attributes {dimension_semantics = [#tpu.dimension_semantics<parallel>], iteration_bounds = array<i64: 1>, scalar_prefetch = 0 : i64, scratch_operands = 0 : i64, tpu.core_type = #tpu.core_type<tc>, window_params = [{transform_indices = @transform_0, window_bounds = array<i64: 8, 3072>}, {pipeline_mode = #tpu.pipeline_mode<synchronous>, transform_indices = @transform_1, window_bounds = array<i64: 3072, 512>}, {pipeline_mode = #tpu.pipeline_mode<synchronous>, transform_indices = @transform_2, window_bounds = array<i64: 1, 512>}, {pipeline_mode = #tpu.pipeline_mode<synchronous>, transform_indices = @transform_3, window_bounds = array<i64: 512, 256>}, {pipeline_mode = #tpu.pipeline_mode<synchronous>, transform_indices = @transform_4, window_bounds = array<i64: 1, 256>}, {pipeline_mode = #tpu.pipeline_mode<synchronous>, transform_indices = @transform_5, window_bounds = array<i64: 256, 128>}, {pipeline_mode = #tpu.pipeline_mode<synchronous>, transform_indices = @transform_6, window_bounds = array<i64: 1, 128>}, {pipeline_mode = #tpu.pipeline_mode<synchronous>, transform_indices = @transform_7, window_bounds = array<i64: 128, 128>}, {pipeline_mode = #tpu.pipeline_mode<synchronous>, transform_indices = @transform_8, window_bounds = array<i64: 1, 128>}, {pipeline_mode = #tpu.pipeline_mode<synchronous>, transform_indices = @transform_9, window_bounds = array<i64: 128, 128>}, {pipeline_mode = #tpu.pipeline_mode<synchronous>, transform_indices = @transform_10, window_bounds = array<i64: 1, 128>}, {pipeline_mode = #tpu.pipeline_mode<synchronous>, transform_indices = @transform_11, window_bounds = array<i64: 128, 128>}, {pipeline_mode = #tpu.pipeline_mode<synchronous>, transform_indices = @transform_12, window_bounds = array<i64: 1, 128>}, {pipeline_mode = #tpu.pipeline_mode<synchronous>, transform_indices = @transform_13, window_bounds = array<i64: 128, 128>}, {pipeline_mode = #tpu.pipeline_mode<synchronous>, transform_indices = @transform_14, window_bounds = array<i64: 1, 128>}, {pipeline_mode = #tpu.pipeline_mode<synchronous>, transform_indices = @transform_15, window_bounds = array<i64: 128, 128>}, {pipeline_mode = #tpu.pipeline_mode<synchronous>, transform_indices = @transform_16, window_bounds = array<i64: 1, 128>}, {pipeline_mode = #tpu.pipeline_mode<synchronous>, transform_indices = @transform_17, window_bounds = array<i64: 128, 128>}, {pipeline_mode = #tpu.pipeline_mode<synchronous>, transform_indices = @transform_18, window_bounds = array<i64: 1, 128>}, {pipeline_mode = #tpu.pipeline_mode<synchronous>, transform_indices = @transform_19, window_bounds = array<i64: 128, 128>}, {pipeline_mode = #tpu.pipeline_mode<synchronous>, transform_indices = @transform_20, window_bounds = array<i64: 1, 128>}, {transform_indices = @transform_21, window_bounds = array<i64: 8, 10>}]} {
    %c0 = arith.constant 0 : index
    %c0_0 = arith.constant 0 : index
    %0 = vector.load %arg1[%c0, %c0_0] : memref<8x3072xbf16, #tpu.memory_space<vmem>>, vector<8x3072xbf16>
    %c0_1 = arith.constant 0 : index
    %c0_2 = arith.constant 0 : index
    %1 = vector.load %arg2[%c0_1, %c0_2] : memref<3072x512xbf16, #tpu.memory_space<vmem>>, vector<3072x512xbf16>
    %c0_3 = arith.constant 0 : index
    %c0_4 = arith.constant 0 : index
    %2 = vector.load %arg3[%c0_3, %c0_4] : memref<1x512xf32, #tpu.memory_space<vmem>>, vector<1x512xf32>
    %cst = arith.constant dense<0.000000e+00> : vector<8x512xf32>
    %3 = tpu.matmul %0, %1, %cst {dimension_numbers = #tpu.dot_dimension_numbers<[1], [0], [0], [1], [0, 0, 1, 1], [], []>} : vector<8x3072xbf16>, vector<3072x512xbf16>, vector<8x512xf32> -> vector<8x512xf32>
    %4 = vector.broadcast %2 : vector<1x512xf32> to vector<8x512xf32>
    %5 = arith.addf %3, %4 : vector<8x512xf32>
    %cst_5 = arith.constant 0.000000e+00 : f32
    %6 = vector.broadcast %cst_5 : f32 to vector<8x512xf32>
    %7 = arith.maximumf %5, %6 : vector<8x512xf32>
    %8 = arith.truncf %7 : vector<8x512xf32> to vector<8x512xbf16>
    %c0_6 = arith.constant 0 : index
    %c0_7 = arith.constant 0 : index
    %9 = vector.load %arg4[%c0_6, %c0_7] : memref<512x256xbf16, #tpu.memory_space<vmem>>, vector<512x256xbf16>
    %c0_8 = arith.constant 0 : index
    %c0_9 = arith.constant 0 : index
    %10 = vector.load %arg5[%c0_8, %c0_9] : memref<1x256xf32, #tpu.memory_space<vmem>>, vector<1x256xf32>
    %cst_10 = arith.constant dense<0.000000e+00> : vector<8x256xf32>
    %11 = tpu.matmul %8, %9, %cst_10 {dimension_numbers = #tpu.dot_dimension_numbers<[1], [0], [0], [1], [0, 0, 1, 1], [], []>} : vector<8x512xbf16>, vector<512x256xbf16>, vector<8x256xf32> -> vector<8x256xf32>
    %12 = vector.broadcast %10 : vector<1x256xf32> to vector<8x256xf32>
    %13 = arith.addf %11, %12 : vector<8x256xf32>
    %cst_11 = arith.constant 0.000000e+00 : f32
    %14 = vector.broadcast %cst_11 : f32 to vector<8x256xf32>
    %15 = arith.maximumf %13, %14 : vector<8x256xf32>
    %16 = arith.truncf %15 : vector<8x256xf32> to vector<8x256xbf16>
    %c0_12 = arith.constant 0 : index
    %c0_13 = arith.constant 0 : index
    %17 = vector.load %arg6[%c0_12, %c0_13] : memref<256x128xbf16, #tpu.memory_space<vmem>>, vector<256x128xbf16>
    %c0_14 = arith.constant 0 : index
    %c0_15 = arith.constant 0 : index
    %18 = vector.load %arg7[%c0_14, %c0_15] : memref<1x128xf32, #tpu.memory_space<vmem>>, vector<1x128xf32>
    %cst_16 = arith.constant dense<0.000000e+00> : vector<8x128xf32>
    %19 = tpu.matmul %16, %17, %cst_16 {dimension_numbers = #tpu.dot_dimension_numbers<[1], [0], [0], [1], [0, 0, 1, 1], [], []>} : vector<8x256xbf16>, vector<256x128xbf16>, vector<8x128xf32> -> vector<8x128xf32>
    %20 = vector.broadcast %18 : vector<1x128xf32> to vector<8x128xf32>
    %21 = arith.addf %19, %20 : vector<8x128xf32>
    %cst_17 = arith.constant 0.000000e+00 : f32
    %22 = vector.broadcast %cst_17 : f32 to vector<8x128xf32>
    %23 = arith.maximumf %21, %22 : vector<8x128xf32>
    %24 = arith.truncf %23 : vector<8x128xf32> to vector<8x128xbf16>
    %c0_18 = arith.constant 0 : index
    %c0_19 = arith.constant 0 : index
    %25 = vector.load %arg8[%c0_18, %c0_19] : memref<128x128xbf16, #tpu.memory_space<vmem>>, vector<128x128xbf16>
    %c0_20 = arith.constant 0 : index
    %c0_21 = arith.constant 0 : index
    %26 = vector.load %arg9[%c0_20, %c0_21] : memref<1x128xf32, #tpu.memory_space<vmem>>, vector<1x128xf32>
    %cst_22 = arith.constant dense<0.000000e+00> : vector<8x128xf32>
    %27 = tpu.matmul %24, %25, %cst_22 {dimension_numbers = #tpu.dot_dimension_numbers<[1], [0], [0], [1], [0, 0, 1, 1], [], []>} : vector<8x128xbf16>, vector<128x128xbf16>, vector<8x128xf32> -> vector<8x128xf32>
    %28 = vector.broadcast %26 : vector<1x128xf32> to vector<8x128xf32>
    %29 = arith.addf %27, %28 : vector<8x128xf32>
    %cst_23 = arith.constant 0.000000e+00 : f32
    %30 = vector.broadcast %cst_23 : f32 to vector<8x128xf32>
    %31 = arith.maximumf %29, %30 : vector<8x128xf32>
    %32 = arith.truncf %31 : vector<8x128xf32> to vector<8x128xbf16>
    %c0_24 = arith.constant 0 : index
    %c0_25 = arith.constant 0 : index
    %33 = vector.load %arg10[%c0_24, %c0_25] : memref<128x128xbf16, #tpu.memory_space<vmem>>, vector<128x128xbf16>
    %c0_26 = arith.constant 0 : index
    %c0_27 = arith.constant 0 : index
    %34 = vector.load %arg11[%c0_26, %c0_27] : memref<1x128xf32, #tpu.memory_space<vmem>>, vector<1x128xf32>
    %cst_28 = arith.constant dense<0.000000e+00> : vector<8x128xf32>
    %35 = tpu.matmul %32, %33, %cst_28 {dimension_numbers = #tpu.dot_dimension_numbers<[1], [0], [0], [1], [0, 0, 1, 1], [], []>} : vector<8x128xbf16>, vector<128x128xbf16>, vector<8x128xf32> -> vector<8x128xf32>
    %36 = vector.broadcast %34 : vector<1x128xf32> to vector<8x128xf32>
    %37 = arith.addf %35, %36 : vector<8x128xf32>
    %cst_29 = arith.constant 0.000000e+00 : f32
    %38 = vector.broadcast %cst_29 : f32 to vector<8x128xf32>
    %39 = arith.maximumf %37, %38 : vector<8x128xf32>
    %40 = arith.truncf %39 : vector<8x128xf32> to vector<8x128xbf16>
    %c0_30 = arith.constant 0 : index
    %c0_31 = arith.constant 0 : index
    %41 = vector.load %arg12[%c0_30, %c0_31] : memref<128x128xbf16, #tpu.memory_space<vmem>>, vector<128x128xbf16>
    %c0_32 = arith.constant 0 : index
    %c0_33 = arith.constant 0 : index
    %42 = vector.load %arg13[%c0_32, %c0_33] : memref<1x128xf32, #tpu.memory_space<vmem>>, vector<1x128xf32>
    %cst_34 = arith.constant dense<0.000000e+00> : vector<8x128xf32>
    %43 = tpu.matmul %40, %41, %cst_34 {dimension_numbers = #tpu.dot_dimension_numbers<[1], [0], [0], [1], [0, 0, 1, 1], [], []>} : vector<8x128xbf16>, vector<128x128xbf16>, vector<8x128xf32> -> vector<8x128xf32>
    %44 = vector.broadcast %42 : vector<1x128xf32> to vector<8x128xf32>
    %45 = arith.addf %43, %44 : vector<8x128xf32>
    %cst_35 = arith.constant 0.000000e+00 : f32
    %46 = vector.broadcast %cst_35 : f32 to vector<8x128xf32>
    %47 = arith.maximumf %45, %46 : vector<8x128xf32>
    %48 = arith.truncf %47 : vector<8x128xf32> to vector<8x128xbf16>
    %c0_36 = arith.constant 0 : index
    %c0_37 = arith.constant 0 : index
    %49 = vector.load %arg14[%c0_36, %c0_37] : memref<128x128xbf16, #tpu.memory_space<vmem>>, vector<128x128xbf16>
    %c0_38 = arith.constant 0 : index
    %c0_39 = arith.constant 0 : index
    %50 = vector.load %arg15[%c0_38, %c0_39] : memref<1x128xf32, #tpu.memory_space<vmem>>, vector<1x128xf32>
    %cst_40 = arith.constant dense<0.000000e+00> : vector<8x128xf32>
    %51 = tpu.matmul %48, %49, %cst_40 {dimension_numbers = #tpu.dot_dimension_numbers<[1], [0], [0], [1], [0, 0, 1, 1], [], []>} : vector<8x128xbf16>, vector<128x128xbf16>, vector<8x128xf32> -> vector<8x128xf32>
    %52 = vector.broadcast %50 : vector<1x128xf32> to vector<8x128xf32>
    %53 = arith.addf %51, %52 : vector<8x128xf32>
    %cst_41 = arith.constant 0.000000e+00 : f32
    %54 = vector.broadcast %cst_41 : f32 to vector<8x128xf32>
    %55 = arith.maximumf %53, %54 : vector<8x128xf32>
    %56 = arith.truncf %55 : vector<8x128xf32> to vector<8x128xbf16>
    %c0_42 = arith.constant 0 : index
    %c0_43 = arith.constant 0 : index
    %57 = vector.load %arg16[%c0_42, %c0_43] : memref<128x128xbf16, #tpu.memory_space<vmem>>, vector<128x128xbf16>
    %c0_44 = arith.constant 0 : index
    %c0_45 = arith.constant 0 : index
    %58 = vector.load %arg17[%c0_44, %c0_45] : memref<1x128xf32, #tpu.memory_space<vmem>>, vector<1x128xf32>
    %cst_46 = arith.constant dense<0.000000e+00> : vector<8x128xf32>
    %59 = tpu.matmul %56, %57, %cst_46 {dimension_numbers = #tpu.dot_dimension_numbers<[1], [0], [0], [1], [0, 0, 1, 1], [], []>} : vector<8x128xbf16>, vector<128x128xbf16>, vector<8x128xf32> -> vector<8x128xf32>
    %60 = vector.broadcast %58 : vector<1x128xf32> to vector<8x128xf32>
    %61 = arith.addf %59, %60 : vector<8x128xf32>
    %cst_47 = arith.constant 0.000000e+00 : f32
    %62 = vector.broadcast %cst_47 : f32 to vector<8x128xf32>
    %63 = arith.maximumf %61, %62 : vector<8x128xf32>
    %64 = arith.truncf %63 : vector<8x128xf32> to vector<8x128xbf16>
    %c0_48 = arith.constant 0 : index
    %c0_49 = arith.constant 0 : index
    %65 = vector.load %arg18[%c0_48, %c0_49] : memref<128x128xbf16, #tpu.memory_space<vmem>>, vector<128x128xbf16>
    %c0_50 = arith.constant 0 : index
    %c0_51 = arith.constant 0 : index
    %66 = vector.load %arg19[%c0_50, %c0_51] : memref<1x128xf32, #tpu.memory_space<vmem>>, vector<1x128xf32>
    %cst_52 = arith.constant dense<0.000000e+00> : vector<8x128xf32>
    %67 = tpu.matmul %64, %65, %cst_52 {dimension_numbers = #tpu.dot_dimension_numbers<[1], [0], [0], [1], [0, 0, 1, 1], [], []>} : vector<8x128xbf16>, vector<128x128xbf16>, vector<8x128xf32> -> vector<8x128xf32>
    %68 = vector.broadcast %66 : vector<1x128xf32> to vector<8x128xf32>
    %69 = arith.addf %67, %68 : vector<8x128xf32>
    %cst_53 = arith.constant 0.000000e+00 : f32
    %70 = vector.broadcast %cst_53 : f32 to vector<8x128xf32>
    %71 = arith.maximumf %69, %70 : vector<8x128xf32>
    %72 = arith.truncf %71 : vector<8x128xf32> to vector<8x128xbf16>
    %c0_54 = arith.constant 0 : index
    %c0_55 = arith.constant 0 : index
    %73 = vector.load %arg20[%c0_54, %c0_55] : memref<128x128xbf16, #tpu.memory_space<vmem>>, vector<128x128xbf16>
    %c0_56 = arith.constant 0 : index
    %c0_57 = arith.constant 0 : index
    %74 = vector.load %arg21[%c0_56, %c0_57] : memref<1x128xf32, #tpu.memory_space<vmem>>, vector<1x128xf32>
    %cst_58 = arith.constant dense<0.000000e+00> : vector<8x128xf32>
    %75 = tpu.matmul %72, %73, %cst_58 {dimension_numbers = #tpu.dot_dimension_numbers<[1], [0], [0], [1], [0, 0, 1, 1], [], []>} : vector<8x128xbf16>, vector<128x128xbf16>, vector<8x128xf32> -> vector<8x128xf32>
    %76 = vector.broadcast %74 : vector<1x128xf32> to vector<8x128xf32>
    %77 = arith.addf %75, %76 : vector<8x128xf32>
    %78 = tpu.iota {dimensions = array<i32: 1>} : vector<8x128xi32>
    %c10_i32 = arith.constant 10 : i32
    %79 = vector.broadcast %c10_i32 : i32 to vector<8x128xi32>
    %80 = arith.cmpi slt, %78, %79 : vector<8x128xi32>
    %cst_59 = arith.constant 0xFF800000 : f32
    %81 = vector.broadcast %cst_59 : f32 to vector<8x128xf32>
    %82 = arith.select %80, %77, %81 : vector<8x128xi1>, vector<8x128xf32>
    %cst_60 = arith.constant dense<0xFF800000> : vector<8xf32>
    %83 = vector.multi_reduction <maximumf>, %82, %cst_60 [1] : vector<8x128xf32> to vector<8xf32>
    %84 = vector.shape_cast %83 : vector<8xf32> to vector<8x1xf32>
    %85 = vector.broadcast %84 : vector<8x1xf32> to vector<8x128xf32>
    %86 = arith.subf %82, %85 : vector<8x128xf32>
    %87 = math.exp %86 : vector<8x128xf32>
    %cst_61 = arith.constant dense<0.000000e+00> : vector<8xf32>
    %88 = vector.multi_reduction <add>, %87, %cst_61 [1] : vector<8x128xf32> to vector<8xf32>
    %89 = vector.shape_cast %88 : vector<8xf32> to vector<8x1xf32>
    %90 = tpu.reciprocal %89 {approx = true} : vector<8x1xf32> -> vector<8x1xf32>
    %91 = vector.broadcast %90 : vector<8x1xf32> to vector<8x128xf32>
    %92 = arith.mulf %87, %91 : vector<8x128xf32>
    %93 = vector.extract_strided_slice %92 {offsets = [0, 0], sizes = [8, 10], strides = [1, 1]} : vector<8x128xf32> to vector<8x10xf32>
    %c0_62 = arith.constant 0 : index
    %c0_63 = arith.constant 0 : index
    %94 = vector.load %arg22[%c0_62, %c0_63] : memref<8x10xf32, #tpu.memory_space<vmem>>, vector<8x10xf32>
    tpu.vector_store %arg22[%c0_62, %c0_63], %93 {strides = array<i32>} : memref<8x10xf32, #tpu.memory_space<vmem>>, vector<8x10xf32>,
    return
  }
  func.func @transform_0(%arg0: i32) -> (i32, i32) {
    %c0_i32 = arith.constant 0 : i32
    %c0_i32_0 = arith.constant 0 : i32
    return %arg0, %c0_i32 : i32, i32
  }
  func.func @transform_1(%arg0: i32) -> (i32, i32) {
    %c0_i32 = arith.constant 0 : i32
    %c0_i32_0 = arith.constant 0 : i32
    %c0_i32_1 = arith.constant 0 : i32
    return %c0_i32, %c0_i32_0 : i32, i32
  }
  func.func @transform_2(%arg0: i32) -> (i32, i32) {
    %c0_i32 = arith.constant 0 : i32
    %c0_i32_0 = arith.constant 0 : i32
    %c0_i32_1 = arith.constant 0 : i32
    return %c0_i32, %c0_i32_0 : i32, i32
  }
  func.func @transform_3(%arg0: i32) -> (i32, i32) {
    %c0_i32 = arith.constant 0 : i32
    %c0_i32_0 = arith.constant 0 : i32
    %c0_i32_1 = arith.constant 0 : i32
    return %c0_i32, %c0_i32_0 : i32, i32
  }
  func.func @transform_4(%arg0: i32) -> (i32, i32) {
    %c0_i32 = arith.constant 0 : i32
    %c0_i32_0 = arith.constant 0 : i32
    %c0_i32_1 = arith.constant 0 : i32
    return %c0_i32, %c0_i32_0 : i32, i32
  }
  func.func @transform_5(%arg0: i32) -> (i32, i32) {
    %c0_i32 = arith.constant 0 : i32
    %c0_i32_0 = arith.constant 0 : i32
    %c0_i32_1 = arith.constant 0 : i32
    return %c0_i32, %c0_i32_0 : i32, i32
  }
  func.func @transform_6(%arg0: i32) -> (i32, i32) {
    %c0_i32 = arith.constant 0 : i32
    %c0_i32_0 = arith.constant 0 : i32
    %c0_i32_1 = arith.constant 0 : i32
    return %c0_i32, %c0_i32_0 : i32, i32
  }
  func.func @transform_7(%arg0: i32) -> (i32, i32) {
    %c0_i32 = arith.constant 0 : i32
    %c0_i32_0 = arith.constant 0 : i32
    %c0_i32_1 = arith.constant 0 : i32
    return %c0_i32, %c0_i32_0 : i32, i32
  }
  func.func @transform_8(%arg0: i32) -> (i32, i32) {
    %c0_i32 = arith.constant 0 : i32
    %c0_i32_0 = arith.constant 0 : i32
    %c0_i32_1 = arith.constant 0 : i32
    return %c0_i32, %c0_i32_0 : i32, i32
  }
  func.func @transform_9(%arg0: i32) -> (i32, i32) {
    %c0_i32 = arith.constant 0 : i32
    %c0_i32_0 = arith.constant 0 : i32
    %c0_i32_1 = arith.constant 0 : i32
    return %c0_i32, %c0_i32_0 : i32, i32
  }
  func.func @transform_10(%arg0: i32) -> (i32, i32) {
    %c0_i32 = arith.constant 0 : i32
    %c0_i32_0 = arith.constant 0 : i32
    %c0_i32_1 = arith.constant 0 : i32
    return %c0_i32, %c0_i32_0 : i32, i32
  }
  func.func @transform_11(%arg0: i32) -> (i32, i32) {
    %c0_i32 = arith.constant 0 : i32
    %c0_i32_0 = arith.constant 0 : i32
    %c0_i32_1 = arith.constant 0 : i32
    return %c0_i32, %c0_i32_0 : i32, i32
  }
  func.func @transform_12(%arg0: i32) -> (i32, i32) {
    %c0_i32 = arith.constant 0 : i32
    %c0_i32_0 = arith.constant 0 : i32
    %c0_i32_1 = arith.constant 0 : i32
    return %c0_i32, %c0_i32_0 : i32, i32
  }
  func.func @transform_13(%arg0: i32) -> (i32, i32) {
    %c0_i32 = arith.constant 0 : i32
    %c0_i32_0 = arith.constant 0 : i32
    %c0_i32_1 = arith.constant 0 : i32
    return %c0_i32, %c0_i32_0 : i32, i32
  }
  func.func @transform_14(%arg0: i32) -> (i32, i32) {
    %c0_i32 = arith.constant 0 : i32
    %c0_i32_0 = arith.constant 0 : i32
    %c0_i32_1 = arith.constant 0 : i32
    return %c0_i32, %c0_i32_0 : i32, i32
  }
  func.func @transform_15(%arg0: i32) -> (i32, i32) {
    %c0_i32 = arith.constant 0 : i32
    %c0_i32_0 = arith.constant 0 : i32
    %c0_i32_1 = arith.constant 0 : i32
    return %c0_i32, %c0_i32_0 : i32, i32
  }
  func.func @transform_16(%arg0: i32) -> (i32, i32) {
    %c0_i32 = arith.constant 0 : i32
    %c0_i32_0 = arith.constant 0 : i32
    %c0_i32_1 = arith.constant 0 : i32
    return %c0_i32, %c0_i32_0 : i32, i32
  }
  func.func @transform_17(%arg0: i32) -> (i32, i32) {
    %c0_i32 = arith.constant 0 : i32
    %c0_i32_0 = arith.constant 0 : i32
    %c0_i32_1 = arith.constant 0 : i32
    return %c0_i32, %c0_i32_0 : i32, i32
  }
  func.func @transform_18(%arg0: i32) -> (i32, i32) {
    %c0_i32 = arith.constant 0 : i32
    %c0_i32_0 = arith.constant 0 : i32
    %c0_i32_1 = arith.constant 0 : i32
    return %c0_i32, %c0_i32_0 : i32, i32
  }
  func.func @transform_19(%arg0: i32) -> (i32, i32) {
    %c0_i32 = arith.constant 0 : i32
    %c0_i32_0 = arith.constant 0 : i32
    %c0_i32_1 = arith.constant 0 : i32
    return %c0_i32, %c0_i32_0 : i32, i32
  }
  func.func @transform_20(%arg0: i32) -> (i32, i32) {
    %c0_i32 = arith.constant 0 : i32
    %c0_i32_0 = arith.constant 0 : i32
    %c0_i32_1 = arith.constant 0 : i32
    return %c0_i32, %c0_i32_0 : i32, i32
  }
  func.func @transform_21(%arg0: i32) -> (i32, i32) {
    %c0_i32 = arith.constant 0 : i32
    %c0_i32_0 = arith.constant 0 : i32
    return %arg0, %c0_i32 : i32, i32
  }
}

</mosaic_0001>

<llo_original>
// kernel: net_forward.1
$region0: #{net_forward.1}
  #allocation0 [shape = 'u32[]', space=smem, size = 0x4, offset = 0x4, fixed_abs, tag = 'smem constant byte address 0x4 - core index']
  #allocation1 [shape = 'u32[144,128]{1,0:T(1,128)}', space=vmem, size = 0x12000, scoped, tag = 'internal scratch']
  %s0 = inlined_call_operand.vmem [shape: bf16[8,3072], index: 0, kind: input, shape index: {}]
  %s1 = inlined_call_operand.hbm [shape: bf16[3072,512], index: 1, kind: input, shape index: {}]
  %s2 = inlined_call_operand.hbm [shape: f32[1,512], index: 2, kind: input, shape index: {}]
  %s3 = inlined_call_operand.hbm [shape: bf16[512,256], index: 3, kind: input, shape index: {}]
  %s4 = inlined_call_operand.hbm [shape: f32[1,256], index: 4, kind: input, shape index: {}]
  %s5 = inlined_call_operand.hbm [shape: bf16[256,128], index: 5, kind: input, shape index: {}]
  %s6 = inlined_call_operand.hbm [shape: f32[1,128], index: 6, kind: input, shape index: {}]
  %s7 = inlined_call_operand.hbm [shape: bf16[128,128], index: 7, kind: input, shape index: {}]
  %s8 = inlined_call_operand.hbm [shape: f32[1,128], index: 8, kind: input, shape index: {}]
  %s9 = inlined_call_operand.hbm [shape: bf16[128,128], index: 9, kind: input, shape index: {}]
  %s10 = inlined_call_operand.hbm [shape: f32[1,128], index: 10, kind: input, shape index: {}]
  %s11 = inlined_call_operand.hbm [shape: bf16[128,128], index: 11, kind: input, shape index: {}]
  %s12 = inlined_call_operand.hbm [shape: f32[1,128], index: 12, kind: input, shape index: {}]
  %s13 = inlined_call_operand.hbm [shape: bf16[128,128], index: 13, kind: input, shape index: {}]
  %s14 = inlined_call_operand.hbm [shape: f32[1,128], index: 14, kind: input, shape index: {}]
  %s15 = inlined_call_operand.hbm [shape: bf16[128,128], index: 15, kind: input, shape index: {}]
  %s16 = inlined_call_operand.hbm [shape: f32[1,128], index: 16, kind: input, shape index: {}]
  %s17 = inlined_call_operand.hbm [shape: bf16[128,128], index: 17, kind: input, shape index: {}]
  %s18 = inlined_call_operand.hbm [shape: f32[1,128], index: 18, kind: input, shape index: {}]
  %s19 = inlined_call_operand.hbm [shape: bf16[128,128], index: 19, kind: input, shape index: {}]
  %s20 = inlined_call_operand.hbm [shape: f32[1,128], index: 20, kind: input, shape index: {}]
  %s21 = inlined_call_operand.hbm [shape: f32[8,10], index: 21, kind: output, shape index: {}]
  %s22 = sld [smem:[#allocation0]]
  $region174: #{net_forward.1} parent=0
    _
  %s24 = ssub.s32 1, %s22
  %s25 = scalar_select 0, %s24, %s22
  $region1: #{net_forward.1} parent=0
    #allocation2 [shape = 'u8[3145728]{0}', space=vmem, size = 0x300000, scoped, tag = 'input window, operand 1, single buffered']
    #allocation3 [shape = 's32[1]{0}', space=sflag, size = 0x4, scoped, tag = 'scoped memory for net_forward.1']
    #allocation4 [shape = 's32[1]{0}', space=sflag, size = 0x4, scoped, tag = 'scoped memory for net_forward.1']
    #allocation5 [shape = 'u8[2048]{0}', space=vmem, size = 0x800, scoped, tag = 'input window, operand 2, single buffered']
    #allocation6 [shape = 's32[1]{0}', space=sflag, size = 0x4, scoped, tag = 'scoped memory for net_forward.1']
    #allocation7 [shape = 'u8[262144]{0}', space=vmem, size = 0x40000, scoped, tag = 'input window, operand 3, single buffered']
    #allocation8 [shape = 'u8[1024]{0}', space=vmem, size = 0x400, scoped, tag = 'input window, operand 4, single buffered']
    #allocation9 [shape = 's32[1]{0}', space=sflag, size = 0x4, scoped, tag = 'scoped memory for net_forward.1']
    #allocation10 [shape = 'u8[65536]{0}', space=vmem, size = 0x10000, scoped, tag = 'input window, operand 5, single buffered']
    #allocation11 [shape = 'u8[512]{0}', space=vmem, size = 0x400, scoped, tag = 'input window, operand 6, single buffered']
    #allocation12 [shape = 's32[1]{0}', space=sflag, size = 0x4, scoped, tag = 'scoped memory for net_forward.1']
    #allocation13 [shape = 'u8[32768]{0}', space=vmem, size = 0x8000, scoped, tag = 'input window, operand 7, single buffered']
    #allocation14 [shape = 'u8[512]{0}', space=vmem, size = 0x400, scoped, tag = 'input window, operand 8, single buffered']
    #allocation15 [shape = 's32[1]{0}', space=sflag, size = 0x4, scoped, tag = 'scoped memory for net_forward.1']
    #allocation16 [shape = 'u8[32768]{0}', space=vmem, size = 0x8000, scoped, tag = 'input window, operand 9, single buffered']
    #allocation17 [shape = 'u8[512]{0}', space=vmem, size = 0x400, scoped, tag = 'input window, operand 10, single buffered']
    #allocation18 [shape = 's32[1]{0}', space=sflag, size = 0x4, scoped, tag = 'scoped memory for net_forward.1']
    #allocation19 [shape = 'u8[32768]{0}', space=vmem, size = 0x8000, scoped, tag = 'input window, operand 11, single buffered']
    #allocation20 [shape = 'u8[512]{0}', space=vmem, size = 0x400, scoped, tag = 'input window, operand 12, single buffered']
    #allocation21 [shape = 's32[1]{0}', space=sflag, size = 0x4, scoped, tag = 'scoped memory for net_forward.1']
    #allocation22 [shape = 'u8[32768]{0}', space=vmem, size = 0x8000, scoped, tag = 'input window, operand 13, single buffered']
    #allocation23 [shape = 'u8[512]{0}', space=vmem, size = 0x400, scoped, tag = 'input window, operand 14, single buffered']
    #allocation24 [shape = 's32[1]{0}', space=sflag, size = 0x4, scoped, tag = 'scoped memory for net_forward.1']
    #allocation25 [shape = 'u8[32768]{0}', space=vmem, size = 0x8000, scoped, tag = 'input window, operand 15, single buffered']
    #allocation26 [shape = 'u8[512]{0}', space=vmem, size = 0x400, scoped, tag = 'input window, operand 16, single buffered']
    #allocation27 [shape = 's32[1]{0}', space=sflag, size = 0x4, scoped, tag = 'scoped memory for net_forward.1']
    #allocation28 [shape = 'u8[32768]{0}', space=vmem, size = 0x8000, scoped, tag = 'input window, operand 17, single buffered']
    #allocation29 [shape = 'u8[512]{0}', space=vmem, size = 0x400, scoped, tag = 'input window, operand 18, single buffered']
    #allocation30 [shape = 's32[1]{0}', space=sflag, size = 0x4, scoped, tag = 'scoped memory for net_forward.1']
    #allocation31 [shape = 'u8[32768]{0}', space=vmem, size = 0x8000, scoped, tag = 'input window, operand 19, single buffered']
    #allocation32 [shape = 'u8[512]{0}', space=vmem, size = 0x400, scoped, tag = 'input window, operand 20, single buffered']
    #allocation33 [shape = 's32[1]{0}', space=sflag, size = 0x4, scoped, tag = 'scoped memory for net_forward.1']
    #allocation34 [shape = 'u8[4096]{0}', space=vmem, size = 0x1000, scoped, tag = 'output window, operand 0, single buffered']
    %26 = vsyncpa [#allocation3], 0
    %27 = vsyncpa [#allocation6], 0
    %28 = vsyncpa [#allocation9], 0
    %29 = vsyncpa [#allocation12], 0
    %30 = vsyncpa [#allocation15], 0
    %31 = vsyncpa [#allocation18], 0
    %32 = vsyncpa [#allocation21], 0
    %33 = vsyncpa [#allocation24], 0
    %34 = vsyncpa [#allocation27], 0
    %35 = vsyncpa [#allocation30], 0
    %36 = vsyncpa [#allocation33], 0
    %37 = vsyncpa [#allocation4], 0
    // Predicated region
    $region2: #{net_forward.1} parent=1 // pred_check
      _
    $region3: #{net_forward.1} parent=1 // pred_check_branch
      %39 = sbr.rel (0) target = $region5
    $region4: #{net_forward.1} parent=1 // pred_region
      _
    $region5: #{net_forward.1} parent=1 // pred_fallthru
      _
    // Predicated region
    $region6: #{net_forward.1} parent=1 // pred_check
      _
    $region7: #{net_forward.1} parent=1 // pred_check_branch
      %41 = sbr.rel (0) target = $region9
    $region8: #{net_forward.1} parent=1 // pred_region
      %s43 = ssub.s32 98304, 98304
      %44 = vsyncadd [#allocation3], %s43
      %s45 = sshll.u32 [#allocation2], 4
      %s46 = int_to_ptr.vmem [resolvable:$true] %s45
      %51 = dma.hbm_to_vmem [thread:$0]  %s1, 98304, %s46, [#allocation3], 256, 256, 16
    $region9: #{net_forward.1} parent=1 // pred_fallthru
      _
    // Predicated region
    $region10: #{net_forward.1} parent=1 // pred_check
      _
    $region11: #{net_forward.1} parent=1 // pred_check_branch
      %53 = sbr.rel (0) target = $region13
    $region12: #{net_forward.1} parent=1 // pred_region
      %s55 = ssub.s32 64, 64
      %56 = vsyncadd [#allocation6], %s55
      %s58 = sshll.u32 [#allocation5], 4
      %s59 = int_to_ptr.vmem [resolvable:$true] %s58
      %61 = dma.hbm_to_vmem [thread:$0]  %s2, 64, %s59, [#allocation6]
    $region13: #{net_forward.1} parent=1 // pred_fallthru
      _
    // Predicated region
    $region14: #{net_forward.1} parent=1 // pred_check
      _
    $region15: #{net_forward.1} parent=1 // pred_check_branch
      %63 = sbr.rel (0) target = $region17
    $region16: #{net_forward.1} parent=1 // pred_region
      %s65 = ssub.s32 8192, 8192
      %66 = vsyncadd [#allocation6], %s65
      %s67 = sshll.u32 [#allocation7], 4
      %s68 = int_to_ptr.vmem [resolvable:$true] %s67
      %73 = dma.hbm_to_vmem [thread:$0]  %s3, 8192, %s68, [#allocation6], 128, 128, 8
    $region17: #{net_forward.1} parent=1 // pred_fallthru
      _
    // Predicated region
    $region18: #{net_forward.1} parent=1 // pred_check
      _
    $region19: #{net_forward.1} parent=1 // pred_check_branch
      %75 = sbr.rel (0) target = $region21
    $region20: #{net_forward.1} parent=1 // pred_region
      %s77 = ssub.s32 32, 32
      %78 = vsyncadd [#allocation9], %s77
      %s80 = sshll.u32 [#allocation8], 4
      %s81 = int_to_ptr.vmem [resolvable:$true] %s80
      %83 = dma.hbm_to_vmem [thread:$0]  %s4, 32, %s81, [#allocation9]
    $region21: #{net_forward.1} parent=1 // pred_fallthru
      _
    // Predicated region
    $region22: #{net_forward.1} parent=1 // pred_check
      _
    $region23: #{net_forward.1} parent=1 // pred_check_branch
      %85 = sbr.rel (0) target = $region25
    $region24: #{net_forward.1} parent=1 // pred_region
      %s87 = ssub.s32 2048, 2048
      %88 = vsyncadd [#allocation9], %s87
      %s89 = sshll.u32 [#allocation10], 4
      %s90 = int_to_ptr.vmem [resolvable:$true] %s89
      %95 = dma.hbm_to_vmem [thread:$0]  %s5, 2048, %s90, [#allocation9], 64, 64, 4
    $region25: #{net_forward.1} parent=1 // pred_fallthru
      _
    // Predicated region
    $region26: #{net_forward.1} parent=1 // pred_check
      _
    $region27: #{net_forward.1} parent=1 // pred_check_branch
      %97 = sbr.rel (0) target = $region29
    $region28: #{net_forward.1} parent=1 // pred_region
      %s99 = ssub.s32 16, 16
      %100 = vsyncadd [#allocation12], %s99
      %s102 = sshll.u32 [#allocation11], 4
      %s103 = int_to_ptr.vmem [resolvable:$true] %s102
      %105 = dma.hbm_to_vmem [thread:$0]  %s6, 16, %s103, [#allocation12]
    $region29: #{net_forward.1} parent=1 // pred_fallthru
      _
    // Predicated region
    $region30: #{net_forward.1} parent=1 // pred_check
      _
    $region31: #{net_forward.1} parent=1 // pred_check_branch
      %107 = sbr.rel (0) target = $region33
    $region32: #{net_forward.1} parent=1 // pred_region
      %s109 = ssub.s32 1024, 1024
      %110 = vsyncadd [#allocation12], %s109
      %s111 = sshll.u32 [#allocation13], 4
      %s112 = int_to_ptr.vmem [resolvable:$true] %s111
      %117 = dma.hbm_to_vmem [thread:$0]  %s7, 1024, %s112, [#allocation12], 64, 64, 4
    $region33: #{net_forward.1} parent=1 // pred_fallthru
      _
    // Predicated region
    $region34: #{net_forward.1} parent=1 // pred_check
      _
    $region35: #{net_forward.1} parent=1 // pred_check_branch
      %119 = sbr.rel (0) target = $region37
    $region36: #{net_forward.1} parent=1 // pred_region
      %s121 = ssub.s32 16, 16
      %122 = vsyncadd [#allocation15], %s121
      %s124 = sshll.u32 [#allocation14], 4
      %s125 = int_to_ptr.vmem [resolvable:$true] %s124
      %127 = dma.hbm_to_vmem [thread:$0]  %s8, 16, %s125, [#allocation15]
    $region37: #{net_forward.1} parent=1 // pred_fallthru
      _
    // Predicated region
    $region38: #{net_forward.1} parent=1 // pred_check
      _
    $region39: #{net_forward.1} parent=1 // pred_check_branch
      %129 = sbr.rel (0) target = $region41
    $region40: #{net_forward.1} parent=1 // pred_region
      %s131 = ssub.s32 1024, 1024
      %132 = vsyncadd [#allocation15], %s131
      %s133 = sshll.u32 [#allocation16], 4
      %s134 = int_to_ptr.vmem [resolvable:$true] %s133
      %139 = dma.hbm_to_vmem [thread:$0]  %s9, 1024, %s134, [#allocation15], 64, 64, 4
    $region41: #{net_forward.1} parent=1 // pred_fallthru
      _
    // Predicated region
    $region42: #{net_forward.1} parent=1 // pred_check
      _
    $region43: #{net_forward.1} parent=1 // pred_check_branch
      %141 = sbr.rel (0) target = $region45
    $region44: #{net_forward.1} parent=1 // pred_region
      %s143 = ssub.s32 16, 16
      %144 = vsyncadd [#allocation18], %s143
      %s146 = sshll.u32 [#allocation17], 4
      %s147 = int_to_ptr.vmem [resolvable:$true] %s146
      %149 = dma.hbm_to_vmem [thread:$0]  %s10, 16, %s147, [#allocation18]
    $region45: #{net_forward.1} parent=1 // pred_fallthru
      _
    // Predicated region
    $region46: #{net_forward.1} parent=1 // pred_check
      _
    $region47: #{net_forward.1} parent=1 // pred_check_branch
      %151 = sbr.rel (0) target = $region49
    $region48: #{net_forward.1} parent=1 // pred_region
      %s153 = ssub.s32 1024, 1024
      %154 = vsyncadd [#allocation18], %s153
      %s155 = sshll.u32 [#allocation19], 4
      %s156 = int_to_ptr.vmem [resolvable:$true] %s155
      %161 = dma.hbm_to_vmem [thread:$0]  %s11, 1024, %s156, [#allocation18], 64, 64, 4
    $region49: #{net_forward.1} parent=1 // pred_fallthru
      _
    // Predicated region
    $region50: #{net_forward.1} parent=1 // pred_check
      _
    $region51: #{net_forward.1} parent=1 // pred_check_branch
      %163 = sbr.rel (0) target = $region53
    $region52: #{net_forward.1} parent=1 // pred_region
      %s165 = ssub.s32 16, 16
      %166 = vsyncadd [#allocation21], %s165
      %s168 = sshll.u32 [#allocation20], 4
      %s169 = int_to_ptr.vmem [resolvable:$true] %s168
      %171 = dma.hbm_to_vmem [thread:$0]  %s12, 16, %s169, [#allocation21]
    $region53: #{net_forward.1} parent=1 // pred_fallthru
      _
    // Predicated region
    $region54: #{net_forward.1} parent=1 // pred_check
      _
    $region55: #{net_forward.1} parent=1 // pred_check_branch
      %173 = sbr.rel (0) target = $region57
    $region56: #{net_forward.1} parent=1 // pred_region
      %s175 = ssub.s32 1024, 1024
      %176 = vsyncadd [#allocation21], %s175
      %s177 = sshll.u32 [#allocation22], 4
      %s178 = int_to_ptr.vmem [resolvable:$true] %s177
      %183 = dma.hbm_to_vmem [thread:$0]  %s13, 1024, %s178, [#allocation21], 64, 64, 4
    $region57: #{net_forward.1} parent=1 // pred_fallthru
      _
    // Predicated region
    $region58: #{net_forward.1} parent=1 // pred_check
      _
    $region59: #{net_forward.1} parent=1 // pred_check_branch
      %185 = sbr.rel (0) target = $region61
    $region60: #{net_forward.1} parent=1 // pred_region
      %s187 = ssub.s32 16, 16
      %188 = vsyncadd [#allocation24], %s187
      %s190 = sshll.u32 [#allocation23], 4
      %s191 = int_to_ptr.vmem [resolvable:$true] %s190
      %193 = dma.hbm_to_vmem [thread:$0]  %s14, 16, %s191, [#allocation24]
    $region61: #{net_forward.1} parent=1 // pred_fallthru
      _
    // Predicated region
    $region62: #{net_forward.1} parent=1 // pred_check
      _
    $region63: #{net_forward.1} parent=1 // pred_check_branch
      %195 = sbr.rel (0) target = $region65
    $region64: #{net_forward.1} parent=1 // pred_region
      %s197 = ssub.s32 1024, 1024
      %198 = vsyncadd [#allocation24], %s197
      %s199 = sshll.u32 [#allocation25], 4
      %s200 = int_to_ptr.vmem [resolvable:$true] %s199
      %205 = dma.hbm_to_vmem [thread:$0]  %s15, 1024, %s200, [#allocation24], 64, 64, 4
    $region65: #{net_forward.1} parent=1 // pred_fallthru
      _
    // Predicated region
    $region66: #{net_forward.1} parent=1 // pred_check
      _
    $region67: #{net_forward.1} parent=1 // pred_check_branch
      %207 = sbr.rel (0) target = $region69
    $region68: #{net_forward.1} parent=1 // pred_region
      %s209 = ssub.s32 16, 16
      %210 = vsyncadd [#allocation27], %s209
      %s212 = sshll.u32 [#allocation26], 4
      %s213 = int_to_ptr.vmem [resolvable:$true] %s212
      %215 = dma.hbm_to_vmem [thread:$0]  %s16, 16, %s213, [#allocation27]
    $region69: #{net_forward.1} parent=1 // pred_fallthru
      _
    // Predicated region
    $region70: #{net_forward.1} parent=1 // pred_check
      _
    $region71: #{net_forward.1} parent=1 // pred_check_branch
      %217 = sbr.rel (0) target = $region73
    $region72: #{net_forward.1} parent=1 // pred_region
      %s219 = ssub.s32 1024, 1024
      %220 = vsyncadd [#allocation27], %s219
      %s221 = sshll.u32 [#allocation28], 4
      %s222 = int_to_ptr.vmem [resolvable:$true] %s221
      %227 = dma.hbm_to_vmem [thread:$0]  %s17, 1024, %s222, [#allocation27], 64, 64, 4
    $region73: #{net_forward.1} parent=1 // pred_fallthru
      _
    // Predicated region
    $region74: #{net_forward.1} parent=1 // pred_check
      _
    $region75: #{net_forward.1} parent=1 // pred_check_branch
      %229 = sbr.rel (0) target = $region77
    $region76: #{net_forward.1} parent=1 // pred_region
      %s231 = ssub.s32 16, 16
      %232 = vsyncadd [#allocation30], %s231
      %s234 = sshll.u32 [#allocation29], 4
      %s235 = int_to_ptr.vmem [resolvable:$true] %s234
      %237 = dma.hbm_to_vmem [thread:$0]  %s18, 16, %s235, [#allocation30]
    $region77: #{net_forward.1} parent=1 // pred_fallthru
      _
    // Predicated region
    $region78: #{net_forward.1} parent=1 // pred_check
      _
    $region79: #{net_forward.1} parent=1 // pred_check_branch
      %239 = sbr.rel (0) target = $region81
    $region80: #{net_forward.1} parent=1 // pred_region
      %s241 = ssub.s32 1024, 1024
      %242 = vsyncadd [#allocation30], %s241
      %s243 = sshll.u32 [#allocation31], 4
      %s244 = int_to_ptr.vmem [resolvable:$true] %s243
      %249 = dma.hbm_to_vmem [thread:$0]  %s19, 1024, %s244, [#allocation30], 64, 64, 4
    $region81: #{net_forward.1} parent=1 // pred_fallthru
      _
    // Predicated region
    $region82: #{net_forward.1} parent=1 // pred_check
      _
    $region83: #{net_forward.1} parent=1 // pred_check_branch
      %251 = sbr.rel (0) target = $region85
    $region84: #{net_forward.1} parent=1 // pred_region
      %s253 = ssub.s32 16, 16
      %254 = vsyncadd [#allocation33], %s253
      %s256 = sshll.u32 [#allocation32], 4
      %s257 = int_to_ptr.vmem [resolvable:$true] %s256
      %259 = dma.hbm_to_vmem [thread:$0]  %s20, 16, %s257, [#allocation33]
    $region85: #{net_forward.1} parent=1 // pred_fallthru
      _
    // Predicated region
    $region86: #{net_forward.1} parent=1 // pred_check
      _
    $region87: #{net_forward.1} parent=1 // pred_check_branch
      %261 = sbr.rel (0) target = $region89
    $region88: #{net_forward.1} parent=1 // pred_region
      %262 = dma.done [#allocation3], 98304
    $region89: #{net_forward.1} parent=1 // pred_fallthru
      _
    // Predicated region
    $region90: #{net_forward.1} parent=1 // pred_check
      _
    $region91: #{net_forward.1} parent=1 // pred_check_branch
      %264 = sbr.rel (0) target = $region93
    $region92: #{net_forward.1} parent=1 // pred_region
      %265 = dma.done [#allocation6], 64
    $region93: #{net_forward.1} parent=1 // pred_fallthru
      _
    // Predicated region
    $region94: #{net_forward.1} parent=1 // pred_check
      _
    $region95: #{net_forward.1} parent=1 // pred_check_branch
      %267 = sbr.rel (0) target = $region97
    $region96: #{net_forward.1} parent=1 // pred_region
      %268 = dma.done [#allocation6], 8192
    $region97: #{net_forward.1} parent=1 // pred_fallthru
      _
    // Predicated region
    $region98: #{net_forward.1} parent=1 // pred_check
      _
    $region99: #{net_forward.1} parent=1 // pred_check_branch
      %270 = sbr.rel (0) target = $region101
    $region100: #{net_forward.1} parent=1 // pred_region
      %271 = dma.done [#allocation9], 32
    $region101: #{net_forward.1} parent=1 // pred_fallthru
      _
    // Predicated region
    $region102: #{net_forward.1} parent=1 // pred_check
      _
    $region103: #{net_forward.1} parent=1 // pred_check_branch
      %273 = sbr.rel (0) target = $region105
    $region104: #{net_forward.1} parent=1 // pred_region
      %274 = dma.done [#allocation9], 2048
    $region105: #{net_forward.1} parent=1 // pred_fallthru
      _
    // Predicated region
    $region106: #{net_forward.1} parent=1 // pred_check
      _
    $region107: #{net_forward.1} parent=1 // pred_check_branch
      %276 = sbr.rel (0) target = $region109
    $region108: #{net_forward.1} parent=1 // pred_region
      %277 = dma.done [#allocation12], 16
    $region109: #{net_forward.1} parent=1 // pred_fallthru
      _
    // Predicated region
    $region110: #{net_forward.1} parent=1 // pred_check
      _
    $region111: #{net_forward.1} parent=1 // pred_check_branch
      %279 = sbr.rel (0) target = $region113
    $region112: #{net_forward.1} parent=1 // pred_region
      %280 = dma.done [#allocation12], 1024
    $region113: #{net_forward.1} parent=1 // pred_fallthru
      _
    // Predicated region
    $region114: #{net_forward.1} parent=1 // pred_check
      _
    $region115: #{net_forward.1} parent=1 // pred_check_branch
      %282 = sbr.rel (0) target = $region117
    $region116: #{net_forward.1} parent=1 // pred_region
      %283 = dma.done [#allocation15], 16
    $region117: #{net_forward.1} parent=1 // pred_fallthru
      _
    // Predicated region
    $region118: #{net_forward.1} parent=1 // pred_check
      _
    $region119: #{net_forward.1} parent=1 // pred_check_branch
      %285 = sbr.rel (0) target = $region121
    $region120: #{net_forward.1} parent=1 // pred_region
      %286 = dma.done [#allocation15], 1024
    $region121: #{net_forward.1} parent=1 // pred_fallthru
      _
    // Predicated region
    $region122: #{net_forward.1} parent=1 // pred_check
      _
    $region123: #{net_forward.1} parent=1 // pred_check_branch
      %288 = sbr.rel (0) target = $region125
    $region124: #{net_forward.1} parent=1 // pred_region
      %289 = dma.done [#allocation18], 16
    $region125: #{net_forward.1} parent=1 // pred_fallthru
      _
    // Predicated region
    $region126: #{net_forward.1} parent=1 // pred_check
      _
    $region127: #{net_forward.1} parent=1 // pred_check_branch
      %291 = sbr.rel (0) target = $region129
    $region128: #{net_forward.1} parent=1 // pred_region
      %292 = dma.done [#allocation18], 1024
    $region129: #{net_forward.1} parent=1 // pred_fallthru
      _
    // Predicated region
    $region130: #{net_forward.1} parent=1 // pred_check
      _
    $region131: #{net_forward.1} parent=1 // pred_check_branch
      %294 = sbr.rel (0) target = $region133
    $region132: #{net_forward.1} parent=1 // pred_region
      %295 = dma.done [#allocation21], 16
    $region133: #{net_forward.1} parent=1 // pred_fallthru
      _
    // Predicated region
    $region134: #{net_forward.1} parent=1 // pred_check
      _
    $region135: #{net_forward.1} parent=1 // pred_check_branch
      %297 = sbr.rel (0) target = $region137
    $region136: #{net_forward.1} parent=1 // pred_region
      %298 = dma.done [#allocation21], 1024
    $region137: #{net_forward.1} parent=1 // pred_fallthru
      _
    // Predicated region
    $region138: #{net_forward.1} parent=1 // pred_check
      _
    $region139: #{net_forward.1} parent=1 // pred_check_branch
      %300 = sbr.rel (0) target = $region141
    $region140: #{net_forward.1} parent=1 // pred_region
      %301 = dma.done [#allocation24], 16
    $region141: #{net_forward.1} parent=1 // pred_fallthru
      _
    // Predicated region
    $region142: #{net_forward.1} parent=1 // pred_check
      _
    $region143: #{net_forward.1} parent=1 // pred_check_branch
      %303 = sbr.rel (0) target = $region145
    $region144: #{net_forward.1} parent=1 // pred_region
      %304 = dma.done [#allocation24], 1024
    $region145: #{net_forward.1} parent=1 // pred_fallthru
      _
    // Predicated region
    $region146: #{net_forward.1} parent=1 // pred_check
      _
    $region147: #{net_forward.1} parent=1 // pred_check_branch
      %306 = sbr.rel (0) target = $region149
    $region148: #{net_forward.1} parent=1 // pred_region
      %307 = dma.done [#allocation27], 16
    $region149: #{net_forward.1} parent=1 // pred_fallthru
      _
    // Predicated region
    $region150: #{net_forward.1} parent=1 // pred_check
      _
    $region151: #{net_forward.1} parent=1 // pred_check_branch
      %309 = sbr.rel (0) target = $region153
    $region152: #{net_forward.1} parent=1 // pred_region
      %310 = dma.done [#allocation27], 1024
    $region153: #{net_forward.1} parent=1 // pred_fallthru
      _
    // Predicated region
    $region154: #{net_forward.1} parent=1 // pred_check
      _
    $region155: #{net_forward.1} parent=1 // pred_check_branch
      %312 = sbr.rel (0) target = $region157
    $region156: #{net_forward.1} parent=1 // pred_region
      %313 = dma.done [#allocation30], 16
    $region157: #{net_forward.1} parent=1 // pred_fallthru
      _
    // Predicated region
    $region158: #{net_forward.1} parent=1 // pred_check
      _
    $region159: #{net_forward.1} parent=1 // pred_check_branch
      %315 = sbr.rel (0) target = $region161
    $region160: #{net_forward.1} parent=1 // pred_region
      %316 = dma.done [#allocation30], 1024
    $region161: #{net_forward.1} parent=1 // pred_fallthru
      _
    // Predicated region
    $region162: #{net_forward.1} parent=1 // pred_check
      _
    $region163: #{net_forward.1} parent=1 // pred_check_branch
      %318 = sbr.rel (0) target = $region165
    $region164: #{net_forward.1} parent=1 // pred_region
      %319 = dma.done [#allocation33], 16
    $region165: #{net_forward.1} parent=1 // pred_fallthru
      _
    %v321 = vld [vmem:[%s0] sm:$0xff]
    %v322 = vld [vmem:[%s0 + $0x8] sm:$0xff]
    %v323 = vld [vmem:[%s0 + $0x10] sm:$0xff]
    %v324 = vld [vmem:[%s0 + $0x18] sm:$0xff]
    %v325 = vld [vmem:[%s0 + $0x20] sm:$0xff]
    %v326 = vld [vmem:[%s0 + $0x28] sm:$0xff]
    %v327 = vld [vmem:[%s0 + $0x30] sm:$0xff]
    %v328 = vld [vmem:[%s0 + $0x38] sm:$0xff]
    %v329 = vld [vmem:[%s0 + $0x40] sm:$0xff]
    %v330 = vld [vmem:[%s0 + $0x48] sm:$0xff]
    %v331 = vld [vmem:[%s0 + $0x50] sm:$0xff]
    %v332 = vld [vmem:[%s0 + $0x58] sm:$0xff]
    %v333 = vld [vmem:[#allocation2] sm:$0xff]
    %v334 = vld [vmem:[#allocation2 + $0x8] sm:$0xff]
    %v335 = vld [vmem:[#allocation2 + $0x10] sm:$0xff]
    %v336 = vld [vmem:[#allocation2 + $0x18] sm:$0xff]
    %v337 = vld [vmem:[#allocation2 + $0x20] sm:$0xff]
    %v338 = vld [vmem:[#allocation2 + $0x28] sm:$0xff]
    %v339 = vld [vmem:[#allocation2 + $0x30] sm:$0xff]
    %v340 = vld [vmem:[#allocation2 + $0x38] sm:$0xff]
    %v341 = vld [vmem:[#allocation2 + $0x40] sm:$0xff]
    %v342 = vld [vmem:[#allocation2 + $0x48] sm:$0xff]
    %v343 = vld [vmem:[#allocation2 + $0x50] sm:$0xff]
    %v344 = vld [vmem:[#allocation2 + $0x58] sm:$0xff]
    %v345 = vld [vmem:[#allocation2 + $0x60] sm:$0xff]
    %v346 = vld [vmem:[#allocation2 + $0x68] sm:$0xff]
    %v347 = vld [vmem:[#allocation2 + $0x70] sm:$0xff]
    %v348 = vld [vmem:[#allocation2 + $0x78] sm:$0xff]
    %v349 = vld [vmem:[#allocation2 + $0x80] sm:$0xff]
    %v350 = vld [vmem:[#allocation2 + $0x88] sm:$0xff]
    %v351 = vld [vmem:[#allocation2 + $0x90] sm:$0xff]
    %v352 = vld [vmem:[#allocation2 + $0x98] sm:$0xff]
    %v353 = vld [vmem:[#allocation2 + $0xa0] sm:$0xff]
    %v354 = vld [vmem:[#allocation2 + $0xa8] sm:$0xff]
    %v355 = vld [vmem:[#allocation2 + $0xb0] sm:$0xff]
    %v356 = vld [vmem:[#allocation2 + $0xb8] sm:$0xff]
    %v357 = vld [vmem:[#allocation2 + $0xc0] sm:$0xff]
    %v358 = vld [vmem:[#allocation2 + $0xc8] sm:$0xff]
    %v359 = vld [vmem:[#allocation2 + $0xd0] sm:$0xff]
    %v360 = vld [vmem:[#allocation2 + $0xd8] sm:$0xff]
    %v361 = vld [vmem:[#allocation2 + $0xe0] sm:$0xff]
    %v362 = vld [vmem:[#allocation2 + $0xe8] sm:$0xff]
    %v363 = vld [vmem:[#allocation2 + $0xf0] sm:$0xff]
    %v364 = vld [vmem:[#allocation2 + $0xf8] sm:$0xff]
    %v365 = vld [vmem:[#allocation2 + $0x100] sm:$0xff]
    %v366 = vld [vmem:[#allocation2 + $0x108] sm:$0xff]
    %v367 = vld [vmem:[#allocation2 + $0x110] sm:$0xff]
    %v368 = vld [vmem:[#allocation2 + $0x118] sm:$0xff]
    %v369 = vld [vmem:[#allocation2 + $0x120] sm:$0xff]
    %v370 = vld [vmem:[#allocation2 + $0x128] sm:$0xff]
    %v371 = vld [vmem:[#allocation2 + $0x130] sm:$0xff]
    %v372 = vld [vmem:[#allocation2 + $0x138] sm:$0xff]
    %v373 = vld [vmem:[#allocation2 + $0x140] sm:$0xff]
    %v374 = vld [vmem:[#allocation2 + $0x148] sm:$0xff]
    %v375 = vld [vmem:[#allocation2 + $0x150] sm:$0xff]
    %v376 = vld [vmem:[#allocation2 + $0x158] sm:$0xff]
    %v377 = vld [vmem:[#allocation2 + $0x160] sm:$0xff]
    %v378 = vld [vmem:[#allocation2 + $0x168] sm:$0xff]
    %v379 = vld [vmem:[#allocation2 + $0x170] sm:$0xff]
    %v380 = vld [vmem:[#allocation2 + $0x178] sm:$0xff]
    %v381 = vld [vmem:[#allocation2 + $0x180] sm:$0xff]
    %v382 = vld [vmem:[#allocation2 + $0x188] sm:$0xff]
    %v383 = vld [vmem:[#allocation2 + $0x190] sm:$0xff]
    %v384 = vld [vmem:[#allocation2 + $0x198] sm:$0xff]
    %v385 = vld [vmem:[#allocation2 + $0x1a0] sm:$0xff]
    %v386 = vld [vmem:[#allocation2 + $0x1a8] sm:$0xff]
    %v387 = vld [vmem:[#allocation2 + $0x1b0] sm:$0xff]
    %v388 = vld [vmem:[#allocation2 + $0x1b8] sm:$0xff]
    %v389 = vld [vmem:[#allocation2 + $0x1c0] sm:$0xff]
    %v390 = vld [vmem:[#allocation2 + $0x1c8] sm:$0xff]
    %v391 = vld [vmem:[#allocation2 + $0x1d0] sm:$0xff]
    %v392 = vld [vmem:[#allocation2 + $0x1d8] sm:$0xff]
    %v393 = vld [vmem:[#allocation2 + $0x1e0] sm:$0xff]
    %v394 = vld [vmem:[#allocation2 + $0x1e8] sm:$0xff]
    %v395 = vld [vmem:[#allocation2 + $0x1f0] sm:$0xff]
    %v396 = vld [vmem:[#allocation2 + $0x1f8] sm:$0xff]
    %v397 = vld [vmem:[#allocation2 + $0x200] sm:$0xff]
    %v398 = vld [vmem:[#allocation2 + $0x208] sm:$0xff]
    %v399 = vld [vmem:[#allocation2 + $0x210] sm:$0xff]
    %v400 = vld [vmem:[#allocation2 + $0x218] sm:$0xff]
    %v401 = vld [vmem:[#allocation2 + $0x220] sm:$0xff]
    %v402 = vld [vmem:[#allocation2 + $0x228] sm:$0xff]
    %v403 = vld [vmem:[#allocation2 + $0x230] sm:$0xff]
    %v404 = vld [vmem:[#allocation2 + $0x238] sm:$0xff]
    %v405 = vld [vmem:[#allocation2 + $0x240] sm:$0xff]
    %v406 = vld [vmem:[#allocation2 + $0x248] sm:$0xff]
    %v407 = vld [vmem:[#allocation2 + $0x250] sm:$0xff]
    %v408 = vld [vmem:[#allocation2 + $0x258] sm:$0xff]
    %v409 = vld [vmem:[#allocation2 + $0x260] sm:$0xff]
    %v410 = vld [vmem:[#allocation2 + $0x268] sm:$0xff]
    %v411 = vld [vmem:[#allocation2 + $0x270] sm:$0xff]
    %v412 = vld [vmem:[#allocation2 + $0x278] sm:$0xff]
    %v413 = vld [vmem:[#allocation2 + $0x280] sm:$0xff]
    %v414 = vld [vmem:[#allocation2 + $0x288] sm:$0xff]
    %v415 = vld [vmem:[#allocation2 + $0x290] sm:$0xff]
    %v416 = vld [vmem:[#allocation2 + $0x298] sm:$0xff]
    %v417 = vld [vmem:[#allocation2 + $0x2a0] sm:$0xff]
    %v418 = vld [vmem:[#allocation2 + $0x2a8] sm:$0xff]
    %v419 = vld [vmem:[#allocation2 + $0x2b0] sm:$0xff]
    %v420 = vld [vmem:[#allocation2 + $0x2b8] sm:$0xff]
    %v421 = vld [vmem:[#allocation2 + $0x2c0] sm:$0xff]
    %v422 = vld [vmem:[#allocation2 + $0x2c8] sm:$0xff]
    %v423 = vld [vmem:[#allocation2 + $0x2d0] sm:$0xff]
    %v424 = vld [vmem:[#allocation2 + $0x2d8] sm:$0xff]
    %v425 = vld [vmem:[#allocation2 + $0x2e0] sm:$0xff]
    %v426 = vld [vmem:[#allocation2 + $0x2e8] sm:$0xff]
    %v427 = vld [vmem:[#allocation2 + $0x2f0] sm:$0xff]
    %v428 = vld [vmem:[#allocation2 + $0x2f8] sm:$0xff]
    %v429 = vld [vmem:[#allocation2 + $0x300] sm:$0xff]
    %v430 = vld [vmem:[#allocation2 + $0x308] sm:$0xff]
    %v431 = vld [vmem:[#allocation2 + $0x310] sm:$0xff]
    %v432 = vld [vmem:[#allocation2 + $0x318] sm:$0xff]
    %v433 = vld [vmem:[#allocation2 + $0x320] sm:$0xff]
    %v434 = vld [vmem:[#allocation2 + $0x328] sm:$0xff]
    %v435 = vld [vmem:[#allocation2 + $0x330] sm:$0xff]
    %v436 = vld [vmem:[#allocation2 + $0x338] sm:$0xff]
    %v437 = vld [vmem:[#allocation2 + $0x340] sm:$0xff]
    %v438 = vld [vmem:[#allocation2 + $0x348] sm:$0xff]
    %v439 = vld [vmem:[#allocation2 + $0x350] sm:$0xff]
    %v440 = vld [vmem:[#allocation2 + $0x358] sm:$0xff]
    %v441 = vld [vmem:[#allocation2 + $0x360] sm:$0xff]
    %v442 = vld [vmem:[#allocation2 + $0x368] sm:$0xff]
    %v443 = vld [vmem:[#allocation2 + $0x370] sm:$0xff]
    %v444 = vld [vmem:[#allocation2 + $0x378] sm:$0xff]
    %v445 = vld [vmem:[#allocation2 + $0x380] sm:$0xff]
    %v446 = vld [vmem:[#allocation2 + $0x388] sm:$0xff]
    %v447 = vld [vmem:[#allocation2 + $0x390] sm:$0xff]
    %v448 = vld [vmem:[#allocation2 + $0x398] sm:$0xff]
    %v449 = vld [vmem:[#allocation2 + $0x3a0] sm:$0xff]
    %v450 = vld [vmem:[#allocation2 + $0x3a8] sm:$0xff]
    %v451 = vld [vmem:[#allocation2 + $0x3b0] sm:$0xff]
    %v452 = vld [vmem:[#allocation2 + $0x3b8] sm:$0xff]
    %v453 = vld [vmem:[#allocation2 + $0x3c0] sm:$0xff]
    %v454 = vld [vmem:[#allocation2 + $0x3c8] sm:$0xff]
    %v455 = vld [vmem:[#allocation2 + $0x3d0] sm:$0xff]
    %v456 = vld [vmem:[#allocation2 + $0x3d8] sm:$0xff]
    %v457 = vld [vmem:[#allocation2 + $0x3e0] sm:$0xff]
    %v458 = vld [vmem:[#allocation2 + $0x3e8] sm:$0xff]
    %v459 = vld [vmem:[#allocation2 + $0x3f0] sm:$0xff]
    %v460 = vld [vmem:[#allocation2 + $0x3f8] sm:$0xff]
    %v461 = vld [vmem:[#allocation2 + $0x400] sm:$0xff]
    %v462 = vld [vmem:[#allocation2 + $0x408] sm:$0xff]
    %v463 = vld [vmem:[#allocation2 + $0x410] sm:$0xff]
    %v464 = vld [vmem:[#allocation2 + $0x418] sm:$0xff]
    %v465 = vld [vmem:[#allocation2 + $0x420] sm:$0xff]
    %v466 = vld [vmem:[#allocation2 + $0x428] sm:$0xff]
    %v467 = vld [vmem:[#allocation2 + $0x430] sm:$0xff]
    %v468 = vld [vmem:[#allocation2 + $0x438] sm:$0xff]
    %v469 = vld [vmem:[#allocation2 + $0x440] sm:$0xff]
    %v470 = vld [vmem:[#allocation2 + $0x448] sm:$0xff]
    %v471 = vld [vmem:[#allocation2 + $0x450] sm:$0xff]
    %v472 = vld [vmem:[#allocation2 + $0x458] sm:$0xff]
    %v473 = vld [vmem:[#allocation2 + $0x460] sm:$0xff]
    %v474 = vld [vmem:[#allocation2 + $0x468] sm:$0xff]
    %v475 = vld [vmem:[#allocation2 + $0x470] sm:$0xff]
    %v476 = vld [vmem:[#allocation2 + $0x478] sm:$0xff]
    %v477 = vld [vmem:[#allocation2 + $0x480] sm:$0xff]
    %v478 = vld [vmem:[#allocation2 + $0x488] sm:$0xff]
    %v479 = vld [vmem:[#allocation2 + $0x490] sm:$0xff]
    %v480 = vld [vmem:[#allocation2 + $0x498] sm:$0xff]
    %v481 = vld [vmem:[#allocation2 + $0x4a0] sm:$0xff]
    %v482 = vld [vmem:[#allocation2 + $0x4a8] sm:$0xff]
    %v483 = vld [vmem:[#allocation2 + $0x4b0] sm:$0xff]
    %v484 = vld [vmem:[#allocation2 + $0x4b8] sm:$0xff]
    %v485 = vld [vmem:[#allocation2 + $0x4c0] sm:$0xff]
    %v486 = vld [vmem:[#allocation2 + $0x4c8] sm:$0xff]
    %v487 = vld [vmem:[#allocation2 + $0x4d0] sm:$0xff]
    %v488 = vld [vmem:[#allocation2 + $0x4d8] sm:$0xff]
    %v489 = vld [vmem:[#allocation2 + $0x4e0] sm:$0xff]
    %v490 = vld [vmem:[#allocation2 + $0x4e8] sm:$0xff]
    %v491 = vld [vmem:[#allocation2 + $0x4f0] sm:$0xff]
    %v492 = vld [vmem:[#allocation2 + $0x4f8] sm:$0xff]
    %v493 = vld [vmem:[#allocation2 + $0x500] sm:$0xff]
    %v494 = vld [vmem:[#allocation2 + $0x508] sm:$0xff]
    %v495 = vld [vmem:[#allocation2 + $0x510] sm:$0xff]
    %v496 = vld [vmem:[#allocation2 + $0x518] sm:$0xff]
    %v497 = vld [vmem:[#allocation2 + $0x520] sm:$0xff]
    %v498 = vld [vmem:[#allocation2 + $0x528] sm:$0xff]
    %v499 = vld [vmem:[#allocation2 + $0x530] sm:$0xff]
    %v500 = vld [vmem:[#allocation2 + $0x538] sm:$0xff]
    %v501 = vld [vmem:[#allocation2 + $0x540] sm:$0xff]
    %v502 = vld [vmem:[#allocation2 + $0x548] sm:$0xff]
    %v503 = vld [vmem:[#allocation2 + $0x550] sm:$0xff]
    %v504 = vld [vmem:[#allocation2 + $0x558] sm:$0xff]
    %v505 = vld [vmem:[#allocation2 + $0x560] sm:$0xff]
    %v506 = vld [vmem:[#allocation2 + $0x568] sm:$0xff]
    %v507 = vld [vmem:[#allocation2 + $0x570] sm:$0xff]
    %v508 = vld [vmem:[#allocation2 + $0x578] sm:$0xff]
    %v509 = vld [vmem:[#allocation2 + $0x580] sm:$0xff]
    %v510 = vld [vmem:[#allocation2 + $0x588] sm:$0xff]
    %v511 = vld [vmem:[#allocation2 + $0x590] sm:$0xff]
    %v512 = vld [vmem:[#allocation2 + $0x598] sm:$0xff]
    %v513 = vld [vmem:[#allocation2 + $0x5a0] sm:$0xff]
    %v514 = vld [vmem:[#allocation2 + $0x5a8] sm:$0xff]
    %v515 = vld [vmem:[#allocation2 + $0x5b0] sm:$0xff]
    %v516 = vld [vmem:[#allocation2 + $0x5b8] sm:$0xff]
    %v517 = vld [vmem:[#allocation2 + $0x5c0] sm:$0xff]
    %v518 = vld [vmem:[#allocation2 + $0x5c8] sm:$0xff]
    %v519 = vld [vmem:[#allocation2 + $0x5d0] sm:$0xff]
    %v520 = vld [vmem:[#allocation2 + $0x5d8] sm:$0xff]
    %v521 = vld [vmem:[#allocation2 + $0x5e0] sm:$0xff]
    %v522 = vld [vmem:[#allocation2 + $0x5e8] sm:$0xff]
    %v523 = vld [vmem:[#allocation2 + $0x5f0] sm:$0xff]
    %v524 = vld [vmem:[#allocation2 + $0x5f8] sm:$0xff]
    %v525 = vld [vmem:[#allocation2 + $0x600] sm:$0xff]
    %v526 = vld [vmem:[#allocation2 + $0x608] sm:$0xff]
    %v527 = vld [vmem:[#allocation2 + $0x610] sm:$0xff]
    %v528 = vld [vmem:[#allocation2 + $0x618] sm:$0xff]
    %v529 = vld [vmem:[#allocation2 + $0x620] sm:$0xff]
    %v530 = vld [vmem:[#allocation2 + $0x628] sm:$0xff]
    %v531 = vld [vmem:[#allocation2 + $0x630] sm:$0xff]
    %v532 = vld [vmem:[#allocation2 + $0x638] sm:$0xff]
    %v533 = vld [vmem:[#allocation2 + $0x640] sm:$0xff]
    %v534 = vld [vmem:[#allocation2 + $0x648] sm:$0xff]
    %v535 = vld [vmem:[#allocation2 + $0x650] sm:$0xff]
    %v536 = vld [vmem:[#allocation2 + $0x658] sm:$0xff]
    %v537 = vld [vmem:[#allocation2 + $0x660] sm:$0xff]
    %v538 = vld [vmem:[#allocation2 + $0x668] sm:$0xff]
    %v539 = vld [vmem:[#allocation2 + $0x670] sm:$0xff]
    %v540 = vld [vmem:[#allocation2 + $0x678] sm:$0xff]
    %v541 = vld [vmem:[#allocation2 + $0x680] sm:$0xff]
    %v542 = vld [vmem:[#allocation2 + $0x688] sm:$0xff]
    %v543 = vld [vmem:[#allocation2 + $0x690] sm:$0xff]
    %v544 = vld [vmem:[#allocation2 + $0x698] sm:$0xff]
    %v545 = vld [vmem:[#allocation2 + $0x6a0] sm:$0xff]
    %v546 = vld [vmem:[#allocation2 + $0x6a8] sm:$0xff]
    %v547 = vld [vmem:[#allocation2 + $0x6b0] sm:$0xff]
    %v548 = vld [vmem:[#allocation2 + $0x6b8] sm:$0xff]
    %v549 = vld [vmem:[#allocation2 + $0x6c0] sm:$0xff]
    %v550 = vld [vmem:[#allocation2 + $0x6c8] sm:$0xff]
    %v551 = vld [vmem:[#allocation2 + $0x6d0] sm:$0xff]
    %v552 = vld [vmem:[#allocation2 + $0x6d8] sm:$0xff]
    %v553 = vld [vmem:[#allocation2 + $0x6e0] sm:$0xff]
    %v554 = vld [vmem:[#allocation2 + $0x6e8] sm:$0xff]
    %v555 = vld [vmem:[#allocation2 + $0x6f0] sm:$0xff]
    %v556 = vld [vmem:[#allocation2 + $0x6f8] sm:$0xff]
    %v557 = vld [vmem:[#allocation2 + $0x700] sm:$0xff]
    %v558 = vld [vmem:[#allocation2 + $0x708] sm:$0xff]
    %v559 = vld [vmem:[#allocation2 + $0x710] sm:$0xff]
    %v560 = vld [vmem:[#allocation2 + $0x718] sm:$0xff]
    %v561 = vld [vmem:[#allocation2 + $0x720] sm:$0xff]
    %v562 = vld [vmem:[#allocation2 + $0x728] sm:$0xff]
    %v563 = vld [vmem:[#allocation2 + $0x730] sm:$0xff]
    %v564 = vld [vmem:[#allocation2 + $0x738] sm:$0xff]
    %v565 = vld [vmem:[#allocation2 + $0x740] sm:$0xff]
    %v566 = vld [vmem:[#allocation2 + $0x748] sm:$0xff]
    %v567 = vld [vmem:[#allocation2 + $0x750] sm:$0xff]
    %v568 = vld [vmem:[#allocation2 + $0x758] sm:$0xff]
    %v569 = vld [vmem:[#allocation2 + $0x760] sm:$0xff]
    %v570 = vld [vmem:[#allocation2 + $0x768] sm:$0xff]
    %v571 = vld [vmem:[#allocation2 + $0x770] sm:$0xff]
    %v572 = vld [vmem:[#allocation2 + $0x778] sm:$0xff]
    %v573 = vld [vmem:[#allocation2 + $0x780] sm:$0xff]
    %v574 = vld [vmem:[#allocation2 + $0x788] sm:$0xff]
    %v575 = vld [vmem:[#allocation2 + $0x790] sm:$0xff]
    %v576 = vld [vmem:[#allocation2 + $0x798] sm:$0xff]
    %v577 = vld [vmem:[#allocation2 + $0x7a0] sm:$0xff]
    %v578 = vld [vmem:[#allocation2 + $0x7a8] sm:$0xff]
    %v579 = vld [vmem:[#allocation2 + $0x7b0] sm:$0xff]
    %v580 = vld [vmem:[#allocation2 + $0x7b8] sm:$0xff]
    %v581 = vld [vmem:[#allocation2 + $0x7c0] sm:$0xff]
    %v582 = vld [vmem:[#allocation2 + $0x7c8] sm:$0xff]
    %v583 = vld [vmem:[#allocation2 + $0x7d0] sm:$0xff]
    %v584 = vld [vmem:[#allocation2 + $0x7d8] sm:$0xff]
    %v585 = vld [vmem:[#allocation2 + $0x7e0] sm:$0xff]
    %v586 = vld [vmem:[#allocation2 + $0x7e8] sm:$0xff]
    %v587 = vld [vmem:[#allocation2 + $0x7f0] sm:$0xff]
    %v588 = vld [vmem:[#allocation2 + $0x7f8] sm:$0xff]
    %v589 = vld [vmem:[#allocation2 + $0x800] sm:$0xff]
    %v590 = vld [vmem:[#allocation2 + $0x808] sm:$0xff]
    %v591 = vld [vmem:[#allocation2 + $0x810] sm:$0xff]
    %v592 = vld [vmem:[#allocation2 + $0x818] sm:$0xff]
    %v593 = vld [vmem:[#allocation2 + $0x820] sm:$0xff]
    %v594 = vld [vmem:[#allocation2 + $0x828] sm:$0xff]
    %v595 = vld [vmem:[#allocation2 + $0x830] sm:$0xff]
    %v596 = vld [vmem:[#allocation2 + $0x838] sm:$0xff]
    %v597 = vld [vmem:[#allocation2 + $0x840] sm:$0xff]
    %v598 = vld [vmem:[#allocation2 + $0x848] sm:$0xff]
    %v599 = vld [vmem:[#allocation2 + $0x850] sm:$0xff]
    %v600 = vld [vmem:[#allocation2 + $0x858] sm:$0xff]
    %v601 = vld [vmem:[#allocation2 + $0x860] sm:$0xff]
    %v602 = vld [vmem:[#allocation2 + $0x868] sm:$0xff]
    %v603 = vld [vmem:[#allocation2 + $0x870] sm:$0xff]
    %v604 = vld [vmem:[#allocation2 + $0x878] sm:$0xff]
    %v605 = vld [vmem:[#allocation2 + $0x880] sm:$0xff]
    %v606 = vld [vmem:[#allocation2 + $0x888] sm:$0xff]
    %v607 = vld [vmem:[#allocation2 + $0x890] sm:$0xff]
    %v608 = vld [vmem:[#allocation2 + $0x898] sm:$0xff]
    %v609 = vld [vmem:[#allocation2 + $0x8a0] sm:$0xff]
    %v610 = vld [vmem:[#allocation2 + $0x8a8] sm:$0xff]
    %v611 = vld [vmem:[#allocation2 + $0x8b0] sm:$0xff]
    %v612 = vld [vmem:[#allocation2 + $0x8b8] sm:$0xff]
    %v613 = vld [vmem:[#allocation2 + $0x8c0] sm:$0xff]
    %v614 = vld [vmem:[#allocation2 + $0x8c8] sm:$0xff]
    %v615 = vld [vmem:[#allocation2 + $0x8d0] sm:$0xff]
    %v616 = vld [vmem:[#allocation2 + $0x8d8] sm:$0xff]
    %v617 = vld [vmem:[#allocation2 + $0x8e0] sm:$0xff]
    %v618 = vld [vmem:[#allocation2 + $0x8e8] sm:$0xff]
    %v619 = vld [vmem:[#allocation2 + $0x8f0] sm:$0xff]
    %v620 = vld [vmem:[#allocation2 + $0x8f8] sm:$0xff]
    %v621 = vld [vmem:[#allocation2 + $0x900] sm:$0xff]
    %v622 = vld [vmem:[#allocation2 + $0x908] sm:$0xff]
    %v623 = vld [vmem:[#allocation2 + $0x910] sm:$0xff]
    %v624 = vld [vmem:[#allocation2 + $0x918] sm:$0xff]
    %v625 = vld [vmem:[#allocation2 + $0x920] sm:$0xff]
    %v626 = vld [vmem:[#allocation2 + $0x928] sm:$0xff]
    %v627 = vld [vmem:[#allocation2 + $0x930] sm:$0xff]
    %v628 = vld [vmem:[#allocation2 + $0x938] sm:$0xff]
    %v629 = vld [vmem:[#allocation2 + $0x940] sm:$0xff]
    %v630 = vld [vmem:[#allocation2 + $0x948] sm:$0xff]
    %v631 = vld [vmem:[#allocation2 + $0x950] sm:$0xff]
    %v632 = vld [vmem:[#allocation2 + $0x958] sm:$0xff]
    %v633 = vld [vmem:[#allocation2 + $0x960] sm:$0xff]
    %v634 = vld [vmem:[#allocation2 + $0x968] sm:$0xff]
    %v635 = vld [vmem:[#allocation2 + $0x970] sm:$0xff]
    %v636 = vld [vmem:[#allocation2 + $0x978] sm:$0xff]
    %v637 = vld [vmem:[#allocation2 + $0x980] sm:$0xff]
    %v638 = vld [vmem:[#allocation2 + $0x988] sm:$0xff]
    %v639 = vld [vmem:[#allocation2 + $0x990] sm:$0xff]
    %v640 = vld [vmem:[#allocation2 + $0x998] sm:$0xff]
    %v641 = vld [vmem:[#allocation2 + $0x9a0] sm:$0xff]
    %v642 = vld [vmem:[#allocation2 + $0x9a8] sm:$0xff]
    %v643 = vld [vmem:[#allocation2 + $0x9b0] sm:$0xff]
    %v644 = vld [vmem:[#allocation2 + $0x9b8] sm:$0xff]
    %v645 = vld [vmem:[#allocation2 + $0x9c0] sm:$0xff]
    %v646 = vld [vmem:[#allocation2 + $0x9c8] sm:$0xff]
    %v647 = vld [vmem:[#allocation2 + $0x9d0] sm:$0xff]
    %v648 = vld [vmem:[#allocation2 + $0x9d8] sm:$0xff]
    %v649 = vld [vmem:[#allocation2 + $0x9e0] sm:$0xff]
    %v650 = vld [vmem:[#allocation2 + $0x9e8] sm:$0xff]
    %v651 = vld [vmem:[#allocation2 + $0x9f0] sm:$0xff]
    %v652 = vld [vmem:[#allocation2 + $0x9f8] sm:$0xff]
    %v653 = vld [vmem:[#allocation2 + $0xa00] sm:$0xff]
    %v654 = vld [vmem:[#allocation2 + $0xa08] sm:$0xff]
    %v655 = vld [vmem:[#allocation2 + $0xa10] sm:$0xff]
    %v656 = vld [vmem:[#allocation2 + $0xa18] sm:$0xff]
    %v657 = vld [vmem:[#allocation2 + $0xa20] sm:$0xff]
    %v658 = vld [vmem:[#allocation2 + $0xa28] sm:$0xff]
    %v659 = vld [vmem:[#allocation2 + $0xa30] sm:$0xff]
    %v660 = vld [vmem:[#allocation2 + $0xa38] sm:$0xff]
    %v661 = vld [vmem:[#allocation2 + $0xa40] sm:$0xff]
    %v662 = vld [vmem:[#allocation2 + $0xa48] sm:$0xff]
    %v663 = vld [vmem:[#allocation2 + $0xa50] sm:$0xff]
    %v664 = vld [vmem:[#allocation2 + $0xa58] sm:$0xff]
    %v665 = vld [vmem:[#allocation2 + $0xa60] sm:$0xff]
    %v666 = vld [vmem:[#allocation2 + $0xa68] sm:$0xff]
    %v667 = vld [vmem:[#allocation2 + $0xa70] sm:$0xff]
    %v668 = vld [vmem:[#allocation2 + $0xa78] sm:$0xff]
    %v669 = vld [vmem:[#allocation2 + $0xa80] sm:$0xff]
    %v670 = vld [vmem:[#allocation2 + $0xa88] sm:$0xff]
    %v671 = vld [vmem:[#allocation2 + $0xa90] sm:$0xff]
    %v672 = vld [vmem:[#allocation2 + $0xa98] sm:$0xff]
    %v673 = vld [vmem:[#allocation2 + $0xaa0] sm:$0xff]
    %v674 = vld [vmem:[#allocation2 + $0xaa8] sm:$0xff]
    %v675 = vld [vmem:[#allocation2 + $0xab0] sm:$0xff]
    %v676 = vld [vmem:[#allocation2 + $0xab8] sm:$0xff]
    %v677 = vld [vmem:[#allocation2 + $0xac0] sm:$0xff]
    %v678 = vld [vmem:[#allocation2 + $0xac8] sm:$0xff]
    %v679 = vld [vmem:[#allocation2 + $0xad0] sm:$0xff]
    %v680 = vld [vmem:[#allocation2 + $0xad8] sm:$0xff]
    %v681 = vld [vmem:[#allocation2 + $0xae0] sm:$0xff]
    %v682 = vld [vmem:[#allocation2 + $0xae8] sm:$0xff]
    %v683 = vld [vmem:[#allocation2 + $0xaf0] sm:$0xff]
    %v684 = vld [vmem:[#allocation2 + $0xaf8] sm:$0xff]
    %v685 = vld [vmem:[#allocation2 + $0xb00] sm:$0xff]
    %v686 = vld [vmem:[#allocation2 + $0xb08] sm:$0xff]
    %v687 = vld [vmem:[#allocation2 + $0xb10] sm:$0xff]
    %v688 = vld [vmem:[#allocation2 + $0xb18] sm:$0xff]
    %v689 = vld [vmem:[#allocation2 + $0xb20] sm:$0xff]
    %v690 = vld [vmem:[#allocation2 + $0xb28] sm:$0xff]
    %v691 = vld [vmem:[#allocation2 + $0xb30] sm:$0xff]
    %v692 = vld [vmem:[#allocation2 + $0xb38] sm:$0xff]
    %v693 = vld [vmem:[#allocation2 + $0xb40] sm:$0xff]
    %v694 = vld [vmem:[#allocation2 + $0xb48] sm:$0xff]
    %v695 = vld [vmem:[#allocation2 + $0xb50] sm:$0xff]
    %v696 = vld [vmem:[#allocation2 + $0xb58] sm:$0xff]
    %v697 = vld [vmem:[#allocation2 + $0xb60] sm:$0xff]
    %v698 = vld [vmem:[#allocation2 + $0xb68] sm:$0xff]
    %v699 = vld [vmem:[#allocation2 + $0xb70] sm:$0xff]
    %v700 = vld [vmem:[#allocation2 + $0xb78] sm:$0xff]
    %v701 = vld [vmem:[#allocation2 + $0xb80] sm:$0xff]
    %v702 = vld [vmem:[#allocation2 + $0xb88] sm:$0xff]
    %v703 = vld [vmem:[#allocation2 + $0xb90] sm:$0xff]
    %v704 = vld [vmem:[#allocation2 + $0xb98] sm:$0xff]
    %v705 = vld [vmem:[#allocation2 + $0xba0] sm:$0xff]
    %v706 = vld [vmem:[#allocation2 + $0xba8] sm:$0xff]
    %v707 = vld [vmem:[#allocation2 + $0xbb0] sm:$0xff]
    %v708 = vld [vmem:[#allocation2 + $0xbb8] sm:$0xff]
    %v709 = vld [vmem:[#allocation2 + $0xbc0] sm:$0xff]
    %v710 = vld [vmem:[#allocation2 + $0xbc8] sm:$0xff]
    %v711 = vld [vmem:[#allocation2 + $0xbd0] sm:$0xff]
    %v712 = vld [vmem:[#allocation2 + $0xbd8] sm:$0xff]
    %v713 = vld [vmem:[#allocation2 + $0xbe0] sm:$0xff]
    %v714 = vld [vmem:[#allocation2 + $0xbe8] sm:$0xff]
    %v715 = vld [vmem:[#allocation2 + $0xbf0] sm:$0xff]
    %v716 = vld [vmem:[#allocation2 + $0xbf8] sm:$0xff]
    %v717 = vld [vmem:[#allocation2 + $0xc00] sm:$0xff]
    %v718 = vld [vmem:[#allocation2 + $0xc08] sm:$0xff]
    %v719 = vld [vmem:[#allocation2 + $0xc10] sm:$0xff]
    %v720 = vld [vmem:[#allocation2 + $0xc18] sm:$0xff]
    %v721 = vld [vmem:[#allocation2 + $0xc20] sm:$0xff]
    %v722 = vld [vmem:[#allocation2 + $0xc28] sm:$0xff]
    %v723 = vld [vmem:[#allocation2 + $0xc30] sm:$0xff]
    %v724 = vld [vmem:[#allocation2 + $0xc38] sm:$0xff]
    %v725 = vld [vmem:[#allocation2 + $0xc40] sm:$0xff]
    %v726 = vld [vmem:[#allocation2 + $0xc48] sm:$0xff]
    %v727 = vld [vmem:[#allocation2 + $0xc50] sm:$0xff]
    %v728 = vld [vmem:[#allocation2 + $0xc58] sm:$0xff]
    %v729 = vld [vmem:[#allocation2 + $0xc60] sm:$0xff]
    %v730 = vld [vmem:[#allocation2 + $0xc68] sm:$0xff]
    %v731 = vld [vmem:[#allocation2 + $0xc70] sm:$0xff]
    %v732 = vld [vmem:[#allocation2 + $0xc78] sm:$0xff]
    %v733 = vld [vmem:[#allocation2 + $0xc80] sm:$0xff]
    %v734 = vld [vmem:[#allocation2 + $0xc88] sm:$0xff]
    %v735 = vld [vmem:[#allocation2 + $0xc90] sm:$0xff]
    %v736 = vld [vmem:[#allocation2 + $0xc98] sm:$0xff]
    %v737 = vld [vmem:[#allocation2 + $0xca0] sm:$0xff]
    %v738 = vld [vmem:[#allocation2 + $0xca8] sm:$0xff]
    %v739 = vld [vmem:[#allocation2 + $0xcb0] sm:$0xff]
    %v740 = vld [vmem:[#allocation2 + $0xcb8] sm:$0xff]
    %v741 = vld [vmem:[#allocation2 + $0xcc0] sm:$0xff]
    %v742 = vld [vmem:[#allocation2 + $0xcc8] sm:$0xff]
    %v743 = vld [vmem:[#allocation2 + $0xcd0] sm:$0xff]
    %v744 = vld [vmem:[#allocation2 + $0xcd8] sm:$0xff]
    %v745 = vld [vmem:[#allocation2 + $0xce0] sm:$0xff]
    %v746 = vld [vmem:[#allocation2 + $0xce8] sm:$0xff]
    %v747 = vld [vmem:[#allocation2 + $0xcf0] sm:$0xff]
    %v748 = vld [vmem:[#allocation2 + $0xcf8] sm:$0xff]
    %v749 = vld [vmem:[#allocation2 + $0xd00] sm:$0xff]
    %v750 = vld [vmem:[#allocation2 + $0xd08] sm:$0xff]
    %v751 = vld [vmem:[#allocation2 + $0xd10] sm:$0xff]
    %v752 = vld [vmem:[#allocation2 + $0xd18] sm:$0xff]
    %v753 = vld [vmem:[#allocation2 + $0xd20] sm:$0xff]
    %v754 = vld [vmem:[#allocation2 + $0xd28] sm:$0xff]
    %v755 = vld [vmem:[#allocation2 + $0xd30] sm:$0xff]
    %v756 = vld [vmem:[#allocation2 + $0xd38] sm:$0xff]
    %v757 = vld [vmem:[#allocation2 + $0xd40] sm:$0xff]
    %v758 = vld [vmem:[#allocation2 + $0xd48] sm:$0xff]
    %v759 = vld [vmem:[#allocation2 + $0xd50] sm:$0xff]
    %v760 = vld [vmem:[#allocation2 + $0xd58] sm:$0xff]
    %v761 = vld [vmem:[#allocation2 + $0xd60] sm:$0xff]
    %v762 = vld [vmem:[#allocation2 + $0xd68] sm:$0xff]
    %v763 = vld [vmem:[#allocation2 + $0xd70] sm:$0xff]
    %v764 = vld [vmem:[#allocation2 + $0xd78] sm:$0xff]
    %v765 = vld [vmem:[#allocation2 + $0xd80] sm:$0xff]
    %v766 = vld [vmem:[#allocation2 + $0xd88] sm:$0xff]
    %v767 = vld [vmem:[#allocation2 + $0xd90] sm:$0xff]
    %v768 = vld [vmem:[#allocation2 + $0xd98] sm:$0xff]
    %v769 = vld [vmem:[#allocation2 + $0xda0] sm:$0xff]
    %v770 = vld [vmem:[#allocation2 + $0xda8] sm:$0xff]
    %v771 = vld [vmem:[#allocation2 + $0xdb0] sm:$0xff]
    %v772 = vld [vmem:[#allocation2 + $0xdb8] sm:$0xff]
    %v773 = vld [vmem:[#allocation2 + $0xdc0] sm:$0xff]
    %v774 = vld [vmem:[#allocation2 + $0xdc8] sm:$0xff]
    %v775 = vld [vmem:[#allocation2 + $0xdd0] sm:$0xff]
    %v776 = vld [vmem:[#allocation2 + $0xdd8] sm:$0xff]
    %v777 = vld [vmem:[#allocation2 + $0xde0] sm:$0xff]
    %v778 = vld [vmem:[#allocation2 + $0xde8] sm:$0xff]
    %v779 = vld [vmem:[#allocation2 + $0xdf0] sm:$0xff]
    %v780 = vld [vmem:[#allocation2 + $0xdf8] sm:$0xff]
    %v781 = vld [vmem:[#allocation2 + $0xe00] sm:$0xff]
    %v782 = vld [vmem:[#allocation2 + $0xe08] sm:$0xff]
    %v783 = vld [vmem:[#allocation2 + $0xe10] sm:$0xff]
    %v784 = vld [vmem:[#allocation2 + $0xe18] sm:$0xff]
    %v785 = vld [vmem:[#allocation2 + $0xe20] sm:$0xff]
    %v786 = vld [vmem:[#allocation2 + $0xe28] sm:$0xff]
    %v787 = vld [vmem:[#allocation2 + $0xe30] sm:$0xff]
    %v788 = vld [vmem:[#allocation2 + $0xe38] sm:$0xff]
    %v789 = vld [vmem:[#allocation2 + $0xe40] sm:$0xff]
    %v790 = vld [vmem:[#allocation2 + $0xe48] sm:$0xff]
    %v791 = vld [vmem:[#allocation2 + $0xe50] sm:$0xff]
    %v792 = vld [vmem:[#allocation2 + $0xe58] sm:$0xff]
    %v793 = vld [vmem:[#allocation2 + $0xe60] sm:$0xff]
    %v794 = vld [vmem:[#allocation2 + $0xe68] sm:$0xff]
    %v795 = vld [vmem:[#allocation2 + $0xe70] sm:$0xff]
    %v796 = vld [vmem:[#allocation2 + $0xe78] sm:$0xff]
    %v797 = vld [vmem:[#allocation2 + $0xe80] sm:$0xff]
    %v798 = vld [vmem:[#allocation2 + $0xe88] sm:$0xff]
    %v799 = vld [vmem:[#allocation2 + $0xe90] sm:$0xff]
    %v800 = vld [vmem:[#allocation2 + $0xe98] sm:$0xff]
    %v801 = vld [vmem:[#allocation2 + $0xea0] sm:$0xff]
    %v802 = vld [vmem:[#allocation2 + $0xea8] sm:$0xff]
    %v803 = vld [vmem:[#allocation2 + $0xeb0] sm:$0xff]
    %v804 = vld [vmem:[#allocation2 + $0xeb8] sm:$0xff]
    %v805 = vld [vmem:[#allocation2 + $0xec0] sm:$0xff]
    %v806 = vld [vmem:[#allocation2 + $0xec8] sm:$0xff]
    %v807 = vld [vmem:[#allocation2 + $0xed0] sm:$0xff]
    %v808 = vld [vmem:[#allocation2 + $0xed8] sm:$0xff]
    %v809 = vld [vmem:[#allocation2 + $0xee0] sm:$0xff]
    %v810 = vld [vmem:[#allocation2 + $0xee8] sm:$0xff]
    %v811 = vld [vmem:[#allocation2 + $0xef0] sm:$0xff]
    %v812 = vld [vmem:[#allocation2 + $0xef8] sm:$0xff]
    %v813 = vld [vmem:[#allocation2 + $0xf00] sm:$0xff]
    %v814 = vld [vmem:[#allocation2 + $0xf08] sm:$0xff]
    %v815 = vld [vmem:[#allocation2 + $0xf10] sm:$0xff]
    %v816 = vld [vmem:[#allocation2 + $0xf18] sm:$0xff]
    %v817 = vld [vmem:[#allocation2 + $0xf20] sm:$0xff]
    %v818 = vld [vmem:[#allocation2 + $0xf28] sm:$0xff]
    %v819 = vld [vmem:[#allocation2 + $0xf30] sm:$0xff]
    %v820 = vld [vmem:[#allocation2 + $0xf38] sm:$0xff]
    %v821 = vld [vmem:[#allocation2 + $0xf40] sm:$0xff]
    %v822 = vld [vmem:[#allocation2 + $0xf48] sm:$0xff]
    %v823 = vld [vmem:[#allocation2 + $0xf50] sm:$0xff]
    %v824 = vld [vmem:[#allocation2 + $0xf58] sm:$0xff]
    %v825 = vld [vmem:[#allocation2 + $0xf60] sm:$0xff]
    %v826 = vld [vmem:[#allocation2 + $0xf68] sm:$0xff]
    %v827 = vld [vmem:[#allocation2 + $0xf70] sm:$0xff]
    %v828 = vld [vmem:[#allocation2 + $0xf78] sm:$0xff]
    %v829 = vld [vmem:[#allocation2 + $0xf80] sm:$0xff]
    %v830 = vld [vmem:[#allocation2 + $0xf88] sm:$0xff]
    %v831 = vld [vmem:[#allocation2 + $0xf90] sm:$0xff]
    %v832 = vld [vmem:[#allocation2 + $0xf98] sm:$0xff]
    %v833 = vld [vmem:[#allocation2 + $0xfa0] sm:$0xff]
    %v834 = vld [vmem:[#allocation2 + $0xfa8] sm:$0xff]
    %v835 = vld [vmem:[#allocation2 + $0xfb0] sm:$0xff]
    %v836 = vld [vmem:[#allocation2 + $0xfb8] sm:$0xff]
    %v837 = vld [vmem:[#allocation2 + $0xfc0] sm:$0xff]
    %v838 = vld [vmem:[#allocation2 + $0xfc8] sm:$0xff]
    %v839 = vld [vmem:[#allocation2 + $0xfd0] sm:$0xff]
    %v840 = vld [vmem:[#allocation2 + $0xfd8] sm:$0xff]
    %v841 = vld [vmem:[#allocation2 + $0xfe0] sm:$0xff]
    %v842 = vld [vmem:[#allocation2 + $0xfe8] sm:$0xff]
    %v843 = vld [vmem:[#allocation2 + $0xff0] sm:$0xff]
    %v844 = vld [vmem:[#allocation2 + $0xff8] sm:$0xff]
    %v845 = vld [vmem:[#allocation2 + $0x1000] sm:$0xff]
    %v846 = vld [vmem:[#allocation2 + $0x1008] sm:$0xff]
    %v847 = vld [vmem:[#allocation2 + $0x1010] sm:$0xff]
    %v848 = vld [vmem:[#allocation2 + $0x1018] sm:$0xff]
    %v849 = vld [vmem:[#allocation2 + $0x1020] sm:$0xff]
    %v850 = vld [vmem:[#allocation2 + $0x1028] sm:$0xff]
    %v851 = vld [vmem:[#allocation2 + $0x1030] sm:$0xff]
    %v852 = vld [vmem:[#allocation2 + $0x1038] sm:$0xff]
    %v853 = vld [vmem:[#allocation2 + $0x1040] sm:$0xff]
    %v854 = vld [vmem:[#allocation2 + $0x1048] sm:$0xff]
    %v855 = vld [vmem:[#allocation2 + $0x1050] sm:$0xff]
    %v856 = vld [vmem:[#allocation2 + $0x1058] sm:$0xff]
    %v857 = vld [vmem:[#allocation2 + $0x1060] sm:$0xff]
    %v858 = vld [vmem:[#allocation2 + $0x1068] sm:$0xff]
    %v859 = vld [vmem:[#allocation2 + $0x1070] sm:$0xff]
    %v860 = vld [vmem:[#allocation2 + $0x1078] sm:$0xff]
    %v861 = vld [vmem:[#allocation2 + $0x1080] sm:$0xff]
    %v862 = vld [vmem:[#allocation2 + $0x1088] sm:$0xff]
    %v863 = vld [vmem:[#allocation2 + $0x1090] sm:$0xff]
    %v864 = vld [vmem:[#allocation2 + $0x1098] sm:$0xff]
    %v865 = vld [vmem:[#allocation2 + $0x10a0] sm:$0xff]
    %v866 = vld [vmem:[#allocation2 + $0x10a8] sm:$0xff]
    %v867 = vld [vmem:[#allocation2 + $0x10b0] sm:$0xff]
    %v868 = vld [vmem:[#allocation2 + $0x10b8] sm:$0xff]
    %v869 = vld [vmem:[#allocation2 + $0x10c0] sm:$0xff]
    %v870 = vld [vmem:[#allocation2 + $0x10c8] sm:$0xff]
    %v871 = vld [vmem:[#allocation2 + $0x10d0] sm:$0xff]
    %v872 = vld [vmem:[#allocation2 + $0x10d8] sm:$0xff]
    %v873 = vld [vmem:[#allocation2 + $0x10e0] sm:$0xff]
    %v874 = vld [vmem:[#allocation2 + $0x10e8] sm:$0xff]
    %v875 = vld [vmem:[#allocation2 + $0x10f0] sm:$0xff]
    %v876 = vld [vmem:[#allocation2 + $0x10f8] sm:$0xff]
    %v877 = vld [vmem:[#allocation2 + $0x1100] sm:$0xff]
    %v878 = vld [vmem:[#allocation2 + $0x1108] sm:$0xff]
    %v879 = vld [vmem:[#allocation2 + $0x1110] sm:$0xff]
    %v880 = vld [vmem:[#allocation2 + $0x1118] sm:$0xff]
    %v881 = vld [vmem:[#allocation2 + $0x1120] sm:$0xff]
    %v882 = vld [vmem:[#allocation2 + $0x1128] sm:$0xff]
    %v883 = vld [vmem:[#allocation2 + $0x1130] sm:$0xff]
    %v884 = vld [vmem:[#allocation2 + $0x1138] sm:$0xff]
    %v885 = vld [vmem:[#allocation2 + $0x1140] sm:$0xff]
    %v886 = vld [vmem:[#allocation2 + $0x1148] sm:$0xff]
    %v887 = vld [vmem:[#allocation2 + $0x1150] sm:$0xff]
    %v888 = vld [vmem:[#allocation2 + $0x1158] sm:$0xff]
    %v889 = vld [vmem:[#allocation2 + $0x1160] sm:$0xff]
    %v890 = vld [vmem:[#allocation2 + $0x1168] sm:$0xff]
    %v891 = vld [vmem:[#allocation2 + $0x1170] sm:$0xff]
    %v892 = vld [vmem:[#allocation2 + $0x1178] sm:$0xff]
    %v893 = vld [vmem:[#allocation2 + $0x1180] sm:$0xff]
    %v894 = vld [vmem:[#allocation2 + $0x1188] sm:$0xff]
    %v895 = vld [vmem:[#allocation2 + $0x1190] sm:$0xff]
    %v896 = vld [vmem:[#allocation2 + $0x1198] sm:$0xff]
    %v897 = vld [vmem:[#allocation2 + $0x11a0] sm:$0xff]
    %v898 = vld [vmem:[#allocation2 + $0x11a8] sm:$0xff]
    %v899 = vld [vmem:[#allocation2 + $0x11b0] sm:$0xff]
    %v900 = vld [vmem:[#allocation2 + $0x11b8] sm:$0xff]
    %v901 = vld [vmem:[#allocation2 + $0x11c0] sm:$0xff]
    %v902 = vld [vmem:[#allocation2 + $0x11c8] sm:$0xff]
    %v903 = vld [vmem:[#allocation2 + $0x11d0] sm:$0xff]
    %v904 = vld [vmem:[#allocation2 + $0x11d8] sm:$0xff]
    %v905 = vld [vmem:[#allocation2 + $0x11e0] sm:$0xff]
    %v906 = vld [vmem:[#allocation2 + $0x11e8] sm:$0xff]
    %v907 = vld [vmem:[#allocation2 + $0x11f0] sm:$0xff]
    %v908 = vld [vmem:[#allocation2 + $0x11f8] sm:$0xff]
    %v909 = vld [vmem:[#allocation2 + $0x1200] sm:$0xff]
    %v910 = vld [vmem:[#allocation2 + $0x1208] sm:$0xff]
    %v911 = vld [vmem:[#allocation2 + $0x1210] sm:$0xff]
    %v912 = vld [vmem:[#allocation2 + $0x1218] sm:$0xff]
    %v913 = vld [vmem:[#allocation2 + $0x1220] sm:$0xff]
    %v914 = vld [vmem:[#allocation2 + $0x1228] sm:$0xff]
    %v915 = vld [vmem:[#allocation2 + $0x1230] sm:$0xff]
    %v916 = vld [vmem:[#allocation2 + $0x1238] sm:$0xff]
    %v917 = vld [vmem:[#allocation2 + $0x1240] sm:$0xff]
    %v918 = vld [vmem:[#allocation2 + $0x1248] sm:$0xff]
    %v919 = vld [vmem:[#allocation2 + $0x1250] sm:$0xff]
    %v920 = vld [vmem:[#allocation2 + $0x1258] sm:$0xff]
    %v921 = vld [vmem:[#allocation2 + $0x1260] sm:$0xff]
    %v922 = vld [vmem:[#allocation2 + $0x1268] sm:$0xff]
    %v923 = vld [vmem:[#allocation2 + $0x1270] sm:$0xff]
    %v924 = vld [vmem:[#allocation2 + $0x1278] sm:$0xff]
    %v925 = vld [vmem:[#allocation2 + $0x1280] sm:$0xff]
    %v926 = vld [vmem:[#allocation2 + $0x1288] sm:$0xff]
    %v927 = vld [vmem:[#allocation2 + $0x1290] sm:$0xff]
    %v928 = vld [vmem:[#allocation2 + $0x1298] sm:$0xff]
    %v929 = vld [vmem:[#allocation2 + $0x12a0] sm:$0xff]
    %v930 = vld [vmem:[#allocation2 + $0x12a8] sm:$0xff]
    %v931 = vld [vmem:[#allocation2 + $0x12b0] sm:$0xff]
    %v932 = vld [vmem:[#allocation2 + $0x12b8] sm:$0xff]
    %v933 = vld [vmem:[#allocation2 + $0x12c0] sm:$0xff]
    %v934 = vld [vmem:[#allocation2 + $0x12c8] sm:$0xff]
    %v935 = vld [vmem:[#allocation2 + $0x12d0] sm:$0xff]
    %v936 = vld [vmem:[#allocation2 + $0x12d8] sm:$0xff]
    %v937 = vld [vmem:[#allocation2 + $0x12e0] sm:$0xff]
    %v938 = vld [vmem:[#allocation2 + $0x12e8] sm:$0xff]
    %v939 = vld [vmem:[#allocation2 + $0x12f0] sm:$0xff]
    %v940 = vld [vmem:[#allocation2 + $0x12f8] sm:$0xff]
    %v941 = vld [vmem:[#allocation2 + $0x1300] sm:$0xff]
    %v942 = vld [vmem:[#allocation2 + $0x1308] sm:$0xff]
    %v943 = vld [vmem:[#allocation2 + $0x1310] sm:$0xff]
    %v944 = vld [vmem:[#allocation2 + $0x1318] sm:$0xff]
    %v945 = vld [vmem:[#allocation2 + $0x1320] sm:$0xff]
    %v946 = vld [vmem:[#allocation2 + $0x1328] sm:$0xff]
    %v947 = vld [vmem:[#allocation2 + $0x1330] sm:$0xff]
    %v948 = vld [vmem:[#allocation2 + $0x1338] sm:$0xff]
    %v949 = vld [vmem:[#allocation2 + $0x1340] sm:$0xff]
    %v950 = vld [vmem:[#allocation2 + $0x1348] sm:$0xff]
    %v951 = vld [vmem:[#allocation2 + $0x1350] sm:$0xff]
    %v952 = vld [vmem:[#allocation2 + $0x1358] sm:$0xff]
    %v953 = vld [vmem:[#allocation2 + $0x1360] sm:$0xff]
    %v954 = vld [vmem:[#allocation2 + $0x1368] sm:$0xff]
    %v955 = vld [vmem:[#allocation2 + $0x1370] sm:$0xff]
    %v956 = vld [vmem:[#allocation2 + $0x1378] sm:$0xff]
    %v957 = vld [vmem:[#allocation2 + $0x1380] sm:$0xff]
    %v958 = vld [vmem:[#allocation2 + $0x1388] sm:$0xff]
    %v959 = vld [vmem:[#allocation2 + $0x1390] sm:$0xff]
    %v960 = vld [vmem:[#allocation2 + $0x1398] sm:$0xff]
    %v961 = vld [vmem:[#allocation2 + $0x13a0] sm:$0xff]
    %v962 = vld [vmem:[#allocation2 + $0x13a8] sm:$0xff]
    %v963 = vld [vmem:[#allocation2 + $0x13b0] sm:$0xff]
    %v964 = vld [vmem:[#allocation2 + $0x13b8] sm:$0xff]
    %v965 = vld [vmem:[#allocation2 + $0x13c0] sm:$0xff]
    %v966 = vld [vmem:[#allocation2 + $0x13c8] sm:$0xff]
    %v967 = vld [vmem:[#allocation2 + $0x13d0] sm:$0xff]
    %v968 = vld [vmem:[#allocation2 + $0x13d8] sm:$0xff]
    %v969 = vld [vmem:[#allocation2 + $0x13e0] sm:$0xff]
    %v970 = vld [vmem:[#allocation2 + $0x13e8] sm:$0xff]
    %v971 = vld [vmem:[#allocation2 + $0x13f0] sm:$0xff]
    %v972 = vld [vmem:[#allocation2 + $0x13f8] sm:$0xff]
    %v973 = vld [vmem:[#allocation2 + $0x1400] sm:$0xff]
    %v974 = vld [vmem:[#allocation2 + $0x1408] sm:$0xff]
    %v975 = vld [vmem:[#allocation2 + $0x1410] sm:$0xff]
    %v976 = vld [vmem:[#allocation2 + $0x1418] sm:$0xff]
    %v977 = vld [vmem:[#allocation2 + $0x1420] sm:$0xff]
    %v978 = vld [vmem:[#allocation2 + $0x1428] sm:$0xff]
    %v979 = vld [vmem:[#allocation2 + $0x1430] sm:$0xff]
    %v980 = vld [vmem:[#allocation2 + $0x1438] sm:$0xff]
    %v981 = vld [vmem:[#allocation2 + $0x1440] sm:$0xff]
    %v982 = vld [vmem:[#allocation2 + $0x1448] sm:$0xff]
    %v983 = vld [vmem:[#allocation2 + $0x1450] sm:$0xff]
    %v984 = vld [vmem:[#allocation2 + $0x1458] sm:$0xff]
    %v985 = vld [vmem:[#allocation2 + $0x1460] sm:$0xff]
    %v986 = vld [vmem:[#allocation2 + $0x1468] sm:$0xff]
    %v987 = vld [vmem:[#allocation2 + $0x1470] sm:$0xff]
    %v988 = vld [vmem:[#allocation2 + $0x1478] sm:$0xff]
    %v989 = vld [vmem:[#allocation2 + $0x1480] sm:$0xff]
    %v990 = vld [vmem:[#allocation2 + $0x1488] sm:$0xff]
    %v991 = vld [vmem:[#allocation2 + $0x1490] sm:$0xff]
    %v992 = vld [vmem:[#allocation2 + $0x1498] sm:$0xff]
    %v993 = vld [vmem:[#allocation2 + $0x14a0] sm:$0xff]
    %v994 = vld [vmem:[#allocation2 + $0x14a8] sm:$0xff]
    %v995 = vld [vmem:[#allocation2 + $0x14b0] sm:$0xff]
    %v996 = vld [vmem:[#allocation2 + $0x14b8] sm:$0xff]
    %v997 = vld [vmem:[#allocation2 + $0x14c0] sm:$0xff]
    %v998 = vld [vmem:[#allocation2 + $0x14c8] sm:$0xff]
    %v999 = vld [vmem:[#allocation2 + $0x14d0] sm:$0xff]
    %v1000 = vld [vmem:[#allocation2 + $0x14d8] sm:$0xff]
    %v1001 = vld [vmem:[#allocation2 + $0x14e0] sm:$0xff]
    %v1002 = vld [vmem:[#allocation2 + $0x14e8] sm:$0xff]
    %v1003 = vld [vmem:[#allocation2 + $0x14f0] sm:$0xff]
    %v1004 = vld [vmem:[#allocation2 + $0x14f8] sm:$0xff]
    %v1005 = vld [vmem:[#allocation2 + $0x1500] sm:$0xff]
    %v1006 = vld [vmem:[#allocation2 + $0x1508] sm:$0xff]
    %v1007 = vld [vmem:[#allocation2 + $0x1510] sm:$0xff]
    %v1008 = vld [vmem:[#allocation2 + $0x1518] sm:$0xff]
    %v1009 = vld [vmem:[#allocation2 + $0x1520] sm:$0xff]
    %v1010 = vld [vmem:[#allocation2 + $0x1528] sm:$0xff]
    %v1011 = vld [vmem:[#allocation2 + $0x1530] sm:$0xff]
    %v1012 = vld [vmem:[#allocation2 + $0x1538] sm:$0xff]
    %v1013 = vld [vmem:[#allocation2 + $0x1540] sm:$0xff]
    %v1014 = vld [vmem:[#allocation2 + $0x1548] sm:$0xff]
    %v1015 = vld [vmem:[#allocation2 + $0x1550] sm:$0xff]
    %v1016 = vld [vmem:[#allocation2 + $0x1558] sm:$0xff]
    %v1017 = vld [vmem:[#allocation2 + $0x1560] sm:$0xff]
    %v1018 = vld [vmem:[#allocation2 + $0x1568] sm:$0xff]
    %v1019 = vld [vmem:[#allocation2 + $0x1570] sm:$0xff]
    %v1020 = vld [vmem:[#allocation2 + $0x1578] sm:$0xff]
    %v1021 = vld [vmem:[#allocation2 + $0x1580] sm:$0xff]
    %v1022 = vld [vmem:[#allocation2 + $0x1588] sm:$0xff]
    %v1023 = vld [vmem:[#allocation2 + $0x1590] sm:$0xff]
    %v1024 = vld [vmem:[#allocation2 + $0x1598] sm:$0xff]
    %v1025 = vld [vmem:[#allocation2 + $0x15a0] sm:$0xff]
    %v1026 = vld [vmem:[#allocation2 + $0x15a8] sm:$0xff]
    %v1027 = vld [vmem:[#allocation2 + $0x15b0] sm:$0xff]
    %v1028 = vld [vmem:[#allocation2 + $0x15b8] sm:$0xff]
    %v1029 = vld [vmem:[#allocation2 + $0x15c0] sm:$0xff]
    %v1030 = vld [vmem:[#allocation2 + $0x15c8] sm:$0xff]
    %v1031 = vld [vmem:[#allocation2 + $0x15d0] sm:$0xff]
    %v1032 = vld [vmem:[#allocation2 + $0x15d8] sm:$0xff]
    %v1033 = vld [vmem:[#allocation2 + $0x15e0] sm:$0xff]
    %v1034 = vld [vmem:[#allocation2 + $0x15e8] sm:$0xff]
    %v1035 = vld [vmem:[#allocation2 + $0x15f0] sm:$0xff]
    %v1036 = vld [vmem:[#allocation2 + $0x15f8] sm:$0xff]
    %v1037 = vld [vmem:[#allocation2 + $0x1600] sm:$0xff]
    %v1038 = vld [vmem:[#allocation2 + $0x1608] sm:$0xff]
    %v1039 = vld [vmem:[#allocation2 + $0x1610] sm:$0xff]
    %v1040 = vld [vmem:[#allocation2 + $0x1618] sm:$0xff]
    %v1041 = vld [vmem:[#allocation2 + $0x1620] sm:$0xff]
    %v1042 = vld [vmem:[#allocation2 + $0x1628] sm:$0xff]
    %v1043 = vld [vmem:[#allocation2 + $0x1630] sm:$0xff]
    %v1044 = vld [vmem:[#allocation2 + $0x1638] sm:$0xff]
    %v1045 = vld [vmem:[#allocation2 + $0x1640] sm:$0xff]
    %v1046 = vld [vmem:[#allocation2 + $0x1648] sm:$0xff]
    %v1047 = vld [vmem:[#allocation2 + $0x1650] sm:$0xff]
    %v1048 = vld [vmem:[#allocation2 + $0x1658] sm:$0xff]
    %v1049 = vld [vmem:[#allocation2 + $0x1660] sm:$0xff]
    %v1050 = vld [vmem:[#allocation2 + $0x1668] sm:$0xff]
    %v1051 = vld [vmem:[#allocation2 + $0x1670] sm:$0xff]
    %v1052 = vld [vmem:[#allocation2 + $0x1678] sm:$0xff]
    %v1053 = vld [vmem:[#allocation2 + $0x1680] sm:$0xff]
    %v1054 = vld [vmem:[#allocation2 + $0x1688] sm:$0xff]
    %v1055 = vld [vmem:[#allocation2 + $0x1690] sm:$0xff]
    %v1056 = vld [vmem:[#allocation2 + $0x1698] sm:$0xff]
    %v1057 = vld [vmem:[#allocation2 + $0x16a0] sm:$0xff]
    %v1058 = vld [vmem:[#allocation2 + $0x16a8] sm:$0xff]
    %v1059 = vld [vmem:[#allocation2 + $0x16b0] sm:$0xff]
    %v1060 = vld [vmem:[#allocation2 + $0x16b8] sm:$0xff]
    %v1061 = vld [vmem:[#allocation2 + $0x16c0] sm:$0xff]
    %v1062 = vld [vmem:[#allocation2 + $0x16c8] sm:$0xff]
    %v1063 = vld [vmem:[#allocation2 + $0x16d0] sm:$0xff]
    %v1064 = vld [vmem:[#allocation2 + $0x16d8] sm:$0xff]
    %v1065 = vld [vmem:[#allocation2 + $0x16e0] sm:$0xff]
    %v1066 = vld [vmem:[#allocation2 + $0x16e8] sm:$0xff]
    %v1067 = vld [vmem:[#allocation2 + $0x16f0] sm:$0xff]
    %v1068 = vld [vmem:[#allocation2 + $0x16f8] sm:$0xff]
    %v1069 = vld [vmem:[#allocation2 + $0x1700] sm:$0xff]
    %v1070 = vld [vmem:[#allocation2 + $0x1708] sm:$0xff]
    %v1071 = vld [vmem:[#allocation2 + $0x1710] sm:$0xff]
    %v1072 = vld [vmem:[#allocation2 + $0x1718] sm:$0xff]
    %v1073 = vld [vmem:[#allocation2 + $0x1720] sm:$0xff]
    %v1074 = vld [vmem:[#allocation2 + $0x1728] sm:$0xff]
    %v1075 = vld [vmem:[#allocation2 + $0x1730] sm:$0xff]
    %v1076 = vld [vmem:[#allocation2 + $0x1738] sm:$0xff]
    %v1077 = vld [vmem:[#allocation2 + $0x1740] sm:$0xff]
    %v1078 = vld [vmem:[#allocation2 + $0x1748] sm:$0xff]
    %v1079 = vld [vmem:[#allocation2 + $0x1750] sm:$0xff]
    %v1080 = vld [vmem:[#allocation2 + $0x1758] sm:$0xff]
    %v1081 = vld [vmem:[#allocation2 + $0x1760] sm:$0xff]
    %v1082 = vld [vmem:[#allocation2 + $0x1768] sm:$0xff]
    %v1083 = vld [vmem:[#allocation2 + $0x1770] sm:$0xff]
    %v1084 = vld [vmem:[#allocation2 + $0x1778] sm:$0xff]
    %v1085 = vld [vmem:[#allocation2 + $0x1780] sm:$0xff]
    %v1086 = vld [vmem:[#allocation2 + $0x1788] sm:$0xff]
    %v1087 = vld [vmem:[#allocation2 + $0x1790] sm:$0xff]
    %v1088 = vld [vmem:[#allocation2 + $0x1798] sm:$0xff]
    %v1089 = vld [vmem:[#allocation2 + $0x17a0] sm:$0xff]
    %v1090 = vld [vmem:[#allocation2 + $0x17a8] sm:$0xff]
    %v1091 = vld [vmem:[#allocation2 + $0x17b0] sm:$0xff]
    %v1092 = vld [vmem:[#allocation2 + $0x17b8] sm:$0xff]
    %v1093 = vld [vmem:[#allocation2 + $0x17c0] sm:$0xff]
    %v1094 = vld [vmem:[#allocation2 + $0x17c8] sm:$0xff]
    %v1095 = vld [vmem:[#allocation2 + $0x17d0] sm:$0xff]
    %v1096 = vld [vmem:[#allocation2 + $0x17d8] sm:$0xff]
    %v1097 = vld [vmem:[#allocation2 + $0x17e0] sm:$0xff]
    %v1098 = vld [vmem:[#allocation2 + $0x17e8] sm:$0xff]
    %v1099 = vld [vmem:[#allocation2 + $0x17f0] sm:$0xff]
    %v1100 = vld [vmem:[#allocation2 + $0x17f8] sm:$0xff]
    %v1101 = vld [vmem:[#allocation5] sm:$0xf]
    %v1103 = vlaneseq
    %v1104 = vshrl.u32 %v1103, 7
    %v1105 = vsub.s32 0, %v1104
    %v1106 = vrot.slane %v1101, %v1105
    %v1107 = vlaneseq
    %v1108 = vshrl.u32 %v1107, 7
    %v1109 = vsub.s32 1, %v1108
    %v1110 = vrot.slane %v1101, %v1109
    %v1111 = vlaneseq
    %v1112 = vshrl.u32 %v1111, 7
    %v1113 = vsub.s32 2, %v1112
    %v1114 = vrot.slane %v1101, %v1113
    %v1115 = vlaneseq
    %v1116 = vshrl.u32 %v1115, 7
    %v1117 = vsub.s32 3, %v1116
    %v1118 = vrot.slane %v1101, %v1117
    %v1135 = vunpack.c.l.b16 %v321
    %v1136 = vunpack.c.h.b16 %v321
    %v1137 = vunpack.c.l.b16 %v322
    %v1138 = vunpack.c.h.b16 %v322
    %v1139 = vunpack.c.l.b16 %v323
    %v1140 = vunpack.c.h.b16 %v323
    %v1141 = vunpack.c.l.b16 %v324
    %v1142 = vunpack.c.h.b16 %v324
    %v1143 = vunpack.c.l.b16 %v325
    %v1144 = vunpack.c.h.b16 %v325
    %v1145 = vunpack.c.l.b16 %v326
    %v1146 = vunpack.c.h.b16 %v326
    %v1147 = vunpack.c.l.b16 %v327
    %v1148 = vunpack.c.h.b16 %v327
    %v1149 = vunpack.c.l.b16 %v328
    %v1150 = vunpack.c.h.b16 %v328
    %v1151 = vunpack.c.l.b16 %v329
    %v1152 = vunpack.c.h.b16 %v329
    %v1153 = vunpack.c.l.b16 %v330
    %v1154 = vunpack.c.h.b16 %v330
    %v1155 = vunpack.c.l.b16 %v331
    %v1156 = vunpack.c.h.b16 %v331
    %v1157 = vunpack.c.l.b16 %v332
    %v1158 = vunpack.c.h.b16 %v332
    %v1159 = vpack.c.b16 %v1135, %v1135
    %v1160 = vpack.c.b16 %v1136, %v1136
    %v1161 = vpack.c.b16 %v1137, %v1137
    %v1162 = vpack.c.b16 %v1138, %v1138
    %v1163 = vpack.c.b16 %v1139, %v1139
    %v1164 = vpack.c.b16 %v1140, %v1140
    %v1165 = vpack.c.b16 %v1141, %v1141
    %v1166 = vpack.c.b16 %v1142, %v1142
    %v1167 = vpack.c.b16 %v1143, %v1143
    %v1168 = vpack.c.b16 %v1144, %v1144
    %v1169 = vpack.c.b16 %v1145, %v1145
    %v1170 = vpack.c.b16 %v1146, %v1146
    %v1171 = vpack.c.b16 %v1147, %v1147
    %v1172 = vpack.c.b16 %v1148, %v1148
    %v1173 = vpack.c.b16 %v1149, %v1149
    %v1174 = vpack.c.b16 %v1150, %v1150
    %v1175 = vpack.c.b16 %v1151, %v1151
    %v1176 = vpack.c.b16 %v1152, %v1152
    %v1177 = vpack.c.b16 %v1153, %v1153
    %v1178 = vpack.c.b16 %v1154, %v1154
    %v1179 = vpack.c.b16 %v1155, %v1155
    %v1180 = vpack.c.b16 %v1156, %v1156
    %v1181 = vpack.c.b16 %v1157, %v1157
    %v1182 = vpack.c.b16 %v1158, %v1158
    %v1975 = vunpack.c.l.b16 %v333
    %v1976 = vunpack.c.h.b16 %v333
    %v1977 = vunpack.c.l.b16 %v334
    %v1978 = vunpack.c.h.b16 %v334
    %v1979 = vunpack.c.l.b16 %v335
    %v1980 = vunpack.c.h.b16 %v335
    %v1981 = vunpack.c.l.b16 %v336
    %v1982 = vunpack.c.h.b16 %v336
    %v1983 = vunpack.c.l.b16 %v337
    %v1984 = vunpack.c.h.b16 %v337
    %v1985 = vunpack.c.l.b16 %v338
    %v1986 = vunpack.c.h.b16 %v338
    %v1987 = vunpack.c.l.b16 %v339
    %v1988 = vunpack.c.h.b16 %v339
    %v1989 = vunpack.c.l.b16 %v340
    %v1990 = vunpack.c.h.b16 %v340
    %v1991 = vunpack.c.l.b16 %v341
    %v1992 = vunpack.c.h.b16 %v341
    %v1993 = vunpack.c.l.b16 %v342
    %v1994 = vunpack.c.h.b16 %v342
    %v1995 = vunpack.c.l.b16 %v343
    %v1996 = vunpack.c.h.b16 %v343
    %v1997 = vunpack.c.l.b16 %v344
    %v1998 = vunpack.c.h.b16 %v344
    %v1999 = vunpack.c.l.b16 %v345
    %v2000 = vunpack.c.h.b16 %v345
    %v2001 = vunpack.c.l.b16 %v346
    %v2002 = vunpack.c.h.b16 %v346
    %v2003 = vunpack.c.l.b16 %v347
    %v2004 = vunpack.c.h.b16 %v347
    %v2005 = vunpack.c.l.b16 %v348
    %v2006 = vunpack.c.h.b16 %v348
    %v2007 = vunpack.c.l.b16 %v349
    %v2008 = vunpack.c.h.b16 %v349
    %v2009 = vunpack.c.l.b16 %v350
    %v2010 = vunpack.c.h.b16 %v350
    %v2011 = vunpack.c.l.b16 %v351
    %v2012 = vunpack.c.h.b16 %v351
    %v2013 = vunpack.c.l.b16 %v352
    %v2014 = vunpack.c.h.b16 %v352
    %v2015 = vunpack.c.l.b16 %v353
    %v2016 = vunpack.c.h.b16 %v353
    %v2017 = vunpack.c.l.b16 %v354
    %v2018 = vunpack.c.h.b16 %v354
    %v2019 = vunpack.c.l.b16 %v355
    %v2020 = vunpack.c.h.b16 %v355
    %v2021 = vunpack.c.l.b16 %v356
    %v2022 = vunpack.c.h.b16 %v356
    %v2023 = vunpack.c.l.b16 %v357
    %v2024 = vunpack.c.h.b16 %v357
    %v2025 = vunpack.c.l.b16 %v358
    %v2026 = vunpack.c.h.b16 %v358
    %v2027 = vunpack.c.l.b16 %v359
    %v2028 = vunpack.c.h.b16 %v359
    %v2029 = vunpack.c.l.b16 %v360
    %v2030 = vunpack.c.h.b16 %v360
    %v2031 = vunpack.c.l.b16 %v361
    %v2032 = vunpack.c.h.b16 %v361
    %v2033 = vunpack.c.l.b16 %v362
    %v2034 = vunpack.c.h.b16 %v362
    %v2035 = vunpack.c.l.b16 %v363
    %v2036 = vunpack.c.h.b16 %v363
    %v2037 = vunpack.c.l.b16 %v364
    %v2038 = vunpack.c.h.b16 %v364
    %v2039 = vunpack.c.l.b16 %v365
    %v2040 = vunpack.c.h.b16 %v365
    %v2041 = vunpack.c.l.b16 %v366
    %v2042 = vunpack.c.h.b16 %v366
    %v2043 = vunpack.c.l.b16 %v367
    %v2044 = vunpack.c.h.b16 %v367
    %v2045 = vunpack.c.l.b16 %v368
    %v2046 = vunpack.c.h.b16 %v368
    %v2047 = vunpack.c.l.b16 %v369
    %v2048 = vunpack.c.h.b16 %v369
    %v2049 = vunpack.c.l.b16 %v370
    %v2050 = vunpack.c.h.b16 %v370
    %v2051 = vunpack.c.l.b16 %v371
    %v2052 = vunpack.c.h.b16 %v371
    %v2053 = vunpack.c.l.b16 %v372
    %v2054 = vunpack.c.h.b16 %v372
    %v2055 = vunpack.c.l.b16 %v373
    %v2056 = vunpack.c.h.b16 %v373
    %v2057 = vunpack.c.l.b16 %v374
    %v2058 = vunpack.c.h.b16 %v374
    %v2059 = vunpack.c.l.b16 %v375
    %v2060 = vunpack.c.h.b16 %v375
    %v2061 = vunpack.c.l.b16 %v376
    %v2062 = vunpack.c.h.b16 %v376
    %v2063 = vunpack.c.l.b16 %v377
    %v2064 = vunpack.c.h.b16 %v377
    %v2065 = vunpack.c.l.b16 %v378
    %v2066 = vunpack.c.h.b16 %v378
    %v2067 = vunpack.c.l.b16 %v379
    %v2068 = vunpack.c.h.b16 %v379
    %v2069 = vunpack.c.l.b16 %v380
    %v2070 = vunpack.c.h.b16 %v380
    %v2071 = vunpack.c.l.b16 %v381
    %v2072 = vunpack.c.h.b16 %v381
    %v2073 = vunpack.c.l.b16 %v382
    %v2074 = vunpack.c.h.b16 %v382
    %v2075 = vunpack.c.l.b16 %v383
    %v2076 = vunpack.c.h.b16 %v383
    %v2077 = vunpack.c.l.b16 %v384
    %v2078 = vunpack.c.h.b16 %v384
    %v2079 = vunpack.c.l.b16 %v385
    %v2080 = vunpack.c.h.b16 %v385
    %v2081 = vunpack.c.l.b16 %v386
    %v2082 = vunpack.c.h.b16 %v386
    %v2083 = vunpack.c.l.b16 %v387
    %v2084 = vunpack.c.h.b16 %v387
    %v2085 = vunpack.c.l.b16 %v388
    %v2086 = vunpack.c.h.b16 %v388
    %v2087 = vunpack.c.l.b16 %v389
    %v2088 = vunpack.c.h.b16 %v389
    %v2089 = vunpack.c.l.b16 %v390
    %v2090 = vunpack.c.h.b16 %v390
    %v2091 = vunpack.c.l.b16 %v391
    %v2092 = vunpack.c.h.b16 %v391
    %v2093 = vunpack.c.l.b16 %v392
    %v2094 = vunpack.c.h.b16 %v392
    %v2095 = vunpack.c.l.b16 %v393
    %v2096 = vunpack.c.h.b16 %v393
    %v2097 = vunpack.c.l.b16 %v394
    %v2098 = vunpack.c.h.b16 %v394
    %v2099 = vunpack.c.l.b16 %v395
    %v2100 = vunpack.c.h.b16 %v395
    %v2101 = vunpack.c.l.b16 %v396
    %v2102 = vunpack.c.h.b16 %v396
    %v2103 = vunpack.c.l.b16 %v397
    %v2104 = vunpack.c.h.b16 %v397
    %v2105 = vunpack.c.l.b16 %v398
    %v2106 = vunpack.c.h.b16 %v398
    %v2107 = vunpack.c.l.b16 %v399
    %v2108 = vunpack.c.h.b16 %v399
    %v2109 = vunpack.c.l.b16 %v400
    %v2110 = vunpack.c.h.b16 %v400
    %v2111 = vunpack.c.l.b16 %v401
    %v2112 = vunpack.c.h.b16 %v401
    %v2113 = vunpack.c.l.b16 %v402
    %v2114 = vunpack.c.h.b16 %v402
    %v2115 = vunpack.c.l.b16 %v403
    %v2116 = vunpack.c.h.b16 %v403
    %v2117 = vunpack.c.l.b16 %v404
    %v2118 = vunpack.c.h.b16 %v404
    %v2119 = vunpack.c.l.b16 %v405
    %v2120 = vunpack.c.h.b16 %v405
    %v2121 = vunpack.c.l.b16 %v406
    %v2122 = vunpack.c.h.b16 %v406
    %v2123 = vunpack.c.l.b16 %v407
    %v2124 = vunpack.c.h.b16 %v407
    %v2125 = vunpack.c.l.b16 %v408
    %v2126 = vunpack.c.h.b16 %v408
    %v2127 = vunpack.c.l.b16 %v409
    %v2128 = vunpack.c.h.b16 %v409
    %v2129 = vunpack.c.l.b16 %v410
    %v2130 = vunpack.c.h.b16 %v410
    %v2131 = vunpack.c.l.b16 %v411
    %v2132 = vunpack.c.h.b16 %v411
    %v2133 = vunpack.c.l.b16 %v412
    %v2134 = vunpack.c.h.b16 %v412
    %v2135 = vunpack.c.l.b16 %v413
    %v2136 = vunpack.c.h.b16 %v413
    %v2137 = vunpack.c.l.b16 %v414
    %v2138 = vunpack.c.h.b16 %v414
    %v2139 = vunpack.c.l.b16 %v415
    %v2140 = vunpack.c.h.b16 %v415
    %v2141 = vunpack.c.l.b16 %v416
    %v2142 = vunpack.c.h.b16 %v416
    %v2143 = vunpack.c.l.b16 %v417
    %v2144 = vunpack.c.h.b16 %v417
    %v2145 = vunpack.c.l.b16 %v418
    %v2146 = vunpack.c.h.b16 %v418
    %v2147 = vunpack.c.l.b16 %v419
    %v2148 = vunpack.c.h.b16 %v419
    %v2149 = vunpack.c.l.b16 %v420
    %v2150 = vunpack.c.h.b16 %v420
    %v2151 = vunpack.c.l.b16 %v421
    %v2152 = vunpack.c.h.b16 %v421
    %v2153 = vunpack.c.l.b16 %v422
    %v2154 = vunpack.c.h.b16 %v422
    %v2155 = vunpack.c.l.b16 %v423
    %v2156 = vunpack.c.h.b16 %v423
    %v2157 = vunpack.c.l.b16 %v424
    %v2158 = vunpack.c.h.b16 %v424
    %v2159 = vunpack.c.l.b16 %v425
    %v2160 = vunpack.c.h.b16 %v425
    %v2161 = vunpack.c.l.b16 %v426
    %v2162 = vunpack.c.h.b16 %v426
    %v2163 = vunpack.c.l.b16 %v427
    %v2164 = vunpack.c.h.b16 %v427
    %v2165 = vunpack.c.l.b16 %v428
    %v2166 = vunpack.c.h.b16 %v428
    %v2167 = vunpack.c.l.b16 %v429
    %v2168 = vunpack.c.h.b16 %v429
    %v2169 = vunpack.c.l.b16 %v430
    %v2170 = vunpack.c.h.b16 %v430
    %v2171 = vunpack.c.l.b16 %v431
    %v2172 = vunpack.c.h.b16 %v431
    %v2173 = vunpack.c.l.b16 %v432
    %v2174 = vunpack.c.h.b16 %v432
    %v2175 = vunpack.c.l.b16 %v433
    %v2176 = vunpack.c.h.b16 %v433
    %v2177 = vunpack.c.l.b16 %v434
    %v2178 = vunpack.c.h.b16 %v434
    %v2179 = vunpack.c.l.b16 %v435
    %v2180 = vunpack.c.h.b16 %v435
    %v2181 = vunpack.c.l.b16 %v436
    %v2182 = vunpack.c.h.b16 %v436
    %v2183 = vunpack.c.l.b16 %v437
    %v2184 = vunpack.c.h.b16 %v437
    %v2185 = vunpack.c.l.b16 %v438
    %v2186 = vunpack.c.h.b16 %v438
    %v2187 = vunpack.c.l.b16 %v439
    %v2188 = vunpack.c.h.b16 %v439
    %v2189 = vunpack.c.l.b16 %v440
    %v2190 = vunpack.c.h.b16 %v440
    %v2191 = vunpack.c.l.b16 %v441
    %v2192 = vunpack.c.h.b16 %v441
    %v2193 = vunpack.c.l.b16 %v442
    %v2194 = vunpack.c.h.b16 %v442
    %v2195 = vunpack.c.l.b16 %v443
    %v2196 = vunpack.c.h.b16 %v443
    %v2197 = vunpack.c.l.b16 %v444
    %v2198 = vunpack.c.h.b16 %v444
    %v2199 = vunpack.c.l.b16 %v445
    %v2200 = vunpack.c.h.b16 %v445
    %v2201 = vunpack.c.l.b16 %v446
    %v2202 = vunpack.c.h.b16 %v446
    %v2203 = vunpack.c.l.b16 %v447
    %v2204 = vunpack.c.h.b16 %v447
    %v2205 = vunpack.c.l.b16 %v448
    %v2206 = vunpack.c.h.b16 %v448
    %v2207 = vunpack.c.l.b16 %v449
    %v2208 = vunpack.c.h.b16 %v449
    %v2209 = vunpack.c.l.b16 %v450
    %v2210 = vunpack.c.h.b16 %v450
    %v2211 = vunpack.c.l.b16 %v451
    %v2212 = vunpack.c.h.b16 %v451
    %v2213 = vunpack.c.l.b16 %v452
    %v2214 = vunpack.c.h.b16 %v452
    %v2215 = vunpack.c.l.b16 %v453
    %v2216 = vunpack.c.h.b16 %v453
    %v2217 = vunpack.c.l.b16 %v454
    %v2218 = vunpack.c.h.b16 %v454
    %v2219 = vunpack.c.l.b16 %v455
    %v2220 = vunpack.c.h.b16 %v455
    %v2221 = vunpack.c.l.b16 %v456
    %v2222 = vunpack.c.h.b16 %v456
    %v2223 = vunpack.c.l.b16 %v457
    %v2224 = vunpack.c.h.b16 %v457
    %v2225 = vunpack.c.l.b16 %v458
    %v2226 = vunpack.c.h.b16 %v458
    %v2227 = vunpack.c.l.b16 %v459
    %v2228 = vunpack.c.h.b16 %v459
    %v2229 = vunpack.c.l.b16 %v460
    %v2230 = vunpack.c.h.b16 %v460
    %v2231 = vunpack.c.l.b16 %v461
    %v2232 = vunpack.c.h.b16 %v461
    %v2233 = vunpack.c.l.b16 %v462
    %v2234 = vunpack.c.h.b16 %v462
    %v2235 = vunpack.c.l.b16 %v463
    %v2236 = vunpack.c.h.b16 %v463
    %v2237 = vunpack.c.l.b16 %v464
    %v2238 = vunpack.c.h.b16 %v464
    %v2239 = vunpack.c.l.b16 %v465
    %v2240 = vunpack.c.h.b16 %v465
    %v2241 = vunpack.c.l.b16 %v466
    %v2242 = vunpack.c.h.b16 %v466
    %v2243 = vunpack.c.l.b16 %v467
    %v2244 = vunpack.c.h.b16 %v467
    %v2245 = vunpack.c.l.b16 %v468
    %v2246 = vunpack.c.h.b16 %v468
    %v2247 = vunpack.c.l.b16 %v469
    %v2248 = vunpack.c.h.b16 %v469
    %v2249 = vunpack.c.l.b16 %v470
    %v2250 = vunpack.c.h.b16 %v470
    %v2251 = vunpack.c.l.b16 %v471
    %v2252 = vunpack.c.h.b16 %v471
    %v2253 = vunpack.c.l.b16 %v472
    %v2254 = vunpack.c.h.b16 %v472
    %v2255 = vunpack.c.l.b16 %v473
    %v2256 = vunpack.c.h.b16 %v473
    %v2257 = vunpack.c.l.b16 %v474
    %v2258 = vunpack.c.h.b16 %v474
    %v2259 = vunpack.c.l.b16 %v475
    %v2260 = vunpack.c.h.b16 %v475
    %v2261 = vunpack.c.l.b16 %v476
    %v2262 = vunpack.c.h.b16 %v476
    %v2263 = vunpack.c.l.b16 %v477
    %v2264 = vunpack.c.h.b16 %v477
    %v2265 = vunpack.c.l.b16 %v478
    %v2266 = vunpack.c.h.b16 %v478
    %v2267 = vunpack.c.l.b16 %v479
    %v2268 = vunpack.c.h.b16 %v479
    %v2269 = vunpack.c.l.b16 %v480
    %v2270 = vunpack.c.h.b16 %v480
    %v2271 = vunpack.c.l.b16 %v481
    %v2272 = vunpack.c.h.b16 %v481
    %v2273 = vunpack.c.l.b16 %v482
    %v2274 = vunpack.c.h.b16 %v482
    %v2275 = vunpack.c.l.b16 %v483
    %v2276 = vunpack.c.h.b16 %v483
    %v2277 = vunpack.c.l.b16 %v484
    %v2278 = vunpack.c.h.b16 %v484
    %v2279 = vunpack.c.l.b16 %v485
    %v2280 = vunpack.c.h.b16 %v485
    %v2281 = vunpack.c.l.b16 %v486
    %v2282 = vunpack.c.h.b16 %v486
    %v2283 = vunpack.c.l.b16 %v487
    %v2284 = vunpack.c.h.b16 %v487
    %v2285 = vunpack.c.l.b16 %v488
    %v2286 = vunpack.c.h.b16 %v488
    %v2287 = vunpack.c.l.b16 %v489
    %v2288 = vunpack.c.h.b16 %v489
    %v2289 = vunpack.c.l.b16 %v490
    %v2290 = vunpack.c.h.b16 %v490
    %v2291 = vunpack.c.l.b16 %v491
    %v2292 = vunpack.c.h.b16 %v491
    %v2293 = vunpack.c.l.b16 %v492
    %v2294 = vunpack.c.h.b16 %v492
    %v2295 = vunpack.c.l.b16 %v493
    %v2296 = vunpack.c.h.b16 %v493
    %v2297 = vunpack.c.l.b16 %v494
    %v2298 = vunpack.c.h.b16 %v494
    %v2299 = vunpack.c.l.b16 %v495
    %v2300 = vunpack.c.h.b16 %v495
    %v2301 = vunpack.c.l.b16 %v496
    %v2302 = vunpack.c.h.b16 %v496
    %v2303 = vunpack.c.l.b16 %v497
    %v2304 = vunpack.c.h.b16 %v497
    %v2305 = vunpack.c.l.b16 %v498
    %v2306 = vunpack.c.h.b16 %v498
    %v2307 = vunpack.c.l.b16 %v499
    %v2308 = vunpack.c.h.b16 %v499
    %v2309 = vunpack.c.l.b16 %v500
    %v2310 = vunpack.c.h.b16 %v500
    %v2311 = vunpack.c.l.b16 %v501
    %v2312 = vunpack.c.h.b16 %v501
    %v2313 = vunpack.c.l.b16 %v502
    %v2314 = vunpack.c.h.b16 %v502
    %v2315 = vunpack.c.l.b16 %v503
    %v2316 = vunpack.c.h.b16 %v503
    %v2317 = vunpack.c.l.b16 %v504
    %v2318 = vunpack.c.h.b16 %v504
    %v2319 = vunpack.c.l.b16 %v505
    %v2320 = vunpack.c.h.b16 %v505
    %v2321 = vunpack.c.l.b16 %v506
    %v2322 = vunpack.c.h.b16 %v506
    %v2323 = vunpack.c.l.b16 %v507
    %v2324 = vunpack.c.h.b16 %v507
    %v2325 = vunpack.c.l.b16 %v508
    %v2326 = vunpack.c.h.b16 %v508
    %v2327 = vunpack.c.l.b16 %v509
    %v2328 = vunpack.c.h.b16 %v509
    %v2329 = vunpack.c.l.b16 %v510
    %v2330 = vunpack.c.h.b16 %v510
    %v2331 = vunpack.c.l.b16 %v511
    %v2332 = vunpack.c.h.b16 %v511
    %v2333 = vunpack.c.l.b16 %v512
    %v2334 = vunpack.c.h.b16 %v512
    %v2335 = vunpack.c.l.b16 %v513
    %v2336 = vunpack.c.h.b16 %v513
    %v2337 = vunpack.c.l.b16 %v514
    %v2338 = vunpack.c.h.b16 %v514
    %v2339 = vunpack.c.l.b16 %v515
    %v2340 = vunpack.c.h.b16 %v515
    %v2341 = vunpack.c.l.b16 %v516
    %v2342 = vunpack.c.h.b16 %v516
    %v2343 = vunpack.c.l.b16 %v517
    %v2344 = vunpack.c.h.b16 %v517
    %v2345 = vunpack.c.l.b16 %v518
    %v2346 = vunpack.c.h.b16 %v518
    %v2347 = vunpack.c.l.b16 %v519
    %v2348 = vunpack.c.h.b16 %v519
    %v2349 = vunpack.c.l.b16 %v520
    %v2350 = vunpack.c.h.b16 %v520
    %v2351 = vunpack.c.l.b16 %v521
    %v2352 = vunpack.c.h.b16 %v521
    %v2353 = vunpack.c.l.b16 %v522
    %v2354 = vunpack.c.h.b16 %v522
    %v2355 = vunpack.c.l.b16 %v523
    %v2356 = vunpack.c.h.b16 %v523
    %v2357 = vunpack.c.l.b16 %v524
    %v2358 = vunpack.c.h.b16 %v524
    %v2359 = vunpack.c.l.b16 %v525
    %v2360 = vunpack.c.h.b16 %v525
    %v2361 = vunpack.c.l.b16 %v526
    %v2362 = vunpack.c.h.b16 %v526
    %v2363 = vunpack.c.l.b16 %v527
    %v2364 = vunpack.c.h.b16 %v527
    %v2365 = vunpack.c.l.b16 %v528
    %v2366 = vunpack.c.h.b16 %v528
    %v2367 = vunpack.c.l.b16 %v529
    %v2368 = vunpack.c.h.b16 %v529
    %v2369 = vunpack.c.l.b16 %v530
    %v2370 = vunpack.c.h.b16 %v530
    %v2371 = vunpack.c.l.b16 %v531
    %v2372 = vunpack.c.h.b16 %v531
    %v2373 = vunpack.c.l.b16 %v532
    %v2374 = vunpack.c.h.b16 %v532
    %v2375 = vunpack.c.l.b16 %v533
    %v2376 = vunpack.c.h.b16 %v533
    %v2377 = vunpack.c.l.b16 %v534
    %v2378 = vunpack.c.h.b16 %v534
    %v2379 = vunpack.c.l.b16 %v535
    %v2380 = vunpack.c.h.b16 %v535
    %v2381 = vunpack.c.l.b16 %v536
    %v2382 = vunpack.c.h.b16 %v536
    %v2383 = vunpack.c.l.b16 %v537
    %v2384 = vunpack.c.h.b16 %v537
    %v2385 = vunpack.c.l.b16 %v538
    %v2386 = vunpack.c.h.b16 %v538
    %v2387 = vunpack.c.l.b16 %v539
    %v2388 = vunpack.c.h.b16 %v539
    %v2389 = vunpack.c.l.b16 %v540
    %v2390 = vunpack.c.h.b16 %v540
    %v2391 = vunpack.c.l.b16 %v541
    %v2392 = vunpack.c.h.b16 %v541
    %v2393 = vunpack.c.l.b16 %v542
    %v2394 = vunpack.c.h.b16 %v542
    %v2395 = vunpack.c.l.b16 %v543
    %v2396 = vunpack.c.h.b16 %v543
    %v2397 = vunpack.c.l.b16 %v544
    %v2398 = vunpack.c.h.b16 %v544
    %v2399 = vunpack.c.l.b16 %v545
    %v2400 = vunpack.c.h.b16 %v545
    %v2401 = vunpack.c.l.b16 %v546
    %v2402 = vunpack.c.h.b16 %v546
    %v2403 = vunpack.c.l.b16 %v547
    %v2404 = vunpack.c.h.b16 %v547
    %v2405 = vunpack.c.l.b16 %v548
    %v2406 = vunpack.c.h.b16 %v548
    %v2407 = vunpack.c.l.b16 %v549
    %v2408 = vunpack.c.h.b16 %v549
    %v2409 = vunpack.c.l.b16 %v550
    %v2410 = vunpack.c.h.b16 %v550
    %v2411 = vunpack.c.l.b16 %v551
    %v2412 = vunpack.c.h.b16 %v551
    %v2413 = vunpack.c.l.b16 %v552
    %v2414 = vunpack.c.h.b16 %v552
    %v2415 = vunpack.c.l.b16 %v553
    %v2416 = vunpack.c.h.b16 %v553
    %v2417 = vunpack.c.l.b16 %v554
    %v2418 = vunpack.c.h.b16 %v554
    %v2419 = vunpack.c.l.b16 %v555
    %v2420 = vunpack.c.h.b16 %v555
    %v2421 = vunpack.c.l.b16 %v556
    %v2422 = vunpack.c.h.b16 %v556
    %v2423 = vunpack.c.l.b16 %v557
    %v2424 = vunpack.c.h.b16 %v557
    %v2425 = vunpack.c.l.b16 %v558
    %v2426 = vunpack.c.h.b16 %v558
    %v2427 = vunpack.c.l.b16 %v559
    %v2428 = vunpack.c.h.b16 %v559
    %v2429 = vunpack.c.l.b16 %v560
    %v2430 = vunpack.c.h.b16 %v560
    %v2431 = vunpack.c.l.b16 %v561
    %v2432 = vunpack.c.h.b16 %v561
    %v2433 = vunpack.c.l.b16 %v562
    %v2434 = vunpack.c.h.b16 %v562
    %v2435 = vunpack.c.l.b16 %v563
    %v2436 = vunpack.c.h.b16 %v563
    %v2437 = vunpack.c.l.b16 %v564
    %v2438 = vunpack.c.h.b16 %v564
    %v2439 = vunpack.c.l.b16 %v565
    %v2440 = vunpack.c.h.b16 %v565
    %v2441 = vunpack.c.l.b16 %v566
    %v2442 = vunpack.c.h.b16 %v566
    %v2443 = vunpack.c.l.b16 %v567
    %v2444 = vunpack.c.h.b16 %v567
    %v2445 = vunpack.c.l.b16 %v568
    %v2446 = vunpack.c.h.b16 %v568
    %v2447 = vunpack.c.l.b16 %v569
    %v2448 = vunpack.c.h.b16 %v569
    %v2449 = vunpack.c.l.b16 %v570
    %v2450 = vunpack.c.h.b16 %v570
    %v2451 = vunpack.c.l.b16 %v571
    %v2452 = vunpack.c.h.b16 %v571
    %v2453 = vunpack.c.l.b16 %v572
    %v2454 = vunpack.c.h.b16 %v572
    %v2455 = vunpack.c.l.b16 %v573
    %v2456 = vunpack.c.h.b16 %v573
    %v2457 = vunpack.c.l.b16 %v574
    %v2458 = vunpack.c.h.b16 %v574
    %v2459 = vunpack.c.l.b16 %v575
    %v2460 = vunpack.c.h.b16 %v575
    %v2461 = vunpack.c.l.b16 %v576
    %v2462 = vunpack.c.h.b16 %v576
    %v2463 = vunpack.c.l.b16 %v577
    %v2464 = vunpack.c.h.b16 %v577
    %v2465 = vunpack.c.l.b16 %v578
    %v2466 = vunpack.c.h.b16 %v578
    %v2467 = vunpack.c.l.b16 %v579
    %v2468 = vunpack.c.h.b16 %v579
    %v2469 = vunpack.c.l.b16 %v580
    %v2470 = vunpack.c.h.b16 %v580
    %v2471 = vunpack.c.l.b16 %v581
    %v2472 = vunpack.c.h.b16 %v581
    %v2473 = vunpack.c.l.b16 %v582
    %v2474 = vunpack.c.h.b16 %v582
    %v2475 = vunpack.c.l.b16 %v583
    %v2476 = vunpack.c.h.b16 %v583
    %v2477 = vunpack.c.l.b16 %v584
    %v2478 = vunpack.c.h.b16 %v584
    %v2479 = vunpack.c.l.b16 %v585
    %v2480 = vunpack.c.h.b16 %v585
    %v2481 = vunpack.c.l.b16 %v586
    %v2482 = vunpack.c.h.b16 %v586
    %v2483 = vunpack.c.l.b16 %v587
    %v2484 = vunpack.c.h.b16 %v587
    %v2485 = vunpack.c.l.b16 %v588
    %v2486 = vunpack.c.h.b16 %v588
    %v2487 = vunpack.c.l.b16 %v589
    %v2488 = vunpack.c.h.b16 %v589
    %v2489 = vunpack.c.l.b16 %v590
    %v2490 = vunpack.c.h.b16 %v590
    %v2491 = vunpack.c.l.b16 %v591
    %v2492 = vunpack.c.h.b16 %v591
    %v2493 = vunpack.c.l.b16 %v592
    %v2494 = vunpack.c.h.b16 %v592
    %v2495 = vunpack.c.l.b16 %v593
    %v2496 = vunpack.c.h.b16 %v593
    %v2497 = vunpack.c.l.b16 %v594
    %v2498 = vunpack.c.h.b16 %v594
    %v2499 = vunpack.c.l.b16 %v595
    %v2500 = vunpack.c.h.b16 %v595
    %v2501 = vunpack.c.l.b16 %v596
    %v2502 = vunpack.c.h.b16 %v596
    %v2503 = vunpack.c.l.b16 %v597
    %v2504 = vunpack.c.h.b16 %v597
    %v2505 = vunpack.c.l.b16 %v598
    %v2506 = vunpack.c.h.b16 %v598
    %v2507 = vunpack.c.l.b16 %v599
    %v2508 = vunpack.c.h.b16 %v599
    %v2509 = vunpack.c.l.b16 %v600
    %v2510 = vunpack.c.h.b16 %v600
    %v2511 = vunpack.c.l.b16 %v601
    %v2512 = vunpack.c.h.b16 %v601
    %v2513 = vunpack.c.l.b16 %v602
    %v2514 = vunpack.c.h.b16 %v602
    %v2515 = vunpack.c.l.b16 %v603
    %v2516 = vunpack.c.h.b16 %v603
    %v2517 = vunpack.c.l.b16 %v604
    %v2518 = vunpack.c.h.b16 %v604
    %v2519 = vunpack.c.l.b16 %v605
    %v2520 = vunpack.c.h.b16 %v605
    %v2521 = vunpack.c.l.b16 %v606
    %v2522 = vunpack.c.h.b16 %v606
    %v2523 = vunpack.c.l.b16 %v607
    %v2524 = vunpack.c.h.b16 %v607
    %v2525 = vunpack.c.l.b16 %v608
    %v2526 = vunpack.c.h.b16 %v608
    %v2527 = vunpack.c.l.b16 %v609
    %v2528 = vunpack.c.h.b16 %v609
    %v2529 = vunpack.c.l.b16 %v610
    %v2530 = vunpack.c.h.b16 %v610
    %v2531 = vunpack.c.l.b16 %v611
    %v2532 = vunpack.c.h.b16 %v611
    %v2533 = vunpack.c.l.b16 %v612
    %v2534 = vunpack.c.h.b16 %v612
    %v2535 = vunpack.c.l.b16 %v613
    %v2536 = vunpack.c.h.b16 %v613
    %v2537 = vunpack.c.l.b16 %v614
    %v2538 = vunpack.c.h.b16 %v614
    %v2539 = vunpack.c.l.b16 %v615
    %v2540 = vunpack.c.h.b16 %v615
    %v2541 = vunpack.c.l.b16 %v616
    %v2542 = vunpack.c.h.b16 %v616
    %v2543 = vunpack.c.l.b16 %v617
    %v2544 = vunpack.c.h.b16 %v617
    %v2545 = vunpack.c.l.b16 %v618
    %v2546 = vunpack.c.h.b16 %v618
    %v2547 = vunpack.c.l.b16 %v619
    %v2548 = vunpack.c.h.b16 %v619
    %v2549 = vunpack.c.l.b16 %v620
    %v2550 = vunpack.c.h.b16 %v620
    %v2551 = vunpack.c.l.b16 %v621
    %v2552 = vunpack.c.h.b16 %v621
    %v2553 = vunpack.c.l.b16 %v622
    %v2554 = vunpack.c.h.b16 %v622
    %v2555 = vunpack.c.l.b16 %v623
    %v2556 = vunpack.c.h.b16 %v623
    %v2557 = vunpack.c.l.b16 %v624
    %v2558 = vunpack.c.h.b16 %v624
    %v2559 = vunpack.c.l.b16 %v625
    %v2560 = vunpack.c.h.b16 %v625
    %v2561 = vunpack.c.l.b16 %v626
    %v2562 = vunpack.c.h.b16 %v626
    %v2563 = vunpack.c.l.b16 %v627
    %v2564 = vunpack.c.h.b16 %v627
    %v2565 = vunpack.c.l.b16 %v628
    %v2566 = vunpack.c.h.b16 %v628
    %v2567 = vunpack.c.l.b16 %v629
    %v2568 = vunpack.c.h.b16 %v629
    %v2569 = vunpack.c.l.b16 %v630
    %v2570 = vunpack.c.h.b16 %v630
    %v2571 = vunpack.c.l.b16 %v631
    %v2572 = vunpack.c.h.b16 %v631
    %v2573 = vunpack.c.l.b16 %v632
    %v2574 = vunpack.c.h.b16 %v632
    %v2575 = vunpack.c.l.b16 %v633
    %v2576 = vunpack.c.h.b16 %v633
    %v2577 = vunpack.c.l.b16 %v634
    %v2578 = vunpack.c.h.b16 %v634
    %v2579 = vunpack.c.l.b16 %v635
    %v2580 = vunpack.c.h.b16 %v635
    %v2581 = vunpack.c.l.b16 %v636
    %v2582 = vunpack.c.h.b16 %v636
    %v2583 = vunpack.c.l.b16 %v637
    %v2584 = vunpack.c.h.b16 %v637
    %v2585 = vunpack.c.l.b16 %v638
    %v2586 = vunpack.c.h.b16 %v638
    %v2587 = vunpack.c.l.b16 %v639
    %v2588 = vunpack.c.h.b16 %v639
    %v2589 = vunpack.c.l.b16 %v640
    %v2590 = vunpack.c.h.b16 %v640
    %v2591 = vunpack.c.l.b16 %v641
    %v2592 = vunpack.c.h.b16 %v641
    %v2593 = vunpack.c.l.b16 %v642
    %v2594 = vunpack.c.h.b16 %v642
    %v2595 = vunpack.c.l.b16 %v643
    %v2596 = vunpack.c.h.b16 %v643
    %v2597 = vunpack.c.l.b16 %v644
    %v2598 = vunpack.c.h.b16 %v644
    %v2599 = vunpack.c.l.b16 %v645
    %v2600 = vunpack.c.h.b16 %v645
    %v2601 = vunpack.c.l.b16 %v646
    %v2602 = vunpack.c.h.b16 %v646
    %v2603 = vunpack.c.l.b16 %v647
    %v2604 = vunpack.c.h.b16 %v647
    %v2605 = vunpack.c.l.b16 %v648
    %v2606 = vunpack.c.h.b16 %v648
    %v2607 = vunpack.c.l.b16 %v649
    %v2608 = vunpack.c.h.b16 %v649
    %v2609 = vunpack.c.l.b16 %v650
    %v2610 = vunpack.c.h.b16 %v650
    %v2611 = vunpack.c.l.b16 %v651
    %v2612 = vunpack.c.h.b16 %v651
    %v2613 = vunpack.c.l.b16 %v652
    %v2614 = vunpack.c.h.b16 %v652
    %v2615 = vunpack.c.l.b16 %v653
    %v2616 = vunpack.c.h.b16 %v653
    %v2617 = vunpack.c.l.b16 %v654
    %v2618 = vunpack.c.h.b16 %v654
    %v2619 = vunpack.c.l.b16 %v655
    %v2620 = vunpack.c.h.b16 %v655
    %v2621 = vunpack.c.l.b16 %v656
    %v2622 = vunpack.c.h.b16 %v656
    %v2623 = vunpack.c.l.b16 %v657
    %v2624 = vunpack.c.h.b16 %v657
    %v2625 = vunpack.c.l.b16 %v658
    %v2626 = vunpack.c.h.b16 %v658
    %v2627 = vunpack.c.l.b16 %v659
    %v2628 = vunpack.c.h.b16 %v659
    %v2629 = vunpack.c.l.b16 %v660
    %v2630 = vunpack.c.h.b16 %v660
    %v2631 = vunpack.c.l.b16 %v661
    %v2632 = vunpack.c.h.b16 %v661
    %v2633 = vunpack.c.l.b16 %v662
    %v2634 = vunpack.c.h.b16 %v662
    %v2635 = vunpack.c.l.b16 %v663
    %v2636 = vunpack.c.h.b16 %v663
    %v2637 = vunpack.c.l.b16 %v664
    %v2638 = vunpack.c.h.b16 %v664
    %v2639 = vunpack.c.l.b16 %v665
    %v2640 = vunpack.c.h.b16 %v665
    %v2641 = vunpack.c.l.b16 %v666
    %v2642 = vunpack.c.h.b16 %v666
    %v2643 = vunpack.c.l.b16 %v667
    %v2644 = vunpack.c.h.b16 %v667
    %v2645 = vunpack.c.l.b16 %v668
    %v2646 = vunpack.c.h.b16 %v668
    %v2647 = vunpack.c.l.b16 %v669
    %v2648 = vunpack.c.h.b16 %v669
    %v2649 = vunpack.c.l.b16 %v670
    %v2650 = vunpack.c.h.b16 %v670
    %v2651 = vunpack.c.l.b16 %v671
    %v2652 = vunpack.c.h.b16 %v671
    %v2653 = vunpack.c.l.b16 %v672
    %v2654 = vunpack.c.h.b16 %v672
    %v2655 = vunpack.c.l.b16 %v673
    %v2656 = vunpack.c.h.b16 %v673
    %v2657 = vunpack.c.l.b16 %v674
    %v2658 = vunpack.c.h.b16 %v674
    %v2659 = vunpack.c.l.b16 %v675
    %v2660 = vunpack.c.h.b16 %v675
    %v2661 = vunpack.c.l.b16 %v676
    %v2662 = vunpack.c.h.b16 %v676
    %v2663 = vunpack.c.l.b16 %v677
    %v2664 = vunpack.c.h.b16 %v677
    %v2665 = vunpack.c.l.b16 %v678
    %v2666 = vunpack.c.h.b16 %v678
    %v2667 = vunpack.c.l.b16 %v679
    %v2668 = vunpack.c.h.b16 %v679
    %v2669 = vunpack.c.l.b16 %v680
    %v2670 = vunpack.c.h.b16 %v680
    %v2671 = vunpack.c.l.b16 %v681
    %v2672 = vunpack.c.h.b16 %v681
    %v2673 = vunpack.c.l.b16 %v682
    %v2674 = vunpack.c.h.b16 %v682
    %v2675 = vunpack.c.l.b16 %v683
    %v2676 = vunpack.c.h.b16 %v683
    %v2677 = vunpack.c.l.b16 %v684
    %v2678 = vunpack.c.h.b16 %v684
    %v2679 = vunpack.c.l.b16 %v685
    %v2680 = vunpack.c.h.b16 %v685
    %v2681 = vunpack.c.l.b16 %v686
    %v2682 = vunpack.c.h.b16 %v686
    %v2683 = vunpack.c.l.b16 %v687
    %v2684 = vunpack.c.h.b16 %v687
    %v2685 = vunpack.c.l.b16 %v688
    %v2686 = vunpack.c.h.b16 %v688
    %v2687 = vunpack.c.l.b16 %v689
    %v2688 = vunpack.c.h.b16 %v689
    %v2689 = vunpack.c.l.b16 %v690
    %v2690 = vunpack.c.h.b16 %v690
    %v2691 = vunpack.c.l.b16 %v691
    %v2692 = vunpack.c.h.b16 %v691
    %v2693 = vunpack.c.l.b16 %v692
    %v2694 = vunpack.c.h.b16 %v692
    %v2695 = vunpack.c.l.b16 %v693
    %v2696 = vunpack.c.h.b16 %v693
    %v2697 = vunpack.c.l.b16 %v694
    %v2698 = vunpack.c.h.b16 %v694
    %v2699 = vunpack.c.l.b16 %v695
    %v2700 = vunpack.c.h.b16 %v695
    %v2701 = vunpack.c.l.b16 %v696
    %v2702 = vunpack.c.h.b16 %v696
    %v2703 = vunpack.c.l.b16 %v697
    %v2704 = vunpack.c.h.b16 %v697
    %v2705 = vunpack.c.l.b16 %v698
    %v2706 = vunpack.c.h.b16 %v698
    %v2707 = vunpack.c.l.b16 %v699
    %v2708 = vunpack.c.h.b16 %v699
    %v2709 = vunpack.c.l.b16 %v700
    %v2710 = vunpack.c.h.b16 %v700
    %v2711 = vunpack.c.l.b16 %v701
    %v2712 = vunpack.c.h.b16 %v701
    %v2713 = vunpack.c.l.b16 %v702
    %v2714 = vunpack.c.h.b16 %v702
    %v2715 = vunpack.c.l.b16 %v703
    %v2716 = vunpack.c.h.b16 %v703
    %v2717 = vunpack.c.l.b16 %v704
    %v2718 = vunpack.c.h.b16 %v704
    %v2719 = vunpack.c.l.b16 %v705
    %v2720 = vunpack.c.h.b16 %v705
    %v2721 = vunpack.c.l.b16 %v706
    %v2722 = vunpack.c.h.b16 %v706
    %v2723 = vunpack.c.l.b16 %v707
    %v2724 = vunpack.c.h.b16 %v707
    %v2725 = vunpack.c.l.b16 %v708
    %v2726 = vunpack.c.h.b16 %v708
    %v2727 = vunpack.c.l.b16 %v709
    %v2728 = vunpack.c.h.b16 %v709
    %v2729 = vunpack.c.l.b16 %v710
    %v2730 = vunpack.c.h.b16 %v710
    %v2731 = vunpack.c.l.b16 %v711
    %v2732 = vunpack.c.h.b16 %v711
    %v2733 = vunpack.c.l.b16 %v712
    %v2734 = vunpack.c.h.b16 %v712
    %v2735 = vunpack.c.l.b16 %v713
    %v2736 = vunpack.c.h.b16 %v713
    %v2737 = vunpack.c.l.b16 %v714
    %v2738 = vunpack.c.h.b16 %v714
    %v2739 = vunpack.c.l.b16 %v715
    %v2740 = vunpack.c.h.b16 %v715
    %v2741 = vunpack.c.l.b16 %v716
    %v2742 = vunpack.c.h.b16 %v716
    %v2743 = vunpack.c.l.b16 %v717
    %v2744 = vunpack.c.h.b16 %v717
    %v2745 = vunpack.c.l.b16 %v718
    %v2746 = vunpack.c.h.b16 %v718
    %v2747 = vunpack.c.l.b16 %v719
    %v2748 = vunpack.c.h.b16 %v719
    %v2749 = vunpack.c.l.b16 %v720
    %v2750 = vunpack.c.h.b16 %v720
    %v2751 = vunpack.c.l.b16 %v721
    %v2752 = vunpack.c.h.b16 %v721
    %v2753 = vunpack.c.l.b16 %v722
    %v2754 = vunpack.c.h.b16 %v722
    %v2755 = vunpack.c.l.b16 %v723
    %v2756 = vunpack.c.h.b16 %v723
    %v2757 = vunpack.c.l.b16 %v724
    %v2758 = vunpack.c.h.b16 %v724
    %v2759 = vunpack.c.l.b16 %v725
    %v2760 = vunpack.c.h.b16 %v725
    %v2761 = vunpack.c.l.b16 %v726
    %v2762 = vunpack.c.h.b16 %v726
    %v2763 = vunpack.c.l.b16 %v727
    %v2764 = vunpack.c.h.b16 %v727
    %v2765 = vunpack.c.l.b16 %v728
    %v2766 = vunpack.c.h.b16 %v728
    %v2767 = vunpack.c.l.b16 %v729
    %v2768 = vunpack.c.h.b16 %v729
    %v2769 = vunpack.c.l.b16 %v730
    %v2770 = vunpack.c.h.b16 %v730
    %v2771 = vunpack.c.l.b16 %v731
    %v2772 = vunpack.c.h.b16 %v731
    %v2773 = vunpack.c.l.b16 %v732
    %v2774 = vunpack.c.h.b16 %v732
    %v2775 = vunpack.c.l.b16 %v733
    %v2776 = vunpack.c.h.b16 %v733
    %v2777 = vunpack.c.l.b16 %v734
    %v2778 = vunpack.c.h.b16 %v734
    %v2779 = vunpack.c.l.b16 %v735
    %v2780 = vunpack.c.h.b16 %v735
    %v2781 = vunpack.c.l.b16 %v736
    %v2782 = vunpack.c.h.b16 %v736
    %v2783 = vunpack.c.l.b16 %v737
    %v2784 = vunpack.c.h.b16 %v737
    %v2785 = vunpack.c.l.b16 %v738
    %v2786 = vunpack.c.h.b16 %v738
    %v2787 = vunpack.c.l.b16 %v739
    %v2788 = vunpack.c.h.b16 %v739
    %v2789 = vunpack.c.l.b16 %v740
    %v2790 = vunpack.c.h.b16 %v740
    %v2791 = vunpack.c.l.b16 %v741
    %v2792 = vunpack.c.h.b16 %v741
    %v2793 = vunpack.c.l.b16 %v742
    %v2794 = vunpack.c.h.b16 %v742
    %v2795 = vunpack.c.l.b16 %v743
    %v2796 = vunpack.c.h.b16 %v743
    %v2797 = vunpack.c.l.b16 %v744
    %v2798 = vunpack.c.h.b16 %v744
    %v2799 = vunpack.c.l.b16 %v745
    %v2800 = vunpack.c.h.b16 %v745
    %v2801 = vunpack.c.l.b16 %v746
    %v2802 = vunpack.c.h.b16 %v746
    %v2803 = vunpack.c.l.b16 %v747
    %v2804 = vunpack.c.h.b16 %v747
    %v2805 = vunpack.c.l.b16 %v748
    %v2806 = vunpack.c.h.b16 %v748
    %v2807 = vunpack.c.l.b16 %v749
    %v2808 = vunpack.c.h.b16 %v749
    %v2809 = vunpack.c.l.b16 %v750
    %v2810 = vunpack.c.h.b16 %v750
    %v2811 = vunpack.c.l.b16 %v751
    %v2812 = vunpack.c.h.b16 %v751
    %v2813 = vunpack.c.l.b16 %v752
    %v2814 = vunpack.c.h.b16 %v752
    %v2815 = vunpack.c.l.b16 %v753
    %v2816 = vunpack.c.h.b16 %v753
    %v2817 = vunpack.c.l.b16 %v754
    %v2818 = vunpack.c.h.b16 %v754
    %v2819 = vunpack.c.l.b16 %v755
    %v2820 = vunpack.c.h.b16 %v755
    %v2821 = vunpack.c.l.b16 %v756
    %v2822 = vunpack.c.h.b16 %v756
    %v2823 = vunpack.c.l.b16 %v757
    %v2824 = vunpack.c.h.b16 %v757
    %v2825 = vunpack.c.l.b16 %v758
    %v2826 = vunpack.c.h.b16 %v758
    %v2827 = vunpack.c.l.b16 %v759
    %v2828 = vunpack.c.h.b16 %v759
    %v2829 = vunpack.c.l.b16 %v760
    %v2830 = vunpack.c.h.b16 %v760
    %v2831 = vunpack.c.l.b16 %v761
    %v2832 = vunpack.c.h.b16 %v761
    %v2833 = vunpack.c.l.b16 %v762
    %v2834 = vunpack.c.h.b16 %v762
    %v2835 = vunpack.c.l.b16 %v763
    %v2836 = vunpack.c.h.b16 %v763
    %v2837 = vunpack.c.l.b16 %v764
    %v2838 = vunpack.c.h.b16 %v764
    %v2839 = vunpack.c.l.b16 %v765
    %v2840 = vunpack.c.h.b16 %v765
    %v2841 = vunpack.c.l.b16 %v766
    %v2842 = vunpack.c.h.b16 %v766
    %v2843 = vunpack.c.l.b16 %v767
    %v2844 = vunpack.c.h.b16 %v767
    %v2845 = vunpack.c.l.b16 %v768
    %v2846 = vunpack.c.h.b16 %v768
    %v2847 = vunpack.c.l.b16 %v769
    %v2848 = vunpack.c.h.b16 %v769
    %v2849 = vunpack.c.l.b16 %v770
    %v2850 = vunpack.c.h.b16 %v770
    %v2851 = vunpack.c.l.b16 %v771
    %v2852 = vunpack.c.h.b16 %v771
    %v2853 = vunpack.c.l.b16 %v772
    %v2854 = vunpack.c.h.b16 %v772
    %v2855 = vunpack.c.l.b16 %v773
    %v2856 = vunpack.c.h.b16 %v773
    %v2857 = vunpack.c.l.b16 %v774
    %v2858 = vunpack.c.h.b16 %v774
    %v2859 = vunpack.c.l.b16 %v775
    %v2860 = vunpack.c.h.b16 %v775
    %v2861 = vunpack.c.l.b16 %v776
    %v2862 = vunpack.c.h.b16 %v776
    %v2863 = vunpack.c.l.b16 %v777
    %v2864 = vunpack.c.h.b16 %v777
    %v2865 = vunpack.c.l.b16 %v778
    %v2866 = vunpack.c.h.b16 %v778
    %v2867 = vunpack.c.l.b16 %v779
    %v2868 = vunpack.c.h.b16 %v779
    %v2869 = vunpack.c.l.b16 %v780
    %v2870 = vunpack.c.h.b16 %v780
    %v2871 = vunpack.c.l.b16 %v781
    %v2872 = vunpack.c.h.b16 %v781
    %v2873 = vunpack.c.l.b16 %v782
    %v2874 = vunpack.c.h.b16 %v782
    %v2875 = vunpack.c.l.b16 %v783
    %v2876 = vunpack.c.h.b16 %v783
    %v2877 = vunpack.c.l.b16 %v784
    %v2878 = vunpack.c.h.b16 %v784
    %v2879 = vunpack.c.l.b16 %v785
    %v2880 = vunpack.c.h.b16 %v785
    %v2881 = vunpack.c.l.b16 %v786
    %v2882 = vunpack.c.h.b16 %v786
    %v2883 = vunpack.c.l.b16 %v787
    %v2884 = vunpack.c.h.b16 %v787
    %v2885 = vunpack.c.l.b16 %v788
    %v2886 = vunpack.c.h.b16 %v788
    %v2887 = vunpack.c.l.b16 %v789
    %v2888 = vunpack.c.h.b16 %v789
    %v2889 = vunpack.c.l.b16 %v790
    %v2890 = vunpack.c.h.b16 %v790
    %v2891 = vunpack.c.l.b16 %v791
    %v2892 = vunpack.c.h.b16 %v791
    %v2893 = vunpack.c.l.b16 %v792
    %v2894 = vunpack.c.h.b16 %v792
    %v2895 = vunpack.c.l.b16 %v793
    %v2896 = vunpack.c.h.b16 %v793
    %v2897 = vunpack.c.l.b16 %v794
    %v2898 = vunpack.c.h.b16 %v794
    %v2899 = vunpack.c.l.b16 %v795
    %v2900 = vunpack.c.h.b16 %v795
    %v2901 = vunpack.c.l.b16 %v796
    %v2902 = vunpack.c.h.b16 %v796
    %v2903 = vunpack.c.l.b16 %v797
    %v2904 = vunpack.c.h.b16 %v797
    %v2905 = vunpack.c.l.b16 %v798
    %v2906 = vunpack.c.h.b16 %v798
    %v2907 = vunpack.c.l.b16 %v799
    %v2908 = vunpack.c.h.b16 %v799
    %v2909 = vunpack.c.l.b16 %v800
    %v2910 = vunpack.c.h.b16 %v800
    %v2911 = vunpack.c.l.b16 %v801
    %v2912 = vunpack.c.h.b16 %v801
    %v2913 = vunpack.c.l.b16 %v802
    %v2914 = vunpack.c.h.b16 %v802
    %v2915 = vunpack.c.l.b16 %v803
    %v2916 = vunpack.c.h.b16 %v803
    %v2917 = vunpack.c.l.b16 %v804
    %v2918 = vunpack.c.h.b16 %v804
    %v2919 = vunpack.c.l.b16 %v805
    %v2920 = vunpack.c.h.b16 %v805
    %v2921 = vunpack.c.l.b16 %v806
    %v2922 = vunpack.c.h.b16 %v806
    %v2923 = vunpack.c.l.b16 %v807
    %v2924 = vunpack.c.h.b16 %v807
    %v2925 = vunpack.c.l.b16 %v808
    %v2926 = vunpack.c.h.b16 %v808
    %v2927 = vunpack.c.l.b16 %v809
    %v2928 = vunpack.c.h.b16 %v809
    %v2929 = vunpack.c.l.b16 %v810
    %v2930 = vunpack.c.h.b16 %v810
    %v2931 = vunpack.c.l.b16 %v811
    %v2932 = vunpack.c.h.b16 %v811
    %v2933 = vunpack.c.l.b16 %v812
    %v2934 = vunpack.c.h.b16 %v812
    %v2935 = vunpack.c.l.b16 %v813
    %v2936 = vunpack.c.h.b16 %v813
    %v2937 = vunpack.c.l.b16 %v814
    %v2938 = vunpack.c.h.b16 %v814
    %v2939 = vunpack.c.l.b16 %v815
    %v2940 = vunpack.c.h.b16 %v815
    %v2941 = vunpack.c.l.b16 %v816
    %v2942 = vunpack.c.h.b16 %v816
    %v2943 = vunpack.c.l.b16 %v817
    %v2944 = vunpack.c.h.b16 %v817
    %v2945 = vunpack.c.l.b16 %v818
    %v2946 = vunpack.c.h.b16 %v818
    %v2947 = vunpack.c.l.b16 %v819
    %v2948 = vunpack.c.h.b16 %v819
    %v2949 = vunpack.c.l.b16 %v820
    %v2950 = vunpack.c.h.b16 %v820
    %v2951 = vunpack.c.l.b16 %v821
    %v2952 = vunpack.c.h.b16 %v821
    %v2953 = vunpack.c.l.b16 %v822
    %v2954 = vunpack.c.h.b16 %v822
    %v2955 = vunpack.c.l.b16 %v823
    %v2956 = vunpack.c.h.b16 %v823
    %v2957 = vunpack.c.l.b16 %v824
    %v2958 = vunpack.c.h.b16 %v824
    %v2959 = vunpack.c.l.b16 %v825
    %v2960 = vunpack.c.h.b16 %v825
    %v2961 = vunpack.c.l.b16 %v826
    %v2962 = vunpack.c.h.b16 %v826
    %v2963 = vunpack.c.l.b16 %v827
    %v2964 = vunpack.c.h.b16 %v827
    %v2965 = vunpack.c.l.b16 %v828
    %v2966 = vunpack.c.h.b16 %v828
    %v2967 = vunpack.c.l.b16 %v829
    %v2968 = vunpack.c.h.b16 %v829
    %v2969 = vunpack.c.l.b16 %v830
    %v2970 = vunpack.c.h.b16 %v830
    %v2971 = vunpack.c.l.b16 %v831
    %v2972 = vunpack.c.h.b16 %v831
    %v2973 = vunpack.c.l.b16 %v832
    %v2974 = vunpack.c.h.b16 %v832
    %v2975 = vunpack.c.l.b16 %v833
    %v2976 = vunpack.c.h.b16 %v833
    %v2977 = vunpack.c.l.b16 %v834
    %v2978 = vunpack.c.h.b16 %v834
    %v2979 = vunpack.c.l.b16 %v835
    %v2980 = vunpack.c.h.b16 %v835
    %v2981 = vunpack.c.l.b16 %v836
    %v2982 = vunpack.c.h.b16 %v836
    %v2983 = vunpack.c.l.b16 %v837
    %v2984 = vunpack.c.h.b16 %v837
    %v2985 = vunpack.c.l.b16 %v838
    %v2986 = vunpack.c.h.b16 %v838
    %v2987 = vunpack.c.l.b16 %v839
    %v2988 = vunpack.c.h.b16 %v839
    %v2989 = vunpack.c.l.b16 %v840
    %v2990 = vunpack.c.h.b16 %v840
    %v2991 = vunpack.c.l.b16 %v841
    %v2992 = vunpack.c.h.b16 %v841
    %v2993 = vunpack.c.l.b16 %v842
    %v2994 = vunpack.c.h.b16 %v842
    %v2995 = vunpack.c.l.b16 %v843
    %v2996 = vunpack.c.h.b16 %v843
    %v2997 = vunpack.c.l.b16 %v844
    %v2998 = vunpack.c.h.b16 %v844
    %v2999 = vunpack.c.l.b16 %v845
    %v3000 = vunpack.c.h.b16 %v845
    %v3001 = vunpack.c.l.b16 %v846
    %v3002 = vunpack.c.h.b16 %v846
    %v3003 = vunpack.c.l.b16 %v847
    %v3004 = vunpack.c.h.b16 %v847
    %v3005 = vunpack.c.l.b16 %v848
    %v3006 = vunpack.c.h.b16 %v848
    %v3007 = vunpack.c.l.b16 %v849
    %v3008 = vunpack.c.h.b16 %v849
    %v3009 = vunpack.c.l.b16 %v850
    %v3010 = vunpack.c.h.b16 %v850
    %v3011 = vunpack.c.l.b16 %v851
    %v3012 = vunpack.c.h.b16 %v851
    %v3013 = vunpack.c.l.b16 %v852
    %v3014 = vunpack.c.h.b16 %v852
    %v3015 = vunpack.c.l.b16 %v853
    %v3016 = vunpack.c.h.b16 %v853
    %v3017 = vunpack.c.l.b16 %v854
    %v3018 = vunpack.c.h.b16 %v854
    %v3019 = vunpack.c.l.b16 %v855
    %v3020 = vunpack.c.h.b16 %v855
    %v3021 = vunpack.c.l.b16 %v856
    %v3022 = vunpack.c.h.b16 %v856
    %v3023 = vunpack.c.l.b16 %v857
    %v3024 = vunpack.c.h.b16 %v857
    %v3025 = vunpack.c.l.b16 %v858
    %v3026 = vunpack.c.h.b16 %v858
    %v3027 = vunpack.c.l.b16 %v859
    %v3028 = vunpack.c.h.b16 %v859
    %v3029 = vunpack.c.l.b16 %v860
    %v3030 = vunpack.c.h.b16 %v860
    %v3031 = vunpack.c.l.b16 %v861
    %v3032 = vunpack.c.h.b16 %v861
    %v3033 = vunpack.c.l.b16 %v862
    %v3034 = vunpack.c.h.b16 %v862
    %v3035 = vunpack.c.l.b16 %v863
    %v3036 = vunpack.c.h.b16 %v863
    %v3037 = vunpack.c.l.b16 %v864
    %v3038 = vunpack.c.h.b16 %v864
    %v3039 = vunpack.c.l.b16 %v865
    %v3040 = vunpack.c.h.b16 %v865
    %v3041 = vunpack.c.l.b16 %v866
    %v3042 = vunpack.c.h.b16 %v866
    %v3043 = vunpack.c.l.b16 %v867
    %v3044 = vunpack.c.h.b16 %v867
    %v3045 = vunpack.c.l.b16 %v868
    %v3046 = vunpack.c.h.b16 %v868
    %v3047 = vunpack.c.l.b16 %v869
    %v3048 = vunpack.c.h.b16 %v869
    %v3049 = vunpack.c.l.b16 %v870
    %v3050 = vunpack.c.h.b16 %v870
    %v3051 = vunpack.c.l.b16 %v871
    %v3052 = vunpack.c.h.b16 %v871
    %v3053 = vunpack.c.l.b16 %v872
    %v3054 = vunpack.c.h.b16 %v872
    %v3055 = vunpack.c.l.b16 %v873
    %v3056 = vunpack.c.h.b16 %v873
    %v3057 = vunpack.c.l.b16 %v874
    %v3058 = vunpack.c.h.b16 %v874
    %v3059 = vunpack.c.l.b16 %v875
    %v3060 = vunpack.c.h.b16 %v875
    %v3061 = vunpack.c.l.b16 %v876
    %v3062 = vunpack.c.h.b16 %v876
    %v3063 = vunpack.c.l.b16 %v877
    %v3064 = vunpack.c.h.b16 %v877
    %v3065 = vunpack.c.l.b16 %v878
    %v3066 = vunpack.c.h.b16 %v878
    %v3067 = vunpack.c.l.b16 %v879
    %v3068 = vunpack.c.h.b16 %v879
    %v3069 = vunpack.c.l.b16 %v880
    %v3070 = vunpack.c.h.b16 %v880
    %v3071 = vunpack.c.l.b16 %v881
    %v3072 = vunpack.c.h.b16 %v881
    %v3073 = vunpack.c.l.b16 %v882
    %v3074 = vunpack.c.h.b16 %v882
    %v3075 = vunpack.c.l.b16 %v883
    %v3076 = vunpack.c.h.b16 %v883
    %v3077 = vunpack.c.l.b16 %v884
    %v3078 = vunpack.c.h.b16 %v884
    %v3079 = vunpack.c.l.b16 %v885
    %v3080 = vunpack.c.h.b16 %v885
    %v3081 = vunpack.c.l.b16 %v886
    %v3082 = vunpack.c.h.b16 %v886
    %v3083 = vunpack.c.l.b16 %v887
    %v3084 = vunpack.c.h.b16 %v887
    %v3085 = vunpack.c.l.b16 %v888
    %v3086 = vunpack.c.h.b16 %v888
    %v3087 = vunpack.c.l.b16 %v889
    %v3088 = vunpack.c.h.b16 %v889
    %v3089 = vunpack.c.l.b16 %v890
    %v3090 = vunpack.c.h.b16 %v890
    %v3091 = vunpack.c.l.b16 %v891
    %v3092 = vunpack.c.h.b16 %v891
    %v3093 = vunpack.c.l.b16 %v892
    %v3094 = vunpack.c.h.b16 %v892
    %v3095 = vunpack.c.l.b16 %v893
    %v3096 = vunpack.c.h.b16 %v893
    %v3097 = vunpack.c.l.b16 %v894
    %v3098 = vunpack.c.h.b16 %v894
    %v3099 = vunpack.c.l.b16 %v895
    %v3100 = vunpack.c.h.b16 %v895
    %v3101 = vunpack.c.l.b16 %v896
    %v3102 = vunpack.c.h.b16 %v896
    %v3103 = vunpack.c.l.b16 %v897
    %v3104 = vunpack.c.h.b16 %v897
    %v3105 = vunpack.c.l.b16 %v898
    %v3106 = vunpack.c.h.b16 %v898
    %v3107 = vunpack.c.l.b16 %v899
    %v3108 = vunpack.c.h.b16 %v899
    %v3109 = vunpack.c.l.b16 %v900
    %v3110 = vunpack.c.h.b16 %v900
    %v3111 = vunpack.c.l.b16 %v901
    %v3112 = vunpack.c.h.b16 %v901
    %v3113 = vunpack.c.l.b16 %v902
    %v3114 = vunpack.c.h.b16 %v902
    %v3115 = vunpack.c.l.b16 %v903
    %v3116 = vunpack.c.h.b16 %v903
    %v3117 = vunpack.c.l.b16 %v904
    %v3118 = vunpack.c.h.b16 %v904
    %v3119 = vunpack.c.l.b16 %v905
    %v3120 = vunpack.c.h.b16 %v905
    %v3121 = vunpack.c.l.b16 %v906
    %v3122 = vunpack.c.h.b16 %v906
    %v3123 = vunpack.c.l.b16 %v907
    %v3124 = vunpack.c.h.b16 %v907
    %v3125 = vunpack.c.l.b16 %v908
    %v3126 = vunpack.c.h.b16 %v908
    %v3127 = vunpack.c.l.b16 %v909
    %v3128 = vunpack.c.h.b16 %v909
    %v3129 = vunpack.c.l.b16 %v910
    %v3130 = vunpack.c.h.b16 %v910
    %v3131 = vunpack.c.l.b16 %v911
    %v3132 = vunpack.c.h.b16 %v911
    %v3133 = vunpack.c.l.b16 %v912
    %v3134 = vunpack.c.h.b16 %v912
    %v3135 = vunpack.c.l.b16 %v913
    %v3136 = vunpack.c.h.b16 %v913
    %v3137 = vunpack.c.l.b16 %v914
    %v3138 = vunpack.c.h.b16 %v914
    %v3139 = vunpack.c.l.b16 %v915
    %v3140 = vunpack.c.h.b16 %v915
    %v3141 = vunpack.c.l.b16 %v916
    %v3142 = vunpack.c.h.b16 %v916
    %v3143 = vunpack.c.l.b16 %v917
    %v3144 = vunpack.c.h.b16 %v917
    %v3145 = vunpack.c.l.b16 %v918
    %v3146 = vunpack.c.h.b16 %v918
    %v3147 = vunpack.c.l.b16 %v919
    %v3148 = vunpack.c.h.b16 %v919
    %v3149 = vunpack.c.l.b16 %v920
    %v3150 = vunpack.c.h.b16 %v920
    %v3151 = vunpack.c.l.b16 %v921
    %v3152 = vunpack.c.h.b16 %v921
    %v3153 = vunpack.c.l.b16 %v922
    %v3154 = vunpack.c.h.b16 %v922
    %v3155 = vunpack.c.l.b16 %v923
    %v3156 = vunpack.c.h.b16 %v923
    %v3157 = vunpack.c.l.b16 %v924
    %v3158 = vunpack.c.h.b16 %v924
    %v3159 = vunpack.c.l.b16 %v925
    %v3160 = vunpack.c.h.b16 %v925
    %v3161 = vunpack.c.l.b16 %v926
    %v3162 = vunpack.c.h.b16 %v926
    %v3163 = vunpack.c.l.b16 %v927
    %v3164 = vunpack.c.h.b16 %v927
    %v3165 = vunpack.c.l.b16 %v928
    %v3166 = vunpack.c.h.b16 %v928
    %v3167 = vunpack.c.l.b16 %v929
    %v3168 = vunpack.c.h.b16 %v929
    %v3169 = vunpack.c.l.b16 %v930
    %v3170 = vunpack.c.h.b16 %v930
    %v3171 = vunpack.c.l.b16 %v931
    %v3172 = vunpack.c.h.b16 %v931
    %v3173 = vunpack.c.l.b16 %v932
    %v3174 = vunpack.c.h.b16 %v932
    %v3175 = vunpack.c.l.b16 %v933
    %v3176 = vunpack.c.h.b16 %v933
    %v3177 = vunpack.c.l.b16 %v934
    %v3178 = vunpack.c.h.b16 %v934
    %v3179 = vunpack.c.l.b16 %v935
    %v3180 = vunpack.c.h.b16 %v935
    %v3181 = vunpack.c.l.b16 %v936
    %v3182 = vunpack.c.h.b16 %v936
    %v3183 = vunpack.c.l.b16 %v937
    %v3184 = vunpack.c.h.b16 %v937
    %v3185 = vunpack.c.l.b16 %v938
    %v3186 = vunpack.c.h.b16 %v938
    %v3187 = vunpack.c.l.b16 %v939
    %v3188 = vunpack.c.h.b16 %v939
    %v3189 = vunpack.c.l.b16 %v940
    %v3190 = vunpack.c.h.b16 %v940
    %v3191 = vunpack.c.l.b16 %v941
    %v3192 = vunpack.c.h.b16 %v941
    %v3193 = vunpack.c.l.b16 %v942
    %v3194 = vunpack.c.h.b16 %v942
    %v3195 = vunpack.c.l.b16 %v943
    %v3196 = vunpack.c.h.b16 %v943
    %v3197 = vunpack.c.l.b16 %v944
    %v3198 = vunpack.c.h.b16 %v944
    %v3199 = vunpack.c.l.b16 %v945
    %v3200 = vunpack.c.h.b16 %v945
    %v3201 = vunpack.c.l.b16 %v946
    %v3202 = vunpack.c.h.b16 %v946
    %v3203 = vunpack.c.l.b16 %v947
    %v3204 = vunpack.c.h.b16 %v947
    %v3205 = vunpack.c.l.b16 %v948
    %v3206 = vunpack.c.h.b16 %v948
    %v3207 = vunpack.c.l.b16 %v949
    %v3208 = vunpack.c.h.b16 %v949
    %v3209 = vunpack.c.l.b16 %v950
    %v3210 = vunpack.c.h.b16 %v950
    %v3211 = vunpack.c.l.b16 %v951
    %v3212 = vunpack.c.h.b16 %v951
    %v3213 = vunpack.c.l.b16 %v952
    %v3214 = vunpack.c.h.b16 %v952
    %v3215 = vunpack.c.l.b16 %v953
    %v3216 = vunpack.c.h.b16 %v953
    %v3217 = vunpack.c.l.b16 %v954
    %v3218 = vunpack.c.h.b16 %v954
    %v3219 = vunpack.c.l.b16 %v955
    %v3220 = vunpack.c.h.b16 %v955
    %v3221 = vunpack.c.l.b16 %v956
    %v3222 = vunpack.c.h.b16 %v956
    %v3223 = vunpack.c.l.b16 %v957
    %v3224 = vunpack.c.h.b16 %v957
    %v3225 = vunpack.c.l.b16 %v958
    %v3226 = vunpack.c.h.b16 %v958
    %v3227 = vunpack.c.l.b16 %v959
    %v3228 = vunpack.c.h.b16 %v959
    %v3229 = vunpack.c.l.b16 %v960
    %v3230 = vunpack.c.h.b16 %v960
    %v3231 = vunpack.c.l.b16 %v961
    %v3232 = vunpack.c.h.b16 %v961
    %v3233 = vunpack.c.l.b16 %v962
    %v3234 = vunpack.c.h.b16 %v962
    %v3235 = vunpack.c.l.b16 %v963
    %v3236 = vunpack.c.h.b16 %v963
    %v3237 = vunpack.c.l.b16 %v964
    %v3238 = vunpack.c.h.b16 %v964
    %v3239 = vunpack.c.l.b16 %v965
    %v3240 = vunpack.c.h.b16 %v965
    %v3241 = vunpack.c.l.b16 %v966
    %v3242 = vunpack.c.h.b16 %v966
    %v3243 = vunpack.c.l.b16 %v967
    %v3244 = vunpack.c.h.b16 %v967
    %v3245 = vunpack.c.l.b16 %v968
    %v3246 = vunpack.c.h.b16 %v968
    %v3247 = vunpack.c.l.b16 %v969
    %v3248 = vunpack.c.h.b16 %v969
    %v3249 = vunpack.c.l.b16 %v970
    %v3250 = vunpack.c.h.b16 %v970
    %v3251 = vunpack.c.l.b16 %v971
    %v3252 = vunpack.c.h.b16 %v971
    %v3253 = vunpack.c.l.b16 %v972
    %v3254 = vunpack.c.h.b16 %v972
    %v3255 = vunpack.c.l.b16 %v973
    %v3256 = vunpack.c.h.b16 %v973
    %v3257 = vunpack.c.l.b16 %v974
    %v3258 = vunpack.c.h.b16 %v974
    %v3259 = vunpack.c.l.b16 %v975
    %v3260 = vunpack.c.h.b16 %v975
    %v3261 = vunpack.c.l.b16 %v976
    %v3262 = vunpack.c.h.b16 %v976
    %v3263 = vunpack.c.l.b16 %v977
    %v3264 = vunpack.c.h.b16 %v977
    %v3265 = vunpack.c.l.b16 %v978
    %v3266 = vunpack.c.h.b16 %v978
    %v3267 = vunpack.c.l.b16 %v979
    %v3268 = vunpack.c.h.b16 %v979
    %v3269 = vunpack.c.l.b16 %v980
    %v3270 = vunpack.c.h.b16 %v980
    %v3271 = vunpack.c.l.b16 %v981
    %v3272 = vunpack.c.h.b16 %v981
    %v3273 = vunpack.c.l.b16 %v982
    %v3274 = vunpack.c.h.b16 %v982
    %v3275 = vunpack.c.l.b16 %v983
    %v3276 = vunpack.c.h.b16 %v983
    %v3277 = vunpack.c.l.b16 %v984
    %v3278 = vunpack.c.h.b16 %v984
    %v3279 = vunpack.c.l.b16 %v985
    %v3280 = vunpack.c.h.b16 %v985
    %v3281 = vunpack.c.l.b16 %v986
    %v3282 = vunpack.c.h.b16 %v986
    %v3283 = vunpack.c.l.b16 %v987
    %v3284 = vunpack.c.h.b16 %v987
    %v3285 = vunpack.c.l.b16 %v988
    %v3286 = vunpack.c.h.b16 %v988
    %v3287 = vunpack.c.l.b16 %v989
    %v3288 = vunpack.c.h.b16 %v989
    %v3289 = vunpack.c.l.b16 %v990
    %v3290 = vunpack.c.h.b16 %v990
    %v3291 = vunpack.c.l.b16 %v991
    %v3292 = vunpack.c.h.b16 %v991
    %v3293 = vunpack.c.l.b16 %v992
    %v3294 = vunpack.c.h.b16 %v992
    %v3295 = vunpack.c.l.b16 %v993
    %v3296 = vunpack.c.h.b16 %v993
    %v3297 = vunpack.c.l.b16 %v994
    %v3298 = vunpack.c.h.b16 %v994
    %v3299 = vunpack.c.l.b16 %v995
    %v3300 = vunpack.c.h.b16 %v995
    %v3301 = vunpack.c.l.b16 %v996
    %v3302 = vunpack.c.h.b16 %v996
    %v3303 = vunpack.c.l.b16 %v997
    %v3304 = vunpack.c.h.b16 %v997
    %v3305 = vunpack.c.l.b16 %v998
    %v3306 = vunpack.c.h.b16 %v998
    %v3307 = vunpack.c.l.b16 %v999
    %v3308 = vunpack.c.h.b16 %v999
    %v3309 = vunpack.c.l.b16 %v1000
    %v3310 = vunpack.c.h.b16 %v1000
    %v3311 = vunpack.c.l.b16 %v1001
    %v3312 = vunpack.c.h.b16 %v1001
    %v3313 = vunpack.c.l.b16 %v1002
    %v3314 = vunpack.c.h.b16 %v1002
    %v3315 = vunpack.c.l.b16 %v1003
    %v3316 = vunpack.c.h.b16 %v1003
    %v3317 = vunpack.c.l.b16 %v1004
    %v3318 = vunpack.c.h.b16 %v1004
    %v3319 = vunpack.c.l.b16 %v1005
    %v3320 = vunpack.c.h.b16 %v1005
    %v3321 = vunpack.c.l.b16 %v1006
    %v3322 = vunpack.c.h.b16 %v1006
    %v3323 = vunpack.c.l.b16 %v1007
    %v3324 = vunpack.c.h.b16 %v1007
    %v3325 = vunpack.c.l.b16 %v1008
    %v3326 = vunpack.c.h.b16 %v1008
    %v3327 = vunpack.c.l.b16 %v1009
    %v3328 = vunpack.c.h.b16 %v1009
    %v3329 = vunpack.c.l.b16 %v1010
    %v3330 = vunpack.c.h.b16 %v1010
    %v3331 = vunpack.c.l.b16 %v1011
    %v3332 = vunpack.c.h.b16 %v1011
    %v3333 = vunpack.c.l.b16 %v1012
    %v3334 = vunpack.c.h.b16 %v1012
    %v3335 = vunpack.c.l.b16 %v1013
    %v3336 = vunpack.c.h.b16 %v1013
    %v3337 = vunpack.c.l.b16 %v1014
    %v3338 = vunpack.c.h.b16 %v1014
    %v3339 = vunpack.c.l.b16 %v1015
    %v3340 = vunpack.c.h.b16 %v1015
    %v3341 = vunpack.c.l.b16 %v1016
    %v3342 = vunpack.c.h.b16 %v1016
    %v3343 = vunpack.c.l.b16 %v1017
    %v3344 = vunpack.c.h.b16 %v1017
    %v3345 = vunpack.c.l.b16 %v1018
    %v3346 = vunpack.c.h.b16 %v1018
    %v3347 = vunpack.c.l.b16 %v1019
    %v3348 = vunpack.c.h.b16 %v1019
    %v3349 = vunpack.c.l.b16 %v1020
    %v3350 = vunpack.c.h.b16 %v1020
    %v3351 = vunpack.c.l.b16 %v1021
    %v3352 = vunpack.c.h.b16 %v1021
    %v3353 = vunpack.c.l.b16 %v1022
    %v3354 = vunpack.c.h.b16 %v1022
    %v3355 = vunpack.c.l.b16 %v1023
    %v3356 = vunpack.c.h.b16 %v1023
    %v3357 = vunpack.c.l.b16 %v1024
    %v3358 = vunpack.c.h.b16 %v1024
    %v3359 = vunpack.c.l.b16 %v1025
    %v3360 = vunpack.c.h.b16 %v1025
    %v3361 = vunpack.c.l.b16 %v1026
    %v3362 = vunpack.c.h.b16 %v1026
    %v3363 = vunpack.c.l.b16 %v1027
    %v3364 = vunpack.c.h.b16 %v1027
    %v3365 = vunpack.c.l.b16 %v1028
    %v3366 = vunpack.c.h.b16 %v1028
    %v3367 = vunpack.c.l.b16 %v1029
    %v3368 = vunpack.c.h.b16 %v1029
    %v3369 = vunpack.c.l.b16 %v1030
    %v3370 = vunpack.c.h.b16 %v1030
    %v3371 = vunpack.c.l.b16 %v1031
    %v3372 = vunpack.c.h.b16 %v1031
    %v3373 = vunpack.c.l.b16 %v1032
    %v3374 = vunpack.c.h.b16 %v1032
    %v3375 = vunpack.c.l.b16 %v1033
    %v3376 = vunpack.c.h.b16 %v1033
    %v3377 = vunpack.c.l.b16 %v1034
    %v3378 = vunpack.c.h.b16 %v1034
    %v3379 = vunpack.c.l.b16 %v1035
    %v3380 = vunpack.c.h.b16 %v1035
    %v3381 = vunpack.c.l.b16 %v1036
    %v3382 = vunpack.c.h.b16 %v1036
    %v3383 = vunpack.c.l.b16 %v1037
    %v3384 = vunpack.c.h.b16 %v1037
    %v3385 = vunpack.c.l.b16 %v1038
    %v3386 = vunpack.c.h.b16 %v1038
    %v3387 = vunpack.c.l.b16 %v1039
    %v3388 = vunpack.c.h.b16 %v1039
    %v3389 = vunpack.c.l.b16 %v1040
    %v3390 = vunpack.c.h.b16 %v1040
    %v3391 = vunpack.c.l.b16 %v1041
    %v3392 = vunpack.c.h.b16 %v1041
    %v3393 = vunpack.c.l.b16 %v1042
    %v3394 = vunpack.c.h.b16 %v1042
    %v3395 = vunpack.c.l.b16 %v1043
    %v3396 = vunpack.c.h.b16 %v1043
    %v3397 = vunpack.c.l.b16 %v1044
    %v3398 = vunpack.c.h.b16 %v1044
    %v3399 = vunpack.c.l.b16 %v1045
    %v3400 = vunpack.c.h.b16 %v1045
    %v3401 = vunpack.c.l.b16 %v1046
    %v3402 = vunpack.c.h.b16 %v1046
    %v3403 = vunpack.c.l.b16 %v1047
    %v3404 = vunpack.c.h.b16 %v1047
    %v3405 = vunpack.c.l.b16 %v1048
    %v3406 = vunpack.c.h.b16 %v1048
    %v3407 = vunpack.c.l.b16 %v1049
    %v3408 = vunpack.c.h.b16 %v1049
    %v3409 = vunpack.c.l.b16 %v1050
    %v3410 = vunpack.c.h.b16 %v1050
    %v3411 = vunpack.c.l.b16 %v1051
    %v3412 = vunpack.c.h.b16 %v1051
    %v3413 = vunpack.c.l.b16 %v1052
    %v3414 = vunpack.c.h.b16 %v1052
    %v3415 = vunpack.c.l.b16 %v1053
    %v3416 = vunpack.c.h.b16 %v1053
    %v3417 = vunpack.c.l.b16 %v1054
    %v3418 = vunpack.c.h.b16 %v1054
    %v3419 = vunpack.c.l.b16 %v1055
    %v3420 = vunpack.c.h.b16 %v1055
    %v3421 = vunpack.c.l.b16 %v1056
    %v3422 = vunpack.c.h.b16 %v1056
    %v3423 = vunpack.c.l.b16 %v1057
    %v3424 = vunpack.c.h.b16 %v1057
    %v3425 = vunpack.c.l.b16 %v1058
    %v3426 = vunpack.c.h.b16 %v1058
    %v3427 = vunpack.c.l.b16 %v1059
    %v3428 = vunpack.c.h.b16 %v1059
    %v3429 = vunpack.c.l.b16 %v1060
    %v3430 = vunpack.c.h.b16 %v1060
    %v3431 = vunpack.c.l.b16 %v1061
    %v3432 = vunpack.c.h.b16 %v1061
    %v3433 = vunpack.c.l.b16 %v1062
    %v3434 = vunpack.c.h.b16 %v1062
    %v3435 = vunpack.c.l.b16 %v1063
    %v3436 = vunpack.c.h.b16 %v1063
    %v3437 = vunpack.c.l.b16 %v1064
    %v3438 = vunpack.c.h.b16 %v1064
    %v3439 = vunpack.c.l.b16 %v1065
    %v3440 = vunpack.c.h.b16 %v1065
    %v3441 = vunpack.c.l.b16 %v1066
    %v3442 = vunpack.c.h.b16 %v1066
    %v3443 = vunpack.c.l.b16 %v1067
    %v3444 = vunpack.c.h.b16 %v1067
    %v3445 = vunpack.c.l.b16 %v1068
    %v3446 = vunpack.c.h.b16 %v1068
    %v3447 = vunpack.c.l.b16 %v1069
    %v3448 = vunpack.c.h.b16 %v1069
    %v3449 = vunpack.c.l.b16 %v1070
    %v3450 = vunpack.c.h.b16 %v1070
    %v3451 = vunpack.c.l.b16 %v1071
    %v3452 = vunpack.c.h.b16 %v1071
    %v3453 = vunpack.c.l.b16 %v1072
    %v3454 = vunpack.c.h.b16 %v1072
    %v3455 = vunpack.c.l.b16 %v1073
    %v3456 = vunpack.c.h.b16 %v1073
    %v3457 = vunpack.c.l.b16 %v1074
    %v3458 = vunpack.c.h.b16 %v1074
    %v3459 = vunpack.c.l.b16 %v1075
    %v3460 = vunpack.c.h.b16 %v1075
    %v3461 = vunpack.c.l.b16 %v1076
    %v3462 = vunpack.c.h.b16 %v1076
    %v3463 = vunpack.c.l.b16 %v1077
    %v3464 = vunpack.c.h.b16 %v1077
    %v3465 = vunpack.c.l.b16 %v1078
    %v3466 = vunpack.c.h.b16 %v1078
    %v3467 = vunpack.c.l.b16 %v1079
    %v3468 = vunpack.c.h.b16 %v1079
    %v3469 = vunpack.c.l.b16 %v1080
    %v3470 = vunpack.c.h.b16 %v1080
    %v3471 = vunpack.c.l.b16 %v1081
    %v3472 = vunpack.c.h.b16 %v1081
    %v3473 = vunpack.c.l.b16 %v1082
    %v3474 = vunpack.c.h.b16 %v1082
    %v3475 = vunpack.c.l.b16 %v1083
    %v3476 = vunpack.c.h.b16 %v1083
    %v3477 = vunpack.c.l.b16 %v1084
    %v3478 = vunpack.c.h.b16 %v1084
    %v3479 = vunpack.c.l.b16 %v1085
    %v3480 = vunpack.c.h.b16 %v1085
    %v3481 = vunpack.c.l.b16 %v1086
    %v3482 = vunpack.c.h.b16 %v1086
    %v3483 = vunpack.c.l.b16 %v1087
    %v3484 = vunpack.c.h.b16 %v1087
    %v3485 = vunpack.c.l.b16 %v1088
    %v3486 = vunpack.c.h.b16 %v1088
    %v3487 = vunpack.c.l.b16 %v1089
    %v3488 = vunpack.c.h.b16 %v1089
    %v3489 = vunpack.c.l.b16 %v1090
    %v3490 = vunpack.c.h.b16 %v1090
    %v3491 = vunpack.c.l.b16 %v1091
    %v3492 = vunpack.c.h.b16 %v1091
    %v3493 = vunpack.c.l.b16 %v1092
    %v3494 = vunpack.c.h.b16 %v1092
    %v3495 = vunpack.c.l.b16 %v1093
    %v3496 = vunpack.c.h.b16 %v1093
    %v3497 = vunpack.c.l.b16 %v1094
    %v3498 = vunpack.c.h.b16 %v1094
    %v3499 = vunpack.c.l.b16 %v1095
    %v3500 = vunpack.c.h.b16 %v1095
    %v3501 = vunpack.c.l.b16 %v1096
    %v3502 = vunpack.c.h.b16 %v1096
    %v3503 = vunpack.c.l.b16 %v1097
    %v3504 = vunpack.c.h.b16 %v1097
    %v3505 = vunpack.c.l.b16 %v1098
    %v3506 = vunpack.c.h.b16 %v1098
    %v3507 = vunpack.c.l.b16 %v1099
    %v3508 = vunpack.c.h.b16 %v1099
    %v3509 = vunpack.c.l.b16 %v1100
    %v3510 = vunpack.c.h.b16 %v1100
    %v3511 = vpack.c.b16 %v1979, %v1975
    %v3512 = vpack.c.b16 %v1980, %v1976
    %v3513 = vpack.c.b16 %v1981, %v1977
    %v3514 = vpack.c.b16 %v1982, %v1978
    %v3515 = vpack.c.b16 %v1987, %v1983
    %v3516 = vpack.c.b16 %v1988, %v1984
    %v3517 = vpack.c.b16 %v1989, %v1985
    %v3518 = vpack.c.b16 %v1990, %v1986
    %v3519 = vpack.c.b16 %v1995, %v1991
    %v3520 = vpack.c.b16 %v1996, %v1992
    %v3521 = vpack.c.b16 %v1997, %v1993
    %v3522 = vpack.c.b16 %v1998, %v1994
    %v3523 = vpack.c.b16 %v2003, %v1999
    %v3524 = vpack.c.b16 %v2004, %v2000
    %v3525 = vpack.c.b16 %v2005, %v2001
    %v3526 = vpack.c.b16 %v2006, %v2002
    %v3527 = vpack.c.b16 %v2011, %v2007
    %v3528 = vpack.c.b16 %v2012, %v2008
    %v3529 = vpack.c.b16 %v2013, %v2009
    %v3530 = vpack.c.b16 %v2014, %v2010
    %v3531 = vpack.c.b16 %v2019, %v2015
    %v3532 = vpack.c.b16 %v2020, %v2016
    %v3533 = vpack.c.b16 %v2021, %v2017
    %v3534 = vpack.c.b16 %v2022, %v2018
    %v3535 = vpack.c.b16 %v2027, %v2023
    %v3536 = vpack.c.b16 %v2028, %v2024
    %v3537 = vpack.c.b16 %v2029, %v2025
    %v3538 = vpack.c.b16 %v2030, %v2026
    %v3539 = vpack.c.b16 %v2035, %v2031
    %v3540 = vpack.c.b16 %v2036, %v2032
    %v3541 = vpack.c.b16 %v2037, %v2033
    %v3542 = vpack.c.b16 %v2038, %v2034
    %v3543 = vpack.c.b16 %v2043, %v2039
    %v3544 = vpack.c.b16 %v2044, %v2040
    %v3545 = vpack.c.b16 %v2045, %v2041
    %v3546 = vpack.c.b16 %v2046, %v2042
    %v3547 = vpack.c.b16 %v2051, %v2047
    %v3548 = vpack.c.b16 %v2052, %v2048
    %v3549 = vpack.c.b16 %v2053, %v2049
    %v3550 = vpack.c.b16 %v2054, %v2050
    %v3551 = vpack.c.b16 %v2059, %v2055
    %v3552 = vpack.c.b16 %v2060, %v2056
    %v3553 = vpack.c.b16 %v2061, %v2057
    %v3554 = vpack.c.b16 %v2062, %v2058
    %v3555 = vpack.c.b16 %v2067, %v2063
    %v3556 = vpack.c.b16 %v2068, %v2064
    %v3557 = vpack.c.b16 %v2069, %v2065
    %v3558 = vpack.c.b16 %v2070, %v2066
    %v3559 = vpack.c.b16 %v2075, %v2071
    %v3560 = vpack.c.b16 %v2076, %v2072
    %v3561 = vpack.c.b16 %v2077, %v2073
    %v3562 = vpack.c.b16 %v2078, %v2074
    %v3563 = vpack.c.b16 %v2083, %v2079
    %v3564 = vpack.c.b16 %v2084, %v2080
    %v3565 = vpack.c.b16 %v2085, %v2081
    %v3566 = vpack.c.b16 %v2086, %v2082
    %v3567 = vpack.c.b16 %v2091, %v2087
    %v3568 = vpack.c.b16 %v2092, %v2088
    %v3569 = vpack.c.b16 %v2093, %v2089
    %v3570 = vpack.c.b16 %v2094, %v2090
    %v3571 = vpack.c.b16 %v2099, %v2095
    %v3572 = vpack.c.b16 %v2100, %v2096
    %v3573 = vpack.c.b16 %v2101, %v2097
    %v3574 = vpack.c.b16 %v2102, %v2098
    %v3575 = vpack.c.b16 %v2107, %v2103
    %v3576 = vpack.c.b16 %v2108, %v2104
    %v3577 = vpack.c.b16 %v2109, %v2105
    %v3578 = vpack.c.b16 %v2110, %v2106
    %v3579 = vpack.c.b16 %v2115, %v2111
    %v3580 = vpack.c.b16 %v2116, %v2112
    %v3581 = vpack.c.b16 %v2117, %v2113
    %v3582 = vpack.c.b16 %v2118, %v2114
    %v3583 = vpack.c.b16 %v2123, %v2119
    %v3584 = vpack.c.b16 %v2124, %v2120
    %v3585 = vpack.c.b16 %v2125, %v2121
    %v3586 = vpack.c.b16 %v2126, %v2122
    %v3587 = vpack.c.b16 %v2131, %v2127
    %v3588 = vpack.c.b16 %v2132, %v2128
    %v3589 = vpack.c.b16 %v2133, %v2129
    %v3590 = vpack.c.b16 %v2134, %v2130
    %v3591 = vpack.c.b16 %v2139, %v2135
    %v3592 = vpack.c.b16 %v2140, %v2136
    %v3593 = vpack.c.b16 %v2141, %v2137
    %v3594 = vpack.c.b16 %v2142, %v2138
    %v3595 = vpack.c.b16 %v2147, %v2143
    %v3596 = vpack.c.b16 %v2148, %v2144
    %v3597 = vpack.c.b16 %v2149, %v2145
    %v3598 = vpack.c.b16 %v2150, %v2146
    %v3599 = vpack.c.b16 %v2155, %v2151
    %v3600 = vpack.c.b16 %v2156, %v2152
    %v3601 = vpack.c.b16 %v2157, %v2153
    %v3602 = vpack.c.b16 %v2158, %v2154
    %v3603 = vpack.c.b16 %v2163, %v2159
    %v3604 = vpack.c.b16 %v2164, %v2160
    %v3605 = vpack.c.b16 %v2165, %v2161
    %v3606 = vpack.c.b16 %v2166, %v2162
    %v3607 = vpack.c.b16 %v2171, %v2167
    %v3608 = vpack.c.b16 %v2172, %v2168
    %v3609 = vpack.c.b16 %v2173, %v2169
    %v3610 = vpack.c.b16 %v2174, %v2170
    %v3611 = vpack.c.b16 %v2179, %v2175
    %v3612 = vpack.c.b16 %v2180, %v2176
    %v3613 = vpack.c.b16 %v2181, %v2177
    %v3614 = vpack.c.b16 %v2182, %v2178
    %v3615 = vpack.c.b16 %v2187, %v2183
    %v3616 = vpack.c.b16 %v2188, %v2184
    %v3617 = vpack.c.b16 %v2189, %v2185
    %v3618 = vpack.c.b16 %v2190, %v2186
    %v3619 = vpack.c.b16 %v2195, %v2191
    %v3620 = vpack.c.b16 %v2196, %v2192
    %v3621 = vpack.c.b16 %v2197, %v2193
    %v3622 = vpack.c.b16 %v2198, %v2194
    %v3623 = vpack.c.b16 %v2203, %v2199
    %v3624 = vpack.c.b16 %v2204, %v2200
    %v3625 = vpack.c.b16 %v2205, %v2201
    %v3626 = vpack.c.b16 %v2206, %v2202
    %v3627 = vpack.c.b16 %v2211, %v2207
    %v3628 = vpack.c.b16 %v2212, %v2208
    %v3629 = vpack.c.b16 %v2213, %v2209
    %v3630 = vpack.c.b16 %v2214, %v2210
    %v3631 = vpack.c.b16 %v2219, %v2215
    %v3632 = vpack.c.b16 %v2220, %v2216
    %v3633 = vpack.c.b16 %v2221, %v2217
    %v3634 = vpack.c.b16 %v2222, %v2218
    %v3635 = vpack.c.b16 %v2227, %v2223
    %v3636 = vpack.c.b16 %v2228, %v2224
    %v3637 = vpack.c.b16 %v2229, %v2225
    %v3638 = vpack.c.b16 %v2230, %v2226
    %v3639 = vpack.c.b16 %v2235, %v2231
    %v3640 = vpack.c.b16 %v2236, %v2232
    %v3641 = vpack.c.b16 %v2237, %v2233
    %v3642 = vpack.c.b16 %v2238, %v2234
    %v3643 = vpack.c.b16 %v2243, %v2239
    %v3644 = vpack.c.b16 %v2244, %v2240
    %v3645 = vpack.c.b16 %v2245, %v2241
    %v3646 = vpack.c.b16 %v2246, %v2242
    %v3647 = vpack.c.b16 %v2251, %v2247
    %v3648 = vpack.c.b16 %v2252, %v2248
    %v3649 = vpack.c.b16 %v2253, %v2249
    %v3650 = vpack.c.b16 %v2254, %v2250
    %v3651 = vpack.c.b16 %v2259, %v2255
    %v3652 = vpack.c.b16 %v2260, %v2256
    %v3653 = vpack.c.b16 %v2261, %v2257
    %v3654 = vpack.c.b16 %v2262, %v2258
    %v3655 = vpack.c.b16 %v2267, %v2263
    %v3656 = vpack.c.b16 %v2268, %v2264
    %v3657 = vpack.c.b16 %v2269, %v2265
    %v3658 = vpack.c.b16 %v2270, %v2266
    %v3659 = vpack.c.b16 %v2275, %v2271
    %v3660 = vpack.c.b16 %v2276, %v2272
    %v3661 = vpack.c.b16 %v2277, %v2273
    %v3662 = vpack.c.b16 %v2278, %v2274
    %v3663 = vpack.c.b16 %v2283, %v2279
    %v3664 = vpack.c.b16 %v2284, %v2280
    %v3665 = vpack.c.b16 %v2285, %v2281
    %v3666 = vpack.c.b16 %v2286, %v2282
    %v3667 = vpack.c.b16 %v2291, %v2287
    %v3668 = vpack.c.b16 %v2292, %v2288
    %v3669 = vpack.c.b16 %v2293, %v2289
    %v3670 = vpack.c.b16 %v2294, %v2290
    %v3671 = vpack.c.b16 %v2299, %v2295
    %v3672 = vpack.c.b16 %v2300, %v2296
    %v3673 = vpack.c.b16 %v2301, %v2297
    %v3674 = vpack.c.b16 %v2302, %v2298
    %v3675 = vpack.c.b16 %v2307, %v2303
    %v3676 = vpack.c.b16 %v2308, %v2304
    %v3677 = vpack.c.b16 %v2309, %v2305
    %v3678 = vpack.c.b16 %v2310, %v2306
    %v3679 = vpack.c.b16 %v2315, %v2311
    %v3680 = vpack.c.b16 %v2316, %v2312
    %v3681 = vpack.c.b16 %v2317, %v2313
    %v3682 = vpack.c.b16 %v2318, %v2314
    %v3683 = vpack.c.b16 %v2323, %v2319
    %v3684 = vpack.c.b16 %v2324, %v2320
    %v3685 = vpack.c.b16 %v2325, %v2321
    %v3686 = vpack.c.b16 %v2326, %v2322
    %v3687 = vpack.c.b16 %v2331, %v2327
    %v3688 = vpack.c.b16 %v2332, %v2328
    %v3689 = vpack.c.b16 %v2333, %v2329
    %v3690 = vpack.c.b16 %v2334, %v2330
    %v3691 = vpack.c.b16 %v2339, %v2335
    %v3692 = vpack.c.b16 %v2340, %v2336
    %v3693 = vpack.c.b16 %v2341, %v2337
    %v3694 = vpack.c.b16 %v2342, %v2338
    %v3695 = vpack.c.b16 %v2347, %v2343
    %v3696 = vpack.c.b16 %v2348, %v2344
    %v3697 = vpack.c.b16 %v2349, %v2345
    %v3698 = vpack.c.b16 %v2350, %v2346
    %v3699 = vpack.c.b16 %v2355, %v2351
    %v3700 = vpack.c.b16 %v2356, %v2352
    %v3701 = vpack.c.b16 %v2357, %v2353
    %v3702 = vpack.c.b16 %v2358, %v2354
    %v3703 = vpack.c.b16 %v2363, %v2359
    %v3704 = vpack.c.b16 %v2364, %v2360
    %v3705 = vpack.c.b16 %v2365, %v2361
    %v3706 = vpack.c.b16 %v2366, %v2362
    %v3707 = vpack.c.b16 %v2371, %v2367
    %v3708 = vpack.c.b16 %v2372, %v2368
    %v3709 = vpack.c.b16 %v2373, %v2369
    %v3710 = vpack.c.b16 %v2374, %v2370
    %v3711 = vpack.c.b16 %v2379, %v2375
    %v3712 = vpack.c.b16 %v2380, %v2376
    %v3713 = vpack.c.b16 %v2381, %v2377
    %v3714 = vpack.c.b16 %v2382, %v2378
    %v3715 = vpack.c.b16 %v2387, %v2383
    %v3716 = vpack.c.b16 %v2388, %v2384
    %v3717 = vpack.c.b16 %v2389, %v2385
    %v3718 = vpack.c.b16 %v2390, %v2386
    %v3719 = vpack.c.b16 %v2395, %v2391
    %v3720 = vpack.c.b16 %v2396, %v2392
    %v3721 = vpack.c.b16 %v2397, %v2393
    %v3722 = vpack.c.b16 %v2398, %v2394
    %v3723 = vpack.c.b16 %v2403, %v2399
    %v3724 = vpack.c.b16 %v2404, %v2400
    %v3725 = vpack.c.b16 %v2405, %v2401
    %v3726 = vpack.c.b16 %v2406, %v2402
    %v3727 = vpack.c.b16 %v2411, %v2407
    %v3728 = vpack.c.b16 %v2412, %v2408
    %v3729 = vpack.c.b16 %v2413, %v2409
    %v3730 = vpack.c.b16 %v2414, %v2410
    %v3731 = vpack.c.b16 %v2419, %v2415
    %v3732 = vpack.c.b16 %v2420, %v2416
    %v3733 = vpack.c.b16 %v2421, %v2417
    %v3734 = vpack.c.b16 %v2422, %v2418
    %v3735 = vpack.c.b16 %v2427, %v2423
    %v3736 = vpack.c.b16 %v2428, %v2424
    %v3737 = vpack.c.b16 %v2429, %v2425
    %v3738 = vpack.c.b16 %v2430, %v2426
    %v3739 = vpack.c.b16 %v2435, %v2431
    %v3740 = vpack.c.b16 %v2436, %v2432
    %v3741 = vpack.c.b16 %v2437, %v2433
    %v3742 = vpack.c.b16 %v2438, %v2434
    %v3743 = vpack.c.b16 %v2443, %v2439
    %v3744 = vpack.c.b16 %v2444, %v2440
    %v3745 = vpack.c.b16 %v2445, %v2441
    %v3746 = vpack.c.b16 %v2446, %v2442
    %v3747 = vpack.c.b16 %v2451, %v2447
    %v3748 = vpack.c.b16 %v2452, %v2448
    %v3749 = vpack.c.b16 %v2453, %v2449
    %v3750 = vpack.c.b16 %v2454, %v2450
    %v3751 = vpack.c.b16 %v2459, %v2455
    %v3752 = vpack.c.b16 %v2460, %v2456
    %v3753 = vpack.c.b16 %v2461, %v2457
    %v3754 = vpack.c.b16 %v2462, %v2458
    %v3755 = vpack.c.b16 %v2467, %v2463
    %v3756 = vpack.c.b16 %v2468, %v2464
    %v3757 = vpack.c.b16 %v2469, %v2465
    %v3758 = vpack.c.b16 %v2470, %v2466
    %v3759 = vpack.c.b16 %v2475, %v2471
    %v3760 = vpack.c.b16 %v2476, %v2472
    %v3761 = vpack.c.b16 %v2477, %v2473
    %v3762 = vpack.c.b16 %v2478, %v2474
    %v3763 = vpack.c.b16 %v2483, %v2479
    %v3764 = vpack.c.b16 %v2484, %v2480
    %v3765 = vpack.c.b16 %v2485, %v2481
    %v3766 = vpack.c.b16 %v2486, %v2482
    %v3767 = vpack.c.b16 %v2491, %v2487
    %v3768 = vpack.c.b16 %v2492, %v2488
    %v3769 = vpack.c.b16 %v2493, %v2489
    %v3770 = vpack.c.b16 %v2494, %v2490
    %v3771 = vpack.c.b16 %v2499, %v2495
    %v3772 = vpack.c.b16 %v2500, %v2496
    %v3773 = vpack.c.b16 %v2501, %v2497
    %v3774 = vpack.c.b16 %v2502, %v2498
    %v3775 = vpack.c.b16 %v2507, %v2503
    %v3776 = vpack.c.b16 %v2508, %v2504
    %v3777 = vpack.c.b16 %v2509, %v2505
    %v3778 = vpack.c.b16 %v2510, %v2506
    %v3779 = vpack.c.b16 %v2515, %v2511
    %v3780 = vpack.c.b16 %v2516, %v2512
    %v3781 = vpack.c.b16 %v2517, %v2513
    %v3782 = vpack.c.b16 %v2518, %v2514
    %v3783 = vpack.c.b16 %v2523, %v2519
    %v3784 = vpack.c.b16 %v2524, %v2520
    %v3785 = vpack.c.b16 %v2525, %v2521
    %v3786 = vpack.c.b16 %v2526, %v2522
    %v3787 = vpack.c.b16 %v2531, %v2527
    %v3788 = vpack.c.b16 %v2532, %v2528
    %v3789 = vpack.c.b16 %v2533, %v2529
    %v3790 = vpack.c.b16 %v2534, %v2530
    %v3791 = vpack.c.b16 %v2539, %v2535
    %v3792 = vpack.c.b16 %v2540, %v2536
    %v3793 = vpack.c.b16 %v2541, %v2537
    %v3794 = vpack.c.b16 %v2542, %v2538
    %v3795 = vpack.c.b16 %v2547, %v2543
    %v3796 = vpack.c.b16 %v2548, %v2544
    %v3797 = vpack.c.b16 %v2549, %v2545
    %v3798 = vpack.c.b16 %v2550, %v2546
    %v3799 = vpack.c.b16 %v2555, %v2551
    %v3800 = vpack.c.b16 %v2556, %v2552
    %v3801 = vpack.c.b16 %v2557, %v2553
    %v3802 = vpack.c.b16 %v2558, %v2554
    %v3803 = vpack.c.b16 %v2563, %v2559
    %v3804 = vpack.c.b16 %v2564, %v2560
    %v3805 = vpack.c.b16 %v2565, %v2561
    %v3806 = vpack.c.b16 %v2566, %v2562
    %v3807 = vpack.c.b16 %v2571, %v2567
    %v3808 = vpack.c.b16 %v2572, %v2568
    %v3809 = vpack.c.b16 %v2573, %v2569
    %v3810 = vpack.c.b16 %v2574, %v2570
    %v3811 = vpack.c.b16 %v2579, %v2575
    %v3812 = vpack.c.b16 %v2580, %v2576
    %v3813 = vpack.c.b16 %v2581, %v2577
    %v3814 = vpack.c.b16 %v2582, %v2578
    %v3815 = vpack.c.b16 %v2587, %v2583
    %v3816 = vpack.c.b16 %v2588, %v2584
    %v3817 = vpack.c.b16 %v2589, %v2585
    %v3818 = vpack.c.b16 %v2590, %v2586
    %v3819 = vpack.c.b16 %v2595, %v2591
    %v3820 = vpack.c.b16 %v2596, %v2592
    %v3821 = vpack.c.b16 %v2597, %v2593
    %v3822 = vpack.c.b16 %v2598, %v2594
    %v3823 = vpack.c.b16 %v2603, %v2599
    %v3824 = vpack.c.b16 %v2604, %v2600
    %v3825 = vpack.c.b16 %v2605, %v2601
    %v3826 = vpack.c.b16 %v2606, %v2602
    %v3827 = vpack.c.b16 %v2611, %v2607
    %v3828 = vpack.c.b16 %v2612, %v2608
    %v3829 = vpack.c.b16 %v2613, %v2609
    %v3830 = vpack.c.b16 %v2614, %v2610
    %v3831 = vpack.c.b16 %v2619, %v2615
    %v3832 = vpack.c.b16 %v2620, %v2616
    %v3833 = vpack.c.b16 %v2621, %v2617
    %v3834 = vpack.c.b16 %v2622, %v2618
    %v3835 = vpack.c.b16 %v2627, %v2623
    %v3836 = vpack.c.b16 %v2628, %v2624
    %v3837 = vpack.c.b16 %v2629, %v2625
    %v3838 = vpack.c.b16 %v2630, %v2626
    %v3839 = vpack.c.b16 %v2635, %v2631
    %v3840 = vpack.c.b16 %v2636, %v2632
    %v3841 = vpack.c.b16 %v2637, %v2633
    %v3842 = vpack.c.b16 %v2638, %v2634
    %v3843 = vpack.c.b16 %v2643, %v2639
    %v3844 = vpack.c.b16 %v2644, %v2640
    %v3845 = vpack.c.b16 %v2645, %v2641
    %v3846 = vpack.c.b16 %v2646, %v2642
    %v3847 = vpack.c.b16 %v2651, %v2647
    %v3848 = vpack.c.b16 %v2652, %v2648
    %v3849 = vpack.c.b16 %v2653, %v2649
    %v3850 = vpack.c.b16 %v2654, %v2650
    %v3851 = vpack.c.b16 %v2659, %v2655
    %v3852 = vpack.c.b16 %v2660, %v2656
    %v3853 = vpack.c.b16 %v2661, %v2657
    %v3854 = vpack.c.b16 %v2662, %v2658
    %v3855 = vpack.c.b16 %v2667, %v2663
    %v3856 = vpack.c.b16 %v2668, %v2664
    %v3857 = vpack.c.b16 %v2669, %v2665
    %v3858 = vpack.c.b16 %v2670, %v2666
    %v3859 = vpack.c.b16 %v2675, %v2671
    %v3860 = vpack.c.b16 %v2676, %v2672
    %v3861 = vpack.c.b16 %v2677, %v2673
    %v3862 = vpack.c.b16 %v2678, %v2674
    %v3863 = vpack.c.b16 %v2683, %v2679
    %v3864 = vpack.c.b16 %v2684, %v2680
    %v3865 = vpack.c.b16 %v2685, %v2681
    %v3866 = vpack.c.b16 %v2686, %v2682
    %v3867 = vpack.c.b16 %v2691, %v2687
    %v3868 = vpack.c.b16 %v2692, %v2688
    %v3869 = vpack.c.b16 %v2693, %v2689
    %v3870 = vpack.c.b16 %v2694, %v2690
    %v3871 = vpack.c.b16 %v2699, %v2695
    %v3872 = vpack.c.b16 %v2700, %v2696
    %v3873 = vpack.c.b16 %v2701, %v2697
    %v3874 = vpack.c.b16 %v2702, %v2698
    %v3875 = vpack.c.b16 %v2707, %v2703
    %v3876 = vpack.c.b16 %v2708, %v2704
    %v3877 = vpack.c.b16 %v2709, %v2705
    %v3878 = vpack.c.b16 %v2710, %v2706
    %v3879 = vpack.c.b16 %v2715, %v2711
    %v3880 = vpack.c.b16 %v2716, %v2712
    %v3881 = vpack.c.b16 %v2717, %v2713
    %v3882 = vpack.c.b16 %v2718, %v2714
    %v3883 = vpack.c.b16 %v2723, %v2719
    %v3884 = vpack.c.b16 %v2724, %v2720
    %v3885 = vpack.c.b16 %v2725, %v2721
    %v3886 = vpack.c.b16 %v2726, %v2722
    %v3887 = vpack.c.b16 %v2731, %v2727
    %v3888 = vpack.c.b16 %v2732, %v2728
    %v3889 = vpack.c.b16 %v2733, %v2729
    %v3890 = vpack.c.b16 %v2734, %v2730
    %v3891 = vpack.c.b16 %v2739, %v2735
    %v3892 = vpack.c.b16 %v2740, %v2736
    %v3893 = vpack.c.b16 %v2741, %v2737
    %v3894 = vpack.c.b16 %v2742, %v2738
    %v3895 = vpack.c.b16 %v2747, %v2743
    %v3896 = vpack.c.b16 %v2748, %v2744
    %v3897 = vpack.c.b16 %v2749, %v2745
    %v3898 = vpack.c.b16 %v2750, %v2746
    %v3899 = vpack.c.b16 %v2755, %v2751
    %v3900 = vpack.c.b16 %v2756, %v2752
    %v3901 = vpack.c.b16 %v2757, %v2753
    %v3902 = vpack.c.b16 %v2758, %v2754
    %v3903 = vpack.c.b16 %v2763, %v2759
    %v3904 = vpack.c.b16 %v2764, %v2760
    %v3905 = vpack.c.b16 %v2765, %v2761
    %v3906 = vpack.c.b16 %v2766, %v2762
    %v3907 = vpack.c.b16 %v2771, %v2767
    %v3908 = vpack.c.b16 %v2772, %v2768
    %v3909 = vpack.c.b16 %v2773, %v2769
    %v3910 = vpack.c.b16 %v2774, %v2770
    %v3911 = vpack.c.b16 %v2779, %v2775
    %v3912 = vpack.c.b16 %v2780, %v2776
    %v3913 = vpack.c.b16 %v2781, %v2777
    %v3914 = vpack.c.b16 %v2782, %v2778
    %v3915 = vpack.c.b16 %v2787, %v2783
    %v3916 = vpack.c.b16 %v2788, %v2784
    %v3917 = vpack.c.b16 %v2789, %v2785
    %v3918 = vpack.c.b16 %v2790, %v2786
    %v3919 = vpack.c.b16 %v2795, %v2791
    %v3920 = vpack.c.b16 %v2796, %v2792
    %v3921 = vpack.c.b16 %v2797, %v2793
    %v3922 = vpack.c.b16 %v2798, %v2794
    %v3923 = vpack.c.b16 %v2803, %v2799
    %v3924 = vpack.c.b16 %v2804, %v2800
    %v3925 = vpack.c.b16 %v2805, %v2801
    %v3926 = vpack.c.b16 %v2806, %v2802
    %v3927 = vpack.c.b16 %v2811, %v2807
    %v3928 = vpack.c.b16 %v2812, %v2808
    %v3929 = vpack.c.b16 %v2813, %v2809
    %v3930 = vpack.c.b16 %v2814, %v2810
    %v3931 = vpack.c.b16 %v2819, %v2815
    %v3932 = vpack.c.b16 %v2820, %v2816
    %v3933 = vpack.c.b16 %v2821, %v2817
    %v3934 = vpack.c.b16 %v2822, %v2818
    %v3935 = vpack.c.b16 %v2827, %v2823
    %v3936 = vpack.c.b16 %v2828, %v2824
    %v3937 = vpack.c.b16 %v2829, %v2825
    %v3938 = vpack.c.b16 %v2830, %v2826
    %v3939 = vpack.c.b16 %v2835, %v2831
    %v3940 = vpack.c.b16 %v2836, %v2832
    %v3941 = vpack.c.b16 %v2837, %v2833
    %v3942 = vpack.c.b16 %v2838, %v2834
    %v3943 = vpack.c.b16 %v2843, %v2839
    %v3944 = vpack.c.b16 %v2844, %v2840
    %v3945 = vpack.c.b16 %v2845, %v2841
    %v3946 = vpack.c.b16 %v2846, %v2842
    %v3947 = vpack.c.b16 %v2851, %v2847
    %v3948 = vpack.c.b16 %v2852, %v2848
    %v3949 = vpack.c.b16 %v2853, %v2849
    %v3950 = vpack.c.b16 %v2854, %v2850
    %v3951 = vpack.c.b16 %v2859, %v2855
    %v3952 = vpack.c.b16 %v2860, %v2856
    %v3953 = vpack.c.b16 %v2861, %v2857
    %v3954 = vpack.c.b16 %v2862, %v2858
    %v3955 = vpack.c.b16 %v2867, %v2863
    %v3956 = vpack.c.b16 %v2868, %v2864
    %v3957 = vpack.c.b16 %v2869, %v2865
    %v3958 = vpack.c.b16 %v2870, %v2866
    %v3959 = vpack.c.b16 %v2875, %v2871
    %v3960 = vpack.c.b16 %v2876, %v2872
    %v3961 = vpack.c.b16 %v2877, %v2873
    %v3962 = vpack.c.b16 %v2878, %v2874
    %v3963 = vpack.c.b16 %v2883, %v2879
    %v3964 = vpack.c.b16 %v2884, %v2880
    %v3965 = vpack.c.b16 %v2885, %v2881
    %v3966 = vpack.c.b16 %v2886, %v2882
    %v3967 = vpack.c.b16 %v2891, %v2887
    %v3968 = vpack.c.b16 %v2892, %v2888
    %v3969 = vpack.c.b16 %v2893, %v2889
    %v3970 = vpack.c.b16 %v2894, %v2890
    %v3971 = vpack.c.b16 %v2899, %v2895
    %v3972 = vpack.c.b16 %v2900, %v2896
    %v3973 = vpack.c.b16 %v2901, %v2897
    %v3974 = vpack.c.b16 %v2902, %v2898
    %v3975 = vpack.c.b16 %v2907, %v2903
    %v3976 = vpack.c.b16 %v2908, %v2904
    %v3977 = vpack.c.b16 %v2909, %v2905
    %v3978 = vpack.c.b16 %v2910, %v2906
    %v3979 = vpack.c.b16 %v2915, %v2911
    %v3980 = vpack.c.b16 %v2916, %v2912
    %v3981 = vpack.c.b16 %v2917, %v2913
    %v3982 = vpack.c.b16 %v2918, %v2914
    %v3983 = vpack.c.b16 %v2923, %v2919
    %v3984 = vpack.c.b16 %v2924, %v2920
    %v3985 = vpack.c.b16 %v2925, %v2921
    %v3986 = vpack.c.b16 %v2926, %v2922
    %v3987 = vpack.c.b16 %v2931, %v2927
    %v3988 = vpack.c.b16 %v2932, %v2928
    %v3989 = vpack.c.b16 %v2933, %v2929
    %v3990 = vpack.c.b16 %v2934, %v2930
    %v3991 = vpack.c.b16 %v2939, %v2935
    %v3992 = vpack.c.b16 %v2940, %v2936
    %v3993 = vpack.c.b16 %v2941, %v2937
    %v3994 = vpack.c.b16 %v2942, %v2938
    %v3995 = vpack.c.b16 %v2947, %v2943
    %v3996 = vpack.c.b16 %v2948, %v2944
    %v3997 = vpack.c.b16 %v2949, %v2945
    %v3998 = vpack.c.b16 %v2950, %v2946
    %v3999 = vpack.c.b16 %v2955, %v2951
    %v4000 = vpack.c.b16 %v2956, %v2952
    %v4001 = vpack.c.b16 %v2957, %v2953
    %v4002 = vpack.c.b16 %v2958, %v2954
    %v4003 = vpack.c.b16 %v2963, %v2959
    %v4004 = vpack.c.b16 %v2964, %v2960
    %v4005 = vpack.c.b16 %v2965, %v2961
    %v4006 = vpack.c.b16 %v2966, %v2962
    %v4007 = vpack.c.b16 %v2971, %v2967
    %v4008 = vpack.c.b16 %v2972, %v2968
    %v4009 = vpack.c.b16 %v2973, %v2969
    %v4010 = vpack.c.b16 %v2974, %v2970
    %v4011 = vpack.c.b16 %v2979, %v2975
    %v4012 = vpack.c.b16 %v2980, %v2976
    %v4013 = vpack.c.b16 %v2981, %v2977
    %v4014 = vpack.c.b16 %v2982, %v2978
    %v4015 = vpack.c.b16 %v2987, %v2983
    %v4016 = vpack.c.b16 %v2988, %v2984
    %v4017 = vpack.c.b16 %v2989, %v2985
    %v4018 = vpack.c.b16 %v2990, %v2986
    %v4019 = vpack.c.b16 %v2995, %v2991
    %v4020 = vpack.c.b16 %v2996, %v2992
    %v4021 = vpack.c.b16 %v2997, %v2993
    %v4022 = vpack.c.b16 %v2998, %v2994
    %v4023 = vpack.c.b16 %v3003, %v2999
    %v4024 = vpack.c.b16 %v3004, %v3000
    %v4025 = vpack.c.b16 %v3005, %v3001
    %v4026 = vpack.c.b16 %v3006, %v3002
    %v4027 = vpack.c.b16 %v3011, %v3007
    %v4028 = vpack.c.b16 %v3012, %v3008
    %v4029 = vpack.c.b16 %v3013, %v3009
    %v4030 = vpack.c.b16 %v3014, %v3010
    %v4031 = vpack.c.b16 %v3019, %v3015
    %v4032 = vpack.c.b16 %v3020, %v3016
    %v4033 = vpack.c.b16 %v3021, %v3017
    %v4034 = vpack.c.b16 %v3022, %v3018
    %v4035 = vpack.c.b16 %v3027, %v3023
    %v4036 = vpack.c.b16 %v3028, %v3024
    %v4037 = vpack.c.b16 %v3029, %v3025
    %v4038 = vpack.c.b16 %v3030, %v3026
    %v4039 = vpack.c.b16 %v3035, %v3031
    %v4040 = vpack.c.b16 %v3036, %v3032
    %v4041 = vpack.c.b16 %v3037, %v3033
    %v4042 = vpack.c.b16 %v3038, %v3034
    %v4043 = vpack.c.b16 %v3043, %v3039
    %v4044 = vpack.c.b16 %v3044, %v3040
    %v4045 = vpack.c.b16 %v3045, %v3041
    %v4046 = vpack.c.b16 %v3046, %v3042
    %v4047 = vpack.c.b16 %v3051, %v3047
    %v4048 = vpack.c.b16 %v3052, %v3048
    %v4049 = vpack.c.b16 %v3053, %v3049
    %v4050 = vpack.c.b16 %v3054, %v3050
    %v4051 = vpack.c.b16 %v3059, %v3055
    %v4052 = vpack.c.b16 %v3060, %v3056
    %v4053 = vpack.c.b16 %v3061, %v3057
    %v4054 = vpack.c.b16 %v3062, %v3058
    %v4055 = vpack.c.b16 %v3067, %v3063
    %v4056 = vpack.c.b16 %v3068, %v3064
    %v4057 = vpack.c.b16 %v3069, %v3065
    %v4058 = vpack.c.b16 %v3070, %v3066
    %v4059 = vpack.c.b16 %v3075, %v3071
    %v4060 = vpack.c.b16 %v3076, %v3072
    %v4061 = vpack.c.b16 %v3077, %v3073
    %v4062 = vpack.c.b16 %v3078, %v3074
    %v4063 = vpack.c.b16 %v3083, %v3079
    %v4064 = vpack.c.b16 %v3084, %v3080
    %v4065 = vpack.c.b16 %v3085, %v3081
    %v4066 = vpack.c.b16 %v3086, %v3082
    %v4067 = vpack.c.b16 %v3091, %v3087
    %v4068 = vpack.c.b16 %v3092, %v3088
    %v4069 = vpack.c.b16 %v3093, %v3089
    %v4070 = vpack.c.b16 %v3094, %v3090
    %v4071 = vpack.c.b16 %v3099, %v3095
    %v4072 = vpack.c.b16 %v3100, %v3096
    %v4073 = vpack.c.b16 %v3101, %v3097
    %v4074 = vpack.c.b16 %v3102, %v3098
    %v4075 = vpack.c.b16 %v3107, %v3103
    %v4076 = vpack.c.b16 %v3108, %v3104
    %v4077 = vpack.c.b16 %v3109, %v3105
    %v4078 = vpack.c.b16 %v3110, %v3106
    %v4079 = vpack.c.b16 %v3115, %v3111
    %v4080 = vpack.c.b16 %v3116, %v3112
    %v4081 = vpack.c.b16 %v3117, %v3113
    %v4082 = vpack.c.b16 %v3118, %v3114
    %v4083 = vpack.c.b16 %v3123, %v3119
    %v4084 = vpack.c.b16 %v3124, %v3120
    %v4085 = vpack.c.b16 %v3125, %v3121
    %v4086 = vpack.c.b16 %v3126, %v3122
    %v4087 = vpack.c.b16 %v3131, %v3127
    %v4088 = vpack.c.b16 %v3132, %v3128
    %v4089 = vpack.c.b16 %v3133, %v3129
    %v4090 = vpack.c.b16 %v3134, %v3130
    %v4091 = vpack.c.b16 %v3139, %v3135
    %v4092 = vpack.c.b16 %v3140, %v3136
    %v4093 = vpack.c.b16 %v3141, %v3137
    %v4094 = vpack.c.b16 %v3142, %v3138
    %v4095 = vpack.c.b16 %v3147, %v3143
    %v4096 = vpack.c.b16 %v3148, %v3144
    %v4097 = vpack.c.b16 %v3149, %v3145
    %v4098 = vpack.c.b16 %v3150, %v3146
    %v4099 = vpack.c.b16 %v3155, %v3151
    %v4100 = vpack.c.b16 %v3156, %v3152
    %v4101 = vpack.c.b16 %v3157, %v3153
    %v4102 = vpack.c.b16 %v3158, %v3154
    %v4103 = vpack.c.b16 %v3163, %v3159
    %v4104 = vpack.c.b16 %v3164, %v3160
    %v4105 = vpack.c.b16 %v3165, %v3161
    %v4106 = vpack.c.b16 %v3166, %v3162
    %v4107 = vpack.c.b16 %v3171, %v3167
    %v4108 = vpack.c.b16 %v3172, %v3168
    %v4109 = vpack.c.b16 %v3173, %v3169
    %v4110 = vpack.c.b16 %v3174, %v3170
    %v4111 = vpack.c.b16 %v3179, %v3175
    %v4112 = vpack.c.b16 %v3180, %v3176
    %v4113 = vpack.c.b16 %v3181, %v3177
    %v4114 = vpack.c.b16 %v3182, %v3178
    %v4115 = vpack.c.b16 %v3187, %v3183
    %v4116 = vpack.c.b16 %v3188, %v3184
    %v4117 = vpack.c.b16 %v3189, %v3185
    %v4118 = vpack.c.b16 %v3190, %v3186
    %v4119 = vpack.c.b16 %v3195, %v3191
    %v4120 = vpack.c.b16 %v3196, %v3192
    %v4121 = vpack.c.b16 %v3197, %v3193
    %v4122 = vpack.c.b16 %v3198, %v3194
    %v4123 = vpack.c.b16 %v3203, %v3199
    %v4124 = vpack.c.b16 %v3204, %v3200
    %v4125 = vpack.c.b16 %v3205, %v3201
    %v4126 = vpack.c.b16 %v3206, %v3202
    %v4127 = vpack.c.b16 %v3211, %v3207
    %v4128 = vpack.c.b16 %v3212, %v3208
    %v4129 = vpack.c.b16 %v3213, %v3209
    %v4130 = vpack.c.b16 %v3214, %v3210
    %v4131 = vpack.c.b16 %v3219, %v3215
    %v4132 = vpack.c.b16 %v3220, %v3216
    %v4133 = vpack.c.b16 %v3221, %v3217
    %v4134 = vpack.c.b16 %v3222, %v3218
    %v4135 = vpack.c.b16 %v3227, %v3223
    %v4136 = vpack.c.b16 %v3228, %v3224
    %v4137 = vpack.c.b16 %v3229, %v3225
    %v4138 = vpack.c.b16 %v3230, %v3226
    %v4139 = vpack.c.b16 %v3235, %v3231
    %v4140 = vpack.c.b16 %v3236, %v3232
    %v4141 = vpack.c.b16 %v3237, %v3233
    %v4142 = vpack.c.b16 %v3238, %v3234
    %v4143 = vpack.c.b16 %v3243, %v3239
    %v4144 = vpack.c.b16 %v3244, %v3240
    %v4145 = vpack.c.b16 %v3245, %v3241
    %v4146 = vpack.c.b16 %v3246, %v3242
    %v4147 = vpack.c.b16 %v3251, %v3247
    %v4148 = vpack.c.b16 %v3252, %v3248
    %v4149 = vpack.c.b16 %v3253, %v3249
    %v4150 = vpack.c.b16 %v3254, %v3250
    %v4151 = vpack.c.b16 %v3259, %v3255
    %v4152 = vpack.c.b16 %v3260, %v3256
    %v4153 = vpack.c.b16 %v3261, %v3257
    %v4154 = vpack.c.b16 %v3262, %v3258
    %v4155 = vpack.c.b16 %v3267, %v3263
    %v4156 = vpack.c.b16 %v3268, %v3264
    %v4157 = vpack.c.b16 %v3269, %v3265
    %v4158 = vpack.c.b16 %v3270, %v3266
    %v4159 = vpack.c.b16 %v3275, %v3271
    %v4160 = vpack.c.b16 %v3276, %v3272
    %v4161 = vpack.c.b16 %v3277, %v3273
    %v4162 = vpack.c.b16 %v3278, %v3274
    %v4163 = vpack.c.b16 %v3283, %v3279
    %v4164 = vpack.c.b16 %v3284, %v3280
    %v4165 = vpack.c.b16 %v3285, %v3281
    %v4166 = vpack.c.b16 %v3286, %v3282
    %v4167 = vpack.c.b16 %v3291, %v3287
    %v4168 = vpack.c.b16 %v3292, %v3288
    %v4169 = vpack.c.b16 %v3293, %v3289
    %v4170 = vpack.c.b16 %v3294, %v3290
    %v4171 = vpack.c.b16 %v3299, %v3295
    %v4172 = vpack.c.b16 %v3300, %v3296
    %v4173 = vpack.c.b16 %v3301, %v3297
    %v4174 = vpack.c.b16 %v3302, %v3298
    %v4175 = vpack.c.b16 %v3307, %v3303
    %v4176 = vpack.c.b16 %v3308, %v3304
    %v4177 = vpack.c.b16 %v3309, %v3305
    %v4178 = vpack.c.b16 %v3310, %v3306
    %v4179 = vpack.c.b16 %v3315, %v3311
    %v4180 = vpack.c.b16 %v3316, %v3312
    %v4181 = vpack.c.b16 %v3317, %v3313
    %v4182 = vpack.c.b16 %v3318, %v3314
    %v4183 = vpack.c.b16 %v3323, %v3319
    %v4184 = vpack.c.b16 %v3324, %v3320
    %v4185 = vpack.c.b16 %v3325, %v3321
    %v4186 = vpack.c.b16 %v3326, %v3322
    %v4187 = vpack.c.b16 %v3331, %v3327
    %v4188 = vpack.c.b16 %v3332, %v3328
    %v4189 = vpack.c.b16 %v3333, %v3329
    %v4190 = vpack.c.b16 %v3334, %v3330
    %v4191 = vpack.c.b16 %v3339, %v3335
    %v4192 = vpack.c.b16 %v3340, %v3336
    %v4193 = vpack.c.b16 %v3341, %v3337
    %v4194 = vpack.c.b16 %v3342, %v3338
    %v4195 = vpack.c.b16 %v3347, %v3343
    %v4196 = vpack.c.b16 %v3348, %v3344
    %v4197 = vpack.c.b16 %v3349, %v3345
    %v4198 = vpack.c.b16 %v3350, %v3346
    %v4199 = vpack.c.b16 %v3355, %v3351
    %v4200 = vpack.c.b16 %v3356, %v3352
    %v4201 = vpack.c.b16 %v3357, %v3353
    %v4202 = vpack.c.b16 %v3358, %v3354
    %v4203 = vpack.c.b16 %v3363, %v3359
    %v4204 = vpack.c.b16 %v3364, %v3360
    %v4205 = vpack.c.b16 %v3365, %v3361
    %v4206 = vpack.c.b16 %v3366, %v3362
    %v4207 = vpack.c.b16 %v3371, %v3367
    %v4208 = vpack.c.b16 %v3372, %v3368
    %v4209 = vpack.c.b16 %v3373, %v3369
    %v4210 = vpack.c.b16 %v3374, %v3370
    %v4211 = vpack.c.b16 %v3379, %v3375
    %v4212 = vpack.c.b16 %v3380, %v3376
    %v4213 = vpack.c.b16 %v3381, %v3377
    %v4214 = vpack.c.b16 %v3382, %v3378
    %v4215 = vpack.c.b16 %v3387, %v3383
    %v4216 = vpack.c.b16 %v3388, %v3384
    %v4217 = vpack.c.b16 %v3389, %v3385
    %v4218 = vpack.c.b16 %v3390, %v3386
    %v4219 = vpack.c.b16 %v3395, %v3391
    %v4220 = vpack.c.b16 %v3396, %v3392
    %v4221 = vpack.c.b16 %v3397, %v3393
    %v4222 = vpack.c.b16 %v3398, %v3394
    %v4223 = vpack.c.b16 %v3403, %v3399
    %v4224 = vpack.c.b16 %v3404, %v3400
    %v4225 = vpack.c.b16 %v3405, %v3401
    %v4226 = vpack.c.b16 %v3406, %v3402
    %v4227 = vpack.c.b16 %v3411, %v3407
    %v4228 = vpack.c.b16 %v3412, %v3408
    %v4229 = vpack.c.b16 %v3413, %v3409
    %v4230 = vpack.c.b16 %v3414, %v3410
    %v4231 = vpack.c.b16 %v3419, %v3415
    %v4232 = vpack.c.b16 %v3420, %v3416
    %v4233 = vpack.c.b16 %v3421, %v3417
    %v4234 = vpack.c.b16 %v3422, %v3418
    %v4235 = vpack.c.b16 %v3427, %v3423
    %v4236 = vpack.c.b16 %v3428, %v3424
    %v4237 = vpack.c.b16 %v3429, %v3425
    %v4238 = vpack.c.b16 %v3430, %v3426
    %v4239 = vpack.c.b16 %v3435, %v3431
    %v4240 = vpack.c.b16 %v3436, %v3432
    %v4241 = vpack.c.b16 %v3437, %v3433
    %v4242 = vpack.c.b16 %v3438, %v3434
    %v4243 = vpack.c.b16 %v3443, %v3439
    %v4244 = vpack.c.b16 %v3444, %v3440
    %v4245 = vpack.c.b16 %v3445, %v3441
    %v4246 = vpack.c.b16 %v3446, %v3442
    %v4247 = vpack.c.b16 %v3451, %v3447
    %v4248 = vpack.c.b16 %v3452, %v3448
    %v4249 = vpack.c.b16 %v3453, %v3449
    %v4250 = vpack.c.b16 %v3454, %v3450
    %v4251 = vpack.c.b16 %v3459, %v3455
    %v4252 = vpack.c.b16 %v3460, %v3456
    %v4253 = vpack.c.b16 %v3461, %v3457
    %v4254 = vpack.c.b16 %v3462, %v3458
    %v4255 = vpack.c.b16 %v3467, %v3463
    %v4256 = vpack.c.b16 %v3468, %v3464
    %v4257 = vpack.c.b16 %v3469, %v3465
    %v4258 = vpack.c.b16 %v3470, %v3466
    %v4259 = vpack.c.b16 %v3475, %v3471
    %v4260 = vpack.c.b16 %v3476, %v3472
    %v4261 = vpack.c.b16 %v3477, %v3473
    %v4262 = vpack.c.b16 %v3478, %v3474
    %v4263 = vpack.c.b16 %v3483, %v3479
    %v4264 = vpack.c.b16 %v3484, %v3480
    %v4265 = vpack.c.b16 %v3485, %v3481
    %v4266 = vpack.c.b16 %v3486, %v3482
    %v4267 = vpack.c.b16 %v3491, %v3487
    %v4268 = vpack.c.b16 %v3492, %v3488
    %v4269 = vpack.c.b16 %v3493, %v3489
    %v4270 = vpack.c.b16 %v3494, %v3490
    %v4271 = vpack.c.b16 %v3499, %v3495
    %v4272 = vpack.c.b16 %v3500, %v3496
    %v4273 = vpack.c.b16 %v3501, %v3497
    %v4274 = vpack.c.b16 %v3502, %v3498
    %v4275 = vpack.c.b16 %v3507, %v3503
    %v4276 = vpack.c.b16 %v3508, %v3504
    %v4277 = vpack.c.b16 %v3509, %v3505
    %v4278 = vpack.c.b16 %v3510, %v3506
    %5047 = vmatprep.subr.bf16.mxu0 %v3512
    %5048 = vmatpush1.bf16.msra.mxu0 %v3511
    %5049 = vmatprep.subr.bf16.mxu0 %v3516
    %5050 = vmatpush1.bf16.msra.mxu0 %v3515
    %5051 = vmatprep.subr.bf16.mxu0 %v3520
    %5052 = vmatpush1.bf16.msra.mxu0 %v3519
    %5053 = vmatprep.subr.bf16.mxu0 %v3524
    %5054 = vmatpush1.bf16.msra.mxu0 %v3523
    %5055 = vmatprep.subr.bf16.mxu0 %v3528
    %5056 = vmatpush1.bf16.msra.mxu0 %v3527
    %5057 = vmatprep.subr.bf16.mxu0 %v3532
    %5058 = vmatpush1.bf16.msra.mxu0 %v3531
    %5059 = vmatprep.subr.bf16.mxu0 %v3536
    %5060 = vmatpush1.bf16.msra.mxu0 %v3535
    %5061 = vmatprep.subr.bf16.mxu0 %v3540
    %5062 = vmatpush1.bf16.msra.mxu0 %v3539
    %5063 = vmatprep.subr.bf16.mxu0 %v3544
    %5064 = vmatpush1.bf16.msra.mxu0 %v3543
    %5065 = vmatprep.subr.bf16.mxu0 %v3548
    %5066 = vmatpush1.bf16.msra.mxu0 %v3547
    %5067 = vmatprep.subr.bf16.mxu0 %v3552
    %5068 = vmatpush1.bf16.msra.mxu0 %v3551
    %5069 = vmatprep.subr.bf16.mxu0 %v3556
    %5070 = vmatpush1.bf16.msra.mxu0 %v3555
    %5071 = vmatprep.subr.bf16.mxu0 %v3560
    %5072 = vmatpush1.bf16.msra.mxu0 %v3559
    %5073 = vmatprep.subr.bf16.mxu0 %v3564
    %5074 = vmatpush1.bf16.msra.mxu0 %v3563
    %5075 = vmatprep.subr.bf16.mxu0 %v3568
    %5076 = vmatpush1.bf16.msra.mxu0 %v3567
    %5077 = vmatprep.subr.bf16.mxu0 %v3572
    %5078 = vmatpush1.bf16.msra.mxu0 %v3571
    %5079 = vmatprep.mubr.bf16.mxu0 %v1160
    %5080 = vmatmul.mubr.bf16.gmra.mrb[0].mxu0 %v1159
    %v5081 = vpop.f32.mrb[0].mxu0
    %v5082 = vadd.f32 %v1106, %v5081
    %v5083 = vpop.f32.mrb[0].mxu0
    %v5084 = vadd.f32 %v1110, %v5083
    %v5085 = vpop.f32.mrb[0].mxu0
    %v5086 = vpop.f32.mrb[0].mxu0
    %5087 = vdwg.mxu0
    %5088 = vmatprep.subr.bf16.mxu0 %v3576
    %5089 = vmatpush1.bf16.msra.mxu0 %v3575
    %5090 = vmatprep.subr.bf16.mxu0 %v3580
    %5091 = vmatpush1.bf16.msra.mxu0 %v3579
    %5092 = vmatprep.subr.bf16.mxu0 %v3584
    %5093 = vmatpush1.bf16.msra.mxu0 %v3583
    %5094 = vmatprep.subr.bf16.mxu0 %v3588
    %5095 = vmatpush1.bf16.msra.mxu0 %v3587
    %5096 = vmatprep.subr.bf16.mxu0 %v3592
    %5097 = vmatpush1.bf16.msra.mxu0 %v3591
    %5098 = vmatprep.subr.bf16.mxu0 %v3596
    %5099 = vmatpush1.bf16.msra.mxu0 %v3595
    %5100 = vmatprep.subr.bf16.mxu0 %v3600
    %5101 = vmatpush1.bf16.msra.mxu0 %v3599
    %5102 = vmatprep.subr.bf16.mxu0 %v3604
    %5103 = vmatpush1.bf16.msra.mxu0 %v3603
    %5104 = vmatprep.subr.bf16.mxu0 %v3608
    %5105 = vmatpush1.bf16.msra.mxu0 %v3607
    %5106 = vmatprep.subr.bf16.mxu0 %v3612
    %5107 = vmatpush1.bf16.msra.mxu0 %v3611
    %5108 = vmatprep.subr.bf16.mxu0 %v3616
    %5109 = vmatpush1.bf16.msra.mxu0 %v3615
    %5110 = vmatprep.subr.bf16.mxu0 %v3620
    %5111 = vmatpush1.bf16.msra.mxu0 %v3619
    %5112 = vmatprep.subr.bf16.mxu0 %v3624
    %5113 = vmatpush1.bf16.msra.mxu0 %v3623
    %5114 = vmatprep.subr.bf16.mxu0 %v3628
    %5115 = vmatpush1.bf16.msra.mxu0 %v3627
    %5116 = vmatprep.subr.bf16.mxu0 %v3632
    %5117 = vmatpush1.bf16.msra.mxu0 %v3631
    %5118 = vmatprep.subr.bf16.mxu0 %v3636
    %5119 = vmatpush1.bf16.msra.mxu0 %v3635
    %5120 = vmatprep.mubr.bf16.mxu0 %v1162
    %5121 = vmatmul.mubr.bf16.gmra.mrb[0].mxu0 %v1161
    %v5122 = vpop.f32.mrb[0].mxu0
    %v5123 = vadd.f32 %v5082, %v5122
    %v5124 = vpop.f32.mrb[0].mxu0
    %v5125 = vadd.f32 %v5084, %v5124
    %v5126 = vpop.f32.mrb[0].mxu0
    %v5127 = vpop.f32.mrb[0].mxu0
    %5128 = vdwg.mxu0
    %5129 = vmatprep.subr.bf16.mxu0 %v3640
    %5130 = vmatpush1.bf16.msra.mxu0 %v3639
    %5131 = vmatprep.subr.bf16.mxu0 %v3644
    %5132 = vmatpush1.bf16.msra.mxu0 %v3643
    %5133 = vmatprep.subr.bf16.mxu0 %v3648
    %5134 = vmatpush1.bf16.msra.mxu0 %v3647
    %5135 = vmatprep.subr.bf16.mxu0 %v3652
    %5136 = vmatpush1.bf16.msra.mxu0 %v3651
    %5137 = vmatprep.subr.bf16.mxu0 %v3656
    %5138 = vmatpush1.bf16.msra.mxu0 %v3655
    %5139 = vmatprep.subr.bf16.mxu0 %v3660
    %5140 = vmatpush1.bf16.msra.mxu0 %v3659
    %5141 = vmatprep.subr.bf16.mxu0 %v3664
    %5142 = vmatpush1.bf16.msra.mxu0 %v3663
    %5143 = vmatprep.subr.bf16.mxu0 %v3668
    %5144 = vmatpush1.bf16.msra.mxu0 %v3667
    %5145 = vmatprep.subr.bf16.mxu0 %v3672
    %5146 = vmatpush1.bf16.msra.mxu0 %v3671
    %5147 = vmatprep.subr.bf16.mxu0 %v3676
    %5148 = vmatpush1.bf16.msra.mxu0 %v3675
    %5149 = vmatprep.subr.bf16.mxu0 %v3680
    %5150 = vmatpush1.bf16.msra.mxu0 %v3679
    %5151 = vmatprep.subr.bf16.mxu0 %v3684
    %5152 = vmatpush1.bf16.msra.mxu0 %v3683
    %5153 = vmatprep.subr.bf16.mxu0 %v3688
    %5154 = vmatpush1.bf16.msra.mxu0 %v3687
    %5155 = vmatprep.subr.bf16.mxu0 %v3692
    %5156 = vmatpush1.bf16.msra.mxu0 %v3691
    %5157 = vmatprep.subr.bf16.mxu0 %v3696
    %5158 = vmatpush1.bf16.msra.mxu0 %v3695
    %5159 = vmatprep.subr.bf16.mxu0 %v3700
    %5160 = vmatpush1.bf16.msra.mxu0 %v3699
    %5161 = vmatprep.mubr.bf16.mxu0 %v1164
    %5162 = vmatmul.mubr.bf16.gmra.mrb[0].mxu0 %v1163
    %v5163 = vpop.f32.mrb[0].mxu0
    %v5164 = vadd.f32 %v5123, %v5163
    %v5165 = vpop.f32.mrb[0].mxu0
    %v5166 = vadd.f32 %v5125, %v5165
    %v5167 = vpop.f32.mrb[0].mxu0
    %v5168 = vpop.f32.mrb[0].mxu0
    %5169 = vdwg.mxu0
    %5170 = vmatprep.subr.bf16.mxu0 %v3704
    %5171 = vmatpush1.bf16.msra.mxu0 %v3703
    %5172 = vmatprep.subr.bf16.mxu0 %v3708
    %5173 = vmatpush1.bf16.msra.mxu0 %v3707
    %5174 = vmatprep.subr.bf16.mxu0 %v3712
    %5175 = vmatpush1.bf16.msra.mxu0 %v3711
    %5176 = vmatprep.subr.bf16.mxu0 %v3716
    %5177 = vmatpush1.bf16.msra.mxu0 %v3715
    %5178 = vmatprep.subr.bf16.mxu0 %v3720
    %5179 = vmatpush1.bf16.msra.mxu0 %v3719
    %5180 = vmatprep.subr.bf16.mxu0 %v3724
    %5181 = vmatpush1.bf16.msra.mxu0 %v3723
    %5182 = vmatprep.subr.bf16.mxu0 %v3728
    %5183 = vmatpush1.bf16.msra.mxu0 %v3727
    %5184 = vmatprep.subr.bf16.mxu0 %v3732
    %5185 = vmatpush1.bf16.msra.mxu0 %v3731
    %5186 = vmatprep.subr.bf16.mxu0 %v3736
    %5187 = vmatpush1.bf16.msra.mxu0 %v3735
    %5188 = vmatprep.subr.bf16.mxu0 %v3740
    %5189 = vmatpush1.bf16.msra.mxu0 %v3739
    %5190 = vmatprep.subr.bf16.mxu0 %v3744
    %5191 = vmatpush1.bf16.msra.mxu0 %v3743
    %5192 = vmatprep.subr.bf16.mxu0 %v3748
    %5193 = vmatpush1.bf16.msra.mxu0 %v3747
    %5194 = vmatprep.subr.bf16.mxu0 %v3752
    %5195 = vmatpush1.bf16.msra.mxu0 %v3751
    %5196 = vmatprep.subr.bf16.mxu0 %v3756
    %5197 = vmatpush1.bf16.msra.mxu0 %v3755
    %5198 = vmatprep.subr.bf16.mxu0 %v3760
    %5199 = vmatpush1.bf16.msra.mxu0 %v3759
    %5200 = vmatprep.subr.bf16.mxu0 %v3764
    %5201 = vmatpush1.bf16.msra.mxu0 %v3763
    %5202 = vmatprep.mubr.bf16.mxu0 %v1166
    %5203 = vmatmul.mubr.bf16.gmra.mrb[0].mxu0 %v1165
    %v5204 = vpop.f32.mrb[0].mxu0
    %v5205 = vadd.f32 %v5164, %v5204
    %v5206 = vpop.f32.mrb[0].mxu0
    %v5207 = vadd.f32 %v5166, %v5206
    %v5208 = vpop.f32.mrb[0].mxu0
    %v5209 = vpop.f32.mrb[0].mxu0
    %5210 = vdwg.mxu0
    %5211 = vmatprep.subr.bf16.mxu0 %v3768
    %5212 = vmatpush1.bf16.msra.mxu0 %v3767
    %5213 = vmatprep.subr.bf16.mxu0 %v3772
    %5214 = vmatpush1.bf16.msra.mxu0 %v3771
    %5215 = vmatprep.subr.bf16.mxu0 %v3776
    %5216 = vmatpush1.bf16.msra.mxu0 %v3775
    %5217 = vmatprep.subr.bf16.mxu0 %v3780
    %5218 = vmatpush1.bf16.msra.mxu0 %v3779
    %5219 = vmatprep.subr.bf16.mxu0 %v3784
    %5220 = vmatpush1.bf16.msra.mxu0 %v3783
    %5221 = vmatprep.subr.bf16.mxu0 %v3788
    %5222 = vmatpush1.bf16.msra.mxu0 %v3787
    %5223 = vmatprep.subr.bf16.mxu0 %v3792
    %5224 = vmatpush1.bf16.msra.mxu0 %v3791
    %5225 = vmatprep.subr.bf16.mxu0 %v3796
    %5226 = vmatpush1.bf16.msra.mxu0 %v3795
    %5227 = vmatprep.subr.bf16.mxu0 %v3800
    %5228 = vmatpush1.bf16.msra.mxu0 %v3799
    %5229 = vmatprep.subr.bf16.mxu0 %v3804
    %5230 = vmatpush1.bf16.msra.mxu0 %v3803
    %5231 = vmatprep.subr.bf16.mxu0 %v3808
    %5232 = vmatpush1.bf16.msra.mxu0 %v3807
    %5233 = vmatprep.subr.bf16.mxu0 %v3812
    %5234 = vmatpush1.bf16.msra.mxu0 %v3811
    %5235 = vmatprep.subr.bf16.mxu0 %v3816
    %5236 = vmatpush1.bf16.msra.mxu0 %v3815
    %5237 = vmatprep.subr.bf16.mxu0 %v3820
    %5238 = vmatpush1.bf16.msra.mxu0 %v3819
    %5239 = vmatprep.subr.bf16.mxu0 %v3824
    %5240 = vmatpush1.bf16.msra.mxu0 %v3823
    %5241 = vmatprep.subr.bf16.mxu0 %v3828
    %5242 = vmatpush1.bf16.msra.mxu0 %v3827
    %5243 = vmatprep.mubr.bf16.mxu0 %v1168
    %5244 = vmatmul.mubr.bf16.gmra.mrb[0].mxu0 %v1167
    %v5245 = vpop.f32.mrb[0].mxu0
    %v5246 = vadd.f32 %v5205, %v5245
    %v5247 = vpop.f32.mrb[0].mxu0
    %v5248 = vadd.f32 %v5207, %v5247
    %v5249 = vpop.f32.mrb[0].mxu0
    %v5250 = vpop.f32.mrb[0].mxu0
    %5251 = vdwg.mxu0
    %5252 = vmatprep.subr.bf16.mxu0 %v3832
    %5253 = vmatpush1.bf16.msra.mxu0 %v3831
    %5254 = vmatprep.subr.bf16.mxu0 %v3836
    %5255 = vmatpush1.bf16.msra.mxu0 %v3835
    %5256 = vmatprep.subr.bf16.mxu0 %v3840
    %5257 = vmatpush1.bf16.msra.mxu0 %v3839
    %5258 = vmatprep.subr.bf16.mxu0 %v3844
    %5259 = vmatpush1.bf16.msra.mxu0 %v3843
    %5260 = vmatprep.subr.bf16.mxu0 %v3848
    %5261 = vmatpush1.bf16.msra.mxu0 %v3847
    %5262 = vmatprep.subr.bf16.mxu0 %v3852
    %5263 = vmatpush1.bf16.msra.mxu0 %v3851
    %5264 = vmatprep.subr.bf16.mxu0 %v3856
    %5265 = vmatpush1.bf16.msra.mxu0 %v3855
    %5266 = vmatprep.subr.bf16.mxu0 %v3860
    %5267 = vmatpush1.bf16.msra.mxu0 %v3859
    %5268 = vmatprep.subr.bf16.mxu0 %v3864
    %5269 = vmatpush1.bf16.msra.mxu0 %v3863
    %5270 = vmatprep.subr.bf16.mxu0 %v3868
    %5271 = vmatpush1.bf16.msra.mxu0 %v3867
    %5272 = vmatprep.subr.bf16.mxu0 %v3872
    %5273 = vmatpush1.bf16.msra.mxu0 %v3871
    %5274 = vmatprep.subr.bf16.mxu0 %v3876
    %5275 = vmatpush1.bf16.msra.mxu0 %v3875
    %5276 = vmatprep.subr.bf16.mxu0 %v3880
    %5277 = vmatpush1.bf16.msra.mxu0 %v3879
    %5278 = vmatprep.subr.bf16.mxu0 %v3884
    %5279 = vmatpush1.bf16.msra.mxu0 %v3883
    %5280 = vmatprep.subr.bf16.mxu0 %v3888
    %5281 = vmatpush1.bf16.msra.mxu0 %v3887
    %5282 = vmatprep.subr.bf16.mxu0 %v3892
    %5283 = vmatpush1.bf16.msra.mxu0 %v3891
    %5284 = vmatprep.mubr.bf16.mxu0 %v1170
    %5285 = vmatmul.mubr.bf16.gmra.mrb[0].mxu0 %v1169
    %v5286 = vpop.f32.mrb[0].mxu0
    %v5287 = vadd.f32 %v5246, %v5286
    %v5288 = vpop.f32.mrb[0].mxu0
    %v5289 = vadd.f32 %v5248, %v5288
    %v5290 = vpop.f32.mrb[0].mxu0
    %v5291 = vpop.f32.mrb[0].mxu0
    %5292 = vdwg.mxu0
    %5293 = vmatprep.subr.bf16.mxu0 %v3896
    %5294 = vmatpush1.bf16.msra.mxu0 %v3895
    %5295 = vmatprep.subr.bf16.mxu0 %v3900
    %5296 = vmatpush1.bf16.msra.mxu0 %v3899
    %5297 = vmatprep.subr.bf16.mxu0 %v3904
    %5298 = vmatpush1.bf16.msra.mxu0 %v3903
    %5299 = vmatprep.subr.bf16.mxu0 %v3908
    %5300 = vmatpush1.bf16.msra.mxu0 %v3907
    %5301 = vmatprep.subr.bf16.mxu0 %v3912
    %5302 = vmatpush1.bf16.msra.mxu0 %v3911
    %5303 = vmatprep.subr.bf16.mxu0 %v3916
    %5304 = vmatpush1.bf16.msra.mxu0 %v3915
    %5305 = vmatprep.subr.bf16.mxu0 %v3920
    %5306 = vmatpush1.bf16.msra.mxu0 %v3919
    %5307 = vmatprep.subr.bf16.mxu0 %v3924
    %5308 = vmatpush1.bf16.msra.mxu0 %v3923
    %5309 = vmatprep.subr.bf16.mxu0 %v3928
    %5310 = vmatpush1.bf16.msra.mxu0 %v3927
    %5311 = vmatprep.subr.bf16.mxu0 %v3932
    %5312 = vmatpush1.bf16.msra.mxu0 %v3931
    %5313 = vmatprep.subr.bf16.mxu0 %v3936
    %5314 = vmatpush1.bf16.msra.mxu0 %v3935
    %5315 = vmatprep.subr.bf16.mxu0 %v3940
    %5316 = vmatpush1.bf16.msra.mxu0 %v3939
    %5317 = vmatprep.subr.bf16.mxu0 %v3944
    %5318 = vmatpush1.bf16.msra.mxu0 %v3943
    %5319 = vmatprep.subr.bf16.mxu0 %v3948
    %5320 = vmatpush1.bf16.msra.mxu0 %v3947
    %5321 = vmatprep.subr.bf16.mxu0 %v3952
    %5322 = vmatpush1.bf16.msra.mxu0 %v3951
    %5323 = vmatprep.subr.bf16.mxu0 %v3956
    %5324 = vmatpush1.bf16.msra.mxu0 %v3955
    %5325 = vmatprep.mubr.bf16.mxu0 %v1172
    %5326 = vmatmul.mubr.bf16.gmra.mrb[0].mxu0 %v1171
    %v5327 = vpop.f32.mrb[0].mxu0
    %v5328 = vadd.f32 %v5287, %v5327
    %v5329 = vpop.f32.mrb[0].mxu0
    %v5330 = vadd.f32 %v5289, %v5329
    %v5331 = vpop.f32.mrb[0].mxu0
    %v5332 = vpop.f32.mrb[0].mxu0
    %5333 = vdwg.mxu0
    %5334 = vmatprep.subr.bf16.mxu0 %v3960
    %5335 = vmatpush1.bf16.msra.mxu0 %v3959
    %5336 = vmatprep.subr.bf16.mxu0 %v3964
    %5337 = vmatpush1.bf16.msra.mxu0 %v3963
    %5338 = vmatprep.subr.bf16.mxu0 %v3968
    %5339 = vmatpush1.bf16.msra.mxu0 %v3967
    %5340 = vmatprep.subr.bf16.mxu0 %v3972
    %5341 = vmatpush1.bf16.msra.mxu0 %v3971
    %5342 = vmatprep.subr.bf16.mxu0 %v3976
    %5343 = vmatpush1.bf16.msra.mxu0 %v3975
    %5344 = vmatprep.subr.bf16.mxu0 %v3980
    %5345 = vmatpush1.bf16.msra.mxu0 %v3979
    %5346 = vmatprep.subr.bf16.mxu0 %v3984
    %5347 = vmatpush1.bf16.msra.mxu0 %v3983
    %5348 = vmatprep.subr.bf16.mxu0 %v3988
    %5349 = vmatpush1.bf16.msra.mxu0 %v3987
    %5350 = vmatprep.subr.bf16.mxu0 %v3992
    %5351 = vmatpush1.bf16.msra.mxu0 %v3991
    %5352 = vmatprep.subr.bf16.mxu0 %v3996
    %5353 = vmatpush1.bf16.msra.mxu0 %v3995
    %5354 = vmatprep.subr.bf16.mxu0 %v4000
    %5355 = vmatpush1.bf16.msra.mxu0 %v3999
    %5356 = vmatprep.subr.bf16.mxu0 %v4004
    %5357 = vmatpush1.bf16.msra.mxu0 %v4003
    %5358 = vmatprep.subr.bf16.mxu0 %v4008
    %5359 = vmatpush1.bf16.msra.mxu0 %v4007
    %5360 = vmatprep.subr.bf16.mxu0 %v4012
    %5361 = vmatpush1.bf16.msra.mxu0 %v4011
    %5362 = vmatprep.subr.bf16.mxu0 %v4016
    %5363 = vmatpush1.bf16.msra.mxu0 %v4015
    %5364 = vmatprep.subr.bf16.mxu0 %v4020
    %5365 = vmatpush1.bf16.msra.mxu0 %v4019
    %5366 = vmatprep.mubr.bf16.mxu0 %v1174
    %5367 = vmatmul.mubr.bf16.gmra.mrb[0].mxu0 %v1173
    %v5368 = vpop.f32.mrb[0].mxu0
    %v5369 = vadd.f32 %v5328, %v5368
    %v5370 = vpop.f32.mrb[0].mxu0
    %v5371 = vadd.f32 %v5330, %v5370
    %v5372 = vpop.f32.mrb[0].mxu0
    %v5373 = vpop.f32.mrb[0].mxu0
    %5374 = vdwg.mxu0
    %5375 = vmatprep.subr.bf16.mxu0 %v4024
    %5376 = vmatpush1.bf16.msra.mxu0 %v4023
    %5377 = vmatprep.subr.bf16.mxu0 %v4028
    %5378 = vmatpush1.bf16.msra.mxu0 %v4027
    %5379 = vmatprep.subr.bf16.mxu0 %v4032
    %5380 = vmatpush1.bf16.msra.mxu0 %v4031
    %5381 = vmatprep.subr.bf16.mxu0 %v4036
    %5382 = vmatpush1.bf16.msra.mxu0 %v4035
    %5383 = vmatprep.subr.bf16.mxu0 %v4040
    %5384 = vmatpush1.bf16.msra.mxu0 %v4039
    %5385 = vmatprep.subr.bf16.mxu0 %v4044
    %5386 = vmatpush1.bf16.msra.mxu0 %v4043
    %5387 = vmatprep.subr.bf16.mxu0 %v4048
    %5388 = vmatpush1.bf16.msra.mxu0 %v4047
    %5389 = vmatprep.subr.bf16.mxu0 %v4052
    %5390 = vmatpush1.bf16.msra.mxu0 %v4051
    %5391 = vmatprep.subr.bf16.mxu0 %v4056
    %5392 = vmatpush1.bf16.msra.mxu0 %v4055
    %5393 = vmatprep.subr.bf16.mxu0 %v4060
    %5394 = vmatpush1.bf16.msra.mxu0 %v4059
    %5395 = vmatprep.subr.bf16.mxu0 %v4064
    %5396 = vmatpush1.bf16.msra.mxu0 %v4063
    %5397 = vmatprep.subr.bf16.mxu0 %v4068
    %5398 = vmatpush1.bf16.msra.mxu0 %v4067
    %5399 = vmatprep.subr.bf16.mxu0 %v4072
    %5400 = vmatpush1.bf16.msra.mxu0 %v4071
    %5401 = vmatprep.subr.bf16.mxu0 %v4076
    %5402 = vmatpush1.bf16.msra.mxu0 %v4075
    %5403 = vmatprep.subr.bf16.mxu0 %v4080
    %5404 = vmatpush1.bf16.msra.mxu0 %v4079
    %5405 = vmatprep.subr.bf16.mxu0 %v4084
    %5406 = vmatpush1.bf16.msra.mxu0 %v4083
    %5407 = vmatprep.mubr.bf16.mxu0 %v1176
    %5408 = vmatmul.mubr.bf16.gmra.mrb[0].mxu0 %v1175
    %v5409 = vpop.f32.mrb[0].mxu0
    %v5410 = vadd.f32 %v5369, %v5409
    %v5411 = vpop.f32.mrb[0].mxu0
    %v5412 = vadd.f32 %v5371, %v5411
    %v5413 = vpop.f32.mrb[0].mxu0
    %v5414 = vpop.f32.mrb[0].mxu0
    %5415 = vdwg.mxu0
    %5416 = vmatprep.subr.bf16.mxu0 %v4088
    %5417 = vmatpush1.bf16.msra.mxu0 %v4087
    %5418 = vmatprep.subr.bf16.mxu0 %v4092
    %5419 = vmatpush1.bf16.msra.mxu0 %v4091
    %5420 = vmatprep.subr.bf16.mxu0 %v4096
    %5421 = vmatpush1.bf16.msra.mxu0 %v4095
    %5422 = vmatprep.subr.bf16.mxu0 %v4100
    %5423 = vmatpush1.bf16.msra.mxu0 %v4099
    %5424 = vmatprep.subr.bf16.mxu0 %v4104
    %5425 = vmatpush1.bf16.msra.mxu0 %v4103
    %5426 = vmatprep.subr.bf16.mxu0 %v4108
    %5427 = vmatpush1.bf16.msra.mxu0 %v4107
    %5428 = vmatprep.subr.bf16.mxu0 %v4112
    %5429 = vmatpush1.bf16.msra.mxu0 %v4111
    %5430 = vmatprep.subr.bf16.mxu0 %v4116
    %5431 = vmatpush1.bf16.msra.mxu0 %v4115
    %5432 = vmatprep.subr.bf16.mxu0 %v4120
    %5433 = vmatpush1.bf16.msra.mxu0 %v4119
    %5434 = vmatprep.subr.bf16.mxu0 %v4124
    %5435 = vmatpush1.bf16.msra.mxu0 %v4123
    %5436 = vmatprep.subr.bf16.mxu0 %v4128
    %5437 = vmatpush1.bf16.msra.mxu0 %v4127
    %5438 = vmatprep.subr.bf16.mxu0 %v4132
    %5439 = vmatpush1.bf16.msra.mxu0 %v4131
    %5440 = vmatprep.subr.bf16.mxu0 %v4136
    %5441 = vmatpush1.bf16.msra.mxu0 %v4135
    %5442 = vmatprep.subr.bf16.mxu0 %v4140
    %5443 = vmatpush1.bf16.msra.mxu0 %v4139
    %5444 = vmatprep.subr.bf16.mxu0 %v4144
    %5445 = vmatpush1.bf16.msra.mxu0 %v4143
    %5446 = vmatprep.subr.bf16.mxu0 %v4148
    %5447 = vmatpush1.bf16.msra.mxu0 %v4147
    %5448 = vmatprep.mubr.bf16.mxu0 %v1178
    %5449 = vmatmul.mubr.bf16.gmra.mrb[0].mxu0 %v1177
    %v5450 = vpop.f32.mrb[0].mxu0
    %v5451 = vadd.f32 %v5410, %v5450
    %v5452 = vpop.f32.mrb[0].mxu0
    %v5453 = vadd.f32 %v5412, %v5452
    %v5454 = vpop.f32.mrb[0].mxu0
    %v5455 = vpop.f32.mrb[0].mxu0
    %5456 = vdwg.mxu0
    %5457 = vmatprep.subr.bf16.mxu0 %v4152
    %5458 = vmatpush1.bf16.msra.mxu0 %v4151
    %5459 = vmatprep.subr.bf16.mxu0 %v4156
    %5460 = vmatpush1.bf16.msra.mxu0 %v4155
    %5461 = vmatprep.subr.bf16.mxu0 %v4160
    %5462 = vmatpush1.bf16.msra.mxu0 %v4159
    %5463 = vmatprep.subr.bf16.mxu0 %v4164
    %5464 = vmatpush1.bf16.msra.mxu0 %v4163
    %5465 = vmatprep.subr.bf16.mxu0 %v4168
    %5466 = vmatpush1.bf16.msra.mxu0 %v4167
    %5467 = vmatprep.subr.bf16.mxu0 %v4172
    %5468 = vmatpush1.bf16.msra.mxu0 %v4171
    %5469 = vmatprep.subr.bf16.mxu0 %v4176
    %5470 = vmatpush1.bf16.msra.mxu0 %v4175
    %5471 = vmatprep.subr.bf16.mxu0 %v4180
    %5472 = vmatpush1.bf16.msra.mxu0 %v4179
    %5473 = vmatprep.subr.bf16.mxu0 %v4184
    %5474 = vmatpush1.bf16.msra.mxu0 %v4183
    %5475 = vmatprep.subr.bf16.mxu0 %v4188
    %5476 = vmatpush1.bf16.msra.mxu0 %v4187
    %5477 = vmatprep.subr.bf16.mxu0 %v4192
    %5478 = vmatpush1.bf16.msra.mxu0 %v4191
    %5479 = vmatprep.subr.bf16.mxu0 %v4196
    %5480 = vmatpush1.bf16.msra.mxu0 %v4195
    %5481 = vmatprep.subr.bf16.mxu0 %v4200
    %5482 = vmatpush1.bf16.msra.mxu0 %v4199
    %5483 = vmatprep.subr.bf16.mxu0 %v4204
    %5484 = vmatpush1.bf16.msra.mxu0 %v4203
    %5485 = vmatprep.subr.bf16.mxu0 %v4208
    %5486 = vmatpush1.bf16.msra.mxu0 %v4207
    %5487 = vmatprep.subr.bf16.mxu0 %v4212
    %5488 = vmatpush1.bf16.msra.mxu0 %v4211
    %5489 = vmatprep.mubr.bf16.mxu0 %v1180
    %5490 = vmatmul.mubr.bf16.gmra.mrb[0].mxu0 %v1179
    %v5491 = vpop.f32.mrb[0].mxu0
    %v5492 = vadd.f32 %v5451, %v5491
    %v5493 = vpop.f32.mrb[0].mxu0
    %v5494 = vadd.f32 %v5453, %v5493
    %v5495 = vpop.f32.mrb[0].mxu0
    %v5496 = vpop.f32.mrb[0].mxu0
    %5497 = vdwg.mxu0
    %5498 = vmatprep.subr.bf16.mxu0 %v4216
    %5499 = vmatpush1.bf16.msra.mxu0 %v4215
    %5500 = vmatprep.subr.bf16.mxu0 %v4220
    %5501 = vmatpush1.bf16.msra.mxu0 %v4219
    %5502 = vmatprep.subr.bf16.mxu0 %v4224
    %5503 = vmatpush1.bf16.msra.mxu0 %v4223
    %5504 = vmatprep.subr.bf16.mxu0 %v4228
    %5505 = vmatpush1.bf16.msra.mxu0 %v4227
    %5506 = vmatprep.subr.bf16.mxu0 %v4232
    %5507 = vmatpush1.bf16.msra.mxu0 %v4231
    %5508 = vmatprep.subr.bf16.mxu0 %v4236
    %5509 = vmatpush1.bf16.msra.mxu0 %v4235
    %5510 = vmatprep.subr.bf16.mxu0 %v4240
    %5511 = vmatpush1.bf16.msra.mxu0 %v4239
    %5512 = vmatprep.subr.bf16.mxu0 %v4244
    %5513 = vmatpush1.bf16.msra.mxu0 %v4243
    %5514 = vmatprep.subr.bf16.mxu0 %v4248
    %5515 = vmatpush1.bf16.msra.mxu0 %v4247
    %5516 = vmatprep.subr.bf16.mxu0 %v4252
    %5517 = vmatpush1.bf16.msra.mxu0 %v4251
    %5518 = vmatprep.subr.bf16.mxu0 %v4256
    %5519 = vmatpush1.bf16.msra.mxu0 %v4255
    %5520 = vmatprep.subr.bf16.mxu0 %v4260
    %5521 = vmatpush1.bf16.msra.mxu0 %v4259
    %5522 = vmatprep.subr.bf16.mxu0 %v4264
    %5523 = vmatpush1.bf16.msra.mxu0 %v4263
    %5524 = vmatprep.subr.bf16.mxu0 %v4268
    %5525 = vmatpush1.bf16.msra.mxu0 %v4267
    %5526 = vmatprep.subr.bf16.mxu0 %v4272
    %5527 = vmatpush1.bf16.msra.mxu0 %v4271
    %5528 = vmatprep.subr.bf16.mxu0 %v4276
    %5529 = vmatpush1.bf16.msra.mxu0 %v4275
    %5530 = vmatprep.mubr.bf16.mxu0 %v1182
    %5531 = vmatmul.mubr.bf16.gmra.mrb[0].mxu0 %v1181
    %v5532 = vpop.f32.mrb[0].mxu0
    %v5533 = vadd.f32 %v5492, %v5532
    %v5534 = vpop.f32.mrb[0].mxu0
    %v5535 = vadd.f32 %v5494, %v5534
    %v5536 = vpop.f32.mrb[0].mxu0
    %v5537 = vpop.f32.mrb[0].mxu0
    %5538 = vdwg.mxu0
    %5539 = vmatprep.subr.bf16.mxu0 %v3514
    %5540 = vmatpush1.bf16.msra.mxu0 %v3513
    %5541 = vmatprep.subr.bf16.mxu0 %v3518
    %5542 = vmatpush1.bf16.msra.mxu0 %v3517
    %5543 = vmatprep.subr.bf16.mxu0 %v3522
    %5544 = vmatpush1.bf16.msra.mxu0 %v3521
    %5545 = vmatprep.subr.bf16.mxu0 %v3526
    %5546 = vmatpush1.bf16.msra.mxu0 %v3525
    %5547 = vmatprep.subr.bf16.mxu0 %v3530
    %5548 = vmatpush1.bf16.msra.mxu0 %v3529
    %5549 = vmatprep.subr.bf16.mxu0 %v3534
    %5550 = vmatpush1.bf16.msra.mxu0 %v3533
    %5551 = vmatprep.subr.bf16.mxu0 %v3538
    %5552 = vmatpush1.bf16.msra.mxu0 %v3537
    %5553 = vmatprep.subr.bf16.mxu0 %v3542
    %5554 = vmatpush1.bf16.msra.mxu0 %v3541
    %5555 = vmatprep.subr.bf16.mxu0 %v3546
    %5556 = vmatpush1.bf16.msra.mxu0 %v3545
    %5557 = vmatprep.subr.bf16.mxu0 %v3550
    %5558 = vmatpush1.bf16.msra.mxu0 %v3549
    %5559 = vmatprep.subr.bf16.mxu0 %v3554
    %5560 = vmatpush1.bf16.msra.mxu0 %v3553
    %5561 = vmatprep.subr.bf16.mxu0 %v3558
    %5562 = vmatpush1.bf16.msra.mxu0 %v3557
    %5563 = vmatprep.subr.bf16.mxu0 %v3562
    %5564 = vmatpush1.bf16.msra.mxu0 %v3561
    %5565 = vmatprep.subr.bf16.mxu0 %v3566
    %5566 = vmatpush1.bf16.msra.mxu0 %v3565
    %5567 = vmatprep.subr.bf16.mxu0 %v3570
    %5568 = vmatpush1.bf16.msra.mxu0 %v3569
    %5569 = vmatprep.subr.bf16.mxu0 %v3574
    %5570 = vmatpush1.bf16.msra.mxu0 %v3573
    %5571 = vmatprep.mubr.bf16.mxu0 %v1160
    %5572 = vmatmul.mubr.bf16.gmra.mrb[0].mxu0 %v1159
    %v5573 = vpop.f32.mrb[0].mxu0
    %v5574 = vadd.f32 %v1114, %v5573
    %v5575 = vpop.f32.mrb[0].mxu0
    %v5576 = vadd.f32 %v1118, %v5575
    %v5577 = vpop.f32.mrb[0].mxu0
    %v5578 = vpop.f32.mrb[0].mxu0
    %5579 = vdwg.mxu0
    %5580 = vmatprep.subr.bf16.mxu0 %v3578
    %5581 = vmatpush1.bf16.msra.mxu0 %v3577
    %5582 = vmatprep.subr.bf16.mxu0 %v3582
    %5583 = vmatpush1.bf16.msra.mxu0 %v3581
    %5584 = vmatprep.subr.bf16.mxu0 %v3586
    %5585 = vmatpush1.bf16.msra.mxu0 %v3585
    %5586 = vmatprep.subr.bf16.mxu0 %v3590
    %5587 = vmatpush1.bf16.msra.mxu0 %v3589
    %5588 = vmatprep.subr.bf16.mxu0 %v3594
    %5589 = vmatpush1.bf16.msra.mxu0 %v3593
    %5590 = vmatprep.subr.bf16.mxu0 %v3598
    %5591 = vmatpush1.bf16.msra.mxu0 %v3597
    %5592 = vmatprep.subr.bf16.mxu0 %v3602
    %5593 = vmatpush1.bf16.msra.mxu0 %v3601
    %5594 = vmatprep.subr.bf16.mxu0 %v3606
    %5595 = vmatpush1.bf16.msra.mxu0 %v3605
    %5596 = vmatprep.subr.bf16.mxu0 %v3610
    %5597 = vmatpush1.bf16.msra.mxu0 %v3609
    %5598 = vmatprep.subr.bf16.mxu0 %v3614
    %5599 = vmatpush1.bf16.msra.mxu0 %v3613
    %5600 = vmatprep.subr.bf16.mxu0 %v3618
    %5601 = vmatpush1.bf16.msra.mxu0 %v3617
    %5602 = vmatprep.subr.bf16.mxu0 %v3622
    %5603 = vmatpush1.bf16.msra.mxu0 %v3621
    %5604 = vmatprep.subr.bf16.mxu0 %v3626
    %5605 = vmatpush1.bf16.msra.mxu0 %v3625
    %5606 = vmatprep.subr.bf16.mxu0 %v3630
    %5607 = vmatpush1.bf16.msra.mxu0 %v3629
    %5608 = vmatprep.subr.bf16.mxu0 %v3634
    %5609 = vmatpush1.bf16.msra.mxu0 %v3633
    %5610 = vmatprep.subr.bf16.mxu0 %v3638
    %5611 = vmatpush1.bf16.msra.mxu0 %v3637
    %5612 = vmatprep.mubr.bf16.mxu0 %v1162
    %5613 = vmatmul.mubr.bf16.gmra.mrb[0].mxu0 %v1161
    %v5614 = vpop.f32.mrb[0].mxu0
    %v5615 = vadd.f32 %v5574, %v5614
    %v5616 = vpop.f32.mrb[0].mxu0
    %v5617 = vadd.f32 %v5576, %v5616
    %v5618 = vpop.f32.mrb[0].mxu0
    %v5619 = vpop.f32.mrb[0].mxu0
    %5620 = vdwg.mxu0
    %5621 = vmatprep.subr.bf16.mxu0 %v3642
    %5622 = vmatpush1.bf16.msra.mxu0 %v3641
    %5623 = vmatprep.subr.bf16.mxu0 %v3646
    %5624 = vmatpush1.bf16.msra.mxu0 %v3645
    %5625 = vmatprep.subr.bf16.mxu0 %v3650
    %5626 = vmatpush1.bf16.msra.mxu0 %v3649
    %5627 = vmatprep.subr.bf16.mxu0 %v3654
    %5628 = vmatpush1.bf16.msra.mxu0 %v3653
    %5629 = vmatprep.subr.bf16.mxu0 %v3658
    %5630 = vmatpush1.bf16.msra.mxu0 %v3657
    %5631 = vmatprep.subr.bf16.mxu0 %v3662
    %5632 = vmatpush1.bf16.msra.mxu0 %v3661
    %5633 = vmatprep.subr.bf16.mxu0 %v3666
    %5634 = vmatpush1.bf16.msra.mxu0 %v3665
    %5635 = vmatprep.subr.bf16.mxu0 %v3670
    %5636 = vmatpush1.bf16.msra.mxu0 %v3669
    %5637 = vmatprep.subr.bf16.mxu0 %v3674
    %5638 = vmatpush1.bf16.msra.mxu0 %v3673
    %5639 = vmatprep.subr.bf16.mxu0 %v3678
    %5640 = vmatpush1.bf16.msra.mxu0 %v3677
    %5641 = vmatprep.subr.bf16.mxu0 %v3682
    %5642 = vmatpush1.bf16.msra.mxu0 %v3681
    %5643 = vmatprep.subr.bf16.mxu0 %v3686
    %5644 = vmatpush1.bf16.msra.mxu0 %v3685
    %5645 = vmatprep.subr.bf16.mxu0 %v3690
    %5646 = vmatpush1.bf16.msra.mxu0 %v3689
    %5647 = vmatprep.subr.bf16.mxu0 %v3694
    %5648 = vmatpush1.bf16.msra.mxu0 %v3693
    %5649 = vmatprep.subr.bf16.mxu0 %v3698
    %5650 = vmatpush1.bf16.msra.mxu0 %v3697
    %5651 = vmatprep.subr.bf16.mxu0 %v3702
    %5652 = vmatpush1.bf16.msra.mxu0 %v3701
    %5653 = vmatprep.mubr.bf16.mxu0 %v1164
    %5654 = vmatmul.mubr.bf16.gmra.mrb[0].mxu0 %v1163
    %v5655 = vpop.f32.mrb[0].mxu0
    %v5656 = vadd.f32 %v5615, %v5655
    %v5657 = vpop.f32.mrb[0].mxu0
    %v5658 = vadd.f32 %v5617, %v5657
    %v5659 = vpop.f32.mrb[0].mxu0
    %v5660 = vpop.f32.mrb[0].mxu0
    %5661 = vdwg.mxu0
    %5662 = vmatprep.subr.bf16.mxu0 %v3706
    %5663 = vmatpush1.bf16.msra.mxu0 %v3705
    %5664 = vmatprep.subr.bf16.mxu0 %v3710
    %5665 = vmatpush1.bf16.msra.mxu0 %v3709
    %5666 = vmatprep.subr.bf16.mxu0 %v3714
    %5667 = vmatpush1.bf16.msra.mxu0 %v3713
    %5668 = vmatprep.subr.bf16.mxu0 %v3718
    %5669 = vmatpush1.bf16.msra.mxu0 %v3717
    %5670 = vmatprep.subr.bf16.mxu0 %v3722
    %5671 = vmatpush1.bf16.msra.mxu0 %v3721
    %5672 = vmatprep.subr.bf16.mxu0 %v3726
    %5673 = vmatpush1.bf16.msra.mxu0 %v3725
    %5674 = vmatprep.subr.bf16.mxu0 %v3730
    %5675 = vmatpush1.bf16.msra.mxu0 %v3729
    %5676 = vmatprep.subr.bf16.mxu0 %v3734
    %5677 = vmatpush1.bf16.msra.mxu0 %v3733
    %5678 = vmatprep.subr.bf16.mxu0 %v3738
    %5679 = vmatpush1.bf16.msra.mxu0 %v3737
    %5680 = vmatprep.subr.bf16.mxu0 %v3742
    %5681 = vmatpush1.bf16.msra.mxu0 %v3741
    %5682 = vmatprep.subr.bf16.mxu0 %v3746
    %5683 = vmatpush1.bf16.msra.mxu0 %v3745
    %5684 = vmatprep.subr.bf16.mxu0 %v3750
    %5685 = vmatpush1.bf16.msra.mxu0 %v3749
    %5686 = vmatprep.subr.bf16.mxu0 %v3754
    %5687 = vmatpush1.bf16.msra.mxu0 %v3753
    %5688 = vmatprep.subr.bf16.mxu0 %v3758
    %5689 = vmatpush1.bf16.msra.mxu0 %v3757
    %5690 = vmatprep.subr.bf16.mxu0 %v3762
    %5691 = vmatpush1.bf16.msra.mxu0 %v3761
    %5692 = vmatprep.subr.bf16.mxu0 %v3766
    %5693 = vmatpush1.bf16.msra.mxu0 %v3765
    %5694 = vmatprep.mubr.bf16.mxu0 %v1166
    %5695 = vmatmul.mubr.bf16.gmra.mrb[0].mxu0 %v1165
    %v5696 = vpop.f32.mrb[0].mxu0
    %v5697 = vadd.f32 %v5656, %v5696
    %v5698 = vpop.f32.mrb[0].mxu0
    %v5699 = vadd.f32 %v5658, %v5698
    %v5700 = vpop.f32.mrb[0].mxu0
    %v5701 = vpop.f32.mrb[0].mxu0
    %5702 = vdwg.mxu0
    %5703 = vmatprep.subr.bf16.mxu0 %v3770
    %5704 = vmatpush1.bf16.msra.mxu0 %v3769
    %5705 = vmatprep.subr.bf16.mxu0 %v3774
    %5706 = vmatpush1.bf16.msra.mxu0 %v3773
    %5707 = vmatprep.subr.bf16.mxu0 %v3778
    %5708 = vmatpush1.bf16.msra.mxu0 %v3777
    %5709 = vmatprep.subr.bf16.mxu0 %v3782
    %5710 = vmatpush1.bf16.msra.mxu0 %v3781
    %5711 = vmatprep.subr.bf16.mxu0 %v3786
    %5712 = vmatpush1.bf16.msra.mxu0 %v3785
    %5713 = vmatprep.subr.bf16.mxu0 %v3790
    %5714 = vmatpush1.bf16.msra.mxu0 %v3789
    %5715 = vmatprep.subr.bf16.mxu0 %v3794
    %5716 = vmatpush1.bf16.msra.mxu0 %v3793
    %5717 = vmatprep.subr.bf16.mxu0 %v3798
    %5718 = vmatpush1.bf16.msra.mxu0 %v3797
    %5719 = vmatprep.subr.bf16.mxu0 %v3802
    %5720 = vmatpush1.bf16.msra.mxu0 %v3801
    %5721 = vmatprep.subr.bf16.mxu0 %v3806
    %5722 = vmatpush1.bf16.msra.mxu0 %v3805
    %5723 = vmatprep.subr.bf16.mxu0 %v3810
    %5724 = vmatpush1.bf16.msra.mxu0 %v3809
    %5725 = vmatprep.subr.bf16.mxu0 %v3814
    %5726 = vmatpush1.bf16.msra.mxu0 %v3813
    %5727 = vmatprep.subr.bf16.mxu0 %v3818
    %5728 = vmatpush1.bf16.msra.mxu0 %v3817
    %5729 = vmatprep.subr.bf16.mxu0 %v3822
    %5730 = vmatpush1.bf16.msra.mxu0 %v3821
    %5731 = vmatprep.subr.bf16.mxu0 %v3826
    %5732 = vmatpush1.bf16.msra.mxu0 %v3825
    %5733 = vmatprep.subr.bf16.mxu0 %v3830
    %5734 = vmatpush1.bf16.msra.mxu0 %v3829
    %5735 = vmatprep.mubr.bf16.mxu0 %v1168
    %5736 = vmatmul.mubr.bf16.gmra.mrb[0].mxu0 %v1167
    %v5737 = vpop.f32.mrb[0].mxu0
    %v5738 = vadd.f32 %v5697, %v5737
    %v5739 = vpop.f32.mrb[0].mxu0
    %v5740 = vadd.f32 %v5699, %v5739
    %v5741 = vpop.f32.mrb[0].mxu0
    %v5742 = vpop.f32.mrb[0].mxu0
    %5743 = vdwg.mxu0
    %5744 = vmatprep.subr.bf16.mxu0 %v3834
    %5745 = vmatpush1.bf16.msra.mxu0 %v3833
    %5746 = vmatprep.subr.bf16.mxu0 %v3838
    %5747 = vmatpush1.bf16.msra.mxu0 %v3837
    %5748 = vmatprep.subr.bf16.mxu0 %v3842
    %5749 = vmatpush1.bf16.msra.mxu0 %v3841
    %5750 = vmatprep.subr.bf16.mxu0 %v3846
    %5751 = vmatpush1.bf16.msra.mxu0 %v3845
    %5752 = vmatprep.subr.bf16.mxu0 %v3850
    %5753 = vmatpush1.bf16.msra.mxu0 %v3849
    %5754 = vmatprep.subr.bf16.mxu0 %v3854
    %5755 = vmatpush1.bf16.msra.mxu0 %v3853
    %5756 = vmatprep.subr.bf16.mxu0 %v3858
    %5757 = vmatpush1.bf16.msra.mxu0 %v3857
    %5758 = vmatprep.subr.bf16.mxu0 %v3862
    %5759 = vmatpush1.bf16.msra.mxu0 %v3861
    %5760 = vmatprep.subr.bf16.mxu0 %v3866
    %5761 = vmatpush1.bf16.msra.mxu0 %v3865
    %5762 = vmatprep.subr.bf16.mxu0 %v3870
    %5763 = vmatpush1.bf16.msra.mxu0 %v3869
    %5764 = vmatprep.subr.bf16.mxu0 %v3874
    %5765 = vmatpush1.bf16.msra.mxu0 %v3873
    %5766 = vmatprep.subr.bf16.mxu0 %v3878
    %5767 = vmatpush1.bf16.msra.mxu0 %v3877
    %5768 = vmatprep.subr.bf16.mxu0 %v3882
    %5769 = vmatpush1.bf16.msra.mxu0 %v3881
    %5770 = vmatprep.subr.bf16.mxu0 %v3886
    %5771 = vmatpush1.bf16.msra.mxu0 %v3885
    %5772 = vmatprep.subr.bf16.mxu0 %v3890
    %5773 = vmatpush1.bf16.msra.mxu0 %v3889
    %5774 = vmatprep.subr.bf16.mxu0 %v3894
    %5775 = vmatpush1.bf16.msra.mxu0 %v3893
    %5776 = vmatprep.mubr.bf16.mxu0 %v1170
    %5777 = vmatmul.mubr.bf16.gmra.mrb[0].mxu0 %v1169
    %v5778 = vpop.f32.mrb[0].mxu0
    %v5779 = vadd.f32 %v5738, %v5778
    %v5780 = vpop.f32.mrb[0].mxu0
    %v5781 = vadd.f32 %v5740, %v5780
    %v5782 = vpop.f32.mrb[0].mxu0
    %v5783 = vpop.f32.mrb[0].mxu0
    %5784 = vdwg.mxu0
    %5785 = vmatprep.subr.bf16.mxu0 %v3898
    %5786 = vmatpush1.bf16.msra.mxu0 %v3897
    %5787 = vmatprep.subr.bf16.mxu0 %v3902
    %5788 = vmatpush1.bf16.msra.mxu0 %v3901
    %5789 = vmatprep.subr.bf16.mxu0 %v3906
    %5790 = vmatpush1.bf16.msra.mxu0 %v3905
    %5791 = vmatprep.subr.bf16.mxu0 %v3910
    %5792 = vmatpush1.bf16.msra.mxu0 %v3909
    %5793 = vmatprep.subr.bf16.mxu0 %v3914
    %5794 = vmatpush1.bf16.msra.mxu0 %v3913
    %5795 = vmatprep.subr.bf16.mxu0 %v3918
    %5796 = vmatpush1.bf16.msra.mxu0 %v3917
    %5797 = vmatprep.subr.bf16.mxu0 %v3922
    %5798 = vmatpush1.bf16.msra.mxu0 %v3921
    %5799 = vmatprep.subr.bf16.mxu0 %v3926
    %5800 = vmatpush1.bf16.msra.mxu0 %v3925
    %5801 = vmatprep.subr.bf16.mxu0 %v3930
    %5802 = vmatpush1.bf16.msra.mxu0 %v3929
    %5803 = vmatprep.subr.bf16.mxu0 %v3934
    %5804 = vmatpush1.bf16.msra.mxu0 %v3933
    %5805 = vmatprep.subr.bf16.mxu0 %v3938
    %5806 = vmatpush1.bf16.msra.mxu0 %v3937
    %5807 = vmatprep.subr.bf16.mxu0 %v3942
    %5808 = vmatpush1.bf16.msra.mxu0 %v3941
    %5809 = vmatprep.subr.bf16.mxu0 %v3946
    %5810 = vmatpush1.bf16.msra.mxu0 %v3945
    %5811 = vmatprep.subr.bf16.mxu0 %v3950
    %5812 = vmatpush1.bf16.msra.mxu0 %v3949
    %5813 = vmatprep.subr.bf16.mxu0 %v3954
    %5814 = vmatpush1.bf16.msra.mxu0 %v3953
    %5815 = vmatprep.subr.bf16.mxu0 %v3958
    %5816 = vmatpush1.bf16.msra.mxu0 %v3957
    %5817 = vmatprep.mubr.bf16.mxu0 %v1172
    %5818 = vmatmul.mubr.bf16.gmra.mrb[0].mxu0 %v1171
    %v5819 = vpop.f32.mrb[0].mxu0
    %v5820 = vadd.f32 %v5779, %v5819
    %v5821 = vpop.f32.mrb[0].mxu0
    %v5822 = vadd.f32 %v5781, %v5821
    %v5823 = vpop.f32.mrb[0].mxu0
    %v5824 = vpop.f32.mrb[0].mxu0
    %5825 = vdwg.mxu0
    %5826 = vmatprep.subr.bf16.mxu0 %v3962
    %5827 = vmatpush1.bf16.msra.mxu0 %v3961
    %5828 = vmatprep.subr.bf16.mxu0 %v3966
    %5829 = vmatpush1.bf16.msra.mxu0 %v3965
    %5830 = vmatprep.subr.bf16.mxu0 %v3970
    %5831 = vmatpush1.bf16.msra.mxu0 %v3969
    %5832 = vmatprep.subr.bf16.mxu0 %v3974
    %5833 = vmatpush1.bf16.msra.mxu0 %v3973
    %5834 = vmatprep.subr.bf16.mxu0 %v3978
    %5835 = vmatpush1.bf16.msra.mxu0 %v3977
    %5836 = vmatprep.subr.bf16.mxu0 %v3982
    %5837 = vmatpush1.bf16.msra.mxu0 %v3981
    %5838 = vmatprep.subr.bf16.mxu0 %v3986
    %5839 = vmatpush1.bf16.msra.mxu0 %v3985
    %5840 = vmatprep.subr.bf16.mxu0 %v3990
    %5841 = vmatpush1.bf16.msra.mxu0 %v3989
    %5842 = vmatprep.subr.bf16.mxu0 %v3994
    %5843 = vmatpush1.bf16.msra.mxu0 %v3993
    %5844 = vmatprep.subr.bf16.mxu0 %v3998
    %5845 = vmatpush1.bf16.msra.mxu0 %v3997
    %5846 = vmatprep.subr.bf16.mxu0 %v4002
    %5847 = vmatpush1.bf16.msra.mxu0 %v4001
    %5848 = vmatprep.subr.bf16.mxu0 %v4006
    %5849 = vmatpush1.bf16.msra.mxu0 %v4005
    %5850 = vmatprep.subr.bf16.mxu0 %v4010
    %5851 = vmatpush1.bf16.msra.mxu0 %v4009
    %5852 = vmatprep.subr.bf16.mxu0 %v4014
    %5853 = vmatpush1.bf16.msra.mxu0 %v4013
    %5854 = vmatprep.subr.bf16.mxu0 %v4018
    %5855 = vmatpush1.bf16.msra.mxu0 %v4017
    %5856 = vmatprep.subr.bf16.mxu0 %v4022
    %5857 = vmatpush1.bf16.msra.mxu0 %v4021
    %5858 = vmatprep.mubr.bf16.mxu0 %v1174
    %5859 = vmatmul.mubr.bf16.gmra.mrb[0].mxu0 %v1173
    %v5860 = vpop.f32.mrb[0].mxu0
    %v5861 = vadd.f32 %v5820, %v5860
    %v5862 = vpop.f32.mrb[0].mxu0
    %v5863 = vadd.f32 %v5822, %v5862
    %v5864 = vpop.f32.mrb[0].mxu0
    %v5865 = vpop.f32.mrb[0].mxu0
    %5866 = vdwg.mxu0
    %5867 = vmatprep.subr.bf16.mxu0 %v4026
    %5868 = vmatpush1.bf16.msra.mxu0 %v4025
    %5869 = vmatprep.subr.bf16.mxu0 %v4030
    %5870 = vmatpush1.bf16.msra.mxu0 %v4029
    %5871 = vmatprep.subr.bf16.mxu0 %v4034
    %5872 = vmatpush1.bf16.msra.mxu0 %v4033
    %5873 = vmatprep.subr.bf16.mxu0 %v4038
    %5874 = vmatpush1.bf16.msra.mxu0 %v4037
    %5875 = vmatprep.subr.bf16.mxu0 %v4042
    %5876 = vmatpush1.bf16.msra.mxu0 %v4041
    %5877 = vmatprep.subr.bf16.mxu0 %v4046
    %5878 = vmatpush1.bf16.msra.mxu0 %v4045
    %5879 = vmatprep.subr.bf16.mxu0 %v4050
    %5880 = vmatpush1.bf16.msra.mxu0 %v4049
    %5881 = vmatprep.subr.bf16.mxu0 %v4054
    %5882 = vmatpush1.bf16.msra.mxu0 %v4053
    %5883 = vmatprep.subr.bf16.mxu0 %v4058
    %5884 = vmatpush1.bf16.msra.mxu0 %v4057
    %5885 = vmatprep.subr.bf16.mxu0 %v4062
    %5886 = vmatpush1.bf16.msra.mxu0 %v4061
    %5887 = vmatprep.subr.bf16.mxu0 %v4066
    %5888 = vmatpush1.bf16.msra.mxu0 %v4065
    %5889 = vmatprep.subr.bf16.mxu0 %v4070
    %5890 = vmatpush1.bf16.msra.mxu0 %v4069
    %5891 = vmatprep.subr.bf16.mxu0 %v4074
    %5892 = vmatpush1.bf16.msra.mxu0 %v4073
    %5893 = vmatprep.subr.bf16.mxu0 %v4078
    %5894 = vmatpush1.bf16.msra.mxu0 %v4077
    %5895 = vmatprep.subr.bf16.mxu0 %v4082
    %5896 = vmatpush1.bf16.msra.mxu0 %v4081
    %5897 = vmatprep.subr.bf16.mxu0 %v4086
    %5898 = vmatpush1.bf16.msra.mxu0 %v4085
    %5899 = vmatprep.mubr.bf16.mxu0 %v1176
    %5900 = vmatmul.mubr.bf16.gmra.mrb[0].mxu0 %v1175
    %v5901 = vpop.f32.mrb[0].mxu0
    %v5902 = vadd.f32 %v5861, %v5901
    %v5903 = vpop.f32.mrb[0].mxu0
    %v5904 = vadd.f32 %v5863, %v5903
    %v5905 = vpop.f32.mrb[0].mxu0
    %v5906 = vpop.f32.mrb[0].mxu0
    %5907 = vdwg.mxu0
    %5908 = vmatprep.subr.bf16.mxu0 %v4090
    %5909 = vmatpush1.bf16.msra.mxu0 %v4089
    %5910 = vmatprep.subr.bf16.mxu0 %v4094
    %5911 = vmatpush1.bf16.msra.mxu0 %v4093
    %5912 = vmatprep.subr.bf16.mxu0 %v4098
    %5913 = vmatpush1.bf16.msra.mxu0 %v4097
    %5914 = vmatprep.subr.bf16.mxu0 %v4102
    %5915 = vmatpush1.bf16.msra.mxu0 %v4101
    %5916 = vmatprep.subr.bf16.mxu0 %v4106
    %5917 = vmatpush1.bf16.msra.mxu0 %v4105
    %5918 = vmatprep.subr.bf16.mxu0 %v4110
    %5919 = vmatpush1.bf16.msra.mxu0 %v4109
    %5920 = vmatprep.subr.bf16.mxu0 %v4114
    %5921 = vmatpush1.bf16.msra.mxu0 %v4113
    %5922 = vmatprep.subr.bf16.mxu0 %v4118
    %5923 = vmatpush1.bf16.msra.mxu0 %v4117
    %5924 = vmatprep.subr.bf16.mxu0 %v4122
    %5925 = vmatpush1.bf16.msra.mxu0 %v4121
    %5926 = vmatprep.subr.bf16.mxu0 %v4126
    %5927 = vmatpush1.bf16.msra.mxu0 %v4125
    %5928 = vmatprep.subr.bf16.mxu0 %v4130
    %5929 = vmatpush1.bf16.msra.mxu0 %v4129
    %5930 = vmatprep.subr.bf16.mxu0 %v4134
    %5931 = vmatpush1.bf16.msra.mxu0 %v4133
    %5932 = vmatprep.subr.bf16.mxu0 %v4138
    %5933 = vmatpush1.bf16.msra.mxu0 %v4137
    %5934 = vmatprep.subr.bf16.mxu0 %v4142
    %5935 = vmatpush1.bf16.msra.mxu0 %v4141
    %5936 = vmatprep.subr.bf16.mxu0 %v4146
    %5937 = vmatpush1.bf16.msra.mxu0 %v4145
    %5938 = vmatprep.subr.bf16.mxu0 %v4150
    %5939 = vmatpush1.bf16.msra.mxu0 %v4149
    %5940 = vmatprep.mubr.bf16.mxu0 %v1178
    %5941 = vmatmul.mubr.bf16.gmra.mrb[0].mxu0 %v1177
    %v5942 = vpop.f32.mrb[0].mxu0
    %v5943 = vadd.f32 %v5902, %v5942
    %v5944 = vpop.f32.mrb[0].mxu0
    %v5945 = vadd.f32 %v5904, %v5944
    %v5946 = vpop.f32.mrb[0].mxu0
    %v5947 = vpop.f32.mrb[0].mxu0
    %5948 = vdwg.mxu0
    %5949 = vmatprep.subr.bf16.mxu0 %v4154
    %5950 = vmatpush1.bf16.msra.mxu0 %v4153
    %5951 = vmatprep.subr.bf16.mxu0 %v4158
    %5952 = vmatpush1.bf16.msra.mxu0 %v4157
    %5953 = vmatprep.subr.bf16.mxu0 %v4162
    %5954 = vmatpush1.bf16.msra.mxu0 %v4161
    %5955 = vmatprep.subr.bf16.mxu0 %v4166
    %5956 = vmatpush1.bf16.msra.mxu0 %v4165
    %5957 = vmatprep.subr.bf16.mxu0 %v4170
    %5958 = vmatpush1.bf16.msra.mxu0 %v4169
    %5959 = vmatprep.subr.bf16.mxu0 %v4174
    %5960 = vmatpush1.bf16.msra.mxu0 %v4173
    %5961 = vmatprep.subr.bf16.mxu0 %v4178
    %5962 = vmatpush1.bf16.msra.mxu0 %v4177
    %5963 = vmatprep.subr.bf16.mxu0 %v4182
    %5964 = vmatpush1.bf16.msra.mxu0 %v4181
    %5965 = vmatprep.subr.bf16.mxu0 %v4186
    %5966 = vmatpush1.bf16.msra.mxu0 %v4185
    %5967 = vmatprep.subr.bf16.mxu0 %v4190
    %5968 = vmatpush1.bf16.msra.mxu0 %v4189
    %5969 = vmatprep.subr.bf16.mxu0 %v4194
    %5970 = vmatpush1.bf16.msra.mxu0 %v4193
    %5971 = vmatprep.subr.bf16.mxu0 %v4198
    %5972 = vmatpush1.bf16.msra.mxu0 %v4197
    %5973 = vmatprep.subr.bf16.mxu0 %v4202
    %5974 = vmatpush1.bf16.msra.mxu0 %v4201
    %5975 = vmatprep.subr.bf16.mxu0 %v4206
    %5976 = vmatpush1.bf16.msra.mxu0 %v4205
    %5977 = vmatprep.subr.bf16.mxu0 %v4210
    %5978 = vmatpush1.bf16.msra.mxu0 %v4209
    %5979 = vmatprep.subr.bf16.mxu0 %v4214
    %5980 = vmatpush1.bf16.msra.mxu0 %v4213
    %5981 = vmatprep.mubr.bf16.mxu0 %v1180
    %5982 = vmatmul.mubr.bf16.gmra.mrb[0].mxu0 %v1179
    %v5983 = vpop.f32.mrb[0].mxu0
    %v5984 = vadd.f32 %v5943, %v5983
    %v5985 = vpop.f32.mrb[0].mxu0
    %v5986 = vadd.f32 %v5945, %v5985
    %v5987 = vpop.f32.mrb[0].mxu0
    %v5988 = vpop.f32.mrb[0].mxu0
    %5989 = vdwg.mxu0
    %5990 = vmatprep.subr.bf16.mxu0 %v4218
    %5991 = vmatpush1.bf16.msra.mxu0 %v4217
    %5992 = vmatprep.subr.bf16.mxu0 %v4222
    %5993 = vmatpush1.bf16.msra.mxu0 %v4221
    %5994 = vmatprep.subr.bf16.mxu0 %v4226
    %5995 = vmatpush1.bf16.msra.mxu0 %v4225
    %5996 = vmatprep.subr.bf16.mxu0 %v4230
    %5997 = vmatpush1.bf16.msra.mxu0 %v4229
    %5998 = vmatprep.subr.bf16.mxu0 %v4234
    %5999 = vmatpush1.bf16.msra.mxu0 %v4233
    %6000 = vmatprep.subr.bf16.mxu0 %v4238
    %6001 = vmatpush1.bf16.msra.mxu0 %v4237
    %6002 = vmatprep.subr.bf16.mxu0 %v4242
    %6003 = vmatpush1.bf16.msra.mxu0 %v4241
    %6004 = vmatprep.subr.bf16.mxu0 %v4246
    %6005 = vmatpush1.bf16.msra.mxu0 %v4245
    %6006 = vmatprep.subr.bf16.mxu0 %v4250
    %6007 = vmatpush1.bf16.msra.mxu0 %v4249
    %6008 = vmatprep.subr.bf16.mxu0 %v4254
    %6009 = vmatpush1.bf16.msra.mxu0 %v4253
    %6010 = vmatprep.subr.bf16.mxu0 %v4258
    %6011 = vmatpush1.bf16.msra.mxu0 %v4257
    %6012 = vmatprep.subr.bf16.mxu0 %v4262
    %6013 = vmatpush1.bf16.msra.mxu0 %v4261
    %6014 = vmatprep.subr.bf16.mxu0 %v4266
    %6015 = vmatpush1.bf16.msra.mxu0 %v4265
    %6016 = vmatprep.subr.bf16.mxu0 %v4270
    %6017 = vmatpush1.bf16.msra.mxu0 %v4269
    %6018 = vmatprep.subr.bf16.mxu0 %v4274
    %6019 = vmatpush1.bf16.msra.mxu0 %v4273
    %6020 = vmatprep.subr.bf16.mxu0 %v4278
    %6021 = vmatpush1.bf16.msra.mxu0 %v4277
    %6022 = vmatprep.mubr.bf16.mxu0 %v1182
    %6023 = vmatmul.mubr.bf16.gmra.mrb[0].mxu0 %v1181
    %v6024 = vpop.f32.mrb[0].mxu0
    %v6025 = vadd.f32 %v5984, %v6024
    %v6026 = vpop.f32.mrb[0].mxu0
    %v6027 = vadd.f32 %v5986, %v6026
    %v6028 = vpop.f32.mrb[0].mxu0
    %v6029 = vpop.f32.mrb[0].mxu0
    %6030 = vdwg.mxu0
    %v6031 = vmax.f32 %v5533, 0.0
    %v6032 = vmax.f32 %v5535, 0.0
    %v6033 = vmax.f32 %v6025, 0.0
    %v6034 = vmax.f32 %v6027, 0.0
    %v6035 = vpack.c.bf16 %v6031, %v6031
    %v6036 = vpack.c.bf16 %v6032, %v6032
    %v6037 = vpack.c.bf16 %v6033, %v6033
    %v6038 = vpack.c.bf16 %v6034, %v6034
    %v6039 = vld [vmem:[#allocation7] sm:$0xff]
    %v6040 = vld [vmem:[#allocation7 + $0x8] sm:$0xff]
    %v6041 = vld [vmem:[#allocation7 + $0x10] sm:$0xff]
    %v6042 = vld [vmem:[#allocation7 + $0x18] sm:$0xff]
    %v6043 = vld [vmem:[#allocation7 + $0x20] sm:$0xff]
    %v6044 = vld [vmem:[#allocation7 + $0x28] sm:$0xff]
    %v6045 = vld [vmem:[#allocation7 + $0x30] sm:$0xff]
    %v6046 = vld [vmem:[#allocation7 + $0x38] sm:$0xff]
    %v6047 = vld [vmem:[#allocation7 + $0x40] sm:$0xff]
    %v6048 = vld [vmem:[#allocation7 + $0x48] sm:$0xff]
    %v6049 = vld [vmem:[#allocation7 + $0x50] sm:$0xff]
    %v6050 = vld [vmem:[#allocation7 + $0x58] sm:$0xff]
    %v6051 = vld [vmem:[#allocation7 + $0x60] sm:$0xff]
    %v6052 = vld [vmem:[#allocation7 + $0x68] sm:$0xff]
    %v6053 = vld [vmem:[#allocation7 + $0x70] sm:$0xff]
    %v6054 = vld [vmem:[#allocation7 + $0x78] sm:$0xff]
    %v6055 = vld [vmem:[#allocation7 + $0x80] sm:$0xff]
    %v6056 = vld [vmem:[#allocation7 + $0x88] sm:$0xff]
    %v6057 = vld [vmem:[#allocation7 + $0x90] sm:$0xff]
    %v6058 = vld [vmem:[#allocation7 + $0x98] sm:$0xff]
    %v6059 = vld [vmem:[#allocation7 + $0xa0] sm:$0xff]
    %v6060 = vld [vmem:[#allocation7 + $0xa8] sm:$0xff]
    %v6061 = vld [vmem:[#allocation7 + $0xb0] sm:$0xff]
    %v6062 = vld [vmem:[#allocation7 + $0xb8] sm:$0xff]
    %v6063 = vld [vmem:[#allocation7 + $0xc0] sm:$0xff]
    %v6064 = vld [vmem:[#allocation7 + $0xc8] sm:$0xff]
    %v6065 = vld [vmem:[#allocation7 + $0xd0] sm:$0xff]
    %v6066 = vld [vmem:[#allocation7 + $0xd8] sm:$0xff]
    %v6067 = vld [vmem:[#allocation7 + $0xe0] sm:$0xff]
    %v6068 = vld [vmem:[#allocation7 + $0xe8] sm:$0xff]
    %v6069 = vld [vmem:[#allocation7 + $0xf0] sm:$0xff]
    %v6070 = vld [vmem:[#allocation7 + $0xf8] sm:$0xff]
    %v6071 = vld [vmem:[#allocation7 + $0x100] sm:$0xff]
    %v6072 = vld [vmem:[#allocation7 + $0x108] sm:$0xff]
    %v6073 = vld [vmem:[#allocation7 + $0x110] sm:$0xff]
    %v6074 = vld [vmem:[#allocation7 + $0x118] sm:$0xff]
    %v6075 = vld [vmem:[#allocation7 + $0x120] sm:$0xff]
    %v6076 = vld [vmem:[#allocation7 + $0x128] sm:$0xff]
    %v6077 = vld [vmem:[#allocation7 + $0x130] sm:$0xff]
    %v6078 = vld [vmem:[#allocation7 + $0x138] sm:$0xff]
    %v6079 = vld [vmem:[#allocation7 + $0x140] sm:$0xff]
    %v6080 = vld [vmem:[#allocation7 + $0x148] sm:$0xff]
    %v6081 = vld [vmem:[#allocation7 + $0x150] sm:$0xff]
    %v6082 = vld [vmem:[#allocation7 + $0x158] sm:$0xff]
    %v6083 = vld [vmem:[#allocation7 + $0x160] sm:$0xff]
    %v6084 = vld [vmem:[#allocation7 + $0x168] sm:$0xff]
    %v6085 = vld [vmem:[#allocation7 + $0x170] sm:$0xff]
    %v6086 = vld [vmem:[#allocation7 + $0x178] sm:$0xff]
    %v6087 = vld [vmem:[#allocation7 + $0x180] sm:$0xff]
    %v6088 = vld [vmem:[#allocation7 + $0x188] sm:$0xff]
    %v6089 = vld [vmem:[#allocation7 + $0x190] sm:$0xff]
    %v6090 = vld [vmem:[#allocation7 + $0x198] sm:$0xff]
    %v6091 = vld [vmem:[#allocation7 + $0x1a0] sm:$0xff]
    %v6092 = vld [vmem:[#allocation7 + $0x1a8] sm:$0xff]
    %v6093 = vld [vmem:[#allocation7 + $0x1b0] sm:$0xff]
    %v6094 = vld [vmem:[#allocation7 + $0x1b8] sm:$0xff]
    %v6095 = vld [vmem:[#allocation7 + $0x1c0] sm:$0xff]
    %v6096 = vld [vmem:[#allocation7 + $0x1c8] sm:$0xff]
    %v6097 = vld [vmem:[#allocation7 + $0x1d0] sm:$0xff]
    %v6098 = vld [vmem:[#allocation7 + $0x1d8] sm:$0xff]
    %v6099 = vld [vmem:[#allocation7 + $0x1e0] sm:$0xff]
    %v6100 = vld [vmem:[#allocation7 + $0x1e8] sm:$0xff]
    %v6101 = vld [vmem:[#allocation7 + $0x1f0] sm:$0xff]
    %v6102 = vld [vmem:[#allocation7 + $0x1f8] sm:$0xff]
    %v6103 = vld [vmem:[#allocation8] sm:$0x3]
    %v6105 = vlaneseq
    %v6106 = vshrl.u32 %v6105, 7
    %v6107 = vsub.s32 0, %v6106
    %v6108 = vrot.slane %v6103, %v6107
    %v6109 = vlaneseq
    %v6110 = vshrl.u32 %v6109, 7
    %v6111 = vsub.s32 1, %v6110
    %v6112 = vrot.slane %v6103, %v6111
    %v6179 = vunpack.c.l.b16 %v6039
    %v6180 = vunpack.c.h.b16 %v6039
    %v6181 = vunpack.c.l.b16 %v6040
    %v6182 = vunpack.c.h.b16 %v6040
    %v6183 = vunpack.c.l.b16 %v6041
    %v6184 = vunpack.c.h.b16 %v6041
    %v6185 = vunpack.c.l.b16 %v6042
    %v6186 = vunpack.c.h.b16 %v6042
    %v6187 = vunpack.c.l.b16 %v6043
    %v6188 = vunpack.c.h.b16 %v6043
    %v6189 = vunpack.c.l.b16 %v6044
    %v6190 = vunpack.c.h.b16 %v6044
    %v6191 = vunpack.c.l.b16 %v6045
    %v6192 = vunpack.c.h.b16 %v6045
    %v6193 = vunpack.c.l.b16 %v6046
    %v6194 = vunpack.c.h.b16 %v6046
    %v6195 = vunpack.c.l.b16 %v6047
    %v6196 = vunpack.c.h.b16 %v6047
    %v6197 = vunpack.c.l.b16 %v6048
    %v6198 = vunpack.c.h.b16 %v6048
    %v6199 = vunpack.c.l.b16 %v6049
    %v6200 = vunpack.c.h.b16 %v6049
    %v6201 = vunpack.c.l.b16 %v6050
    %v6202 = vunpack.c.h.b16 %v6050
    %v6203 = vunpack.c.l.b16 %v6051
    %v6204 = vunpack.c.h.b16 %v6051
    %v6205 = vunpack.c.l.b16 %v6052
    %v6206 = vunpack.c.h.b16 %v6052
    %v6207 = vunpack.c.l.b16 %v6053
    %v6208 = vunpack.c.h.b16 %v6053
    %v6209 = vunpack.c.l.b16 %v6054
    %v6210 = vunpack.c.h.b16 %v6054
    %v6211 = vunpack.c.l.b16 %v6055
    %v6212 = vunpack.c.h.b16 %v6055
    %v6213 = vunpack.c.l.b16 %v6056
    %v6214 = vunpack.c.h.b16 %v6056
    %v6215 = vunpack.c.l.b16 %v6057
    %v6216 = vunpack.c.h.b16 %v6057
    %v6217 = vunpack.c.l.b16 %v6058
    %v6218 = vunpack.c.h.b16 %v6058
    %v6219 = vunpack.c.l.b16 %v6059
    %v6220 = vunpack.c.h.b16 %v6059
    %v6221 = vunpack.c.l.b16 %v6060
    %v6222 = vunpack.c.h.b16 %v6060
    %v6223 = vunpack.c.l.b16 %v6061
    %v6224 = vunpack.c.h.b16 %v6061
    %v6225 = vunpack.c.l.b16 %v6062
    %v6226 = vunpack.c.h.b16 %v6062
    %v6227 = vunpack.c.l.b16 %v6063
    %v6228 = vunpack.c.h.b16 %v6063
    %v6229 = vunpack.c.l.b16 %v6064
    %v6230 = vunpack.c.h.b16 %v6064
    %v6231 = vunpack.c.l.b16 %v6065
    %v6232 = vunpack.c.h.b16 %v6065
    %v6233 = vunpack.c.l.b16 %v6066
    %v6234 = vunpack.c.h.b16 %v6066
    %v6235 = vunpack.c.l.b16 %v6067
    %v6236 = vunpack.c.h.b16 %v6067
    %v6237 = vunpack.c.l.b16 %v6068
    %v6238 = vunpack.c.h.b16 %v6068
    %v6239 = vunpack.c.l.b16 %v6069
    %v6240 = vunpack.c.h.b16 %v6069
    %v6241 = vunpack.c.l.b16 %v6070
    %v6242 = vunpack.c.h.b16 %v6070
    %v6243 = vunpack.c.l.b16 %v6071
    %v6244 = vunpack.c.h.b16 %v6071
    %v6245 = vunpack.c.l.b16 %v6072
    %v6246 = vunpack.c.h.b16 %v6072
    %v6247 = vunpack.c.l.b16 %v6073
    %v6248 = vunpack.c.h.b16 %v6073
    %v6249 = vunpack.c.l.b16 %v6074
    %v6250 = vunpack.c.h.b16 %v6074
    %v6251 = vunpack.c.l.b16 %v6075
    %v6252 = vunpack.c.h.b16 %v6075
    %v6253 = vunpack.c.l.b16 %v6076
    %v6254 = vunpack.c.h.b16 %v6076
    %v6255 = vunpack.c.l.b16 %v6077
    %v6256 = vunpack.c.h.b16 %v6077
    %v6257 = vunpack.c.l.b16 %v6078
    %v6258 = vunpack.c.h.b16 %v6078
    %v6259 = vunpack.c.l.b16 %v6079
    %v6260 = vunpack.c.h.b16 %v6079
    %v6261 = vunpack.c.l.b16 %v6080
    %v6262 = vunpack.c.h.b16 %v6080
    %v6263 = vunpack.c.l.b16 %v6081
    %v6264 = vunpack.c.h.b16 %v6081
    %v6265 = vunpack.c.l.b16 %v6082
    %v6266 = vunpack.c.h.b16 %v6082
    %v6267 = vunpack.c.l.b16 %v6083
    %v6268 = vunpack.c.h.b16 %v6083
    %v6269 = vunpack.c.l.b16 %v6084
    %v6270 = vunpack.c.h.b16 %v6084
    %v6271 = vunpack.c.l.b16 %v6085
    %v6272 = vunpack.c.h.b16 %v6085
    %v6273 = vunpack.c.l.b16 %v6086
    %v6274 = vunpack.c.h.b16 %v6086
    %v6275 = vunpack.c.l.b16 %v6087
    %v6276 = vunpack.c.h.b16 %v6087
    %v6277 = vunpack.c.l.b16 %v6088
    %v6278 = vunpack.c.h.b16 %v6088
    %v6279 = vunpack.c.l.b16 %v6089
    %v6280 = vunpack.c.h.b16 %v6089
    %v6281 = vunpack.c.l.b16 %v6090
    %v6282 = vunpack.c.h.b16 %v6090
    %v6283 = vunpack.c.l.b16 %v6091
    %v6284 = vunpack.c.h.b16 %v6091
    %v6285 = vunpack.c.l.b16 %v6092
    %v6286 = vunpack.c.h.b16 %v6092
    %v6287 = vunpack.c.l.b16 %v6093
    %v6288 = vunpack.c.h.b16 %v6093
    %v6289 = vunpack.c.l.b16 %v6094
    %v6290 = vunpack.c.h.b16 %v6094
    %v6291 = vunpack.c.l.b16 %v6095
    %v6292 = vunpack.c.h.b16 %v6095
    %v6293 = vunpack.c.l.b16 %v6096
    %v6294 = vunpack.c.h.b16 %v6096
    %v6295 = vunpack.c.l.b16 %v6097
    %v6296 = vunpack.c.h.b16 %v6097
    %v6297 = vunpack.c.l.b16 %v6098
    %v6298 = vunpack.c.h.b16 %v6098
    %v6299 = vunpack.c.l.b16 %v6099
    %v6300 = vunpack.c.h.b16 %v6099
    %v6301 = vunpack.c.l.b16 %v6100
    %v6302 = vunpack.c.h.b16 %v6100
    %v6303 = vunpack.c.l.b16 %v6101
    %v6304 = vunpack.c.h.b16 %v6101
    %v6305 = vunpack.c.l.b16 %v6102
    %v6306 = vunpack.c.h.b16 %v6102
    %v6307 = vpack.c.b16 %v6181, %v6179
    %v6308 = vpack.c.b16 %v6182, %v6180
    %v6309 = vpack.c.b16 %v6185, %v6183
    %v6310 = vpack.c.b16 %v6186, %v6184
    %v6311 = vpack.c.b16 %v6189, %v6187
    %v6312 = vpack.c.b16 %v6190, %v6188
    %v6313 = vpack.c.b16 %v6193, %v6191
    %v6314 = vpack.c.b16 %v6194, %v6192
    %v6315 = vpack.c.b16 %v6197, %v6195
    %v6316 = vpack.c.b16 %v6198, %v6196
    %v6317 = vpack.c.b16 %v6201, %v6199
    %v6318 = vpack.c.b16 %v6202, %v6200
    %v6319 = vpack.c.b16 %v6205, %v6203
    %v6320 = vpack.c.b16 %v6206, %v6204
    %v6321 = vpack.c.b16 %v6209, %v6207
    %v6322 = vpack.c.b16 %v6210, %v6208
    %v6323 = vpack.c.b16 %v6213, %v6211
    %v6324 = vpack.c.b16 %v6214, %v6212
    %v6325 = vpack.c.b16 %v6217, %v6215
    %v6326 = vpack.c.b16 %v6218, %v6216
    %v6327 = vpack.c.b16 %v6221, %v6219
    %v6328 = vpack.c.b16 %v6222, %v6220
    %v6329 = vpack.c.b16 %v6225, %v6223
    %v6330 = vpack.c.b16 %v6226, %v6224
    %v6331 = vpack.c.b16 %v6229, %v6227
    %v6332 = vpack.c.b16 %v6230, %v6228
    %v6333 = vpack.c.b16 %v6233, %v6231
    %v6334 = vpack.c.b16 %v6234, %v6232
    %v6335 = vpack.c.b16 %v6237, %v6235
    %v6336 = vpack.c.b16 %v6238, %v6236
    %v6337 = vpack.c.b16 %v6241, %v6239
    %v6338 = vpack.c.b16 %v6242, %v6240
    %v6339 = vpack.c.b16 %v6245, %v6243
    %v6340 = vpack.c.b16 %v6246, %v6244
    %v6341 = vpack.c.b16 %v6249, %v6247
    %v6342 = vpack.c.b16 %v6250, %v6248
    %v6343 = vpack.c.b16 %v6253, %v6251
    %v6344 = vpack.c.b16 %v6254, %v6252
    %v6345 = vpack.c.b16 %v6257, %v6255
    %v6346 = vpack.c.b16 %v6258, %v6256
    %v6347 = vpack.c.b16 %v6261, %v6259
    %v6348 = vpack.c.b16 %v6262, %v6260
    %v6349 = vpack.c.b16 %v6265, %v6263
    %v6350 = vpack.c.b16 %v6266, %v6264
    %v6351 = vpack.c.b16 %v6269, %v6267
    %v6352 = vpack.c.b16 %v6270, %v6268
    %v6353 = vpack.c.b16 %v6273, %v6271
    %v6354 = vpack.c.b16 %v6274, %v6272
    %v6355 = vpack.c.b16 %v6277, %v6275
    %v6356 = vpack.c.b16 %v6278, %v6276
    %v6357 = vpack.c.b16 %v6281, %v6279
    %v6358 = vpack.c.b16 %v6282, %v6280
    %v6359 = vpack.c.b16 %v6285, %v6283
    %v6360 = vpack.c.b16 %v6286, %v6284
    %v6361 = vpack.c.b16 %v6289, %v6287
    %v6362 = vpack.c.b16 %v6290, %v6288
    %v6363 = vpack.c.b16 %v6293, %v6291
    %v6364 = vpack.c.b16 %v6294, %v6292
    %v6365 = vpack.c.b16 %v6297, %v6295
    %v6366 = vpack.c.b16 %v6298, %v6296
    %v6367 = vpack.c.b16 %v6301, %v6299
    %v6368 = vpack.c.b16 %v6302, %v6300
    %v6369 = vpack.c.b16 %v6305, %v6303
    %v6370 = vpack.c.b16 %v6306, %v6304
    %6435 = vmatprep.subr.bf16.mxu0 %v6308
    %6436 = vmatpush1.bf16.msra.mxu0 %v6307
    %6437 = vmatprep.subr.bf16.mxu0 %v6310
    %6438 = vmatpush1.bf16.msra.mxu0 %v6309
    %6439 = vmatprep.subr.bf16.mxu0 %v6312
    %6440 = vmatpush1.bf16.msra.mxu0 %v6311
    %6441 = vmatprep.subr.bf16.mxu0 %v6314
    %6442 = vmatpush1.bf16.msra.mxu0 %v6313
    %6443 = vmatprep.subr.bf16.mxu0 %v6316
    %6444 = vmatpush1.bf16.msra.mxu0 %v6315
    %6445 = vmatprep.subr.bf16.mxu0 %v6318
    %6446 = vmatpush1.bf16.msra.mxu0 %v6317
    %6447 = vmatprep.subr.bf16.mxu0 %v6320
    %6448 = vmatpush1.bf16.msra.mxu0 %v6319
    %6449 = vmatprep.subr.bf16.mxu0 %v6322
    %6450 = vmatpush1.bf16.msra.mxu0 %v6321
    %6451 = vmatprep.subr.bf16.mxu0 %v6324
    %6452 = vmatpush1.bf16.msra.mxu0 %v6323
    %6453 = vmatprep.subr.bf16.mxu0 %v6326
    %6454 = vmatpush1.bf16.msra.mxu0 %v6325
    %6455 = vmatprep.subr.bf16.mxu0 %v6328
    %6456 = vmatpush1.bf16.msra.mxu0 %v6327
    %6457 = vmatprep.subr.bf16.mxu0 %v6330
    %6458 = vmatpush1.bf16.msra.mxu0 %v6329
    %6459 = vmatprep.subr.bf16.mxu0 %v6332
    %6460 = vmatpush1.bf16.msra.mxu0 %v6331
    %6461 = vmatprep.subr.bf16.mxu0 %v6334
    %6462 = vmatpush1.bf16.msra.mxu0 %v6333
    %6463 = vmatprep.subr.bf16.mxu0 %v6336
    %6464 = vmatpush1.bf16.msra.mxu0 %v6335
    %6465 = vmatprep.subr.bf16.mxu0 %v6338
    %6466 = vmatpush1.bf16.msra.mxu0 %v6337
    %6467 = vmatprep.mubr.bf16.mxu0 %v6036
    %6468 = vmatmul.mubr.bf16.gmra.mrb[0].mxu0 %v6035
    %v6469 = vpop.f32.mrb[0].mxu0
    %v6470 = vadd.f32 %v6108, %v6469
    %v6471 = vpop.f32.mrb[0].mxu0
    %v6472 = vadd.f32 %v6112, %v6471
    %v6473 = vpop.f32.mrb[0].mxu0
    %v6474 = vpop.f32.mrb[0].mxu0
    %6475 = vdwg.mxu0
    %6476 = vmatprep.subr.bf16.mxu0 %v6340
    %6477 = vmatpush1.bf16.msra.mxu0 %v6339
    %6478 = vmatprep.subr.bf16.mxu0 %v6342
    %6479 = vmatpush1.bf16.msra.mxu0 %v6341
    %6480 = vmatprep.subr.bf16.mxu0 %v6344
    %6481 = vmatpush1.bf16.msra.mxu0 %v6343
    %6482 = vmatprep.subr.bf16.mxu0 %v6346
    %6483 = vmatpush1.bf16.msra.mxu0 %v6345
    %6484 = vmatprep.subr.bf16.mxu0 %v6348
    %6485 = vmatpush1.bf16.msra.mxu0 %v6347
    %6486 = vmatprep.subr.bf16.mxu0 %v6350
    %6487 = vmatpush1.bf16.msra.mxu0 %v6349
    %6488 = vmatprep.subr.bf16.mxu0 %v6352
    %6489 = vmatpush1.bf16.msra.mxu0 %v6351
    %6490 = vmatprep.subr.bf16.mxu0 %v6354
    %6491 = vmatpush1.bf16.msra.mxu0 %v6353
    %6492 = vmatprep.subr.bf16.mxu0 %v6356
    %6493 = vmatpush1.bf16.msra.mxu0 %v6355
    %6494 = vmatprep.subr.bf16.mxu0 %v6358
    %6495 = vmatpush1.bf16.msra.mxu0 %v6357
    %6496 = vmatprep.subr.bf16.mxu0 %v6360
    %6497 = vmatpush1.bf16.msra.mxu0 %v6359
    %6498 = vmatprep.subr.bf16.mxu0 %v6362
    %6499 = vmatpush1.bf16.msra.mxu0 %v6361
    %6500 = vmatprep.subr.bf16.mxu0 %v6364
    %6501 = vmatpush1.bf16.msra.mxu0 %v6363
    %6502 = vmatprep.subr.bf16.mxu0 %v6366
    %6503 = vmatpush1.bf16.msra.mxu0 %v6365
    %6504 = vmatprep.subr.bf16.mxu0 %v6368
    %6505 = vmatpush1.bf16.msra.mxu0 %v6367
    %6506 = vmatprep.subr.bf16.mxu0 %v6370
    %6507 = vmatpush1.bf16.msra.mxu0 %v6369
    %6508 = vmatprep.mubr.bf16.mxu0 %v6038
    %6509 = vmatmul.mubr.bf16.gmra.mrb[0].mxu0 %v6037
    %v6510 = vpop.f32.mrb[0].mxu0
    %v6511 = vadd.f32 %v6470, %v6510
    %v6512 = vpop.f32.mrb[0].mxu0
    %v6513 = vadd.f32 %v6472, %v6512
    %v6514 = vpop.f32.mrb[0].mxu0
    %v6515 = vpop.f32.mrb[0].mxu0
    %6516 = vdwg.mxu0
    %v6517 = vmax.f32 %v6511, 0.0
    %v6518 = vmax.f32 %v6513, 0.0
    %v6519 = vpack.c.bf16 %v6517, %v6517
    %v6520 = vpack.c.bf16 %v6518, %v6518
    %v6521 = vld [vmem:[#allocation10] sm:$0xf]
    %v6522 = vld [vmem:[#allocation10 + $0x4] sm:$0xf]
    %v6523 = vld [vmem:[#allocation10 + $0x8] sm:$0xf]
    %v6524 = vld [vmem:[#allocation10 + $0xc] sm:$0xf]
    %v6525 = vld [vmem:[#allocation10 + $0x10] sm:$0xf]
    %v6526 = vld [vmem:[#allocation10 + $0x14] sm:$0xf]
    %v6527 = vld [vmem:[#allocation10 + $0x18] sm:$0xf]
    %v6528 = vld [vmem:[#allocation10 + $0x1c] sm:$0xf]
    %v6529 = vld [vmem:[#allocation10 + $0x20] sm:$0xf]
    %v6530 = vld [vmem:[#allocation10 + $0x24] sm:$0xf]
    %v6531 = vld [vmem:[#allocation10 + $0x28] sm:$0xf]
    %v6532 = vld [vmem:[#allocation10 + $0x2c] sm:$0xf]
    %v6533 = vld [vmem:[#allocation10 + $0x30] sm:$0xf]
    %v6534 = vld [vmem:[#allocation10 + $0x34] sm:$0xf]
    %v6535 = vld [vmem:[#allocation10 + $0x38] sm:$0xf]
    %v6536 = vld [vmem:[#allocation10 + $0x3c] sm:$0xf]
    %v6537 = vld [vmem:[#allocation10 + $0x40] sm:$0xf]
    %v6538 = vld [vmem:[#allocation10 + $0x44] sm:$0xf]
    %v6539 = vld [vmem:[#allocation10 + $0x48] sm:$0xf]
    %v6540 = vld [vmem:[#allocation10 + $0x4c] sm:$0xf]
    %v6541 = vld [vmem:[#allocation10 + $0x50] sm:$0xf]
    %v6542 = vld [vmem:[#allocation10 + $0x54] sm:$0xf]
    %v6543 = vld [vmem:[#allocation10 + $0x58] sm:$0xf]
    %v6544 = vld [vmem:[#allocation10 + $0x5c] sm:$0xf]
    %v6545 = vld [vmem:[#allocation10 + $0x60] sm:$0xf]
    %v6546 = vld [vmem:[#allocation10 + $0x64] sm:$0xf]
    %v6547 = vld [vmem:[#allocation10 + $0x68] sm:$0xf]
    %v6548 = vld [vmem:[#allocation10 + $0x6c] sm:$0xf]
    %v6549 = vld [vmem:[#allocation10 + $0x70] sm:$0xf]
    %v6550 = vld [vmem:[#allocation10 + $0x74] sm:$0xf]
    %v6551 = vld [vmem:[#allocation10 + $0x78] sm:$0xf]
    %v6552 = vld [vmem:[#allocation10 + $0x7c] sm:$0xf]
    %v6553 = vld [vmem:[#allocation11] sm:$0x1]
    %v6555 = vlaneseq
    %v6556 = vshrl.u32 %v6555, 7
    %v6557 = vsub.s32 0, %v6556
    %v6558 = vrot.slane %v6553, %v6557
    %v6592 = vunpack.c.l.b16 %v6521
    %v6593 = vunpack.c.l.b16 %v6522
    %v6594 = vunpack.c.l.b16 %v6523
    %v6595 = vunpack.c.l.b16 %v6524
    %v6596 = vunpack.c.l.b16 %v6525
    %v6597 = vunpack.c.l.b16 %v6526
    %v6598 = vunpack.c.l.b16 %v6527
    %v6599 = vunpack.c.l.b16 %v6528
    %v6600 = vunpack.c.l.b16 %v6529
    %v6601 = vunpack.c.l.b16 %v6530
    %v6602 = vunpack.c.l.b16 %v6531
    %v6603 = vunpack.c.l.b16 %v6532
    %v6604 = vunpack.c.l.b16 %v6533
    %v6605 = vunpack.c.l.b16 %v6534
    %v6606 = vunpack.c.l.b16 %v6535
    %v6607 = vunpack.c.l.b16 %v6536
    %v6608 = vunpack.c.l.b16 %v6537
    %v6609 = vunpack.c.l.b16 %v6538
    %v6610 = vunpack.c.l.b16 %v6539
    %v6611 = vunpack.c.l.b16 %v6540
    %v6612 = vunpack.c.l.b16 %v6541
    %v6613 = vunpack.c.l.b16 %v6542
    %v6614 = vunpack.c.l.b16 %v6543
    %v6615 = vunpack.c.l.b16 %v6544
    %v6616 = vunpack.c.l.b16 %v6545
    %v6617 = vunpack.c.l.b16 %v6546
    %v6618 = vunpack.c.l.b16 %v6547
    %v6619 = vunpack.c.l.b16 %v6548
    %v6620 = vunpack.c.l.b16 %v6549
    %v6621 = vunpack.c.l.b16 %v6550
    %v6622 = vunpack.c.l.b16 %v6551
    %v6623 = vunpack.c.l.b16 %v6552
    %v6624 = vpack.c.b16 %v6593, %v6592
    %v6625 = vpack.c.b16 %v6595, %v6594
    %v6626 = vpack.c.b16 %v6597, %v6596
    %v6627 = vpack.c.b16 %v6599, %v6598
    %v6628 = vpack.c.b16 %v6601, %v6600
    %v6629 = vpack.c.b16 %v6603, %v6602
    %v6630 = vpack.c.b16 %v6605, %v6604
    %v6631 = vpack.c.b16 %v6607, %v6606
    %v6632 = vpack.c.b16 %v6609, %v6608
    %v6633 = vpack.c.b16 %v6611, %v6610
    %v6634 = vpack.c.b16 %v6613, %v6612
    %v6635 = vpack.c.b16 %v6615, %v6614
    %v6636 = vpack.c.b16 %v6617, %v6616
    %v6637 = vpack.c.b16 %v6619, %v6618
    %v6638 = vpack.c.b16 %v6621, %v6620
    %v6639 = vpack.c.b16 %v6623, %v6622
    %6656 = vmatprep.subr.bf16.mxu0 0
    %6657 = vmatpush1.bf16.msra.mxu0 %v6624
    %6658 = vmatprep.subr.bf16.mxu0 0
    %6659 = vmatpush1.bf16.msra.mxu0 %v6625
    %6660 = vmatprep.subr.bf16.mxu0 0
    %6661 = vmatpush1.bf16.msra.mxu0 %v6626
    %6662 = vmatprep.subr.bf16.mxu0 0
    %6663 = vmatpush1.bf16.msra.mxu0 %v6627
    %6664 = vmatprep.subr.bf16.mxu0 0
    %6665 = vmatpush1.bf16.msra.mxu0 %v6628
    %6666 = vmatprep.subr.bf16.mxu0 0
    %6667 = vmatpush1.bf16.msra.mxu0 %v6629
    %6668 = vmatprep.subr.bf16.mxu0 0
    %6669 = vmatpush1.bf16.msra.mxu0 %v6630
    %6670 = vmatprep.subr.bf16.mxu0 0
    %6671 = vmatpush1.bf16.msra.mxu0 %v6631
    %6672 = vmatprep.subr.bf16.mxu0 0
    %6673 = vmatpush1.bf16.msra.mxu0 %v6632
    %6674 = vmatprep.subr.bf16.mxu0 0
    %6675 = vmatpush1.bf16.msra.mxu0 %v6633
    %6676 = vmatprep.subr.bf16.mxu0 0
    %6677 = vmatpush1.bf16.msra.mxu0 %v6634
    %6678 = vmatprep.subr.bf16.mxu0 0
    %6679 = vmatpush1.bf16.msra.mxu0 %v6635
    %6680 = vmatprep.subr.bf16.mxu0 0
    %6681 = vmatpush1.bf16.msra.mxu0 %v6636
    %6682 = vmatprep.subr.bf16.mxu0 0
    %6683 = vmatpush1.bf16.msra.mxu0 %v6637
    %6684 = vmatprep.subr.bf16.mxu0 0
    %6685 = vmatpush1.bf16.msra.mxu0 %v6638
    %6686 = vmatprep.subr.bf16.mxu0 0
    %6687 = vmatpush1.bf16.msra.mxu0 %v6639
    %6688 = vmatprep.mubr.bf16.mxu0 %v6520
    %6689 = vmatmul.mubr.bf16.gmra.mrb[0].mxu0 %v6519
    %v6690 = vpop.f32.mrb[0].mxu0
    %v6691 = vadd.f32 %v6558, %v6690
    %v6692 = vpop.f32.mrb[0].mxu0
    %v6693 = vpop.f32.mrb[0].mxu0
    %v6694 = vpop.f32.mrb[0].mxu0
    %6695 = vdwg.mxu0
    %v6696 = vmax.f32 %v6691, 0.0
    %v6697 = vpack.c.bf16 %v6696, %v6696
    %v6698 = vld [vmem:[#allocation13] sm:$0xf]
    %v6699 = vld [vmem:[#allocation13 + $0x4] sm:$0xf]
    %v6700 = vld [vmem:[#allocation13 + $0x8] sm:$0xf]
    %v6701 = vld [vmem:[#allocation13 + $0xc] sm:$0xf]
    %v6702 = vld [vmem:[#allocation13 + $0x10] sm:$0xf]
    %v6703 = vld [vmem:[#allocation13 + $0x14] sm:$0xf]
    %v6704 = vld [vmem:[#allocation13 + $0x18] sm:$0xf]
    %v6705 = vld [vmem:[#allocation13 + $0x1c] sm:$0xf]
    %v6706 = vld [vmem:[#allocation13 + $0x20] sm:$0xf]
    %v6707 = vld [vmem:[#allocation13 + $0x24] sm:$0xf]
    %v6708 = vld [vmem:[#allocation13 + $0x28] sm:$0xf]
    %v6709 = vld [vmem:[#allocation13 + $0x2c] sm:$0xf]
    %v6710 = vld [vmem:[#allocation13 + $0x30] sm:$0xf]
    %v6711 = vld [vmem:[#allocation13 + $0x34] sm:$0xf]
    %v6712 = vld [vmem:[#allocation13 + $0x38] sm:$0xf]
    %v6713 = vld [vmem:[#allocation13 + $0x3c] sm:$0xf]
    %v6714 = vld [vmem:[#allocation14] sm:$0x1]
    %v6716 = vlaneseq
    %v6717 = vshrl.u32 %v6716, 7
    %v6718 = vsub.s32 0, %v6717
    %v6719 = vrot.slane %v6714, %v6718
    %v6737 = vunpack.c.l.b16 %v6698
    %v6738 = vunpack.c.l.b16 %v6699
    %v6739 = vunpack.c.l.b16 %v6700
    %v6740 = vunpack.c.l.b16 %v6701
    %v6741 = vunpack.c.l.b16 %v6702
    %v6742 = vunpack.c.l.b16 %v6703
    %v6743 = vunpack.c.l.b16 %v6704
    %v6744 = vunpack.c.l.b16 %v6705
    %v6745 = vunpack.c.l.b16 %v6706
    %v6746 = vunpack.c.l.b16 %v6707
    %v6747 = vunpack.c.l.b16 %v6708
    %v6748 = vunpack.c.l.b16 %v6709
    %v6749 = vunpack.c.l.b16 %v6710
    %v6750 = vunpack.c.l.b16 %v6711
    %v6751 = vunpack.c.l.b16 %v6712
    %v6752 = vunpack.c.l.b16 %v6713
    %v6753 = vpack.c.b16 %v6738, %v6737
    %v6754 = vpack.c.b16 %v6740, %v6739
    %v6755 = vpack.c.b16 %v6742, %v6741
    %v6756 = vpack.c.b16 %v6744, %v6743
    %v6757 = vpack.c.b16 %v6746, %v6745
    %v6758 = vpack.c.b16 %v6748, %v6747
    %v6759 = vpack.c.b16 %v6750, %v6749
    %v6760 = vpack.c.b16 %v6752, %v6751
    %6769 = vmatprep.subr.bf16.mxu0 0
    %6770 = vmatpush1.bf16.msra.mxu0 %v6753
    %6771 = vmatprep.subr.bf16.mxu0 0
    %6772 = vmatpush1.bf16.msra.mxu0 %v6754
    %6773 = vmatprep.subr.bf16.mxu0 0
    %6774 = vmatpush1.bf16.msra.mxu0 %v6755
    %6775 = vmatprep.subr.bf16.mxu0 0
    %6776 = vmatpush1.bf16.msra.mxu0 %v6756
    %6777 = vmatprep.subr.bf16.mxu0 0
    %6778 = vmatpush1.bf16.msra.mxu0 %v6757
    %6779 = vmatprep.subr.bf16.mxu0 0
    %6780 = vmatpush1.bf16.msra.mxu0 %v6758
    %6781 = vmatprep.subr.bf16.mxu0 0
    %6782 = vmatpush1.bf16.msra.mxu0 %v6759
    %6783 = vmatprep.subr.bf16.mxu0 0
    %6784 = vmatpush1.bf16.msra.mxu0 %v6760
    %6785 = vmatprep.subr.bf16.mxu0 0
    %6786 = vmatpush1.bf16.msra.mxu0 0
    %6787 = vmatprep.subr.bf16.mxu0 0
    %6788 = vmatpush1.bf16.msra.mxu0 0
    %6789 = vmatprep.subr.bf16.mxu0 0
    %6790 = vmatpush1.bf16.msra.mxu0 0
    %6791 = vmatprep.subr.bf16.mxu0 0
    %6792 = vmatpush1.bf16.msra.mxu0 0
    %6793 = vmatprep.subr.bf16.mxu0 0
    %6794 = vmatpush1.bf16.msra.mxu0 0
    %6795 = vmatprep.subr.bf16.mxu0 0
    %6796 = vmatpush1.bf16.msra.mxu0 0
    %6797 = vmatprep.subr.bf16.mxu0 0
    %6798 = vmatpush1.bf16.msra.mxu0 0
    %6799 = vmatprep.subr.bf16.mxu0 0
    %6800 = vmatpush1.bf16.msra.mxu0 0
    %6801 = vmatprep.mubr.bf16.mxu0 0
    %6802 = vmatmul.mubr.bf16.gmra.mrb[0].mxu0 %v6697
    %v6803 = vpop.f32.mrb[0].mxu0
    %v6804 = vadd.f32 %v6719, %v6803
    %v6805 = vpop.f32.mrb[0].mxu0
    %v6806 = vpop.f32.mrb[0].mxu0
    %v6807 = vpop.f32.mrb[0].mxu0
    %6808 = vdwg.mxu0
    %v6809 = vmax.f32 %v6804, 0.0
    %v6810 = vpack.c.bf16 %v6809, %v6809
    %v6811 = vld [vmem:[#allocation16] sm:$0xf]
    %v6812 = vld [vmem:[#allocation16 + $0x4] sm:$0xf]
    %v6813 = vld [vmem:[#allocation16 + $0x8] sm:$0xf]
    %v6814 = vld [vmem:[#allocation16 + $0xc] sm:$0xf]
    %v6815 = vld [vmem:[#allocation16 + $0x10] sm:$0xf]
    %v6816 = vld [vmem:[#allocation16 + $0x14] sm:$0xf]
    %v6817 = vld [vmem:[#allocation16 + $0x18] sm:$0xf]
    %v6818 = vld [vmem:[#allocation16 + $0x1c] sm:$0xf]
    %v6819 = vld [vmem:[#allocation16 + $0x20] sm:$0xf]
    %v6820 = vld [vmem:[#allocation16 + $0x24] sm:$0xf]
    %v6821 = vld [vmem:[#allocation16 + $0x28] sm:$0xf]
    %v6822 = vld [vmem:[#allocation16 + $0x2c] sm:$0xf]
    %v6823 = vld [vmem:[#allocation16 + $0x30] sm:$0xf]
    %v6824 = vld [vmem:[#allocation16 + $0x34] sm:$0xf]
    %v6825 = vld [vmem:[#allocation16 + $0x38] sm:$0xf]
    %v6826 = vld [vmem:[#allocation16 + $0x3c] sm:$0xf]
    %v6827 = vld [vmem:[#allocation17] sm:$0x1]
    %v6829 = vlaneseq
    %v6830 = vshrl.u32 %v6829, 7
    %v6831 = vsub.s32 0, %v6830
    %v6832 = vrot.slane %v6827, %v6831
    %v6850 = vunpack.c.l.b16 %v6811
    %v6851 = vunpack.c.l.b16 %v6812
    %v6852 = vunpack.c.l.b16 %v6813
    %v6853 = vunpack.c.l.b16 %v6814
    %v6854 = vunpack.c.l.b16 %v6815
    %v6855 = vunpack.c.l.b16 %v6816
    %v6856 = vunpack.c.l.b16 %v6817
    %v6857 = vunpack.c.l.b16 %v6818
    %v6858 = vunpack.c.l.b16 %v6819
    %v6859 = vunpack.c.l.b16 %v6820
    %v6860 = vunpack.c.l.b16 %v6821
    %v6861 = vunpack.c.l.b16 %v6822
    %v6862 = vunpack.c.l.b16 %v6823
    %v6863 = vunpack.c.l.b16 %v6824
    %v6864 = vunpack.c.l.b16 %v6825
    %v6865 = vunpack.c.l.b16 %v6826
    %v6866 = vpack.c.b16 %v6851, %v6850
    %v6867 = vpack.c.b16 %v6853, %v6852
    %v6868 = vpack.c.b16 %v6855, %v6854
    %v6869 = vpack.c.b16 %v6857, %v6856
    %v6870 = vpack.c.b16 %v6859, %v6858
    %v6871 = vpack.c.b16 %v6861, %v6860
    %v6872 = vpack.c.b16 %v6863, %v6862
    %v6873 = vpack.c.b16 %v6865, %v6864
    %6882 = vmatprep.subr.bf16.mxu0 0
    %6883 = vmatpush1.bf16.msra.mxu0 %v6866
    %6884 = vmatprep.subr.bf16.mxu0 0
    %6885 = vmatpush1.bf16.msra.mxu0 %v6867
    %6886 = vmatprep.subr.bf16.mxu0 0
    %6887 = vmatpush1.bf16.msra.mxu0 %v6868
    %6888 = vmatprep.subr.bf16.mxu0 0
    %6889 = vmatpush1.bf16.msra.mxu0 %v6869
    %6890 = vmatprep.subr.bf16.mxu0 0
    %6891 = vmatpush1.bf16.msra.mxu0 %v6870
    %6892 = vmatprep.subr.bf16.mxu0 0
    %6893 = vmatpush1.bf16.msra.mxu0 %v6871
    %6894 = vmatprep.subr.bf16.mxu0 0
    %6895 = vmatpush1.bf16.msra.mxu0 %v6872
    %6896 = vmatprep.subr.bf16.mxu0 0
    %6897 = vmatpush1.bf16.msra.mxu0 %v6873
    %6898 = vmatprep.subr.bf16.mxu0 0
    %6899 = vmatpush1.bf16.msra.mxu0 0
    %6900 = vmatprep.subr.bf16.mxu0 0
    %6901 = vmatpush1.bf16.msra.mxu0 0
    %6902 = vmatprep.subr.bf16.mxu0 0
    %6903 = vmatpush1.bf16.msra.mxu0 0
    %6904 = vmatprep.subr.bf16.mxu0 0
    %6905 = vmatpush1.bf16.msra.mxu0 0
    %6906 = vmatprep.subr.bf16.mxu0 0
    %6907 = vmatpush1.bf16.msra.mxu0 0
    %6908 = vmatprep.subr.bf16.mxu0 0
    %6909 = vmatpush1.bf16.msra.mxu0 0
    %6910 = vmatprep.subr.bf16.mxu0 0
    %6911 = vmatpush1.bf16.msra.mxu0 0
    %6912 = vmatprep.subr.bf16.mxu0 0
    %6913 = vmatpush1.bf16.msra.mxu0 0
    %6914 = vmatprep.mubr.bf16.mxu0 0
    %6915 = vmatmul.mubr.bf16.gmra.mrb[0].mxu0 %v6810
    %v6916 = vpop.f32.mrb[0].mxu0
    %v6917 = vadd.f32 %v6832, %v6916
    %v6918 = vpop.f32.mrb[0].mxu0
    %v6919 = vpop.f32.mrb[0].mxu0
    %v6920 = vpop.f32.mrb[0].mxu0
    %6921 = vdwg.mxu0
    %v6922 = vmax.f32 %v6917, 0.0
    %v6923 = vpack.c.bf16 %v6922, %v6922
    %v6924 = vld [vmem:[#allocation19] sm:$0xf]
    %v6925 = vld [vmem:[#allocation19 + $0x4] sm:$0xf]
    %v6926 = vld [vmem:[#allocation19 + $0x8] sm:$0xf]
    %v6927 = vld [vmem:[#allocation19 + $0xc] sm:$0xf]
    %v6928 = vld [vmem:[#allocation19 + $0x10] sm:$0xf]
    %v6929 = vld [vmem:[#allocation19 + $0x14] sm:$0xf]
    %v6930 = vld [vmem:[#allocation19 + $0x18] sm:$0xf]
    %v6931 = vld [vmem:[#allocation19 + $0x1c] sm:$0xf]
    %v6932 = vld [vmem:[#allocation19 + $0x20] sm:$0xf]
    %v6933 = vld [vmem:[#allocation19 + $0x24] sm:$0xf]
    %v6934 = vld [vmem:[#allocation19 + $0x28] sm:$0xf]
    %v6935 = vld [vmem:[#allocation19 + $0x2c] sm:$0xf]
    %v6936 = vld [vmem:[#allocation19 + $0x30] sm:$0xf]
    %v6937 = vld [vmem:[#allocation19 + $0x34] sm:$0xf]
    %v6938 = vld [vmem:[#allocation19 + $0x38] sm:$0xf]
    %v6939 = vld [vmem:[#allocation19 + $0x3c] sm:$0xf]
    %v6940 = vld [vmem:[#allocation20] sm:$0x1]
    %v6942 = vlaneseq
    %v6943 = vshrl.u32 %v6942, 7
    %v6944 = vsub.s32 0, %v6943
    %v6945 = vrot.slane %v6940, %v6944
    %v6963 = vunpack.c.l.b16 %v6924
    %v6964 = vunpack.c.l.b16 %v6925
    %v6965 = vunpack.c.l.b16 %v6926
    %v6966 = vunpack.c.l.b16 %v6927
    %v6967 = vunpack.c.l.b16 %v6928
    %v6968 = vunpack.c.l.b16 %v6929
    %v6969 = vunpack.c.l.b16 %v6930
    %v6970 = vunpack.c.l.b16 %v6931
    %v6971 = vunpack.c.l.b16 %v6932
    %v6972 = vunpack.c.l.b16 %v6933
    %v6973 = vunpack.c.l.b16 %v6934
    %v6974 = vunpack.c.l.b16 %v6935
    %v6975 = vunpack.c.l.b16 %v6936
    %v6976 = vunpack.c.l.b16 %v6937
    %v6977 = vunpack.c.l.b16 %v6938
    %v6978 = vunpack.c.l.b16 %v6939
    %v6979 = vpack.c.b16 %v6964, %v6963
    %v6980 = vpack.c.b16 %v6966, %v6965
    %v6981 = vpack.c.b16 %v6968, %v6967
    %v6982 = vpack.c.b16 %v6970, %v6969
    %v6983 = vpack.c.b16 %v6972, %v6971
    %v6984 = vpack.c.b16 %v6974, %v6973
    %v6985 = vpack.c.b16 %v6976, %v6975
    %v6986 = vpack.c.b16 %v6978, %v6977
    %6995 = vmatprep.subr.bf16.mxu0 0
    %6996 = vmatpush1.bf16.msra.mxu0 %v6979
    %6997 = vmatprep.subr.bf16.mxu0 0
    %6998 = vmatpush1.bf16.msra.mxu0 %v6980
    %6999 = vmatprep.subr.bf16.mxu0 0
    %7000 = vmatpush1.bf16.msra.mxu0 %v6981
    %7001 = vmatprep.subr.bf16.mxu0 0
    %7002 = vmatpush1.bf16.msra.mxu0 %v6982
    %7003 = vmatprep.subr.bf16.mxu0 0
    %7004 = vmatpush1.bf16.msra.mxu0 %v6983
    %7005 = vmatprep.subr.bf16.mxu0 0
    %7006 = vmatpush1.bf16.msra.mxu0 %v6984
    %7007 = vmatprep.subr.bf16.mxu0 0
    %7008 = vmatpush1.bf16.msra.mxu0 %v6985
    %7009 = vmatprep.subr.bf16.mxu0 0
    %7010 = vmatpush1.bf16.msra.mxu0 %v6986
    %7011 = vmatprep.subr.bf16.mxu0 0
    %7012 = vmatpush1.bf16.msra.mxu0 0
    %7013 = vmatprep.subr.bf16.mxu0 0
    %7014 = vmatpush1.bf16.msra.mxu0 0
    %7015 = vmatprep.subr.bf16.mxu0 0
    %7016 = vmatpush1.bf16.msra.mxu0 0
    %7017 = vmatprep.subr.bf16.mxu0 0
    %7018 = vmatpush1.bf16.msra.mxu0 0
    %7019 = vmatprep.subr.bf16.mxu0 0
    %7020 = vmatpush1.bf16.msra.mxu0 0
    %7021 = vmatprep.subr.bf16.mxu0 0
    %7022 = vmatpush1.bf16.msra.mxu0 0
    %7023 = vmatprep.subr.bf16.mxu0 0
    %7024 = vmatpush1.bf16.msra.mxu0 0
    %7025 = vmatprep.subr.bf16.mxu0 0
    %7026 = vmatpush1.bf16.msra.mxu0 0
    %7027 = vmatprep.mubr.bf16.mxu0 0
    %7028 = vmatmul.mubr.bf16.gmra.mrb[0].mxu0 %v6923
    %v7029 = vpop.f32.mrb[0].mxu0
    %v7030 = vadd.f32 %v6945, %v7029
    %v7031 = vpop.f32.mrb[0].mxu0
    %v7032 = vpop.f32.mrb[0].mxu0
    %v7033 = vpop.f32.mrb[0].mxu0
    %7034 = vdwg.mxu0
    %v7035 = vmax.f32 %v7030, 0.0
    %v7036 = vpack.c.bf16 %v7035, %v7035
    %v7037 = vld [vmem:[#allocation22] sm:$0xf]
    %v7038 = vld [vmem:[#allocation22 + $0x4] sm:$0xf]
    %v7039 = vld [vmem:[#allocation22 + $0x8] sm:$0xf]
    %v7040 = vld [vmem:[#allocation22 + $0xc] sm:$0xf]
    %v7041 = vld [vmem:[#allocation22 + $0x10] sm:$0xf]
    %v7042 = vld [vmem:[#allocation22 + $0x14] sm:$0xf]
    %v7043 = vld [vmem:[#allocation22 + $0x18] sm:$0xf]
    %v7044 = vld [vmem:[#allocation22 + $0x1c] sm:$0xf]
    %v7045 = vld [vmem:[#allocation22 + $0x20] sm:$0xf]
    %v7046 = vld [vmem:[#allocation22 + $0x24] sm:$0xf]
    %v7047 = vld [vmem:[#allocation22 + $0x28] sm:$0xf]
    %v7048 = vld [vmem:[#allocation22 + $0x2c] sm:$0xf]
    %v7049 = vld [vmem:[#allocation22 + $0x30] sm:$0xf]
    %v7050 = vld [vmem:[#allocation22 + $0x34] sm:$0xf]
    %v7051 = vld [vmem:[#allocation22 + $0x38] sm:$0xf]
    %v7052 = vld [vmem:[#allocation22 + $0x3c] sm:$0xf]
    %v7053 = vld [vmem:[#allocation23] sm:$0x1]
    %v7055 = vlaneseq
    %v7056 = vshrl.u32 %v7055, 7
    %v7057 = vsub.s32 0, %v7056
    %v7058 = vrot.slane %v7053, %v7057
    %v7076 = vunpack.c.l.b16 %v7037
    %v7077 = vunpack.c.l.b16 %v7038
    %v7078 = vunpack.c.l.b16 %v7039
    %v7079 = vunpack.c.l.b16 %v7040
    %v7080 = vunpack.c.l.b16 %v7041
    %v7081 = vunpack.c.l.b16 %v7042
    %v7082 = vunpack.c.l.b16 %v7043
    %v7083 = vunpack.c.l.b16 %v7044
    %v7084 = vunpack.c.l.b16 %v7045
    %v7085 = vunpack.c.l.b16 %v7046
    %v7086 = vunpack.c.l.b16 %v7047
    %v7087 = vunpack.c.l.b16 %v7048
    %v7088 = vunpack.c.l.b16 %v7049
    %v7089 = vunpack.c.l.b16 %v7050
    %v7090 = vunpack.c.l.b16 %v7051
    %v7091 = vunpack.c.l.b16 %v7052
    %v7092 = vpack.c.b16 %v7077, %v7076
    %v7093 = vpack.c.b16 %v7079, %v7078
    %v7094 = vpack.c.b16 %v7081, %v7080
    %v7095 = vpack.c.b16 %v7083, %v7082
    %v7096 = vpack.c.b16 %v7085, %v7084
    %v7097 = vpack.c.b16 %v7087, %v7086
    %v7098 = vpack.c.b16 %v7089, %v7088
    %v7099 = vpack.c.b16 %v7091, %v7090
    %7108 = vmatprep.subr.bf16.mxu0 0
    %7109 = vmatpush1.bf16.msra.mxu0 %v7092
    %7110 = vmatprep.subr.bf16.mxu0 0
    %7111 = vmatpush1.bf16.msra.mxu0 %v7093
    %7112 = vmatprep.subr.bf16.mxu0 0
    %7113 = vmatpush1.bf16.msra.mxu0 %v7094
    %7114 = vmatprep.subr.bf16.mxu0 0
    %7115 = vmatpush1.bf16.msra.mxu0 %v7095
    %7116 = vmatprep.subr.bf16.mxu0 0
    %7117 = vmatpush1.bf16.msra.mxu0 %v7096
    %7118 = vmatprep.subr.bf16.mxu0 0
    %7119 = vmatpush1.bf16.msra.mxu0 %v7097
    %7120 = vmatprep.subr.bf16.mxu0 0
    %7121 = vmatpush1.bf16.msra.mxu0 %v7098
    %7122 = vmatprep.subr.bf16.mxu0 0
    %7123 = vmatpush1.bf16.msra.mxu0 %v7099
    %7124 = vmatprep.subr.bf16.mxu0 0
    %7125 = vmatpush1.bf16.msra.mxu0 0
    %7126 = vmatprep.subr.bf16.mxu0 0
    %7127 = vmatpush1.bf16.msra.mxu0 0
    %7128 = vmatprep.subr.bf16.mxu0 0
    %7129 = vmatpush1.bf16.msra.mxu0 0
    %7130 = vmatprep.subr.bf16.mxu0 0
    %7131 = vmatpush1.bf16.msra.mxu0 0
    %7132 = vmatprep.subr.bf16.mxu0 0
    %7133 = vmatpush1.bf16.msra.mxu0 0
    %7134 = vmatprep.subr.bf16.mxu0 0
    %7135 = vmatpush1.bf16.msra.mxu0 0
    %7136 = vmatprep.subr.bf16.mxu0 0
    %7137 = vmatpush1.bf16.msra.mxu0 0
    %7138 = vmatprep.subr.bf16.mxu0 0
    %7139 = vmatpush1.bf16.msra.mxu0 0
    %7140 = vmatprep.mubr.bf16.mxu0 0
    %7141 = vmatmul.mubr.bf16.gmra.mrb[0].mxu0 %v7036
    %v7142 = vpop.f32.mrb[0].mxu0
    %v7143 = vadd.f32 %v7058, %v7142
    %v7144 = vpop.f32.mrb[0].mxu0
    %v7145 = vpop.f32.mrb[0].mxu0
    %v7146 = vpop.f32.mrb[0].mxu0
    %7147 = vdwg.mxu0
    %v7148 = vmax.f32 %v7143, 0.0
    %v7149 = vpack.c.bf16 %v7148, %v7148
    %v7150 = vld [vmem:[#allocation25] sm:$0xf]
    %v7151 = vld [vmem:[#allocation25 + $0x4] sm:$0xf]
    %v7152 = vld [vmem:[#allocation25 + $0x8] sm:$0xf]
    %v7153 = vld [vmem:[#allocation25 + $0xc] sm:$0xf]
    %v7154 = vld [vmem:[#allocation25 + $0x10] sm:$0xf]
    %v7155 = vld [vmem:[#allocation25 + $0x14] sm:$0xf]
    %v7156 = vld [vmem:[#allocation25 + $0x18] sm:$0xf]
    %v7157 = vld [vmem:[#allocation25 + $0x1c] sm:$0xf]
    %v7158 = vld [vmem:[#allocation25 + $0x20] sm:$0xf]
    %v7159 = vld [vmem:[#allocation25 + $0x24] sm:$0xf]
    %v7160 = vld [vmem:[#allocation25 + $0x28] sm:$0xf]
    %v7161 = vld [vmem:[#allocation25 + $0x2c] sm:$0xf]
    %v7162 = vld [vmem:[#allocation25 + $0x30] sm:$0xf]
    %v7163 = vld [vmem:[#allocation25 + $0x34] sm:$0xf]
    %v7164 = vld [vmem:[#allocation25 + $0x38] sm:$0xf]
    %v7165 = vld [vmem:[#allocation25 + $0x3c] sm:$0xf]
    %v7166 = vld [vmem:[#allocation26] sm:$0x1]
    %v7168 = vlaneseq
    %v7169 = vshrl.u32 %v7168, 7
    %v7170 = vsub.s32 0, %v7169
    %v7171 = vrot.slane %v7166, %v7170
    %v7189 = vunpack.c.l.b16 %v7150
    %v7190 = vunpack.c.l.b16 %v7151
    %v7191 = vunpack.c.l.b16 %v7152
    %v7192 = vunpack.c.l.b16 %v7153
    %v7193 = vunpack.c.l.b16 %v7154
    %v7194 = vunpack.c.l.b16 %v7155
    %v7195 = vunpack.c.l.b16 %v7156
    %v7196 = vunpack.c.l.b16 %v7157
    %v7197 = vunpack.c.l.b16 %v7158
    %v7198 = vunpack.c.l.b16 %v7159
    %v7199 = vunpack.c.l.b16 %v7160
    %v7200 = vunpack.c.l.b16 %v7161
    %v7201 = vunpack.c.l.b16 %v7162
    %v7202 = vunpack.c.l.b16 %v7163
    %v7203 = vunpack.c.l.b16 %v7164
    %v7204 = vunpack.c.l.b16 %v7165
    %v7205 = vpack.c.b16 %v7190, %v7189
    %v7206 = vpack.c.b16 %v7192, %v7191
    %v7207 = vpack.c.b16 %v7194, %v7193
    %v7208 = vpack.c.b16 %v7196, %v7195
    %v7209 = vpack.c.b16 %v7198, %v7197
    %v7210 = vpack.c.b16 %v7200, %v7199
    %v7211 = vpack.c.b16 %v7202, %v7201
    %v7212 = vpack.c.b16 %v7204, %v7203
    %7221 = vmatprep.subr.bf16.mxu0 0
    %7222 = vmatpush1.bf16.msra.mxu0 %v7205
    %7223 = vmatprep.subr.bf16.mxu0 0
    %7224 = vmatpush1.bf16.msra.mxu0 %v7206
    %7225 = vmatprep.subr.bf16.mxu0 0
    %7226 = vmatpush1.bf16.msra.mxu0 %v7207
    %7227 = vmatprep.subr.bf16.mxu0 0
    %7228 = vmatpush1.bf16.msra.mxu0 %v7208
    %7229 = vmatprep.subr.bf16.mxu0 0
    %7230 = vmatpush1.bf16.msra.mxu0 %v7209
    %7231 = vmatprep.subr.bf16.mxu0 0
    %7232 = vmatpush1.bf16.msra.mxu0 %v7210
    %7233 = vmatprep.subr.bf16.mxu0 0
    %7234 = vmatpush1.bf16.msra.mxu0 %v7211
    %7235 = vmatprep.subr.bf16.mxu0 0
    %7236 = vmatpush1.bf16.msra.mxu0 %v7212
    %7237 = vmatprep.subr.bf16.mxu0 0
    %7238 = vmatpush1.bf16.msra.mxu0 0
    %7239 = vmatprep.subr.bf16.mxu0 0
    %7240 = vmatpush1.bf16.msra.mxu0 0
    %7241 = vmatprep.subr.bf16.mxu0 0
    %7242 = vmatpush1.bf16.msra.mxu0 0
    %7243 = vmatprep.subr.bf16.mxu0 0
    %7244 = vmatpush1.bf16.msra.mxu0 0
    %7245 = vmatprep.subr.bf16.mxu0 0
    %7246 = vmatpush1.bf16.msra.mxu0 0
    %7247 = vmatprep.subr.bf16.mxu0 0
    %7248 = vmatpush1.bf16.msra.mxu0 0
    %7249 = vmatprep.subr.bf16.mxu0 0
    %7250 = vmatpush1.bf16.msra.mxu0 0
    %7251 = vmatprep.subr.bf16.mxu0 0
    %7252 = vmatpush1.bf16.msra.mxu0 0
    %7253 = vmatprep.mubr.bf16.mxu0 0
    %7254 = vmatmul.mubr.bf16.gmra.mrb[0].mxu0 %v7149
    %v7255 = vpop.f32.mrb[0].mxu0
    %v7256 = vadd.f32 %v7171, %v7255
    %v7257 = vpop.f32.mrb[0].mxu0
    %v7258 = vpop.f32.mrb[0].mxu0
    %v7259 = vpop.f32.mrb[0].mxu0
    %7260 = vdwg.mxu0
    %v7261 = vmax.f32 %v7256, 0.0
    %v7262 = vpack.c.bf16 %v7261, %v7261
    %v7263 = vld [vmem:[#allocation28] sm:$0xf]
    %v7264 = vld [vmem:[#allocation28 + $0x4] sm:$0xf]
    %v7265 = vld [vmem:[#allocation28 + $0x8] sm:$0xf]
    %v7266 = vld [vmem:[#allocation28 + $0xc] sm:$0xf]
    %v7267 = vld [vmem:[#allocation28 + $0x10] sm:$0xf]
    %v7268 = vld [vmem:[#allocation28 + $0x14] sm:$0xf]
    %v7269 = vld [vmem:[#allocation28 + $0x18] sm:$0xf]
    %v7270 = vld [vmem:[#allocation28 + $0x1c] sm:$0xf]
    %v7271 = vld [vmem:[#allocation28 + $0x20] sm:$0xf]
    %v7272 = vld [vmem:[#allocation28 + $0x24] sm:$0xf]
    %v7273 = vld [vmem:[#allocation28 + $0x28] sm:$0xf]
    %v7274 = vld [vmem:[#allocation28 + $0x2c] sm:$0xf]
    %v7275 = vld [vmem:[#allocation28 + $0x30] sm:$0xf]
    %v7276 = vld [vmem:[#allocation28 + $0x34] sm:$0xf]
    %v7277 = vld [vmem:[#allocation28 + $0x38] sm:$0xf]
    %v7278 = vld [vmem:[#allocation28 + $0x3c] sm:$0xf]
    %v7279 = vld [vmem:[#allocation29] sm:$0x1]
    %v7281 = vlaneseq
    %v7282 = vshrl.u32 %v7281, 7
    %v7283 = vsub.s32 0, %v7282
    %v7284 = vrot.slane %v7279, %v7283
    %v7302 = vunpack.c.l.b16 %v7263
    %v7303 = vunpack.c.l.b16 %v7264
    %v7304 = vunpack.c.l.b16 %v7265
    %v7305 = vunpack.c.l.b16 %v7266
    %v7306 = vunpack.c.l.b16 %v7267
    %v7307 = vunpack.c.l.b16 %v7268
    %v7308 = vunpack.c.l.b16 %v7269
    %v7309 = vunpack.c.l.b16 %v7270
    %v7310 = vunpack.c.l.b16 %v7271
    %v7311 = vunpack.c.l.b16 %v7272
    %v7312 = vunpack.c.l.b16 %v7273
    %v7313 = vunpack.c.l.b16 %v7274
    %v7314 = vunpack.c.l.b16 %v7275
    %v7315 = vunpack.c.l.b16 %v7276
    %v7316 = vunpack.c.l.b16 %v7277
    %v7317 = vunpack.c.l.b16 %v7278
    %v7318 = vpack.c.b16 %v7303, %v7302
    %v7319 = vpack.c.b16 %v7305, %v7304
    %v7320 = vpack.c.b16 %v7307, %v7306
    %v7321 = vpack.c.b16 %v7309, %v7308
    %v7322 = vpack.c.b16 %v7311, %v7310
    %v7323 = vpack.c.b16 %v7313, %v7312
    %v7324 = vpack.c.b16 %v7315, %v7314
    %v7325 = vpack.c.b16 %v7317, %v7316
    %7334 = vmatprep.subr.bf16.mxu0 0
    %7335 = vmatpush1.bf16.msra.mxu0 %v7318
    %7336 = vmatprep.subr.bf16.mxu0 0
    %7337 = vmatpush1.bf16.msra.mxu0 %v7319
    %7338 = vmatprep.subr.bf16.mxu0 0
    %7339 = vmatpush1.bf16.msra.mxu0 %v7320
    %7340 = vmatprep.subr.bf16.mxu0 0
    %7341 = vmatpush1.bf16.msra.mxu0 %v7321
    %7342 = vmatprep.subr.bf16.mxu0 0
    %7343 = vmatpush1.bf16.msra.mxu0 %v7322
    %7344 = vmatprep.subr.bf16.mxu0 0
    %7345 = vmatpush1.bf16.msra.mxu0 %v7323
    %7346 = vmatprep.subr.bf16.mxu0 0
    %7347 = vmatpush1.bf16.msra.mxu0 %v7324
    %7348 = vmatprep.subr.bf16.mxu0 0
    %7349 = vmatpush1.bf16.msra.mxu0 %v7325
    %7350 = vmatprep.subr.bf16.mxu0 0
    %7351 = vmatpush1.bf16.msra.mxu0 0
    %7352 = vmatprep.subr.bf16.mxu0 0
    %7353 = vmatpush1.bf16.msra.mxu0 0
    %7354 = vmatprep.subr.bf16.mxu0 0
    %7355 = vmatpush1.bf16.msra.mxu0 0
    %7356 = vmatprep.subr.bf16.mxu0 0
    %7357 = vmatpush1.bf16.msra.mxu0 0
    %7358 = vmatprep.subr.bf16.mxu0 0
    %7359 = vmatpush1.bf16.msra.mxu0 0
    %7360 = vmatprep.subr.bf16.mxu0 0
    %7361 = vmatpush1.bf16.msra.mxu0 0
    %7362 = vmatprep.subr.bf16.mxu0 0
    %7363 = vmatpush1.bf16.msra.mxu0 0
    %7364 = vmatprep.subr.bf16.mxu0 0
    %7365 = vmatpush1.bf16.msra.mxu0 0
    %7366 = vmatprep.mubr.bf16.mxu0 0
    %7367 = vmatmul.mubr.bf16.gmra.mrb[0].mxu0 %v7262
    %v7368 = vpop.f32.mrb[0].mxu0
    %v7369 = vadd.f32 %v7284, %v7368
    %v7370 = vpop.f32.mrb[0].mxu0
    %v7371 = vpop.f32.mrb[0].mxu0
    %v7372 = vpop.f32.mrb[0].mxu0
    %7373 = vdwg.mxu0
    %v7374 = vmax.f32 %v7369, 0.0
    %v7375 = vpack.c.bf16 %v7374, %v7374
    %v7376 = vld [vmem:[#allocation31] sm:$0xf]
    %v7377 = vld [vmem:[#allocation31 + $0x4] sm:$0xf]
    %v7378 = vld [vmem:[#allocation31 + $0x8] sm:$0xf]
    %v7379 = vld [vmem:[#allocation31 + $0xc] sm:$0xf]
    %v7380 = vld [vmem:[#allocation31 + $0x10] sm:$0xf]
    %v7381 = vld [vmem:[#allocation31 + $0x14] sm:$0xf]
    %v7382 = vld [vmem:[#allocation31 + $0x18] sm:$0xf]
    %v7383 = vld [vmem:[#allocation31 + $0x1c] sm:$0xf]
    %v7384 = vld [vmem:[#allocation31 + $0x20] sm:$0xf]
    %v7385 = vld [vmem:[#allocation31 + $0x24] sm:$0xf]
    %v7386 = vld [vmem:[#allocation31 + $0x28] sm:$0xf]
    %v7387 = vld [vmem:[#allocation31 + $0x2c] sm:$0xf]
    %v7388 = vld [vmem:[#allocation31 + $0x30] sm:$0xf]
    %v7389 = vld [vmem:[#allocation31 + $0x34] sm:$0xf]
    %v7390 = vld [vmem:[#allocation31 + $0x38] sm:$0xf]
    %v7391 = vld [vmem:[#allocation31 + $0x3c] sm:$0xf]
    %v7392 = vld [vmem:[#allocation32] sm:$0x1]
    %v7394 = vlaneseq
    %v7395 = vshrl.u32 %v7394, 7
    %v7396 = vsub.s32 0, %v7395
    %v7397 = vrot.slane %v7392, %v7396
    %v7415 = vunpack.c.l.b16 %v7376
    %v7416 = vunpack.c.l.b16 %v7377
    %v7417 = vunpack.c.l.b16 %v7378
    %v7418 = vunpack.c.l.b16 %v7379
    %v7419 = vunpack.c.l.b16 %v7380
    %v7420 = vunpack.c.l.b16 %v7381
    %v7421 = vunpack.c.l.b16 %v7382
    %v7422 = vunpack.c.l.b16 %v7383
    %v7423 = vunpack.c.l.b16 %v7384
    %v7424 = vunpack.c.l.b16 %v7385
    %v7425 = vunpack.c.l.b16 %v7386
    %v7426 = vunpack.c.l.b16 %v7387
    %v7427 = vunpack.c.l.b16 %v7388
    %v7428 = vunpack.c.l.b16 %v7389
    %v7429 = vunpack.c.l.b16 %v7390
    %v7430 = vunpack.c.l.b16 %v7391
    %v7431 = vpack.c.b16 %v7416, %v7415
    %v7432 = vpack.c.b16 %v7418, %v7417
    %v7433 = vpack.c.b16 %v7420, %v7419
    %v7434 = vpack.c.b16 %v7422, %v7421
    %v7435 = vpack.c.b16 %v7424, %v7423
    %v7436 = vpack.c.b16 %v7426, %v7425
    %v7437 = vpack.c.b16 %v7428, %v7427
    %v7438 = vpack.c.b16 %v7430, %v7429
    %7447 = vmatprep.subr.bf16.mxu0 0
    %7448 = vmatpush1.bf16.msra.mxu0 %v7431
    %7449 = vmatprep.subr.bf16.mxu0 0
    %7450 = vmatpush1.bf16.msra.mxu0 %v7432
    %7451 = vmatprep.subr.bf16.mxu0 0
    %7452 = vmatpush1.bf16.msra.mxu0 %v7433
    %7453 = vmatprep.subr.bf16.mxu0 0
    %7454 = vmatpush1.bf16.msra.mxu0 %v7434
    %7455 = vmatprep.subr.bf16.mxu0 0
    %7456 = vmatpush1.bf16.msra.mxu0 %v7435
    %7457 = vmatprep.subr.bf16.mxu0 0
    %7458 = vmatpush1.bf16.msra.mxu0 %v7436
    %7459 = vmatprep.subr.bf16.mxu0 0
    %7460 = vmatpush1.bf16.msra.mxu0 %v7437
    %7461 = vmatprep.subr.bf16.mxu0 0
    %7462 = vmatpush1.bf16.msra.mxu0 %v7438
    %7463 = vmatprep.subr.bf16.mxu0 0
    %7464 = vmatpush1.bf16.msra.mxu0 0
    %7465 = vmatprep.subr.bf16.mxu0 0
    %7466 = vmatpush1.bf16.msra.mxu0 0
    %7467 = vmatprep.subr.bf16.mxu0 0
    %7468 = vmatpush1.bf16.msra.mxu0 0
    %7469 = vmatprep.subr.bf16.mxu0 0
    %7470 = vmatpush1.bf16.msra.mxu0 0
    %7471 = vmatprep.subr.bf16.mxu0 0
    %7472 = vmatpush1.bf16.msra.mxu0 0
    %7473 = vmatprep.subr.bf16.mxu0 0
    %7474 = vmatpush1.bf16.msra.mxu0 0
    %7475 = vmatprep.subr.bf16.mxu0 0
    %7476 = vmatpush1.bf16.msra.mxu0 0
    %7477 = vmatprep.subr.bf16.mxu0 0
    %7478 = vmatpush1.bf16.msra.mxu0 0
    %7479 = vmatprep.mubr.bf16.mxu0 0
    %7480 = vmatmul.mubr.bf16.gmra.mrb[0].mxu0 %v7375
    %v7481 = vpop.f32.mrb[0].mxu0
    %v7482 = vadd.f32 %v7397, %v7481
    %v7483 = vpop.f32.mrb[0].mxu0
    %v7484 = vpop.f32.mrb[0].mxu0
    %v7485 = vpop.f32.mrb[0].mxu0
    %7486 = vdwg.mxu0
    %v7487 = vlaneseq
    %v7488 = vand.u32 %v7487, 127
    %vm7489 = vcmp.lt.s32.totalorder %v7488, 10
    %v7490 = vsel %vm7489, %v7482, -inf
    %7491 = vmax.xlane.f32.xlu0 %v7490
    %v7492 = vpop.xlane.xlu0 %7491
    %v7493 = vsub.f32 %v7490, %v7492
    %v7494 = vmul.f32 %v7493, 1.442695
    %v7495 = vpow.pop %v7494
    %7496 = vadd.xlane.f32.xlu0 %v7495
    %v7497 = vpop.xlane.xlu0 %7496
    %v7498 = vrcp.pop %v7497
    %v7499 = vmul.f32 %v7495, %v7498
    %vm7500 = vcmask 80896
    %7501 = vst.msk [vmem:[#allocation34] sm:$0xff] %vm7500, %v7499
    // Predicated region
    $region166: #{net_forward.1} parent=1 // pred_check
      _
    $region167: #{net_forward.1} parent=1 // pred_check_branch
      %7503 = sbr.rel (0) target = $region169
    $region168: #{net_forward.1} parent=1 // pred_region
      %s7505 = ssub.s32 128, 128
      %7506 = vsyncadd [#allocation4], %s7505
      %s7508 = sshll.u32 [#allocation34], 4
      %s7509 = int_to_ptr.vmem [resolvable:$true] %s7508
      %7511 = dma.vmem_to_hbm [thread:$0]  %s7509, 128, %s21, [#allocation4]
    $region169: #{net_forward.1} parent=1 // pred_fallthru
      _
    // Predicated region
    $region170: #{net_forward.1} parent=1 // pred_check
      _
    $region171: #{net_forward.1} parent=1 // pred_check_branch
      %7513 = sbr.rel (0) target = $region173
    $region172: #{net_forward.1} parent=1 // pred_region
      %7514 = dma.done [#allocation4], 128
    $region173: #{net_forward.1} parent=1 // pred_fallthru
      _
    %7515 = vsyncpa [#allocation3], 1
    %7516 = vsyncpa [#allocation6], 1
    %7517 = vsyncpa [#allocation9], 1
    %7518 = vsyncpa [#allocation12], 1
    %7519 = vsyncpa [#allocation15], 1
    %7520 = vsyncpa [#allocation18], 1
    %7521 = vsyncpa [#allocation21], 1
    %7522 = vsyncpa [#allocation24], 1
    %7523 = vsyncpa [#allocation27], 1
    %7524 = vsyncpa [#allocation30], 1
    %7525 = vsyncpa [#allocation33], 1
    %7526 = vsyncpa [#allocation4], 1

</llo_original>
